<compile_context>
chip_gen: v6e
topology: v6e:2x2x1
jax: 0.10.0
libtpu: 0.0.40
codegen_flags: <defaults>
</compile_context>

<pallas_src>
import functools
import math

import jax
import jax.numpy as jnp
from jax.experimental import pallas as pl
from jax.experimental.pallas import tpu as pltpu


def _largest_divisor_leq(n, target):
    t = max(1, min(n, int(target)))
    while n % t:
        t -= 1
    return t


def block_choi_kernel(*refs, kh, kw, ph, pw, w_total, avgpool):
    """One BlockChoi on one time tile: Conv2dSame -> pool -> BN -> ELU.

    refs (in order):
      x_ref                      (H, tcw, N, Cin)   main conv-width tile
      left halo refs  (pad_l x)  (H, 1, N, Cin)     columns left of the tile
      right halo refs (pad_r x)  (H, 1, N, Cin)     columns right of the tile
      s_ref, t_ref               (1, 1)             folded spec_bn affine
      w_ref                      (kh*kw, 1, Cout) if Cin==1 else (kh*kw*Cin, Cout)
      b_ref, scale_ref, shift_ref(1, Cout)
      o_ref                      (H//ph, tcw//pw, N, Cout)
    """
    pad_l = (kw - 1) // 2
    pad_r = (kw - 1) - pad_l
    x_ref = refs[0]
    l_refs = refs[1:1 + pad_l]
    r_refs = refs[1 + pad_l:1 + pad_l + pad_r]
    (s_ref, t_ref, w_ref, b_ref, scale_ref, shift_ref,
     o_ref) = refs[1 + pad_l + pad_r:]

    H, tcw, N, cin = x_ref.shape
    cout = o_ref.shape[-1]
    j = pl.program_id(0)

    def load(ref):
        # Folded spec_bn affine for block 0 (identity for later blocks):
        # applied on the VMEM tile, so there is no separate HBM pass.
        return ref[...] * s_ref[...] + t_ref[...]

    # ---- assemble the TF-"SAME"-padded tile (leading-dim concats only) ----
    cols = []
    for i in range(pad_l):
        # real data unless the column lies left of the sequence start
        valid = (j * tcw - pad_l + i >= 0).astype(jnp.float32)
        cols.append(load(l_refs[i]) * valid)
    cols.append(load(x_ref))
    for i in range(pad_r):
        # real data unless the column lies past the sequence end
        valid = (j * tcw + tcw + i < w_total).astype(jnp.float32)
        cols.append(load(r_refs[i]) * valid)
    xw = cols[0] if len(cols) == 1 else jnp.concatenate(cols, axis=1)

    pad_t = (kh - 1) // 2
    pad_b = (kh - 1) - pad_t
    if pad_t or pad_b:
        wp = tcw + kw - 1
        xw = jnp.concatenate(
            [jnp.zeros((pad_t, wp, N, cin), jnp.float32), xw,
             jnp.zeros((pad_b, wp, N, cin), jnp.float32)], axis=0)
    # xw: (H + kh - 1, tcw + kw - 1, N, Cin)

    # ---- convolution (stride 1, dilation 1) ----
    if cin == 1:
        # A K=1 contraction wastes the MXU: do kh*kw broadcast FMAs on the VPU.
        acc = jnp.zeros((H, tcw, N, cout), jnp.float32)
        for dy in range(kh):
            for dx in range(kw):
                acc = acc + xw[dy:dy + H, dx:dx + tcw] * w_ref[dy * kw + dx]
    else:
        # im2col: one MXU matmul with K = kh*kw*Cin instead of kh*kw tiny dots.
        taps = [xw[dy:dy + H, dx:dx + tcw]
                for dy in range(kh) for dx in range(kw)]
        patch = jnp.concatenate(taps, axis=-1)           # (H, tcw, N, kh*kw*Cin)
        acc = jax.lax.dot_general(patch, w_ref[...], (((3,), (0,)), ((), ())),
                                  preferred_element_type=jnp.float32)
    acc = acc + b_ref[0]

    # ---- pooling, kernel == stride == (ph, pw), floor semantics ----
    Hout = H // ph
    a = acc[:Hout * ph].reshape((Hout, ph, tcw, N, cout))
    r = a[:, 0]
    for i in range(1, ph):
        r = (r + a[:, i]) if avgpool else jnp.maximum(r, a[:, i])
    tpw = tcw // pw
    bsh = r.reshape((Hout, tpw, pw, N, cout))
    p = bsh[:, :, 0]
    for i in range(1, pw):
        p = (p + bsh[:, :, i]) if avgpool else jnp.maximum(p, bsh[:, :, i])
    if avgpool:
        p = p * (1.0 / float(ph * pw))

    # ---- BatchNorm (inference, folded affine) + ELU(alpha=1) ----
    # Kept AFTER the pool (module order); not folded into the conv because
    # maxpool does not commute with a negative scale.
    y = p * scale_ref[0] + shift_ref[0]
    y = jnp.where(y > 0.0, y, jnp.exp(jnp.minimum(y, 0.0)) - 1.0)
    # TODO(synk): Dropout(p=0.1) is train-time only; identity at inference.
    o_ref[...] = y.astype(o_ref.dtype)


def _run_block(x, w, b, scale, shift, in_scale, in_shift, *,
               kh, kw, ph, pw, avgpool, max_tile_w=128,
               vmem_budget_bytes=6 * 1024 * 1024):
    """One BlockChoi as a pallas_call gridded over pooled time tiles."""
    H, W, N, cin = x.shape
    cout = b.shape[-1]
    pad_l = (kw - 1) // 2
    pad_r = (kw - 1) - pad_l
    Hout = H // ph
    Wpool = W // pw                       # SAME conv, stride 1: conv width == W
    if Hout < 1 or Wpool < 1:
        raise ValueError("pool window larger than the input")

    # Budget-driven tile size: input tile (double-buffered) + im2col patch +
    # f32 accumulator + output tile must stay a few MiB (portable to v7x).
    bytes_per_col = 4 * H * N * (cin * (kh * kw + 2) + 3 * cout)
    max_tcw = max(1, vmem_budget_bytes // bytes_per_col)
    tpw = _largest_divisor_leq(Wpool, max(1, min(max_tile_w, max_tcw // pw)))
    tcw = tpw * pw
    ntiles = Wpool // tpw

    kern = functools.partial(block_choi_kernel, kh=kh, kw=kw, ph=ph, pw=pw,
                             w_total=W, avgpool=avgpool)

    # Main conv-width tile + (kw-1) one-column halo views of the same array.
    in_specs = [pl.BlockSpec((H, tcw, N, cin), lambda j: (0, j, 0, 0))]
    for i in range(pad_l):
        in_specs.append(pl.BlockSpec(
            (H, 1, N, cin),
            lambda j, i=i: (0, jnp.maximum(j * tcw - pad_l + i, 0), 0, 0)))
    for i in range(pad_r):
        in_specs.append(pl.BlockSpec(
            (H, 1, N, cin),
            lambda j, i=i: (0, jnp.minimum(j * tcw + tcw + i, W - 1), 0, 0)))
    # Small parameters: full arrays, constant block index (fetched once).
    for arr in (in_scale, in_shift, w, b, scale, shift):
        in_specs.append(pl.BlockSpec(arr.shape, lambda j, nd=arr.ndim: (0,) * nd))

    out_specs = pl.BlockSpec((Hout, tpw, N, cout), lambda j: (0, j, 0, 0))

    return pl.pallas_call(
        kern,
        grid=(ntiles,),
        in_specs=in_specs,
        out_specs=out_specs,
        out_shape=jax.ShapeDtypeStruct((Hout, Wpool, N, cout), jnp.float32),
        compiler_params=pltpu.CompilerParams(
            dimension_semantics=("parallel",),
            vmem_limit_bytes=32 * 1024 * 1024),
    )(x, *([x] * (pad_l + pad_r)), in_scale, in_shift, w, b, scale, shift)


def frontend_forward(x_nchw, params, *, max_tile_w=128):
    """Equivalent of Frontend_mine.forward; input is PyTorch NCHW (N,1,F,T)."""
    eps = 1e-5
    sb = params["spec_bn"]
    # spec_bn (BatchNorm2d(1), eval) == affine a0*x + c0; applied to block-0's
    # tiles inside the kernel (no standalone elementwise HBM pass).
    a0 = sb["gamma"] / jnp.sqrt(sb["var"] + eps)
    c0 = sb["beta"] - sb["mean"] * a0

    # NCHW -> (H=freq, W=time, N, C): channels on lanes, batch on sublanes.
    x = jnp.transpose(x_nchw, (2, 3, 0, 1)).astype(jnp.float32)

    one = jnp.ones((1, 1), jnp.float32)
    zero = jnp.zeros((1, 1), jnp.float32)

    for bi, blk in enumerate(params["blocks"]):
        kh, kw = blk["kernel_size"]
        ph, pw = blk["pool_size"]
        in_s = a0.reshape(1, 1).astype(jnp.float32) if bi == 0 else one
        in_t = c0.reshape(1, 1).astype(jnp.float32) if bi == 0 else zero
        x = _run_block(x, blk["w"], blk["b"], blk["scale"], blk["shift"],
                       in_s, in_t, kh=kh, kw=kw, ph=ph, pw=pw,
                       avgpool=blk["avgpool"], max_tile_w=max_tile_w)

    if x.shape[0] != 1:
        raise Exception("Insufficient pooling along the frequency axis, "
                        "the required resulting size is 1.")
    # (1, T, N, C) -> squeeze freq -> (N, C, T) to match PyTorch output layout.
    return jnp.transpose(x[0], (1, 2, 0))


def frontend_reference(x_nchw, params):
    """Pure-JAX (non-Pallas) reference with the module's forward semantics."""
    eps = 1e-5
    sb = params["spec_bn"]
    x = (x_nchw - sb["mean"]) / jnp.sqrt(sb["var"] + eps) * sb["gamma"] + sb["beta"]
    for blk in params["blocks"]:
        kh, kw = blk["kernel_size"]
        ph, pw = blk["pool_size"]
        pad_h, pad_w = kh - 1, kw - 1
        x = jax.lax.conv_general_dilated(
            x, blk["w_torch"], window_strides=(1, 1),
            padding=[(pad_h // 2, pad_h - pad_h // 2),
                     (pad_w // 2, pad_w - pad_w // 2)],
            dimension_numbers=("NCHW", "OIHW", "NCHW"),
            precision=jax.lax.Precision.HIGHEST)
        x = x + blk["b"][0][None, :, None, None]
        if blk["avgpool"]:
            x = jax.lax.reduce_window(x, 0.0, jax.lax.add, (1, 1, ph, pw),
                                      (1, 1, ph, pw), "VALID") / float(ph * pw)
        else:
            x = jax.lax.reduce_window(x, -jnp.inf, jax.lax.max, (1, 1, ph, pw),
                                      (1, 1, ph, pw), "VALID")
        x = (x * blk["scale"][0][None, :, None, None]
             + blk["shift"][0][None, :, None, None])
        x = jnp.where(x > 0.0, x, jnp.exp(jnp.minimum(x, 0.0)) - 1.0)
    if x.shape[2] != 1:
        raise Exception("Insufficient pooling along the frequency axis.")
    return x[:, :, 0, :]


def init_params(key, front_end_dict, in_channels=1):
    """Deterministic synthetic parameters (same shapes as the PyTorch module)."""
    eps = 1e-5
    depth = len(front_end_dict["list_out_channels"])
    keys = jax.random.split(key, depth + 1)

    sk = jax.random.split(keys[0], 4)
    spec_bn = {
        "gamma": 1.0 + 0.1 * jax.random.normal(sk[0], ()),
        "beta": 0.1 * jax.random.normal(sk[1], ()),
        "mean": 0.1 * jax.random.normal(sk[2], ()),
        "var": 1.0 + 0.1 * jax.random.uniform(sk[3], ()),
    }

    blocks = []
    cin = in_channels
    for i in range(depth):
        cout = front_end_dict["list_out_channels"][i]
        kh, kw = front_end_dict["list_kernel_sizes"][i]
        ph, pw = front_end_dict["list_pool_sizes"][i]
        avg = bool(front_end_dict["list_avgpool_flags"][i])
        kw_, kb_, kg_, km_ = jax.random.split(keys[1 + i], 4)

        fan_in = cin * kh * kw
        bound = 1.0 / math.sqrt(fan_in)
        # PyTorch conv weight layout (Cout, Cin, kh, kw), uniform(-bound, bound).
        w_torch = jax.random.uniform(kw_, (cout, cin, kh, kw), minval=-bound,
                                     maxval=bound, dtype=jnp.float32)
        bias = jax.random.uniform(kb_, (cout,), minval=-bound, maxval=bound,
                                  dtype=jnp.float32)
        gamma = 1.0 + 0.1 * jax.random.normal(kg_, (cout,), dtype=jnp.float32)
        beta = 0.1 * jax.random.normal(km_, (cout,), dtype=jnp.float32)
        run_mean = jnp.zeros((cout,), jnp.float32)
        run_var = jnp.ones((cout,), jnp.float32)
        scale = gamma / jnp.sqrt(run_var + eps)
        shift = beta - run_mean * scale

        # (Cout,Cin,kh,kw) -> (kh,kw,Cin,Cout); kernel-side layout depends on Cin.
        w_hwio = jnp.transpose(w_torch, (2, 3, 1, 0))
        if cin == 1:
            w_k = w_hwio.reshape(kh * kw, cin, cout)      # per-tap VPU weights
        else:
            w_k = w_hwio.reshape(kh * kw * cin, cout)     # im2col matmul weights
        # TODO(synk): for large configs store w_k (and activations) in bfloat16
        # with f32 accumulation to halve DMA bytes; kept f32 to match PyTorch.

        blocks.append({
            "w": w_k, "w_torch": w_torch,
            "b": bias.reshape(1, cout),
            "scale": scale.reshape(1, cout),
            "shift": shift.reshape(1, cout),
            "kernel_size": (kh, kw),
            "pool_size": (ph, pw),
            "avgpool": avg,
        })
        cin = cout

    return {"spec_bn": spec_bn, "blocks": blocks}


if __name__ == "__main__":
    # Small config consistent with Frontend_mine: freq pooled down to exactly 1.
    front_end_dict = {
        "list_out_channels": [8, 16],
        "list_kernel_sizes": [(3, 3), (3, 3)],
        "list_pool_sizes": [(4, 1), (2, 2)],
        "list_avgpool_flags": [False, True],
    }
    key = jax.random.PRNGKey(0)
    kx, kp = jax.random.split(key)
    # PyTorch-style input: NCHW = (batch=2, channels=1, freq=8, time=64)
    x = jax.random.uniform(kx, (2, 1, 8, 64), dtype=jnp.float32)
    params = init_params(kp, front_end_dict, in_channels=1)

    # max_tile_w=16 forces multiple time tiles even at toy size, exercising the
    # halo / edge-padding logic and the pipelined grid.
    out = jax.jit(lambda a: frontend_forward(a, params, max_tile_w=16))(x)
    out = jax.block_until_ready(out)
    assert out.shape == (2, 16, 32), out.shape       # (N, C_last, T)
    assert bool(jnp.all(jnp.isfinite(out)))

    ref = jax.jit(lambda a: frontend_reference(a, params))(x)
    ref = jax.block_until_ready(ref)
    err = float(jnp.max(jnp.abs(out - ref)))
    assert err < 1e-3, f"max abs error vs reference: {err}"

    print("KERNEL_OK")
</pallas_src>

<mosaic_0001>
module attributes {stable_mosaic.version = 11 : i64} {
  func.func @block_choi_kernel(%arg0: i32, %arg1: memref<8x16x2x1xf32, #tpu.memory_space<vmem>>, %arg2: memref<8x1x2x1xf32, #tpu.memory_space<vmem>>, %arg3: memref<8x1x2x1xf32, #tpu.memory_space<vmem>>, %arg4: memref<1x1xf32, #tpu.memory_space<vmem>>, %arg5: memref<1x1xf32, #tpu.memory_space<vmem>>, %arg6: memref<9x1x8xf32, #tpu.memory_space<vmem>>, %arg7: memref<1x8xf32, #tpu.memory_space<vmem>>, %arg8: memref<1x8xf32, #tpu.memory_space<vmem>>, %arg9: memref<1x8xf32, #tpu.memory_space<vmem>>, %arg10: memref<2x16x2x8xf32, #tpu.memory_space<vmem>>) attributes {dimension_semantics = [#tpu.dimension_semantics<parallel>], iteration_bounds = array<i64: 4>, scalar_prefetch = 0 : i64, scratch_operands = 0 : i64, tpu.core_type = #tpu.core_type<tc>, window_params = [{transform_indices = @transform_0, window_bounds = array<i64: 8, 16, 2, 1>}, {transform_indices = @transform_1, window_bounds = array<i64: 8, 1, 2, 1>}, {transform_indices = @transform_2, window_bounds = array<i64: 8, 1, 2, 1>}, {pipeline_mode = #tpu.pipeline_mode<synchronous>, transform_indices = @transform_3, window_bounds = array<i64: 1, 1>}, {pipeline_mode = #tpu.pipeline_mode<synchronous>, transform_indices = @transform_4, window_bounds = array<i64: 1, 1>}, {pipeline_mode = #tpu.pipeline_mode<synchronous>, transform_indices = @transform_5, window_bounds = array<i64: 9, 1, 8>}, {pipeline_mode = #tpu.pipeline_mode<synchronous>, transform_indices = @transform_6, window_bounds = array<i64: 1, 8>}, {pipeline_mode = #tpu.pipeline_mode<synchronous>, transform_indices = @transform_7, window_bounds = array<i64: 1, 8>}, {pipeline_mode = #tpu.pipeline_mode<synchronous>, transform_indices = @transform_8, window_bounds = array<i64: 1, 8>}, {transform_indices = @transform_9, window_bounds = array<i64: 2, 16, 2, 8>}]} {
    %c16_i32 = arith.constant 16 : i32
    %0 = arith.muli %arg0, %c16_i32 : i32
    %c1_i32 = arith.constant 1 : i32
    %1 = arith.subi %0, %c1_i32 : i32
    %c0_i32 = arith.constant 0 : i32
    %2 = arith.addi %1, %c0_i32 : i32
    %c0_i32_0 = arith.constant 0 : i32
    %3 = arith.cmpi sge, %2, %c0_i32_0 : i32
    %4 = arith.extui %3 : i1 to i32
    %5 = arith.sitofp %4 : i32 to f32
    %c0 = arith.constant 0 : index
    %c0_1 = arith.constant 0 : index
    %c0_2 = arith.constant 0 : index
    %c0_3 = arith.constant 0 : index
    %6 = vector.load %arg2[%c0, %c0_1, %c0_2, %c0_3] : memref<8x1x2x1xf32, #tpu.memory_space<vmem>>, vector<8x1x2x1xf32>
    %c0_4 = arith.constant 0 : index
    %c0_5 = arith.constant 0 : index
    %7 = vector.load %arg4[%c0_4, %c0_5] : memref<1x1xf32, #tpu.memory_space<vmem>>, vector<1x1xf32>
    %8 = vector.shape_cast %7 : vector<1x1xf32> to vector<1x1x1x1xf32>
    %9 = vector.broadcast %8 : vector<1x1x1x1xf32> to vector<8x1x2x1xf32>
    %10 = arith.mulf %6, %9 : vector<8x1x2x1xf32>
    %c0_6 = arith.constant 0 : index
    %c0_7 = arith.constant 0 : index
    %11 = vector.load %arg5[%c0_6, %c0_7] : memref<1x1xf32, #tpu.memory_space<vmem>>, vector<1x1xf32>
    %12 = vector.shape_cast %11 : vector<1x1xf32> to vector<1x1x1x1xf32>
    %13 = vector.broadcast %12 : vector<1x1x1x1xf32> to vector<8x1x2x1xf32>
    %14 = arith.addf %10, %13 : vector<8x1x2x1xf32>
    %15 = vector.broadcast %5 : f32 to vector<8x1x2x1xf32>
    %16 = arith.mulf %14, %15 : vector<8x1x2x1xf32>
    %c0_8 = arith.constant 0 : index
    %c0_9 = arith.constant 0 : index
    %c0_10 = arith.constant 0 : index
    %c0_11 = arith.constant 0 : index
    %17 = vector.load %arg1[%c0_8, %c0_9, %c0_10, %c0_11] : memref<8x16x2x1xf32, #tpu.memory_space<vmem>>, vector<8x16x2x1xf32>
    %c0_12 = arith.constant 0 : index
    %c0_13 = arith.constant 0 : index
    %18 = vector.load %arg4[%c0_12, %c0_13] : memref<1x1xf32, #tpu.memory_space<vmem>>, vector<1x1xf32>
    %19 = vector.shape_cast %18 : vector<1x1xf32> to vector<1x1x1x1xf32>
    %20 = vector.broadcast %19 : vector<1x1x1x1xf32> to vector<8x16x2x1xf32>
    %21 = arith.mulf %17, %20 : vector<8x16x2x1xf32>
    %c0_14 = arith.constant 0 : index
    %c0_15 = arith.constant 0 : index
    %22 = vector.load %arg5[%c0_14, %c0_15] : memref<1x1xf32, #tpu.memory_space<vmem>>, vector<1x1xf32>
    %23 = vector.shape_cast %22 : vector<1x1xf32> to vector<1x1x1x1xf32>
    %24 = vector.broadcast %23 : vector<1x1x1x1xf32> to vector<8x16x2x1xf32>
    %25 = arith.addf %21, %24 : vector<8x16x2x1xf32>
    %c16_i32_16 = arith.constant 16 : i32
    %26 = arith.muli %arg0, %c16_i32_16 : i32
    %c16_i32_17 = arith.constant 16 : i32
    %27 = arith.addi %26, %c16_i32_17 : i32
    %c0_i32_18 = arith.constant 0 : i32
    %28 = arith.addi %27, %c0_i32_18 : i32
    %c64_i32 = arith.constant 64 : i32
    %29 = arith.cmpi slt, %28, %c64_i32 : i32
    %30 = arith.extui %29 : i1 to i32
    %31 = arith.sitofp %30 : i32 to f32
    %c0_19 = arith.constant 0 : index
    %c0_20 = arith.constant 0 : index
    %c0_21 = arith.constant 0 : index
    %c0_22 = arith.constant 0 : index
    %32 = vector.load %arg3[%c0_19, %c0_20, %c0_21, %c0_22] : memref<8x1x2x1xf32, #tpu.memory_space<vmem>>, vector<8x1x2x1xf32>
    %c0_23 = arith.constant 0 : index
    %c0_24 = arith.constant 0 : index
    %33 = vector.load %arg4[%c0_23, %c0_24] : memref<1x1xf32, #tpu.memory_space<vmem>>, vector<1x1xf32>
    %34 = vector.shape_cast %33 : vector<1x1xf32> to vector<1x1x1x1xf32>
    %35 = vector.broadcast %34 : vector<1x1x1x1xf32> to vector<8x1x2x1xf32>
    %36 = arith.mulf %32, %35 : vector<8x1x2x1xf32>
    %c0_25 = arith.constant 0 : index
    %c0_26 = arith.constant 0 : index
    %37 = vector.load %arg5[%c0_25, %c0_26] : memref<1x1xf32, #tpu.memory_space<vmem>>, vector<1x1xf32>
    %38 = vector.shape_cast %37 : vector<1x1xf32> to vector<1x1x1x1xf32>
    %39 = vector.broadcast %38 : vector<1x1x1x1xf32> to vector<8x1x2x1xf32>
    %40 = arith.addf %36, %39 : vector<8x1x2x1xf32>
    %41 = vector.broadcast %31 : f32 to vector<8x1x2x1xf32>
    %42 = arith.mulf %40, %41 : vector<8x1x2x1xf32>
    %43 = tpu.concatenate %16, %25, %42 in 1 : vector<8x1x2x1xf32>, vector<8x16x2x1xf32>, vector<8x1x2x1xf32> -> vector<8x18x2x1xf32>
    %cst = arith.constant 0.000000e+00 : f32
    %44 = vector.broadcast %cst : f32 to vector<1x18x2x1xf32>
    %cst_27 = arith.constant 0.000000e+00 : f32
    %45 = vector.broadcast %cst_27 : f32 to vector<1x18x2x1xf32>
    %46 = tpu.concatenate %44, %43, %45 in 0 : vector<1x18x2x1xf32>, vector<8x18x2x1xf32>, vector<1x18x2x1xf32> -> vector<10x18x2x1xf32>
    %cst_28 = arith.constant 0.000000e+00 : f32
    %47 = vector.broadcast %cst_28 : f32 to vector<8x16x2x8xf32>
    %48 = vector.extract_strided_slice %46 {offsets = [0, 0, 0, 0], sizes = [8, 16, 2, 1], strides = [1, 1, 1, 1]} : vector<10x18x2x1xf32> to vector<8x16x2x1xf32>
    %c0_29 = arith.constant 0 : index
    %c0_30 = arith.constant 0 : index
    %c0_31 = arith.constant 0 : index
    %49 = vector.load %arg6[%c0_29, %c0_30, %c0_31] : memref<9x1x8xf32, #tpu.memory_space<vmem>>, vector<1x1x8xf32>
    %50 = vector.shape_cast %49 : vector<1x1x8xf32> to vector<1x8xf32>
    %51 = vector.shape_cast %50 : vector<1x8xf32> to vector<1x1x1x8xf32>
    %52 = vector.broadcast %48 : vector<8x16x2x1xf32> to vector<8x16x2x8xf32>
    %53 = vector.broadcast %51 : vector<1x1x1x8xf32> to vector<8x16x2x8xf32>
    %54 = arith.mulf %52, %53 : vector<8x16x2x8xf32>
    %55 = arith.addf %47, %54 : vector<8x16x2x8xf32>
    %56 = vector.extract_strided_slice %46 {offsets = [0, 1, 0, 0], sizes = [8, 16, 2, 1], strides = [1, 1, 1, 1]} : vector<10x18x2x1xf32> to vector<8x16x2x1xf32>
    %c1 = arith.constant 1 : index
    %c0_32 = arith.constant 0 : index
    %c0_33 = arith.constant 0 : index
    %57 = vector.load %arg6[%c1, %c0_32, %c0_33] : memref<9x1x8xf32, #tpu.memory_space<vmem>>, vector<1x1x8xf32>
    %58 = vector.shape_cast %57 : vector<1x1x8xf32> to vector<1x8xf32>
    %59 = vector.shape_cast %58 : vector<1x8xf32> to vector<1x1x1x8xf32>
    %60 = vector.broadcast %56 : vector<8x16x2x1xf32> to vector<8x16x2x8xf32>
    %61 = vector.broadcast %59 : vector<1x1x1x8xf32> to vector<8x16x2x8xf32>
    %62 = arith.mulf %60, %61 : vector<8x16x2x8xf32>
    %63 = arith.addf %55, %62 : vector<8x16x2x8xf32>
    %64 = vector.extract_strided_slice %46 {offsets = [0, 2, 0, 0], sizes = [8, 16, 2, 1], strides = [1, 1, 1, 1]} : vector<10x18x2x1xf32> to vector<8x16x2x1xf32>
    %c2 = arith.constant 2 : index
    %c0_34 = arith.constant 0 : index
    %c0_35 = arith.constant 0 : index
    %65 = vector.load %arg6[%c2, %c0_34, %c0_35] : memref<9x1x8xf32, #tpu.memory_space<vmem>>, vector<1x1x8xf32>
    %66 = vector.shape_cast %65 : vector<1x1x8xf32> to vector<1x8xf32>
    %67 = vector.shape_cast %66 : vector<1x8xf32> to vector<1x1x1x8xf32>
    %68 = vector.broadcast %64 : vector<8x16x2x1xf32> to vector<8x16x2x8xf32>
    %69 = vector.broadcast %67 : vector<1x1x1x8xf32> to vector<8x16x2x8xf32>
    %70 = arith.mulf %68, %69 : vector<8x16x2x8xf32>
    %71 = arith.addf %63, %70 : vector<8x16x2x8xf32>
    %72 = vector.extract_strided_slice %46 {offsets = [1, 0, 0, 0], sizes = [8, 16, 2, 1], strides = [1, 1, 1, 1]} : vector<10x18x2x1xf32> to vector<8x16x2x1xf32>
    %c3 = arith.constant 3 : index
    %c0_36 = arith.constant 0 : index
    %c0_37 = arith.constant 0 : index
    %73 = vector.load %arg6[%c3, %c0_36, %c0_37] : memref<9x1x8xf32, #tpu.memory_space<vmem>>, vector<1x1x8xf32>
    %74 = vector.shape_cast %73 : vector<1x1x8xf32> to vector<1x8xf32>
    %75 = vector.shape_cast %74 : vector<1x8xf32> to vector<1x1x1x8xf32>
    %76 = vector.broadcast %72 : vector<8x16x2x1xf32> to vector<8x16x2x8xf32>
    %77 = vector.broadcast %75 : vector<1x1x1x8xf32> to vector<8x16x2x8xf32>
    %78 = arith.mulf %76, %77 : vector<8x16x2x8xf32>
    %79 = arith.addf %71, %78 : vector<8x16x2x8xf32>
    %80 = vector.extract_strided_slice %46 {offsets = [1, 1, 0, 0], sizes = [8, 16, 2, 1], strides = [1, 1, 1, 1]} : vector<10x18x2x1xf32> to vector<8x16x2x1xf32>
    %c4 = arith.constant 4 : index
    %c0_38 = arith.constant 0 : index
    %c0_39 = arith.constant 0 : index
    %81 = vector.load %arg6[%c4, %c0_38, %c0_39] : memref<9x1x8xf32, #tpu.memory_space<vmem>>, vector<1x1x8xf32>
    %82 = vector.shape_cast %81 : vector<1x1x8xf32> to vector<1x8xf32>
    %83 = vector.shape_cast %82 : vector<1x8xf32> to vector<1x1x1x8xf32>
    %84 = vector.broadcast %80 : vector<8x16x2x1xf32> to vector<8x16x2x8xf32>
    %85 = vector.broadcast %83 : vector<1x1x1x8xf32> to vector<8x16x2x8xf32>
    %86 = arith.mulf %84, %85 : vector<8x16x2x8xf32>
    %87 = arith.addf %79, %86 : vector<8x16x2x8xf32>
    %88 = vector.extract_strided_slice %46 {offsets = [1, 2, 0, 0], sizes = [8, 16, 2, 1], strides = [1, 1, 1, 1]} : vector<10x18x2x1xf32> to vector<8x16x2x1xf32>
    %c5 = arith.constant 5 : index
    %c0_40 = arith.constant 0 : index
    %c0_41 = arith.constant 0 : index
    %89 = vector.load %arg6[%c5, %c0_40, %c0_41] : memref<9x1x8xf32, #tpu.memory_space<vmem>>, vector<1x1x8xf32>
    %90 = vector.shape_cast %89 : vector<1x1x8xf32> to vector<1x8xf32>
    %91 = vector.shape_cast %90 : vector<1x8xf32> to vector<1x1x1x8xf32>
    %92 = vector.broadcast %88 : vector<8x16x2x1xf32> to vector<8x16x2x8xf32>
    %93 = vector.broadcast %91 : vector<1x1x1x8xf32> to vector<8x16x2x8xf32>
    %94 = arith.mulf %92, %93 : vector<8x16x2x8xf32>
    %95 = arith.addf %87, %94 : vector<8x16x2x8xf32>
    %96 = vector.extract_strided_slice %46 {offsets = [2, 0, 0, 0], sizes = [8, 16, 2, 1], strides = [1, 1, 1, 1]} : vector<10x18x2x1xf32> to vector<8x16x2x1xf32>
    %c6 = arith.constant 6 : index
    %c0_42 = arith.constant 0 : index
    %c0_43 = arith.constant 0 : index
    %97 = vector.load %arg6[%c6, %c0_42, %c0_43] : memref<9x1x8xf32, #tpu.memory_space<vmem>>, vector<1x1x8xf32>
    %98 = vector.shape_cast %97 : vector<1x1x8xf32> to vector<1x8xf32>
    %99 = vector.shape_cast %98 : vector<1x8xf32> to vector<1x1x1x8xf32>
    %100 = vector.broadcast %96 : vector<8x16x2x1xf32> to vector<8x16x2x8xf32>
    %101 = vector.broadcast %99 : vector<1x1x1x8xf32> to vector<8x16x2x8xf32>
    %102 = arith.mulf %100, %101 : vector<8x16x2x8xf32>
    %103 = arith.addf %95, %102 : vector<8x16x2x8xf32>
    %104 = vector.extract_strided_slice %46 {offsets = [2, 1, 0, 0], sizes = [8, 16, 2, 1], strides = [1, 1, 1, 1]} : vector<10x18x2x1xf32> to vector<8x16x2x1xf32>
    %c7 = arith.constant 7 : index
    %c0_44 = arith.constant 0 : index
    %c0_45 = arith.constant 0 : index
    %105 = vector.load %arg6[%c7, %c0_44, %c0_45] : memref<9x1x8xf32, #tpu.memory_space<vmem>>, vector<1x1x8xf32>
    %106 = vector.shape_cast %105 : vector<1x1x8xf32> to vector<1x8xf32>
    %107 = vector.shape_cast %106 : vector<1x8xf32> to vector<1x1x1x8xf32>
    %108 = vector.broadcast %104 : vector<8x16x2x1xf32> to vector<8x16x2x8xf32>
    %109 = vector.broadcast %107 : vector<1x1x1x8xf32> to vector<8x16x2x8xf32>
    %110 = arith.mulf %108, %109 : vector<8x16x2x8xf32>
    %111 = arith.addf %103, %110 : vector<8x16x2x8xf32>
    %112 = vector.extract_strided_slice %46 {offsets = [2, 2, 0, 0], sizes = [8, 16, 2, 1], strides = [1, 1, 1, 1]} : vector<10x18x2x1xf32> to vector<8x16x2x1xf32>
    %c8 = arith.constant 8 : index
    %c0_46 = arith.constant 0 : index
    %c0_47 = arith.constant 0 : index
    %113 = vector.load %arg6[%c8, %c0_46, %c0_47] : memref<9x1x8xf32, #tpu.memory_space<vmem>>, vector<1x1x8xf32>
    %114 = vector.shape_cast %113 : vector<1x1x8xf32> to vector<1x8xf32>
    %115 = vector.shape_cast %114 : vector<1x8xf32> to vector<1x1x1x8xf32>
    %116 = vector.broadcast %112 : vector<8x16x2x1xf32> to vector<8x16x2x8xf32>
    %117 = vector.broadcast %115 : vector<1x1x1x8xf32> to vector<8x16x2x8xf32>
    %118 = arith.mulf %116, %117 : vector<8x16x2x8xf32>
    %119 = arith.addf %111, %118 : vector<8x16x2x8xf32>
    %c0_48 = arith.constant 0 : index
    %c0_49 = arith.constant 0 : index
    %120 = vector.load %arg7[%c0_48, %c0_49] : memref<1x8xf32, #tpu.memory_space<vmem>>, vector<1x8xf32>
    %121 = vector.shape_cast %120 : vector<1x8xf32> to vector<8xf32>
    %122 = vector.shape_cast %121 : vector<8xf32> to vector<1x1x1x8xf32>
    %123 = vector.broadcast %122 : vector<1x1x1x8xf32> to vector<8x16x2x8xf32>
    %124 = arith.addf %119, %123 : vector<8x16x2x8xf32>
    %125 = vector.shape_cast %124 : vector<8x16x2x8xf32> to vector<2x4x16x2x8xf32>
    %126 = vector.extract_strided_slice %125 {offsets = [0, 0, 0, 0, 0], sizes = [2, 1, 16, 2, 8], strides = [1, 1, 1, 1, 1]} : vector<2x4x16x2x8xf32> to vector<2x1x16x2x8xf32>
    %127 = vector.shape_cast %126 : vector<2x1x16x2x8xf32> to vector<2x16x2x8xf32>
    %128 = vector.extract_strided_slice %125 {offsets = [0, 1, 0, 0, 0], sizes = [2, 1, 16, 2, 8], strides = [1, 1, 1, 1, 1]} : vector<2x4x16x2x8xf32> to vector<2x1x16x2x8xf32>
    %129 = vector.shape_cast %128 : vector<2x1x16x2x8xf32> to vector<2x16x2x8xf32>
    %130 = arith.maximumf %127, %129 : vector<2x16x2x8xf32>
    %131 = vector.extract_strided_slice %125 {offsets = [0, 2, 0, 0, 0], sizes = [2, 1, 16, 2, 8], strides = [1, 1, 1, 1, 1]} : vector<2x4x16x2x8xf32> to vector<2x1x16x2x8xf32>
    %132 = vector.shape_cast %131 : vector<2x1x16x2x8xf32> to vector<2x16x2x8xf32>
    %133 = arith.maximumf %130, %132 : vector<2x16x2x8xf32>
    %134 = vector.extract_strided_slice %125 {offsets = [0, 3, 0, 0, 0], sizes = [2, 1, 16, 2, 8], strides = [1, 1, 1, 1, 1]} : vector<2x4x16x2x8xf32> to vector<2x1x16x2x8xf32>
    %135 = vector.shape_cast %134 : vector<2x1x16x2x8xf32> to vector<2x16x2x8xf32>
    %136 = arith.maximumf %133, %135 : vector<2x16x2x8xf32>
    %137 = vector.shape_cast %136 : vector<2x16x2x8xf32> to vector<2x16x1x2x8xf32>
    %138 = vector.shape_cast %137 : vector<2x16x1x2x8xf32> to vector<2x16x2x8xf32>
    %c0_50 = arith.constant 0 : index
    %c0_51 = arith.constant 0 : index
    %139 = vector.load %arg8[%c0_50, %c0_51] : memref<1x8xf32, #tpu.memory_space<vmem>>, vector<1x8xf32>
    %140 = vector.shape_cast %139 : vector<1x8xf32> to vector<8xf32>
    %141 = vector.shape_cast %140 : vector<8xf32> to vector<1x1x1x8xf32>
    %142 = vector.broadcast %141 : vector<1x1x1x8xf32> to vector<2x16x2x8xf32>
    %143 = arith.mulf %138, %142 : vector<2x16x2x8xf32>
    %c0_52 = arith.constant 0 : index
    %c0_53 = arith.constant 0 : index
    %144 = vector.load %arg9[%c0_52, %c0_53] : memref<1x8xf32, #tpu.memory_space<vmem>>, vector<1x8xf32>
    %145 = vector.shape_cast %144 : vector<1x8xf32> to vector<8xf32>
    %146 = vector.shape_cast %145 : vector<8xf32> to vector<1x1x1x8xf32>
    %147 = vector.broadcast %146 : vector<1x1x1x8xf32> to vector<2x16x2x8xf32>
    %148 = arith.addf %143, %147 : vector<2x16x2x8xf32>
    %cst_54 = arith.constant 0.000000e+00 : f32
    %149 = vector.broadcast %cst_54 : f32 to vector<2x16x2x8xf32>
    %150 = arith.cmpf ogt, %148, %149 : vector<2x16x2x8xf32>
    %cst_55 = arith.constant 0.000000e+00 : f32
    %151 = vector.broadcast %cst_55 : f32 to vector<2x16x2x8xf32>
    %152 = arith.minimumf %148, %151 : vector<2x16x2x8xf32>
    %153 = math.exp %152 : vector<2x16x2x8xf32>
    %cst_56 = arith.constant 1.000000e+00 : f32
    %154 = vector.broadcast %cst_56 : f32 to vector<2x16x2x8xf32>
    %155 = arith.subf %153, %154 : vector<2x16x2x8xf32>
    %156 = arith.select %150, %148, %155 : vector<2x16x2x8xi1>, vector<2x16x2x8xf32>
    %c0_57 = arith.constant 0 : index
    %c0_58 = arith.constant 0 : index
    %c0_59 = arith.constant 0 : index
    %c0_60 = arith.constant 0 : index
    %157 = vector.load %arg10[%c0_57, %c0_58, %c0_59, %c0_60] : memref<2x16x2x8xf32, #tpu.memory_space<vmem>>, vector<2x16x2x8xf32>
    tpu.vector_store %arg10[%c0_57, %c0_58, %c0_59, %c0_60], %156 {strides = array<i32>} : memref<2x16x2x8xf32, #tpu.memory_space<vmem>>, vector<2x16x2x8xf32>,
    return
  }
  func.func @transform_0(%arg0: i32) -> (i32, i32, i32, i32) {
    %c0_i32 = arith.constant 0 : i32
    %c0_i32_0 = arith.constant 0 : i32
    %c0_i32_1 = arith.constant 0 : i32
    %c0_i32_2 = arith.constant 0 : i32
    return %c0_i32, %arg0, %c0_i32_0, %c0_i32_1 : i32, i32, i32, i32
  }
  func.func @transform_1(%arg0: i32) -> (i32, i32, i32, i32) {
    %c16_i32 = arith.constant 16 : i32
    %0 = arith.muli %arg0, %c16_i32 : i32
    %c1_i32 = arith.constant 1 : i32
    %1 = arith.subi %0, %c1_i32 : i32
    %c0_i32 = arith.constant 0 : i32
    %2 = arith.addi %1, %c0_i32 : i32
    %c0_i32_0 = arith.constant 0 : i32
    %3 = arith.maxsi %2, %c0_i32_0 : i32
    %c0_i32_1 = arith.constant 0 : i32
    %c0_i32_2 = arith.constant 0 : i32
    %c0_i32_3 = arith.constant 0 : i32
    %c0_i32_4 = arith.constant 0 : i32
    return %c0_i32_1, %3, %c0_i32_2, %c0_i32_3 : i32, i32, i32, i32
  }
  func.func @transform_2(%arg0: i32) -> (i32, i32, i32, i32) {
    %c16_i32 = arith.constant 16 : i32
    %0 = arith.muli %arg0, %c16_i32 : i32
    %c16_i32_0 = arith.constant 16 : i32
    %1 = arith.addi %0, %c16_i32_0 : i32
    %c0_i32 = arith.constant 0 : i32
    %2 = arith.addi %1, %c0_i32 : i32
    %c63_i32 = arith.constant 63 : i32
    %3 = arith.minsi %2, %c63_i32 : i32
    %c0_i32_1 = arith.constant 0 : i32
    %c0_i32_2 = arith.constant 0 : i32
    %c0_i32_3 = arith.constant 0 : i32
    %c0_i32_4 = arith.constant 0 : i32
    return %c0_i32_1, %3, %c0_i32_2, %c0_i32_3 : i32, i32, i32, i32
  }
  func.func @transform_3(%arg0: i32) -> (i32, i32) {
    %c0_i32 = arith.constant 0 : i32
    %c0_i32_0 = arith.constant 0 : i32
    %c0_i32_1 = arith.constant 0 : i32
    return %c0_i32, %c0_i32_0 : i32, i32
  }
  func.func @transform_4(%arg0: i32) -> (i32, i32) {
    %c0_i32 = arith.constant 0 : i32
    %c0_i32_0 = arith.constant 0 : i32
    %c0_i32_1 = arith.constant 0 : i32
    return %c0_i32, %c0_i32_0 : i32, i32
  }
  func.func @transform_5(%arg0: i32) -> (i32, i32, i32) {
    %c0_i32 = arith.constant 0 : i32
    %c0_i32_0 = arith.constant 0 : i32
    %c0_i32_1 = arith.constant 0 : i32
    %c0_i32_2 = arith.constant 0 : i32
    return %c0_i32, %c0_i32_0, %c0_i32_1 : i32, i32, i32
  }
  func.func @transform_6(%arg0: i32) -> (i32, i32) {
    %c0_i32 = arith.constant 0 : i32
    %c0_i32_0 = arith.constant 0 : i32
    %c0_i32_1 = arith.constant 0 : i32
    return %c0_i32, %c0_i32_0 : i32, i32
  }
  func.func @transform_7(%arg0: i32) -> (i32, i32) {
    %c0_i32 = arith.constant 0 : i32
    %c0_i32_0 = arith.constant 0 : i32
    %c0_i32_1 = arith.constant 0 : i32
    return %c0_i32, %c0_i32_0 : i32, i32
  }
  func.func @transform_8(%arg0: i32) -> (i32, i32) {
    %c0_i32 = arith.constant 0 : i32
    %c0_i32_0 = arith.constant 0 : i32
    %c0_i32_1 = arith.constant 0 : i32
    return %c0_i32, %c0_i32_0 : i32, i32
  }
  func.func @transform_9(%arg0: i32) -> (i32, i32, i32, i32) {
    %c0_i32 = arith.constant 0 : i32
    %c0_i32_0 = arith.constant 0 : i32
    %c0_i32_1 = arith.constant 0 : i32
    %c0_i32_2 = arith.constant 0 : i32
    return %c0_i32, %arg0, %c0_i32_0, %c0_i32_1 : i32, i32, i32, i32
  }
}

module attributes {stable_mosaic.version = 11 : i64} {
  func.func @block_choi_kernel(%arg0: i32, %arg1: memref<2x32x2x8xf32, #tpu.memory_space<vmem>>, %arg2: memref<2x1x2x8xf32, #tpu.memory_space<vmem>>, %arg3: memref<2x1x2x8xf32, #tpu.memory_space<vmem>>, %arg4: memref<1x1xf32, #tpu.memory_space<vmem>>, %arg5: memref<1x1xf32, #tpu.memory_space<vmem>>, %arg6: memref<72x16xf32, #tpu.memory_space<vmem>>, %arg7: memref<1x16xf32, #tpu.memory_space<vmem>>, %arg8: memref<1x16xf32, #tpu.memory_space<vmem>>, %arg9: memref<1x16xf32, #tpu.memory_space<vmem>>, %arg10: memref<1x16x2x16xf32, #tpu.memory_space<vmem>>) attributes {dimension_semantics = [#tpu.dimension_semantics<parallel>], iteration_bounds = array<i64: 2>, scalar_prefetch = 0 : i64, scratch_operands = 0 : i64, tpu.core_type = #tpu.core_type<tc>, window_params = [{transform_indices = @transform_0, window_bounds = array<i64: 2, 32, 2, 8>}, {transform_indices = @transform_1, window_bounds = array<i64: 2, 1, 2, 8>}, {transform_indices = @transform_2, window_bounds = array<i64: 2, 1, 2, 8>}, {pipeline_mode = #tpu.pipeline_mode<synchronous>, transform_indices = @transform_3, window_bounds = array<i64: 1, 1>}, {pipeline_mode = #tpu.pipeline_mode<synchronous>, transform_indices = @transform_4, window_bounds = array<i64: 1, 1>}, {pipeline_mode = #tpu.pipeline_mode<synchronous>, transform_indices = @transform_5, window_bounds = array<i64: 72, 16>}, {pipeline_mode = #tpu.pipeline_mode<synchronous>, transform_indices = @transform_6, window_bounds = array<i64: 1, 16>}, {pipeline_mode = #tpu.pipeline_mode<synchronous>, transform_indices = @transform_7, window_bounds = array<i64: 1, 16>}, {pipeline_mode = #tpu.pipeline_mode<synchronous>, transform_indices = @transform_8, window_bounds = array<i64: 1, 16>}, {transform_indices = @transform_9, window_bounds = array<i64: 1, 16, 2, 16>}]} {
    %c32_i32 = arith.constant 32 : i32
    %0 = arith.muli %arg0, %c32_i32 : i32
    %c1_i32 = arith.constant 1 : i32
    %1 = arith.subi %0, %c1_i32 : i32
    %c0_i32 = arith.constant 0 : i32
    %2 = arith.addi %1, %c0_i32 : i32
    %c0_i32_0 = arith.constant 0 : i32
    %3 = arith.cmpi sge, %2, %c0_i32_0 : i32
    %4 = arith.extui %3 : i1 to i32
    %5 = arith.sitofp %4 : i32 to f32
    %c0 = arith.constant 0 : index
    %c0_1 = arith.constant 0 : index
    %c0_2 = arith.constant 0 : index
    %c0_3 = arith.constant 0 : index
    %6 = vector.load %arg2[%c0, %c0_1, %c0_2, %c0_3] : memref<2x1x2x8xf32, #tpu.memory_space<vmem>>, vector<2x1x2x8xf32>
    %c0_4 = arith.constant 0 : index
    %c0_5 = arith.constant 0 : index
    %7 = vector.load %arg4[%c0_4, %c0_5] : memref<1x1xf32, #tpu.memory_space<vmem>>, vector<1x1xf32>
    %8 = vector.shape_cast %7 : vector<1x1xf32> to vector<1x1x1x1xf32>
    %9 = vector.broadcast %8 : vector<1x1x1x1xf32> to vector<2x1x2x8xf32>
    %10 = arith.mulf %6, %9 : vector<2x1x2x8xf32>
    %c0_6 = arith.constant 0 : index
    %c0_7 = arith.constant 0 : index
    %11 = vector.load %arg5[%c0_6, %c0_7] : memref<1x1xf32, #tpu.memory_space<vmem>>, vector<1x1xf32>
    %12 = vector.shape_cast %11 : vector<1x1xf32> to vector<1x1x1x1xf32>
    %13 = vector.broadcast %12 : vector<1x1x1x1xf32> to vector<2x1x2x8xf32>
    %14 = arith.addf %10, %13 : vector<2x1x2x8xf32>
    %15 = vector.broadcast %5 : f32 to vector<2x1x2x8xf32>
    %16 = arith.mulf %14, %15 : vector<2x1x2x8xf32>
    %c0_8 = arith.constant 0 : index
    %c0_9 = arith.constant 0 : index
    %c0_10 = arith.constant 0 : index
    %c0_11 = arith.constant 0 : index
    %17 = vector.load %arg1[%c0_8, %c0_9, %c0_10, %c0_11] : memref<2x32x2x8xf32, #tpu.memory_space<vmem>>, vector<2x32x2x8xf32>
    %c0_12 = arith.constant 0 : index
    %c0_13 = arith.constant 0 : index
    %18 = vector.load %arg4[%c0_12, %c0_13] : memref<1x1xf32, #tpu.memory_space<vmem>>, vector<1x1xf32>
    %19 = vector.shape_cast %18 : vector<1x1xf32> to vector<1x1x1x1xf32>
    %20 = vector.broadcast %19 : vector<1x1x1x1xf32> to vector<2x32x2x8xf32>
    %21 = arith.mulf %17, %20 : vector<2x32x2x8xf32>
    %c0_14 = arith.constant 0 : index
    %c0_15 = arith.constant 0 : index
    %22 = vector.load %arg5[%c0_14, %c0_15] : memref<1x1xf32, #tpu.memory_space<vmem>>, vector<1x1xf32>
    %23 = vector.shape_cast %22 : vector<1x1xf32> to vector<1x1x1x1xf32>
    %24 = vector.broadcast %23 : vector<1x1x1x1xf32> to vector<2x32x2x8xf32>
    %25 = arith.addf %21, %24 : vector<2x32x2x8xf32>
    %c32_i32_16 = arith.constant 32 : i32
    %26 = arith.muli %arg0, %c32_i32_16 : i32
    %c32_i32_17 = arith.constant 32 : i32
    %27 = arith.addi %26, %c32_i32_17 : i32
    %c0_i32_18 = arith.constant 0 : i32
    %28 = arith.addi %27, %c0_i32_18 : i32
    %c64_i32 = arith.constant 64 : i32
    %29 = arith.cmpi slt, %28, %c64_i32 : i32
    %30 = arith.extui %29 : i1 to i32
    %31 = arith.sitofp %30 : i32 to f32
    %c0_19 = arith.constant 0 : index
    %c0_20 = arith.constant 0 : index
    %c0_21 = arith.constant 0 : index
    %c0_22 = arith.constant 0 : index
    %32 = vector.load %arg3[%c0_19, %c0_20, %c0_21, %c0_22] : memref<2x1x2x8xf32, #tpu.memory_space<vmem>>, vector<2x1x2x8xf32>
    %c0_23 = arith.constant 0 : index
    %c0_24 = arith.constant 0 : index
    %33 = vector.load %arg4[%c0_23, %c0_24] : memref<1x1xf32, #tpu.memory_space<vmem>>, vector<1x1xf32>
    %34 = vector.shape_cast %33 : vector<1x1xf32> to vector<1x1x1x1xf32>
    %35 = vector.broadcast %34 : vector<1x1x1x1xf32> to vector<2x1x2x8xf32>
    %36 = arith.mulf %32, %35 : vector<2x1x2x8xf32>
    %c0_25 = arith.constant 0 : index
    %c0_26 = arith.constant 0 : index
    %37 = vector.load %arg5[%c0_25, %c0_26] : memref<1x1xf32, #tpu.memory_space<vmem>>, vector<1x1xf32>
    %38 = vector.shape_cast %37 : vector<1x1xf32> to vector<1x1x1x1xf32>
    %39 = vector.broadcast %38 : vector<1x1x1x1xf32> to vector<2x1x2x8xf32>
    %40 = arith.addf %36, %39 : vector<2x1x2x8xf32>
    %41 = vector.broadcast %31 : f32 to vector<2x1x2x8xf32>
    %42 = arith.mulf %40, %41 : vector<2x1x2x8xf32>
    %43 = tpu.concatenate %16, %25, %42 in 1 : vector<2x1x2x8xf32>, vector<2x32x2x8xf32>, vector<2x1x2x8xf32> -> vector<2x34x2x8xf32>
    %cst = arith.constant 0.000000e+00 : f32
    %44 = vector.broadcast %cst : f32 to vector<1x34x2x8xf32>
    %cst_27 = arith.constant 0.000000e+00 : f32
    %45 = vector.broadcast %cst_27 : f32 to vector<1x34x2x8xf32>
    %46 = tpu.concatenate %44, %43, %45 in 0 : vector<1x34x2x8xf32>, vector<2x34x2x8xf32>, vector<1x34x2x8xf32> -> vector<4x34x2x8xf32>
    %47 = vector.extract_strided_slice %46 {offsets = [0, 0, 0, 0], sizes = [2, 32, 2, 8], strides = [1, 1, 1, 1]} : vector<4x34x2x8xf32> to vector<2x32x2x8xf32>
    %48 = vector.extract_strided_slice %46 {offsets = [0, 1, 0, 0], sizes = [2, 32, 2, 8], strides = [1, 1, 1, 1]} : vector<4x34x2x8xf32> to vector<2x32x2x8xf32>
    %49 = vector.extract_strided_slice %46 {offsets = [0, 2, 0, 0], sizes = [2, 32, 2, 8], strides = [1, 1, 1, 1]} : vector<4x34x2x8xf32> to vector<2x32x2x8xf32>
    %50 = vector.extract_strided_slice %46 {offsets = [1, 0, 0, 0], sizes = [2, 32, 2, 8], strides = [1, 1, 1, 1]} : vector<4x34x2x8xf32> to vector<2x32x2x8xf32>
    %51 = vector.extract_strided_slice %46 {offsets = [1, 1, 0, 0], sizes = [2, 32, 2, 8], strides = [1, 1, 1, 1]} : vector<4x34x2x8xf32> to vector<2x32x2x8xf32>
    %52 = vector.extract_strided_slice %46 {offsets = [1, 2, 0, 0], sizes = [2, 32, 2, 8], strides = [1, 1, 1, 1]} : vector<4x34x2x8xf32> to vector<2x32x2x8xf32>
    %53 = vector.extract_strided_slice %46 {offsets = [2, 0, 0, 0], sizes = [2, 32, 2, 8], strides = [1, 1, 1, 1]} : vector<4x34x2x8xf32> to vector<2x32x2x8xf32>
    %54 = vector.extract_strided_slice %46 {offsets = [2, 1, 0, 0], sizes = [2, 32, 2, 8], strides = [1, 1, 1, 1]} : vector<4x34x2x8xf32> to vector<2x32x2x8xf32>
    %55 = vector.extract_strided_slice %46 {offsets = [2, 2, 0, 0], sizes = [2, 32, 2, 8], strides = [1, 1, 1, 1]} : vector<4x34x2x8xf32> to vector<2x32x2x8xf32>
    %56 = tpu.concatenate %47, %48, %49, %50, %51, %52, %53, %54, %55 in 3 : vector<2x32x2x8xf32>, vector<2x32x2x8xf32>, vector<2x32x2x8xf32>, vector<2x32x2x8xf32>, vector<2x32x2x8xf32>, vector<2x32x2x8xf32>, vector<2x32x2x8xf32>, vector<2x32x2x8xf32>, vector<2x32x2x8xf32> -> vector<2x32x2x72xf32>
    %c0_28 = arith.constant 0 : index
    %c0_29 = arith.constant 0 : index
    %57 = vector.load %arg6[%c0_28, %c0_29] : memref<72x16xf32, #tpu.memory_space<vmem>>, vector<72x16xf32>
    %cst_30 = arith.constant dense<0.000000e+00> : vector<2x32x2x16xf32>
    %58 = tpu.matmul %56, %57, %cst_30 {dimension_numbers = #tpu.dot_dimension_numbers<[3], [0], [0, 1, 2], [1], [0, 0, 0, 1, 0, 2, 1, 1], [], []>} : vector<2x32x2x72xf32>, vector<72x16xf32>, vector<2x32x2x16xf32> -> vector<2x32x2x16xf32>
    %c0_31 = arith.constant 0 : index
    %c0_32 = arith.constant 0 : index
    %59 = vector.load %arg7[%c0_31, %c0_32] : memref<1x16xf32, #tpu.memory_space<vmem>>, vector<1x16xf32>
    %60 = vector.shape_cast %59 : vector<1x16xf32> to vector<16xf32>
    %61 = vector.shape_cast %60 : vector<16xf32> to vector<1x1x1x16xf32>
    %62 = vector.broadcast %61 : vector<1x1x1x16xf32> to vector<2x32x2x16xf32>
    %63 = arith.addf %58, %62 : vector<2x32x2x16xf32>
    %64 = vector.shape_cast %63 : vector<2x32x2x16xf32> to vector<1x2x32x2x16xf32>
    %65 = vector.extract_strided_slice %64 {offsets = [0, 0, 0, 0, 0], sizes = [1, 1, 32, 2, 16], strides = [1, 1, 1, 1, 1]} : vector<1x2x32x2x16xf32> to vector<1x1x32x2x16xf32>
    %66 = vector.shape_cast %65 : vector<1x1x32x2x16xf32> to vector<1x32x2x16xf32>
    %67 = vector.extract_strided_slice %64 {offsets = [0, 1, 0, 0, 0], sizes = [1, 1, 32, 2, 16], strides = [1, 1, 1, 1, 1]} : vector<1x2x32x2x16xf32> to vector<1x1x32x2x16xf32>
    %68 = vector.shape_cast %67 : vector<1x1x32x2x16xf32> to vector<1x32x2x16xf32>
    %69 = arith.addf %66, %68 : vector<1x32x2x16xf32>
    %70 = vector.shape_cast %69 : vector<1x32x2x16xf32> to vector<1x16x2x2x16xf32>
    %71 = vector.extract_strided_slice %70 {offsets = [0, 0, 0, 0, 0], sizes = [1, 16, 1, 2, 16], strides = [1, 1, 1, 1, 1]} : vector<1x16x2x2x16xf32> to vector<1x16x1x2x16xf32>
    %72 = vector.shape_cast %71 : vector<1x16x1x2x16xf32> to vector<1x16x2x16xf32>
    %73 = vector.extract_strided_slice %70 {offsets = [0, 0, 1, 0, 0], sizes = [1, 16, 1, 2, 16], strides = [1, 1, 1, 1, 1]} : vector<1x16x2x2x16xf32> to vector<1x16x1x2x16xf32>
    %74 = vector.shape_cast %73 : vector<1x16x1x2x16xf32> to vector<1x16x2x16xf32>
    %75 = arith.addf %72, %74 : vector<1x16x2x16xf32>
    %cst_33 = arith.constant 2.500000e-01 : f32
    %76 = vector.broadcast %cst_33 : f32 to vector<1x16x2x16xf32>
    %77 = arith.mulf %75, %76 : vector<1x16x2x16xf32>
    %c0_34 = arith.constant 0 : index
    %c0_35 = arith.constant 0 : index
    %78 = vector.load %arg8[%c0_34, %c0_35] : memref<1x16xf32, #tpu.memory_space<vmem>>, vector<1x16xf32>
    %79 = vector.shape_cast %78 : vector<1x16xf32> to vector<16xf32>
    %80 = vector.shape_cast %79 : vector<16xf32> to vector<1x1x1x16xf32>
    %81 = vector.broadcast %80 : vector<1x1x1x16xf32> to vector<1x16x2x16xf32>
    %82 = arith.mulf %77, %81 : vector<1x16x2x16xf32>
    %c0_36 = arith.constant 0 : index
    %c0_37 = arith.constant 0 : index
    %83 = vector.load %arg9[%c0_36, %c0_37] : memref<1x16xf32, #tpu.memory_space<vmem>>, vector<1x16xf32>
    %84 = vector.shape_cast %83 : vector<1x16xf32> to vector<16xf32>
    %85 = vector.shape_cast %84 : vector<16xf32> to vector<1x1x1x16xf32>
    %86 = vector.broadcast %85 : vector<1x1x1x16xf32> to vector<1x16x2x16xf32>
    %87 = arith.addf %82, %86 : vector<1x16x2x16xf32>
    %cst_38 = arith.constant 0.000000e+00 : f32
    %88 = vector.broadcast %cst_38 : f32 to vector<1x16x2x16xf32>
    %89 = arith.cmpf ogt, %87, %88 : vector<1x16x2x16xf32>
    %cst_39 = arith.constant 0.000000e+00 : f32
    %90 = vector.broadcast %cst_39 : f32 to vector<1x16x2x16xf32>
    %91 = arith.minimumf %87, %90 : vector<1x16x2x16xf32>
    %92 = math.exp %91 : vector<1x16x2x16xf32>
    %cst_40 = arith.constant 1.000000e+00 : f32
    %93 = vector.broadcast %cst_40 : f32 to vector<1x16x2x16xf32>
    %94 = arith.subf %92, %93 : vector<1x16x2x16xf32>
    %95 = arith.select %89, %87, %94 : vector<1x16x2x16xi1>, vector<1x16x2x16xf32>
    %c0_41 = arith.constant 0 : index
    %c0_42 = arith.constant 0 : index
    %c0_43 = arith.constant 0 : index
    %c0_44 = arith.constant 0 : index
    %96 = vector.load %arg10[%c0_41, %c0_42, %c0_43, %c0_44] : memref<1x16x2x16xf32, #tpu.memory_space<vmem>>, vector<1x16x2x16xf32>
    tpu.vector_store %arg10[%c0_41, %c0_42, %c0_43, %c0_44], %95 {strides = array<i32>} : memref<1x16x2x16xf32, #tpu.memory_space<vmem>>, vector<1x16x2x16xf32>,
    return
  }
  func.func @transform_0(%arg0: i32) -> (i32, i32, i32, i32) {
    %c0_i32 = arith.constant 0 : i32
    %c0_i32_0 = arith.constant 0 : i32
    %c0_i32_1 = arith.constant 0 : i32
    %c0_i32_2 = arith.constant 0 : i32
    return %c0_i32, %arg0, %c0_i32_0, %c0_i32_1 : i32, i32, i32, i32
  }
  func.func @transform_1(%arg0: i32) -> (i32, i32, i32, i32) {
    %c32_i32 = arith.constant 32 : i32
    %0 = arith.muli %arg0, %c32_i32 : i32
    %c1_i32 = arith.constant 1 : i32
    %1 = arith.subi %0, %c1_i32 : i32
    %c0_i32 = arith.constant 0 : i32
    %2 = arith.addi %1, %c0_i32 : i32
    %c0_i32_0 = arith.constant 0 : i32
    %3 = arith.maxsi %2, %c0_i32_0 : i32
    %c0_i32_1 = arith.constant 0 : i32
    %c0_i32_2 = arith.constant 0 : i32
    %c0_i32_3 = arith.constant 0 : i32
    %c0_i32_4 = arith.constant 0 : i32
    return %c0_i32_1, %3, %c0_i32_2, %c0_i32_3 : i32, i32, i32, i32
  }
  func.func @transform_2(%arg0: i32) -> (i32, i32, i32, i32) {
    %c32_i32 = arith.constant 32 : i32
    %0 = arith.muli %arg0, %c32_i32 : i32
    %c32_i32_0 = arith.constant 32 : i32
    %1 = arith.addi %0, %c32_i32_0 : i32
    %c0_i32 = arith.constant 0 : i32
    %2 = arith.addi %1, %c0_i32 : i32
    %c63_i32 = arith.constant 63 : i32
    %3 = arith.minsi %2, %c63_i32 : i32
    %c0_i32_1 = arith.constant 0 : i32
    %c0_i32_2 = arith.constant 0 : i32
    %c0_i32_3 = arith.constant 0 : i32
    %c0_i32_4 = arith.constant 0 : i32
    return %c0_i32_1, %3, %c0_i32_2, %c0_i32_3 : i32, i32, i32, i32
  }
  func.func @transform_3(%arg0: i32) -> (i32, i32) {
    %c0_i32 = arith.constant 0 : i32
    %c0_i32_0 = arith.constant 0 : i32
    %c0_i32_1 = arith.constant 0 : i32
    return %c0_i32, %c0_i32_0 : i32, i32
  }
  func.func @transform_4(%arg0: i32) -> (i32, i32) {
    %c0_i32 = arith.constant 0 : i32
    %c0_i32_0 = arith.constant 0 : i32
    %c0_i32_1 = arith.constant 0 : i32
    return %c0_i32, %c0_i32_0 : i32, i32
  }
  func.func @transform_5(%arg0: i32) -> (i32, i32) {
    %c0_i32 = arith.constant 0 : i32
    %c0_i32_0 = arith.constant 0 : i32
    %c0_i32_1 = arith.constant 0 : i32
    return %c0_i32, %c0_i32_0 : i32, i32
  }
  func.func @transform_6(%arg0: i32) -> (i32, i32) {
    %c0_i32 = arith.constant 0 : i32
    %c0_i32_0 = arith.constant 0 : i32
    %c0_i32_1 = arith.constant 0 : i32
    return %c0_i32, %c0_i32_0 : i32, i32
  }
  func.func @transform_7(%arg0: i32) -> (i32, i32) {
    %c0_i32 = arith.constant 0 : i32
    %c0_i32_0 = arith.constant 0 : i32
    %c0_i32_1 = arith.constant 0 : i32
    return %c0_i32, %c0_i32_0 : i32, i32
  }
  func.func @transform_8(%arg0: i32) -> (i32, i32) {
    %c0_i32 = arith.constant 0 : i32
    %c0_i32_0 = arith.constant 0 : i32
    %c0_i32_1 = arith.constant 0 : i32
    return %c0_i32, %c0_i32_0 : i32, i32
  }
  func.func @transform_9(%arg0: i32) -> (i32, i32, i32, i32) {
    %c0_i32 = arith.constant 0 : i32
    %c0_i32_0 = arith.constant 0 : i32
    %c0_i32_1 = arith.constant 0 : i32
    %c0_i32_2 = arith.constant 0 : i32
    return %c0_i32, %arg0, %c0_i32_0, %c0_i32_1 : i32, i32, i32, i32
  }
}

</mosaic_0001>

<llo_original>
// kernel: _lambda_.3
$region0: #{_lambda_.3}
  #allocation0 [shape = 'u32[]', space=smem, size = 0x4, offset = 0x4, fixed_abs, tag = 'smem constant byte address 0x4 - core index']
  #allocation1 [shape = 'u32[144,128]{1,0:T(1,128)}', space=vmem, size = 0x12000, scoped, tag = 'internal scratch']
  #allocation2 [shape = 'f32[1,1]{1,0:T(1,128)S(1)}', space=vmem, size = 0x200, scoped, tag = 'scoped memory for _lambda_.3']
  #allocation3 [shape = 'f32[1,1]{1,0:T(1,128)S(1)}', space=vmem, size = 0x200, scoped, tag = 'scoped memory for _lambda_.3']
  %s0 = inlined_call_operand.vmem [shape: f32[2,64,2,8], index: 0, kind: input, shape index: {}, may-alias: {0,1,2}]
  %s1 = inlined_call_operand.vmem [shape: f32[2,64,2,8], index: 1, kind: input, shape index: {}, may-alias: {0,1,2}]
  %s2 = inlined_call_operand.vmem [shape: f32[2,64,2,8], index: 2, kind: input, shape index: {}, may-alias: {0,1,2}]
  %s3 = inlined_call_operand.<no memory space> [shape: f32[1,1], index: 3, kind: input, shape index: {}]
  %s4 = inlined_call_operand.<no memory space> [shape: f32[1,1], index: 4, kind: input, shape index: {}]
  %s5 = inlined_call_operand.vmem [shape: f32[72,16], index: 5, kind: input, shape index: {}]
  %s6 = inlined_call_operand.vmem [shape: f32[1,16], index: 6, kind: input, shape index: {}]
  %s7 = inlined_call_operand.vmem [shape: f32[1,16], index: 7, kind: input, shape index: {}]
  %s8 = inlined_call_operand.vmem [shape: f32[1,16], index: 8, kind: input, shape index: {}]
  %s9 = inlined_call_operand.vmem [shape: f32[1,32,2,16], index: 9, kind: output, shape index: {}]
  %s10 = sld [smem:[#allocation0]]
  $region178: #{_lambda_.3} parent=0
    _
  %s12 = ssub.s32 1, %s10
  %s13 = scalar_select 0, %s12, %s10
  %v14 = vstv %s3
  %15 = vst [vmem:[#allocation2] sm:$0x1] %v14
  %v16 = vstv %s4
  %17 = vst [vmem:[#allocation3] sm:$0x1] %v16
  $region1: #{_lambda_.3} parent=0
    #allocation4 [shape = 'u8[131072]{0}', space=vmem, size = 0x20000, scoped, tag = 'input window, operand 0']
    #allocation5 [shape = 'u8[4096]{0}', space=vmem, size = 0x1000, scoped, tag = 'input window, operand 1']
    #allocation6 [shape = 'u8[4096]{0}', space=vmem, size = 0x1000, scoped, tag = 'input window, operand 2']
    loop: start=0, step=1, limit=4
    $region2: #{_lambda_.3} parent=1 // loop_pre_header
      _
    $region3: #{_lambda_.3} parent=1 // loop_header
      %s19 = sphi 0, %s23
      %p20 = scmp.ge.s32.totalorder %s19, 4
      %s29 = sphi 0, %s31
      %s32 = sphi 0, %s29
      %s33 = sphi 0, %s32
      %s49 = sphi 0, %s33
      %s63 = sphi 0, %s65
      %s66 = sphi 0, %s63
      %s67 = sphi 0, %s66
      %s83 = sphi 0, %s67
      %s97 = sphi 0, %s99
      %s100 = sphi 0, %s97
      %s101 = sphi 0, %s100
      %s117 = sphi 0, %s101
      %s121 = sphi 0, %s121
      %s123 = sphi 0, %s121
      %s124 = sphi 0, %s123
      %s138 = sphi 0, %s124
      %s142 = sphi 0, %s142
      %s144 = sphi 0, %s142
      %s145 = sphi 0, %s144
      %s159 = sphi 0, %s145
      %s163 = sphi 0, %s163
      %s165 = sphi 0, %s163
      %s166 = sphi 0, %s165
      %s180 = sphi 0, %s166
      %s184 = sphi 0, %s184
      %s186 = sphi 0, %s184
      %s187 = sphi 0, %s186
      %s201 = sphi 0, %s187
      %s205 = sphi 0, %s205
      %s207 = sphi 0, %s205
      %s208 = sphi 0, %s207
      %s222 = sphi 0, %s208
      %s226 = sphi 0, %s226
      %s228 = sphi 0, %s226
      %s229 = sphi 0, %s228
      %s243 = sphi 0, %s229
      %s249 = sphi 0, %s251
      %s252 = sphi 0, %s249
      %s253 = sphi 0, %s252
      %s269 = sphi 0, %s253
    $region4: #{_lambda_.3} parent=1 // loop_header_branch
      %22 = sbr.rel (%p20) target = $region8
    $region5: #{_lambda_.3} parent=1 // loop_body
      %s24 = ssub.s32 %s19, 1
      %s25 = ssub.s32 %s19, 2
      %s26 = sadd.s32 %s19, 1
      %s27 = ssub.s32 %s19, %s26
      %p28 = scmp.eq.s32.totalorder %s27, 0
      %s30 = sadd.s32 %s29, 1
      %s31 = scalar_select %p28, %s29, %s30
      %p34 = pneg %p28
      %p35 = scmp.eq.s32.totalorder %s19, 1
      %p36 = por %p34, %p35
      %p37 = scmp.ne.s32.totalorder %s29, %s32
      %p38 = scmp.eq.s32.totalorder %s19, 0
      %p39 = por %p37, %p38
      %p40 = scmp.ne.s32.totalorder %s29, %s32
      %p41 = scmp.eq.s32.totalorder %s24, 1
      %p42 = por %p40, %p41
      %p43 = scmp.ne.s32.totalorder %s32, %s33
      %p44 = scmp.eq.s32.totalorder %s24, 0
      %p45 = por %p43, %p44
      %p46 = scmp.ne.s32.totalorder %s32, %s33
      %p47 = scmp.eq.s32.totalorder %s25, 1
      %p48 = por %p46, %p47
      %p50 = scmp.ne.s32.totalorder %s33, %s49
      %p51 = scmp.eq.s32.totalorder %s25, 0
      %p52 = por %p50, %p51
      %s53 = smul.u32 %s19, 32
      %s54 = ssub.s32 %s53, 1
      %p55 = scmp.gt.s32.totalorder %s54, 0
      %s56 = scalar_select %p55, %s54, 0
      %s57 = smul.u32 %s26, 32
      %s58 = ssub.s32 %s57, 1
      %p59 = scmp.gt.s32.totalorder %s58, 0
      %s60 = scalar_select %p59, %s58, 0
      %s61 = ssub.s32 %s56, %s60
      %p62 = scmp.eq.s32.totalorder %s61, 0
      %s64 = sadd.s32 %s63, 1
      %s65 = scalar_select %p62, %s63, %s64
      %p68 = pneg %p62
      %p69 = scmp.eq.s32.totalorder %s19, 1
      %p70 = por %p68, %p69
      %p71 = scmp.ne.s32.totalorder %s63, %s66
      %p72 = scmp.eq.s32.totalorder %s19, 0
      %p73 = por %p71, %p72
      %p74 = scmp.ne.s32.totalorder %s63, %s66
      %p75 = scmp.eq.s32.totalorder %s24, 1
      %p76 = por %p74, %p75
      %p77 = scmp.ne.s32.totalorder %s66, %s67
      %p78 = scmp.eq.s32.totalorder %s24, 0
      %p79 = por %p77, %p78
      %p80 = scmp.ne.s32.totalorder %s66, %s67
      %p81 = scmp.eq.s32.totalorder %s25, 1
      %p82 = por %p80, %p81
      %p84 = scmp.ne.s32.totalorder %s67, %s83
      %p85 = scmp.eq.s32.totalorder %s25, 0
      %p86 = por %p84, %p85
      %s87 = smul.u32 %s19, 32
      %s88 = sadd.s32 %s87, 32
      %p89 = scmp.lt.s32.totalorder %s88, 63
      %s90 = scalar_select %p89, %s88, 63
      %s91 = smul.u32 %s26, 32
      %s92 = sadd.s32 %s91, 32
      %p93 = scmp.lt.s32.totalorder %s92, 63
      %s94 = scalar_select %p93, %s92, 63
      %s95 = ssub.s32 %s90, %s94
      %p96 = scmp.eq.s32.totalorder %s95, 0
      %s98 = sadd.s32 %s97, 1
      %s99 = scalar_select %p96, %s97, %s98
      %p102 = pneg %p96
      %p103 = scmp.eq.s32.totalorder %s19, 1
      %p104 = por %p102, %p103
      %p105 = scmp.ne.s32.totalorder %s97, %s100
      %p106 = scmp.eq.s32.totalorder %s19, 0
      %p107 = por %p105, %p106
      %p108 = scmp.ne.s32.totalorder %s97, %s100
      %p109 = scmp.eq.s32.totalorder %s24, 1
      %p110 = por %p108, %p109
      %p111 = scmp.ne.s32.totalorder %s100, %s101
      %p112 = scmp.eq.s32.totalorder %s24, 0
      %p113 = por %p111, %p112
      %p114 = scmp.ne.s32.totalorder %s100, %s101
      %p115 = scmp.eq.s32.totalorder %s25, 1
      %p116 = por %p114, %p115
      %p118 = scmp.ne.s32.totalorder %s101, %s117
      %p119 = scmp.eq.s32.totalorder %s25, 0
      %p120 = por %p118, %p119
      %s122 = sadd.s32 %s121, 1
      %p125 = scmp.eq.s32.totalorder %s19, 1
      %p126 = scmp.ne.s32.totalorder %s121, %s123
      %p127 = scmp.eq.s32.totalorder %s19, 0
      %p128 = por %p126, %p127
      %p129 = scmp.ne.s32.totalorder %s121, %s123
      %p130 = scmp.eq.s32.totalorder %s24, 1
      %p131 = por %p129, %p130
      %p132 = scmp.ne.s32.totalorder %s123, %s124
      %p133 = scmp.eq.s32.totalorder %s24, 0
      %p134 = por %p132, %p133
      %p135 = scmp.ne.s32.totalorder %s123, %s124
      %p136 = scmp.eq.s32.totalorder %s25, 1
      %p137 = por %p135, %p136
      %p139 = scmp.ne.s32.totalorder %s124, %s138
      %p140 = scmp.eq.s32.totalorder %s25, 0
      %p141 = por %p139, %p140
      %s143 = sadd.s32 %s142, 1
      %p146 = scmp.eq.s32.totalorder %s19, 1
      %p147 = scmp.ne.s32.totalorder %s142, %s144
      %p148 = scmp.eq.s32.totalorder %s19, 0
      %p149 = por %p147, %p148
      %p150 = scmp.ne.s32.totalorder %s142, %s144
      %p151 = scmp.eq.s32.totalorder %s24, 1
      %p152 = por %p150, %p151
      %p153 = scmp.ne.s32.totalorder %s144, %s145
      %p154 = scmp.eq.s32.totalorder %s24, 0
      %p155 = por %p153, %p154
      %p156 = scmp.ne.s32.totalorder %s144, %s145
      %p157 = scmp.eq.s32.totalorder %s25, 1
      %p158 = por %p156, %p157
      %p160 = scmp.ne.s32.totalorder %s145, %s159
      %p161 = scmp.eq.s32.totalorder %s25, 0
      %p162 = por %p160, %p161
      %s164 = sadd.s32 %s163, 1
      %p167 = scmp.eq.s32.totalorder %s19, 1
      %p168 = scmp.ne.s32.totalorder %s163, %s165
      %p169 = scmp.eq.s32.totalorder %s19, 0
      %p170 = por %p168, %p169
      %p171 = scmp.ne.s32.totalorder %s163, %s165
      %p172 = scmp.eq.s32.totalorder %s24, 1
      %p173 = por %p171, %p172
      %p174 = scmp.ne.s32.totalorder %s165, %s166
      %p175 = scmp.eq.s32.totalorder %s24, 0
      %p176 = por %p174, %p175
      %p177 = scmp.ne.s32.totalorder %s165, %s166
      %p178 = scmp.eq.s32.totalorder %s25, 1
      %p179 = por %p177, %p178
      %p181 = scmp.ne.s32.totalorder %s166, %s180
      %p182 = scmp.eq.s32.totalorder %s25, 0
      %p183 = por %p181, %p182
      %s185 = sadd.s32 %s184, 1
      %p188 = scmp.eq.s32.totalorder %s19, 1
      %p189 = scmp.ne.s32.totalorder %s184, %s186
      %p190 = scmp.eq.s32.totalorder %s19, 0
      %p191 = por %p189, %p190
      %p192 = scmp.ne.s32.totalorder %s184, %s186
      %p193 = scmp.eq.s32.totalorder %s24, 1
      %p194 = por %p192, %p193
      %p195 = scmp.ne.s32.totalorder %s186, %s187
      %p196 = scmp.eq.s32.totalorder %s24, 0
      %p197 = por %p195, %p196
      %p198 = scmp.ne.s32.totalorder %s186, %s187
      %p199 = scmp.eq.s32.totalorder %s25, 1
      %p200 = por %p198, %p199
      %p202 = scmp.ne.s32.totalorder %s187, %s201
      %p203 = scmp.eq.s32.totalorder %s25, 0
      %p204 = por %p202, %p203
      %s206 = sadd.s32 %s205, 1
      %p209 = scmp.eq.s32.totalorder %s19, 1
      %p210 = scmp.ne.s32.totalorder %s205, %s207
      %p211 = scmp.eq.s32.totalorder %s19, 0
      %p212 = por %p210, %p211
      %p213 = scmp.ne.s32.totalorder %s205, %s207
      %p214 = scmp.eq.s32.totalorder %s24, 1
      %p215 = por %p213, %p214
      %p216 = scmp.ne.s32.totalorder %s207, %s208
      %p217 = scmp.eq.s32.totalorder %s24, 0
      %p218 = por %p216, %p217
      %p219 = scmp.ne.s32.totalorder %s207, %s208
      %p220 = scmp.eq.s32.totalorder %s25, 1
      %p221 = por %p219, %p220
      %p223 = scmp.ne.s32.totalorder %s208, %s222
      %p224 = scmp.eq.s32.totalorder %s25, 0
      %p225 = por %p223, %p224
      %s227 = sadd.s32 %s226, 1
      %p230 = scmp.eq.s32.totalorder %s19, 1
      %p231 = scmp.ne.s32.totalorder %s226, %s228
      %p232 = scmp.eq.s32.totalorder %s19, 0
      %p233 = por %p231, %p232
      %p234 = scmp.ne.s32.totalorder %s226, %s228
      %p235 = scmp.eq.s32.totalorder %s24, 1
      %p236 = por %p234, %p235
      %p237 = scmp.ne.s32.totalorder %s228, %s229
      %p238 = scmp.eq.s32.totalorder %s24, 0
      %p239 = por %p237, %p238
      %p240 = scmp.ne.s32.totalorder %s228, %s229
      %p241 = scmp.eq.s32.totalorder %s25, 1
      %p242 = por %p240, %p241
      %p244 = scmp.ne.s32.totalorder %s229, %s243
      %p245 = scmp.eq.s32.totalorder %s25, 0
      %p246 = por %p244, %p245
      %s247 = ssub.s32 %s19, %s26
      %p248 = scmp.eq.s32.totalorder %s247, 0
      %s250 = sadd.s32 %s249, 1
      %s251 = scalar_select %p248, %s249, %s250
      %p254 = pneg %p248
      %p255 = scmp.eq.s32.totalorder %s19, 1
      %p256 = por %p254, %p255
      %p257 = scmp.ne.s32.totalorder %s249, %s252
      %p258 = scmp.eq.s32.totalorder %s19, 0
      %p259 = por %p257, %p258
      %p260 = scmp.ne.s32.totalorder %s249, %s252
      %p261 = scmp.eq.s32.totalorder %s24, 1
      %p262 = por %p260, %p261
      %p263 = scmp.ne.s32.totalorder %s252, %s253
      %p264 = scmp.eq.s32.totalorder %s24, 0
      %p265 = por %p263, %p264
      %p266 = scmp.ne.s32.totalorder %s252, %s253
      %p267 = scmp.eq.s32.totalorder %s25, 1
      %p268 = por %p266, %p267
      %p270 = scmp.ne.s32.totalorder %s253, %s269
      %p271 = scmp.eq.s32.totalorder %s25, 0
      %p272 = por %p270, %p271
      %p273 = scmp.le.s32.totalorder 1, %s19
      %p274 = scmp.lt.s32.totalorder %s19, 3
      %p275 = pnand %p273, %p274
      %p276 = pneg %p275
      // Predicated region
      $region9: #{_lambda_.3} parent=5 // pred_check
        _
      $region10: #{_lambda_.3} parent=5 // pred_check_branch
        %278 = sbr.rel (%p275) target = $region12
      $region11: #{_lambda_.3} parent=5 // pred_region
        %s279 = ssub.s32 %s19, 1
        // Predicated region
        $region13: #{_lambda_.3} parent=11 // pred_check
          %p280 = pneg %p134
        $region14: #{_lambda_.3} parent=11 // pred_check_branch
          %282 = sbr.rel (%p280) target = $region16
        $region15: #{_lambda_.3} parent=11 // pred_region
          _
        $region16: #{_lambda_.3} parent=11 // pred_fallthru
          _
        // Predicated region
        $region17: #{_lambda_.3} parent=11 // pred_check
          %p283 = pneg %p155
        $region18: #{_lambda_.3} parent=11 // pred_check_branch
          %285 = sbr.rel (%p283) target = $region20
        $region19: #{_lambda_.3} parent=11 // pred_region
          _
        $region20: #{_lambda_.3} parent=11 // pred_fallthru
          _
        // Predicated region
        $region21: #{_lambda_.3} parent=11 // pred_check
          %p286 = pneg %p176
        $region22: #{_lambda_.3} parent=11 // pred_check_branch
          %288 = sbr.rel (%p286) target = $region24
        $region23: #{_lambda_.3} parent=11 // pred_region
          _
        $region24: #{_lambda_.3} parent=11 // pred_fallthru
          _
        // Predicated region
        $region25: #{_lambda_.3} parent=11 // pred_check
          %p289 = pneg %p197
        $region26: #{_lambda_.3} parent=11 // pred_check_branch
          %291 = sbr.rel (%p289) target = $region28
        $region27: #{_lambda_.3} parent=11 // pred_region
          _
        $region28: #{_lambda_.3} parent=11 // pred_fallthru
          _
        // Predicated region
        $region29: #{_lambda_.3} parent=11 // pred_check
          %p292 = pneg %p218
        $region30: #{_lambda_.3} parent=11 // pred_check_branch
          %294 = sbr.rel (%p292) target = $region32
        $region31: #{_lambda_.3} parent=11 // pred_region
          _
        $region32: #{_lambda_.3} parent=11 // pred_fallthru
          _
        // Predicated region
        $region33: #{_lambda_.3} parent=11 // pred_check
          %p295 = pneg %p239
        $region34: #{_lambda_.3} parent=11 // pred_check_branch
          %297 = sbr.rel (%p295) target = $region36
        $region35: #{_lambda_.3} parent=11 // pred_region
          _
        $region36: #{_lambda_.3} parent=11 // pred_fallthru
          _
      $region12: #{_lambda_.3} parent=5 // pred_fallthru
        _
      %p298 = scmp.lt.s32.totalorder %s19, 2
      // Predicated region
      $region37: #{_lambda_.3} parent=5 // pred_check
        %p299 = pneg %p298
      $region38: #{_lambda_.3} parent=5 // pred_check_branch
        %301 = sbr.rel (%p299) target = $region40
      $region39: #{_lambda_.3} parent=5 // pred_region
        // Predicated region
        $region41: #{_lambda_.3} parent=39 // pred_check
          %p302 = pneg %p39
        $region42: #{_lambda_.3} parent=39 // pred_check_branch
          %304 = sbr.rel (%p302) target = $region44
        $region43: #{_lambda_.3} parent=39 // pred_region
          %s305 = sand.u32 %s29, 1
          %s306 = sand.u32 %s29, 1
          %s307 = smul.addr %s306, 128
          %s308 = scalar_lea.vmem [#allocation4], %s307
          %s309 = smul.u32 32, %s19
          %s310 = smul.addr %s309, 2
          %s311 = scalar_lea.vmem %s0, %s310
          // Predicated region
          $region45: #{_lambda_.3} parent=43 // pred_check
            _
          $region46: #{_lambda_.3} parent=43 // pred_check_branch
            %313 = sbr.rel (0) target = $region48
          $region47: #{_lambda_.3} parent=43 // pred_region
            // Predicated region
            $region49: #{_lambda_.3} parent=47 // pred_check
              _
            $region50: #{_lambda_.3} parent=47 // pred_check_branch
              %315 = sbr.rel target = $region52
            $region51: #{_lambda_.3} parent=47 // pred_region
              // Predicated region
              $region64: #{_lambda_.3} parent=51 // pred_check
                _
              $region65: #{_lambda_.3} parent=51 // pred_check_branch
                %457 = sbr.rel (0) target = $region67
              $region66: #{_lambda_.3} parent=51 // pred_region
                loop: start=0, step=1, limit=1
                $region68: #{_lambda_.3} parent=66 // loop_pre_header
                  _
                $region69: #{_lambda_.3} parent=66 // loop_header
                  %s459 = sphi 0, %s463
                  %p460 = scmp.ge.s32.totalorder %s459, 1
                  %s464 = sphi %s311, %s311
                  %s465 = sphi %s308, %s308
                $region70: #{_lambda_.3} parent=66 // loop_header_branch
                  %462 = sbr.rel (%p460) target = $region74
                $region71: #{_lambda_.3} parent=66 // loop_body
                  _
                $region72: #{_lambda_.3} parent=66 // loop_footer
                  %s463 = sadd.s32 1, %s459
                $region73: #{_lambda_.3} parent=66 // loop_footer_branch
                  %458 = sbr.rel target = $region69
                $region74: #{_lambda_.3} parent=66 // loop_exit
                  _
                %s467 = ssub.s32 4, 1
                loop: start=0, step=1, limit=1
                $region75: #{_lambda_.3} parent=66 // loop_pre_header
                  _
                $region76: #{_lambda_.3} parent=66 // loop_header
                  %s469 = sphi 0, %s473
                  %p470 = scmp.ge.s32.totalorder %s469, 1
                  %s474 = sphi %s311, %s311
                  %s475 = sphi %s308, %s308
                $region77: #{_lambda_.3} parent=66 // loop_header_branch
                  %472 = sbr.rel (%p470) target = $region81
                $region78: #{_lambda_.3} parent=66 // loop_body
                  %v476 = vld [vmem:[%s474] sm:%s467]
                  %477 = vst [vmem:[%s475] sm:%s467] %v476
                  %v478 = vld [vmem:[%s474 + $0x2] sm:%s467]
                  %479 = vst [vmem:[%s475 + $0x2] sm:%s467] %v478
                  %v480 = vld [vmem:[%s474 + $0x4] sm:%s467]
                  %481 = vst [vmem:[%s475 + $0x4] sm:%s467] %v480
                  %v482 = vld [vmem:[%s474 + $0x6] sm:%s467]
                  %483 = vst [vmem:[%s475 + $0x6] sm:%s467] %v482
                  %v484 = vld [vmem:[%s474 + $0x8] sm:%s467]
                  %485 = vst [vmem:[%s475 + $0x8] sm:%s467] %v484
                  %v486 = vld [vmem:[%s474 + $0xa] sm:%s467]
                  %487 = vst [vmem:[%s475 + $0xa] sm:%s467] %v486
                  %v488 = vld [vmem:[%s474 + $0xc] sm:%s467]
                  %489 = vst [vmem:[%s475 + $0xc] sm:%s467] %v488
                  %v490 = vld [vmem:[%s474 + $0xe] sm:%s467]
                  %491 = vst [vmem:[%s475 + $0xe] sm:%s467] %v490
                  %v492 = vld [vmem:[%s474 + $0x10] sm:%s467]
                  %493 = vst [vmem:[%s475 + $0x10] sm:%s467] %v492
                  %v494 = vld [vmem:[%s474 + $0x12] sm:%s467]
                  %495 = vst [vmem:[%s475 + $0x12] sm:%s467] %v494
                  %v496 = vld [vmem:[%s474 + $0x14] sm:%s467]
                  %497 = vst [vmem:[%s475 + $0x14] sm:%s467] %v496
                  %v498 = vld [vmem:[%s474 + $0x16] sm:%s467]
                  %499 = vst [vmem:[%s475 + $0x16] sm:%s467] %v498
                  %v500 = vld [vmem:[%s474 + $0x18] sm:%s467]
                  %501 = vst [vmem:[%s475 + $0x18] sm:%s467] %v500
                  %v502 = vld [vmem:[%s474 + $0x1a] sm:%s467]
                  %503 = vst [vmem:[%s475 + $0x1a] sm:%s467] %v502
                  %v504 = vld [vmem:[%s474 + $0x1c] sm:%s467]
                  %505 = vst [vmem:[%s475 + $0x1c] sm:%s467] %v504
                  %v506 = vld [vmem:[%s474 + $0x1e] sm:%s467]
                  %507 = vst [vmem:[%s475 + $0x1e] sm:%s467] %v506
                  %v508 = vld [vmem:[%s474 + $0x20] sm:%s467]
                  %509 = vst [vmem:[%s475 + $0x20] sm:%s467] %v508
                  %v510 = vld [vmem:[%s474 + $0x22] sm:%s467]
                  %511 = vst [vmem:[%s475 + $0x22] sm:%s467] %v510
                  %v512 = vld [vmem:[%s474 + $0x24] sm:%s467]
                  %513 = vst [vmem:[%s475 + $0x24] sm:%s467] %v512
                  %v514 = vld [vmem:[%s474 + $0x26] sm:%s467]
                  %515 = vst [vmem:[%s475 + $0x26] sm:%s467] %v514
                  %v516 = vld [vmem:[%s474 + $0x28] sm:%s467]
                  %517 = vst [vmem:[%s475 + $0x28] sm:%s467] %v516
                  %v518 = vld [vmem:[%s474 + $0x2a] sm:%s467]
                  %519 = vst [vmem:[%s475 + $0x2a] sm:%s467] %v518
                  %v520 = vld [vmem:[%s474 + $0x2c] sm:%s467]
                  %521 = vst [vmem:[%s475 + $0x2c] sm:%s467] %v520
                  %v522 = vld [vmem:[%s474 + $0x2e] sm:%s467]
                  %523 = vst [vmem:[%s475 + $0x2e] sm:%s467] %v522
                  %v524 = vld [vmem:[%s474 + $0x30] sm:%s467]
                  %525 = vst [vmem:[%s475 + $0x30] sm:%s467] %v524
                  %v526 = vld [vmem:[%s474 + $0x32] sm:%s467]
                  %527 = vst [vmem:[%s475 + $0x32] sm:%s467] %v526
                  %v528 = vld [vmem:[%s474 + $0x34] sm:%s467]
                  %529 = vst [vmem:[%s475 + $0x34] sm:%s467] %v528
                  %v530 = vld [vmem:[%s474 + $0x36] sm:%s467]
                  %531 = vst [vmem:[%s475 + $0x36] sm:%s467] %v530
                  %v532 = vld [vmem:[%s474 + $0x38] sm:%s467]
                  %533 = vst [vmem:[%s475 + $0x38] sm:%s467] %v532
                  %v534 = vld [vmem:[%s474 + $0x3a] sm:%s467]
                  %535 = vst [vmem:[%s475 + $0x3a] sm:%s467] %v534
                  %v536 = vld [vmem:[%s474 + $0x3c] sm:%s467]
                  %537 = vst [vmem:[%s475 + $0x3c] sm:%s467] %v536
                  %v538 = vld [vmem:[%s474 + $0x3e] sm:%s467]
                  %539 = vst [vmem:[%s475 + $0x3e] sm:%s467] %v538
                  %v540 = vld [vmem:[%s474 + $0x80] sm:%s467]
                  %541 = vst [vmem:[%s475 + $0x40] sm:%s467] %v540
                  %v542 = vld [vmem:[%s474 + $0x82] sm:%s467]
                  %543 = vst [vmem:[%s475 + $0x42] sm:%s467] %v542
                  %v544 = vld [vmem:[%s474 + $0x84] sm:%s467]
                  %545 = vst [vmem:[%s475 + $0x44] sm:%s467] %v544
                  %v546 = vld [vmem:[%s474 + $0x86] sm:%s467]
                  %547 = vst [vmem:[%s475 + $0x46] sm:%s467] %v546
                  %v548 = vld [vmem:[%s474 + $0x88] sm:%s467]
                  %549 = vst [vmem:[%s475 + $0x48] sm:%s467] %v548
                  %v550 = vld [vmem:[%s474 + $0x8a] sm:%s467]
                  %551 = vst [vmem:[%s475 + $0x4a] sm:%s467] %v550
                  %v552 = vld [vmem:[%s474 + $0x8c] sm:%s467]
                  %553 = vst [vmem:[%s475 + $0x4c] sm:%s467] %v552
                  %v554 = vld [vmem:[%s474 + $0x8e] sm:%s467]
                  %555 = vst [vmem:[%s475 + $0x4e] sm:%s467] %v554
                  %v556 = vld [vmem:[%s474 + $0x90] sm:%s467]
                  %557 = vst [vmem:[%s475 + $0x50] sm:%s467] %v556
                  %v558 = vld [vmem:[%s474 + $0x92] sm:%s467]
                  %559 = vst [vmem:[%s475 + $0x52] sm:%s467] %v558
                  %v560 = vld [vmem:[%s474 + $0x94] sm:%s467]
                  %561 = vst [vmem:[%s475 + $0x54] sm:%s467] %v560
                  %v562 = vld [vmem:[%s474 + $0x96] sm:%s467]
                  %563 = vst [vmem:[%s475 + $0x56] sm:%s467] %v562
                  %v564 = vld [vmem:[%s474 + $0x98] sm:%s467]
                  %565 = vst [vmem:[%s475 + $0x58] sm:%s467] %v564
                  %v566 = vld [vmem:[%s474 + $0x9a] sm:%s467]
                  %567 = vst [vmem:[%s475 + $0x5a] sm:%s467] %v566
                  %v568 = vld [vmem:[%s474 + $0x9c] sm:%s467]
                  %569 = vst [vmem:[%s475 + $0x5c] sm:%s467] %v568
                  %v570 = vld [vmem:[%s474 + $0x9e] sm:%s467]
                  %571 = vst [vmem:[%s475 + $0x5e] sm:%s467] %v570
                  %v572 = vld [vmem:[%s474 + $0xa0] sm:%s467]
                  %573 = vst [vmem:[%s475 + $0x60] sm:%s467] %v572
                  %v574 = vld [vmem:[%s474 + $0xa2] sm:%s467]
                  %575 = vst [vmem:[%s475 + $0x62] sm:%s467] %v574
                  %v576 = vld [vmem:[%s474 + $0xa4] sm:%s467]
                  %577 = vst [vmem:[%s475 + $0x64] sm:%s467] %v576
                  %v578 = vld [vmem:[%s474 + $0xa6] sm:%s467]
                  %579 = vst [vmem:[%s475 + $0x66] sm:%s467] %v578
                  %v580 = vld [vmem:[%s474 + $0xa8] sm:%s467]
                  %581 = vst [vmem:[%s475 + $0x68] sm:%s467] %v580
                  %v582 = vld [vmem:[%s474 + $0xaa] sm:%s467]
                  %583 = vst [vmem:[%s475 + $0x6a] sm:%s467] %v582
                  %v584 = vld [vmem:[%s474 + $0xac] sm:%s467]
                  %585 = vst [vmem:[%s475 + $0x6c] sm:%s467] %v584
                  %v586 = vld [vmem:[%s474 + $0xae] sm:%s467]
                  %587 = vst [vmem:[%s475 + $0x6e] sm:%s467] %v586
                  %v588 = vld [vmem:[%s474 + $0xb0] sm:%s467]
                  %589 = vst [vmem:[%s475 + $0x70] sm:%s467] %v588
                  %v590 = vld [vmem:[%s474 + $0xb2] sm:%s467]
                  %591 = vst [vmem:[%s475 + $0x72] sm:%s467] %v590
                  %v592 = vld [vmem:[%s474 + $0xb4] sm:%s467]
                  %593 = vst [vmem:[%s475 + $0x74] sm:%s467] %v592
                  %v594 = vld [vmem:[%s474 + $0xb6] sm:%s467]
                  %595 = vst [vmem:[%s475 + $0x76] sm:%s467] %v594
                  %v596 = vld [vmem:[%s474 + $0xb8] sm:%s467]
                  %597 = vst [vmem:[%s475 + $0x78] sm:%s467] %v596
                  %v598 = vld [vmem:[%s474 + $0xba] sm:%s467]
                  %599 = vst [vmem:[%s475 + $0x7a] sm:%s467] %v598
                  %v600 = vld [vmem:[%s474 + $0xbc] sm:%s467]
                  %601 = vst [vmem:[%s475 + $0x7c] sm:%s467] %v600
                  %v602 = vld [vmem:[%s474 + $0xbe] sm:%s467]
                  %603 = vst [vmem:[%s475 + $0x7e] sm:%s467] %v602
                $region79: #{_lambda_.3} parent=66 // loop_footer
                  %s473 = sadd.s32 1, %s469
                $region80: #{_lambda_.3} parent=66 // loop_footer_branch
                  %468 = sbr.rel target = $region76
                $region81: #{_lambda_.3} parent=66 // loop_exit
                  _
              $region67: #{_lambda_.3} parent=51 // pred_fallthru
                _
            $region52: #{_lambda_.3} parent=47 // pred_fallthru
              _
            // Predicated region
            $region53: #{_lambda_.3} parent=47 // pred_check
              _
            $region54: #{_lambda_.3} parent=47 // pred_check_branch
              %317 = sbr.rel (0) target = $region56
            $region55: #{_lambda_.3} parent=47 // pred_region
              %s319 = ssub.s32 4, 1
              loop: start=0, step=1, limit=1
              $region57: #{_lambda_.3} parent=55 // loop_pre_header
                _
              $region58: #{_lambda_.3} parent=55 // loop_header
                %s321 = sphi 0, %s325
                %p322 = scmp.ge.s32.totalorder %s321, 1
                %s326 = sphi %s311, %s311
                %s327 = sphi %s308, %s308
              $region59: #{_lambda_.3} parent=55 // loop_header_branch
                %324 = sbr.rel (%p322) target = $region63
              $region60: #{_lambda_.3} parent=55 // loop_body
                %v328 = vld [vmem:[%s326] sm:%s319]
                %329 = vst [vmem:[%s327] sm:%s319] %v328
                %v330 = vld [vmem:[%s326 + $0x2] sm:%s319]
                %331 = vst [vmem:[%s327 + $0x2] sm:%s319] %v330
                %v332 = vld [vmem:[%s326 + $0x4] sm:%s319]
                %333 = vst [vmem:[%s327 + $0x4] sm:%s319] %v332
                %v334 = vld [vmem:[%s326 + $0x6] sm:%s319]
                %335 = vst [vmem:[%s327 + $0x6] sm:%s319] %v334
                %v336 = vld [vmem:[%s326 + $0x8] sm:%s319]
                %337 = vst [vmem:[%s327 + $0x8] sm:%s319] %v336
                %v338 = vld [vmem:[%s326 + $0xa] sm:%s319]
                %339 = vst [vmem:[%s327 + $0xa] sm:%s319] %v338
                %v340 = vld [vmem:[%s326 + $0xc] sm:%s319]
                %341 = vst [vmem:[%s327 + $0xc] sm:%s319] %v340
                %v342 = vld [vmem:[%s326 + $0xe] sm:%s319]
                %343 = vst [vmem:[%s327 + $0xe] sm:%s319] %v342
                %v344 = vld [vmem:[%s326 + $0x10] sm:%s319]
                %345 = vst [vmem:[%s327 + $0x10] sm:%s319] %v344
                %v346 = vld [vmem:[%s326 + $0x12] sm:%s319]
                %347 = vst [vmem:[%s327 + $0x12] sm:%s319] %v346
                %v348 = vld [vmem:[%s326 + $0x14] sm:%s319]
                %349 = vst [vmem:[%s327 + $0x14] sm:%s319] %v348
                %v350 = vld [vmem:[%s326 + $0x16] sm:%s319]
                %351 = vst [vmem:[%s327 + $0x16] sm:%s319] %v350
                %v352 = vld [vmem:[%s326 + $0x18] sm:%s319]
                %353 = vst [vmem:[%s327 + $0x18] sm:%s319] %v352
                %v354 = vld [vmem:[%s326 + $0x1a] sm:%s319]
                %355 = vst [vmem:[%s327 + $0x1a] sm:%s319] %v354
                %v356 = vld [vmem:[%s326 + $0x1c] sm:%s319]
                %357 = vst [vmem:[%s327 + $0x1c] sm:%s319] %v356
                %v358 = vld [vmem:[%s326 + $0x1e] sm:%s319]
                %359 = vst [vmem:[%s327 + $0x1e] sm:%s319] %v358
                %v360 = vld [vmem:[%s326 + $0x20] sm:%s319]
                %361 = vst [vmem:[%s327 + $0x20] sm:%s319] %v360
                %v362 = vld [vmem:[%s326 + $0x22] sm:%s319]
                %363 = vst [vmem:[%s327 + $0x22] sm:%s319] %v362
                %v364 = vld [vmem:[%s326 + $0x24] sm:%s319]
                %365 = vst [vmem:[%s327 + $0x24] sm:%s319] %v364
                %v366 = vld [vmem:[%s326 + $0x26] sm:%s319]
                %367 = vst [vmem:[%s327 + $0x26] sm:%s319] %v366
                %v368 = vld [vmem:[%s326 + $0x28] sm:%s319]
                %369 = vst [vmem:[%s327 + $0x28] sm:%s319] %v368
                %v370 = vld [vmem:[%s326 + $0x2a] sm:%s319]
                %371 = vst [vmem:[%s327 + $0x2a] sm:%s319] %v370
                %v372 = vld [vmem:[%s326 + $0x2c] sm:%s319]
                %373 = vst [vmem:[%s327 + $0x2c] sm:%s319] %v372
                %v374 = vld [vmem:[%s326 + $0x2e] sm:%s319]
                %375 = vst [vmem:[%s327 + $0x2e] sm:%s319] %v374
                %v376 = vld [vmem:[%s326 + $0x30] sm:%s319]
                %377 = vst [vmem:[%s327 + $0x30] sm:%s319] %v376
                %v378 = vld [vmem:[%s326 + $0x32] sm:%s319]
                %379 = vst [vmem:[%s327 + $0x32] sm:%s319] %v378
                %v380 = vld [vmem:[%s326 + $0x34] sm:%s319]
                %381 = vst [vmem:[%s327 + $0x34] sm:%s319] %v380
                %v382 = vld [vmem:[%s326 + $0x36] sm:%s319]
                %383 = vst [vmem:[%s327 + $0x36] sm:%s319] %v382
                %v384 = vld [vmem:[%s326 + $0x38] sm:%s319]
                %385 = vst [vmem:[%s327 + $0x38] sm:%s319] %v384
                %v386 = vld [vmem:[%s326 + $0x3a] sm:%s319]
                %387 = vst [vmem:[%s327 + $0x3a] sm:%s319] %v386
                %v388 = vld [vmem:[%s326 + $0x3c] sm:%s319]
                %389 = vst [vmem:[%s327 + $0x3c] sm:%s319] %v388
                %v390 = vld [vmem:[%s326 + $0x3e] sm:%s319]
                %391 = vst [vmem:[%s327 + $0x3e] sm:%s319] %v390
                %v392 = vld [vmem:[%s326 + $0x80] sm:%s319]
                %393 = vst [vmem:[%s327 + $0x40] sm:%s319] %v392
                %v394 = vld [vmem:[%s326 + $0x82] sm:%s319]
                %395 = vst [vmem:[%s327 + $0x42] sm:%s319] %v394
                %v396 = vld [vmem:[%s326 + $0x84] sm:%s319]
                %397 = vst [vmem:[%s327 + $0x44] sm:%s319] %v396
                %v398 = vld [vmem:[%s326 + $0x86] sm:%s319]
                %399 = vst [vmem:[%s327 + $0x46] sm:%s319] %v398
                %v400 = vld [vmem:[%s326 + $0x88] sm:%s319]
                %401 = vst [vmem:[%s327 + $0x48] sm:%s319] %v400
                %v402 = vld [vmem:[%s326 + $0x8a] sm:%s319]
                %403 = vst [vmem:[%s327 + $0x4a] sm:%s319] %v402
                %v404 = vld [vmem:[%s326 + $0x8c] sm:%s319]
                %405 = vst [vmem:[%s327 + $0x4c] sm:%s319] %v404
                %v406 = vld [vmem:[%s326 + $0x8e] sm:%s319]
                %407 = vst [vmem:[%s327 + $0x4e] sm:%s319] %v406
                %v408 = vld [vmem:[%s326 + $0x90] sm:%s319]
                %409 = vst [vmem:[%s327 + $0x50] sm:%s319] %v408
                %v410 = vld [vmem:[%s326 + $0x92] sm:%s319]
                %411 = vst [vmem:[%s327 + $0x52] sm:%s319] %v410
                %v412 = vld [vmem:[%s326 + $0x94] sm:%s319]
                %413 = vst [vmem:[%s327 + $0x54] sm:%s319] %v412
                %v414 = vld [vmem:[%s326 + $0x96] sm:%s319]
                %415 = vst [vmem:[%s327 + $0x56] sm:%s319] %v414
                %v416 = vld [vmem:[%s326 + $0x98] sm:%s319]
                %417 = vst [vmem:[%s327 + $0x58] sm:%s319] %v416
                %v418 = vld [vmem:[%s326 + $0x9a] sm:%s319]
                %419 = vst [vmem:[%s327 + $0x5a] sm:%s319] %v418
                %v420 = vld [vmem:[%s326 + $0x9c] sm:%s319]
                %421 = vst [vmem:[%s327 + $0x5c] sm:%s319] %v420
                %v422 = vld [vmem:[%s326 + $0x9e] sm:%s319]
                %423 = vst [vmem:[%s327 + $0x5e] sm:%s319] %v422
                %v424 = vld [vmem:[%s326 + $0xa0] sm:%s319]
                %425 = vst [vmem:[%s327 + $0x60] sm:%s319] %v424
                %v426 = vld [vmem:[%s326 + $0xa2] sm:%s319]
                %427 = vst [vmem:[%s327 + $0x62] sm:%s319] %v426
                %v428 = vld [vmem:[%s326 + $0xa4] sm:%s319]
                %429 = vst [vmem:[%s327 + $0x64] sm:%s319] %v428
                %v430 = vld [vmem:[%s326 + $0xa6] sm:%s319]
                %431 = vst [vmem:[%s327 + $0x66] sm:%s319] %v430
                %v432 = vld [vmem:[%s326 + $0xa8] sm:%s319]
                %433 = vst [vmem:[%s327 + $0x68] sm:%s319] %v432
                %v434 = vld [vmem:[%s326 + $0xaa] sm:%s319]
                %435 = vst [vmem:[%s327 + $0x6a] sm:%s319] %v434
                %v436 = vld [vmem:[%s326 + $0xac] sm:%s319]
                %437 = vst [vmem:[%s327 + $0x6c] sm:%s319] %v436
                %v438 = vld [vmem:[%s326 + $0xae] sm:%s319]
                %439 = vst [vmem:[%s327 + $0x6e] sm:%s319] %v438
                %v440 = vld [vmem:[%s326 + $0xb0] sm:%s319]
                %441 = vst [vmem:[%s327 + $0x70] sm:%s319] %v440
                %v442 = vld [vmem:[%s326 + $0xb2] sm:%s319]
                %443 = vst [vmem:[%s327 + $0x72] sm:%s319] %v442
                %v444 = vld [vmem:[%s326 + $0xb4] sm:%s319]
                %445 = vst [vmem:[%s327 + $0x74] sm:%s319] %v444
                %v446 = vld [vmem:[%s326 + $0xb6] sm:%s319]
                %447 = vst [vmem:[%s327 + $0x76] sm:%s319] %v446
                %v448 = vld [vmem:[%s326 + $0xb8] sm:%s319]
                %449 = vst [vmem:[%s327 + $0x78] sm:%s319] %v448
                %v450 = vld [vmem:[%s326 + $0xba] sm:%s319]
                %451 = vst [vmem:[%s327 + $0x7a] sm:%s319] %v450
                %v452 = vld [vmem:[%s326 + $0xbc] sm:%s319]
                %453 = vst [vmem:[%s327 + $0x7c] sm:%s319] %v452
                %v454 = vld [vmem:[%s326 + $0xbe] sm:%s319]
                %455 = vst [vmem:[%s327 + $0x7e] sm:%s319] %v454
              $region61: #{_lambda_.3} parent=55 // loop_footer
                %s325 = sadd.s32 1, %s321
              $region62: #{_lambda_.3} parent=55 // loop_footer_branch
                %320 = sbr.rel target = $region58
              $region63: #{_lambda_.3} parent=55 // loop_exit
                _
            $region56: #{_lambda_.3} parent=47 // pred_fallthru
              _
          $region48: #{_lambda_.3} parent=43 // pred_fallthru
            _
          %604 = vnop
        $region44: #{_lambda_.3} parent=39 // pred_fallthru
          _
        // Predicated region
        $region82: #{_lambda_.3} parent=39 // pred_check
          %p605 = pneg %p73
        $region83: #{_lambda_.3} parent=39 // pred_check_branch
          %607 = sbr.rel (%p605) target = $region85
        $region84: #{_lambda_.3} parent=39 // pred_region
          %s608 = sand.u32 %s63, 1
          %s609 = sand.u32 %s63, 1
          %s610 = smul.addr %s609, 4
          %s611 = scalar_lea.vmem [#allocation5], %s610
          %s612 = smul.u32 %s19, 32
          %s613 = ssub.s32 %s612, 1
          %p614 = scmp.gt.s32.totalorder %s613, 0
          %s615 = scalar_select %p614, %s613, 0
          %s616 = smul.addr %s615, 2
          %s617 = scalar_lea.vmem %s1, %s616
          // Predicated region
          $region86: #{_lambda_.3} parent=84 // pred_check
            _
          $region87: #{_lambda_.3} parent=84 // pred_check_branch
            %619 = sbr.rel (0) target = $region89
          $region88: #{_lambda_.3} parent=84 // pred_region
            // Predicated region
            $region90: #{_lambda_.3} parent=88 // pred_check
              _
            $region91: #{_lambda_.3} parent=88 // pred_check_branch
              %621 = sbr.rel target = $region93
            $region92: #{_lambda_.3} parent=88 // pred_region
              // Predicated region
              $region105: #{_lambda_.3} parent=92 // pred_check
                _
              $region106: #{_lambda_.3} parent=92 // pred_check_branch
                %639 = sbr.rel (0) target = $region108
              $region107: #{_lambda_.3} parent=92 // pred_region
                %s641 = ssub.s32 4, 1
                loop: start=0, step=1, limit=1
                $region109: #{_lambda_.3} parent=107 // loop_pre_header
                  _
                $region110: #{_lambda_.3} parent=107 // loop_header
                  %s643 = sphi 0, %s647
                  %p644 = scmp.ge.s32.totalorder %s643, 1
                  %s648 = sphi %s617, %s617
                  %s649 = sphi %s611, %s611
                $region111: #{_lambda_.3} parent=107 // loop_header_branch
                  %646 = sbr.rel (%p644) target = $region115
                $region112: #{_lambda_.3} parent=107 // loop_body
                  %v650 = vld [vmem:[%s648] sm:%s641]
                  %651 = vst [vmem:[%s649] sm:%s641] %v650
                  %v652 = vld [vmem:[%s648 + $0x80] sm:%s641]
                  %653 = vst [vmem:[%s649 + $0x2] sm:%s641] %v652
                $region113: #{_lambda_.3} parent=107 // loop_footer
                  %s647 = sadd.s32 1, %s643
                $region114: #{_lambda_.3} parent=107 // loop_footer_branch
                  %642 = sbr.rel target = $region110
                $region115: #{_lambda_.3} parent=107 // loop_exit
                  _
              $region108: #{_lambda_.3} parent=92 // pred_fallthru
                _
            $region93: #{_lambda_.3} parent=88 // pred_fallthru
              _
            // Predicated region
            $region94: #{_lambda_.3} parent=88 // pred_check
              _
            $region95: #{_lambda_.3} parent=88 // pred_check_branch
              %623 = sbr.rel (0) target = $region97
            $region96: #{_lambda_.3} parent=88 // pred_region
              %s625 = ssub.s32 4, 1
              loop: start=0, step=1, limit=1
              $region98: #{_lambda_.3} parent=96 // loop_pre_header
                _
              $region99: #{_lambda_.3} parent=96 // loop_header
                %s627 = sphi 0, %s631
                %p628 = scmp.ge.s32.totalorder %s627, 1
                %s632 = sphi %s617, %s617
                %s633 = sphi %s611, %s611
              $region100: #{_lambda_.3} parent=96 // loop_header_branch
                %630 = sbr.rel (%p628) target = $region104
              $region101: #{_lambda_.3} parent=96 // loop_body
                %v634 = vld [vmem:[%s632] sm:%s625]
                %635 = vst [vmem:[%s633] sm:%s625] %v634
                %v636 = vld [vmem:[%s632 + $0x80] sm:%s625]
                %637 = vst [vmem:[%s633 + $0x2] sm:%s625] %v636
              $region102: #{_lambda_.3} parent=96 // loop_footer
                %s631 = sadd.s32 1, %s627
              $region103: #{_lambda_.3} parent=96 // loop_footer_branch
                %626 = sbr.rel target = $region99
              $region104: #{_lambda_.3} parent=96 // loop_exit
                _
            $region97: #{_lambda_.3} parent=88 // pred_fallthru
              _
          $region89: #{_lambda_.3} parent=84 // pred_fallthru
            _
          %654 = vnop
        $region85: #{_lambda_.3} parent=39 // pred_fallthru
          _
        // Predicated region
        $region116: #{_lambda_.3} parent=39 // pred_check
          %p655 = pneg %p107
        $region117: #{_lambda_.3} parent=39 // pred_check_branch
          %657 = sbr.rel (%p655) target = $region119
        $region118: #{_lambda_.3} parent=39 // pred_region
          %s658 = sand.u32 %s97, 1
          %s659 = sand.u32 %s97, 1
          %s660 = smul.addr %s659, 4
          %s661 = scalar_lea.vmem [#allocation6], %s660
          %s662 = smul.u32 %s19, 32
          %s663 = sadd.s32 %s662, 32
          %p664 = scmp.lt.s32.totalorder %s663, 63
          %s665 = scalar_select %p664, %s663, 63
          %s666 = smul.addr %s665, 2
          %s667 = scalar_lea.vmem %s2, %s666
          // Predicated region
          $region120: #{_lambda_.3} parent=118 // pred_check
            _
          $region121: #{_lambda_.3} parent=118 // pred_check_branch
            %669 = sbr.rel (0) target = $region123
          $region122: #{_lambda_.3} parent=118 // pred_region
            // Predicated region
            $region124: #{_lambda_.3} parent=122 // pred_check
              _
            $region125: #{_lambda_.3} parent=122 // pred_check_branch
              %671 = sbr.rel target = $region127
            $region126: #{_lambda_.3} parent=122 // pred_region
              // Predicated region
              $region139: #{_lambda_.3} parent=126 // pred_check
                _
              $region140: #{_lambda_.3} parent=126 // pred_check_branch
                %689 = sbr.rel (0) target = $region142
              $region141: #{_lambda_.3} parent=126 // pred_region
                %s691 = ssub.s32 4, 1
                loop: start=0, step=1, limit=1
                $region143: #{_lambda_.3} parent=141 // loop_pre_header
                  _
                $region144: #{_lambda_.3} parent=141 // loop_header
                  %s693 = sphi 0, %s697
                  %p694 = scmp.ge.s32.totalorder %s693, 1
                  %s698 = sphi %s667, %s667
                  %s699 = sphi %s661, %s661
                $region145: #{_lambda_.3} parent=141 // loop_header_branch
                  %696 = sbr.rel (%p694) target = $region149
                $region146: #{_lambda_.3} parent=141 // loop_body
                  %v700 = vld [vmem:[%s698] sm:%s691]
                  %701 = vst [vmem:[%s699] sm:%s691] %v700
                  %v702 = vld [vmem:[%s698 + $0x80] sm:%s691]
                  %703 = vst [vmem:[%s699 + $0x2] sm:%s691] %v702
                $region147: #{_lambda_.3} parent=141 // loop_footer
                  %s697 = sadd.s32 1, %s693
                $region148: #{_lambda_.3} parent=141 // loop_footer_branch
                  %692 = sbr.rel target = $region144
                $region149: #{_lambda_.3} parent=141 // loop_exit
                  _
              $region142: #{_lambda_.3} parent=126 // pred_fallthru
                _
            $region127: #{_lambda_.3} parent=122 // pred_fallthru
              _
            // Predicated region
            $region128: #{_lambda_.3} parent=122 // pred_check
              _
            $region129: #{_lambda_.3} parent=122 // pred_check_branch
              %673 = sbr.rel (0) target = $region131
            $region130: #{_lambda_.3} parent=122 // pred_region
              %s675 = ssub.s32 4, 1
              loop: start=0, step=1, limit=1
              $region132: #{_lambda_.3} parent=130 // loop_pre_header
                _
              $region133: #{_lambda_.3} parent=130 // loop_header
                %s677 = sphi 0, %s681
                %p678 = scmp.ge.s32.totalorder %s677, 1
                %s682 = sphi %s667, %s667
                %s683 = sphi %s661, %s661
              $region134: #{_lambda_.3} parent=130 // loop_header_branch
                %680 = sbr.rel (%p678) target = $region138
              $region135: #{_lambda_.3} parent=130 // loop_body
                %v684 = vld [vmem:[%s682] sm:%s675]
                %685 = vst [vmem:[%s683] sm:%s675] %v684
                %v686 = vld [vmem:[%s682 + $0x80] sm:%s675]
                %687 = vst [vmem:[%s683 + $0x2] sm:%s675] %v686
              $region136: #{_lambda_.3} parent=130 // loop_footer
                %s681 = sadd.s32 1, %s677
              $region137: #{_lambda_.3} parent=130 // loop_footer_branch
                %676 = sbr.rel target = $region133
              $region138: #{_lambda_.3} parent=130 // loop_exit
                _
            $region131: #{_lambda_.3} parent=122 // pred_fallthru
              _
          $region123: #{_lambda_.3} parent=118 // pred_fallthru
            _
          %704 = vnop
        $region119: #{_lambda_.3} parent=39 // pred_fallthru
          _
      $region40: #{_lambda_.3} parent=5 // pred_fallthru
        _
      %p705 = scmp.le.s32.totalorder 1, %s19
      %p706 = scmp.lt.s32.totalorder %s19, 3
      %p707 = pnand %p705, %p706
      %p708 = pneg %p707
      // Predicated region
      $region150: #{_lambda_.3} parent=5 // pred_check
        _
      $region151: #{_lambda_.3} parent=5 // pred_check_branch
        %710 = sbr.rel (%p707) target = $region153
      $region152: #{_lambda_.3} parent=5 // pred_region
        %s711 = ssub.s32 %s19, 1
        %s712 = sand.u32 %s32, 1
        %s713 = sand.u32 %s32, 1
        %s714 = smul.addr %s713, 128
        %s715 = scalar_lea.vmem [#allocation4], %s714
        // Predicated region
        $region154: #{_lambda_.3} parent=152 // pred_check
          %p716 = pneg %p45
        $region155: #{_lambda_.3} parent=152 // pred_check_branch
          %718 = sbr.rel (%p716) target = $region157
        $region156: #{_lambda_.3} parent=152 // pred_region
          _
        $region157: #{_lambda_.3} parent=152 // pred_fallthru
          _
        %s719 = sand.u32 %s66, 1
        %s720 = sand.u32 %s66, 1
        %s721 = smul.addr %s720, 4
        %s722 = scalar_lea.vmem [#allocation5], %s721
        // Predicated region
        $region158: #{_lambda_.3} parent=152 // pred_check
          %p723 = pneg %p79
        $region159: #{_lambda_.3} parent=152 // pred_check_branch
          %725 = sbr.rel (%p723) target = $region161
        $region160: #{_lambda_.3} parent=152 // pred_region
          _
        $region161: #{_lambda_.3} parent=152 // pred_fallthru
          _
        %s726 = sand.u32 %s100, 1
        %s727 = sand.u32 %s100, 1
        %s728 = smul.addr %s727, 4
        %s729 = scalar_lea.vmem [#allocation6], %s728
        // Predicated region
        $region162: #{_lambda_.3} parent=152 // pred_check
          %p730 = pneg %p113
        $region163: #{_lambda_.3} parent=152 // pred_check_branch
          %732 = sbr.rel (%p730) target = $region165
        $region164: #{_lambda_.3} parent=152 // pred_region
          _
        $region165: #{_lambda_.3} parent=152 // pred_fallthru
          _
        %s733 = sand.u32 %s32, 1
        %s734 = sand.u32 %s32, 1
        %s735 = smul.addr %s734, 128
        %s736 = scalar_lea.vmem [#allocation4], %s735
        %p737 = pneg %p45
        %p738 = pneg %p42
        %s739 = sand.u32 %s66, 1
        %s740 = sand.u32 %s66, 1
        %s741 = smul.addr %s740, 4
        %s742 = scalar_lea.vmem [#allocation5], %s741
        %p743 = pneg %p79
        %p744 = pneg %p76
        %s745 = sand.u32 %s100, 1
        %s746 = sand.u32 %s100, 1
        %s747 = smul.addr %s746, 4
        %s748 = scalar_lea.vmem [#allocation6], %s747
        %p749 = pneg %p113
        %p750 = pneg %p110
        %p751 = pneg %p134
        %p752 = pneg %p131
        %p753 = pneg %p155
        %p754 = pneg %p152
        %p755 = pneg %p176
        %p756 = pneg %p173
        %p757 = pneg %p197
        %p758 = pneg %p194
        %p759 = pneg %p218
        %p760 = pneg %p215
        %p761 = pneg %p239
        %p762 = pneg %p236
        %p763 = pneg %p265
        %p764 = pneg %p262
        %s765 = smul.u32 16, %s24
        %p766 = scmp.lt.s32.totalorder %s765, 31
        %s767 = scalar_select %p766, %s765, 31
        %s768 = smul.addr %s767, 2
        %s769 = scalar_lea.vmem %s9, %s768
        %s770 = smul.u32 32, %s24
        %s771 = smul.u32 %s24, 32
        %s772 = ssub.s32 %s771, 1
        %p773 = scmp.gt.s32.totalorder %s772, 0
        %s774 = scalar_select %p773, %s772, 0
        %s775 = smul.u32 %s24, 32
        %s776 = sadd.s32 %s775, 32
        %p777 = scmp.lt.s32.totalorder %s776, 63
        %s778 = scalar_select %p777, %s776, 63
        %s779 = smul.u32 16, %s24
        %p780 = scmp.lt.s32.totalorder %s779, 31
        %s781 = scalar_select %p780, %s779, 31
        %s782 = smul.addr %s781, 2
        %s783 = scalar_lea.vmem %s9, %s782
        %s784 = smul.u32 16, %s24
        %s785 = smul.u32 %s24, 32
        %s786 = ssub.s32 %s785, 1
        %p787 = scmp.ge.s32.totalorder %s786, 0
        %s788 = scalar_select %p787, 1, 0
        %s789 = scvt.s32.f32 %s788
        %v790 = vld [vmem:[%s722] sm:$0x3]
        %v791 = vld [vmem:[%s722 + $0x2] sm:$0x3]
        %v792 = vld [vmem:[#allocation2] sm:$0x1]
        %v794 = vlaneseq
        %v795 = vshrl.u32 %v794, 7
        %v796 = vsub.s32 0, %v795
        %v797 = vrot.slane %v792, %v796
        %798 = vset.pattern.permute.xlu0 0
        %799 = vperm.xlu0 %798, %v797
        %v800 = vpop.permute.xlu0 %799
        %v802 = vmul.f32 %v790, %v800
        %v803 = vmul.f32 %v791, %v800
        %v804 = vld [vmem:[#allocation3] sm:$0x1]
        %v806 = vlaneseq
        %v807 = vshrl.u32 %v806, 7
        %v808 = vsub.s32 0, %v807
        %v809 = vrot.slane %v804, %v808
        %810 = vset.pattern.permute.xlu0 0
        %811 = vperm.xlu0 %810, %v809
        %v812 = vpop.permute.xlu0 %811
        %v814 = vadd.f32 %v802, %v812
        %v815 = vadd.f32 %v803, %v812
        %v816 = vstv %s789
        %v817 = vmul.f32 %v814, %v816
        %v818 = vmul.f32 %v815, %v816
        %v819 = vld [vmem:[%s715] sm:$0x3]
        %v820 = vld [vmem:[%s715 + $0x2] sm:$0x3]
        %v821 = vld [vmem:[%s715 + $0x4] sm:$0x3]
        %v822 = vld [vmem:[%s715 + $0x6] sm:$0x3]
        %v823 = vld [vmem:[%s715 + $0x8] sm:$0x3]
        %v824 = vld [vmem:[%s715 + $0xa] sm:$0x3]
        %v825 = vld [vmem:[%s715 + $0xc] sm:$0x3]
        %v826 = vld [vmem:[%s715 + $0xe] sm:$0x3]
        %v827 = vld [vmem:[%s715 + $0x10] sm:$0x3]
        %v828 = vld [vmem:[%s715 + $0x12] sm:$0x3]
        %v829 = vld [vmem:[%s715 + $0x14] sm:$0x3]
        %v830 = vld [vmem:[%s715 + $0x16] sm:$0x3]
        %v831 = vld [vmem:[%s715 + $0x18] sm:$0x3]
        %v832 = vld [vmem:[%s715 + $0x1a] sm:$0x3]
        %v833 = vld [vmem:[%s715 + $0x1c] sm:$0x3]
        %v834 = vld [vmem:[%s715 + $0x1e] sm:$0x3]
        %v835 = vld [vmem:[%s715 + $0x20] sm:$0x3]
        %v836 = vld [vmem:[%s715 + $0x22] sm:$0x3]
        %v837 = vld [vmem:[%s715 + $0x24] sm:$0x3]
        %v838 = vld [vmem:[%s715 + $0x26] sm:$0x3]
        %v839 = vld [vmem:[%s715 + $0x28] sm:$0x3]
        %v840 = vld [vmem:[%s715 + $0x2a] sm:$0x3]
        %v841 = vld [vmem:[%s715 + $0x2c] sm:$0x3]
        %v842 = vld [vmem:[%s715 + $0x2e] sm:$0x3]
        %v843 = vld [vmem:[%s715 + $0x30] sm:$0x3]
        %v844 = vld [vmem:[%s715 + $0x32] sm:$0x3]
        %v845 = vld [vmem:[%s715 + $0x34] sm:$0x3]
        %v846 = vld [vmem:[%s715 + $0x36] sm:$0x3]
        %v847 = vld [vmem:[%s715 + $0x38] sm:$0x3]
        %v848 = vld [vmem:[%s715 + $0x3a] sm:$0x3]
        %v849 = vld [vmem:[%s715 + $0x3c] sm:$0x3]
        %v850 = vld [vmem:[%s715 + $0x3e] sm:$0x3]
        %v851 = vld [vmem:[%s715 + $0x40] sm:$0x3]
        %v852 = vld [vmem:[%s715 + $0x42] sm:$0x3]
        %v853 = vld [vmem:[%s715 + $0x44] sm:$0x3]
        %v854 = vld [vmem:[%s715 + $0x46] sm:$0x3]
        %v855 = vld [vmem:[%s715 + $0x48] sm:$0x3]
        %v856 = vld [vmem:[%s715 + $0x4a] sm:$0x3]
        %v857 = vld [vmem:[%s715 + $0x4c] sm:$0x3]
        %v858 = vld [vmem:[%s715 + $0x4e] sm:$0x3]
        %v859 = vld [vmem:[%s715 + $0x50] sm:$0x3]
        %v860 = vld [vmem:[%s715 + $0x52] sm:$0x3]
        %v861 = vld [vmem:[%s715 + $0x54] sm:$0x3]
        %v862 = vld [vmem:[%s715 + $0x56] sm:$0x3]
        %v863 = vld [vmem:[%s715 + $0x58] sm:$0x3]
        %v864 = vld [vmem:[%s715 + $0x5a] sm:$0x3]
        %v865 = vld [vmem:[%s715 + $0x5c] sm:$0x3]
        %v866 = vld [vmem:[%s715 + $0x5e] sm:$0x3]
        %v867 = vld [vmem:[%s715 + $0x60] sm:$0x3]
        %v868 = vld [vmem:[%s715 + $0x62] sm:$0x3]
        %v869 = vld [vmem:[%s715 + $0x64] sm:$0x3]
        %v870 = vld [vmem:[%s715 + $0x66] sm:$0x3]
        %v871 = vld [vmem:[%s715 + $0x68] sm:$0x3]
        %v872 = vld [vmem:[%s715 + $0x6a] sm:$0x3]
        %v873 = vld [vmem:[%s715 + $0x6c] sm:$0x3]
        %v874 = vld [vmem:[%s715 + $0x6e] sm:$0x3]
        %v875 = vld [vmem:[%s715 + $0x70] sm:$0x3]
        %v876 = vld [vmem:[%s715 + $0x72] sm:$0x3]
        %v877 = vld [vmem:[%s715 + $0x74] sm:$0x3]
        %v878 = vld [vmem:[%s715 + $0x76] sm:$0x3]
        %v879 = vld [vmem:[%s715 + $0x78] sm:$0x3]
        %v880 = vld [vmem:[%s715 + $0x7a] sm:$0x3]
        %v881 = vld [vmem:[%s715 + $0x7c] sm:$0x3]
        %v882 = vld [vmem:[%s715 + $0x7e] sm:$0x3]
        %v883 = vmul.f32 %v819, %v800
        %v884 = vmul.f32 %v820, %v800
        %v885 = vmul.f32 %v821, %v800
        %v886 = vmul.f32 %v822, %v800
        %v887 = vmul.f32 %v823, %v800
        %v888 = vmul.f32 %v824, %v800
        %v889 = vmul.f32 %v825, %v800
        %v890 = vmul.f32 %v826, %v800
        %v891 = vmul.f32 %v827, %v800
        %v892 = vmul.f32 %v828, %v800
        %v893 = vmul.f32 %v829, %v800
        %v894 = vmul.f32 %v830, %v800
        %v895 = vmul.f32 %v831, %v800
        %v896 = vmul.f32 %v832, %v800
        %v897 = vmul.f32 %v833, %v800
        %v898 = vmul.f32 %v834, %v800
        %v899 = vmul.f32 %v835, %v800
        %v900 = vmul.f32 %v836, %v800
        %v901 = vmul.f32 %v837, %v800
        %v902 = vmul.f32 %v838, %v800
        %v903 = vmul.f32 %v839, %v800
        %v904 = vmul.f32 %v840, %v800
        %v905 = vmul.f32 %v841, %v800
        %v906 = vmul.f32 %v842, %v800
        %v907 = vmul.f32 %v843, %v800
        %v908 = vmul.f32 %v844, %v800
        %v909 = vmul.f32 %v845, %v800
        %v910 = vmul.f32 %v846, %v800
        %v911 = vmul.f32 %v847, %v800
        %v912 = vmul.f32 %v848, %v800
        %v913 = vmul.f32 %v849, %v800
        %v914 = vmul.f32 %v850, %v800
        %v915 = vmul.f32 %v851, %v800
        %v916 = vmul.f32 %v852, %v800
        %v917 = vmul.f32 %v853, %v800
        %v918 = vmul.f32 %v854, %v800
        %v919 = vmul.f32 %v855, %v800
        %v920 = vmul.f32 %v856, %v800
        %v921 = vmul.f32 %v857, %v800
        %v922 = vmul.f32 %v858, %v800
        %v923 = vmul.f32 %v859, %v800
        %v924 = vmul.f32 %v860, %v800
        %v925 = vmul.f32 %v861, %v800
        %v926 = vmul.f32 %v862, %v800
        %v927 = vmul.f32 %v863, %v800
        %v928 = vmul.f32 %v864, %v800
        %v929 = vmul.f32 %v865, %v800
        %v930 = vmul.f32 %v866, %v800
        %v931 = vmul.f32 %v867, %v800
        %v932 = vmul.f32 %v868, %v800
        %v933 = vmul.f32 %v869, %v800
        %v934 = vmul.f32 %v870, %v800
        %v935 = vmul.f32 %v871, %v800
        %v936 = vmul.f32 %v872, %v800
        %v937 = vmul.f32 %v873, %v800
        %v938 = vmul.f32 %v874, %v800
        %v939 = vmul.f32 %v875, %v800
        %v940 = vmul.f32 %v876, %v800
        %v941 = vmul.f32 %v877, %v800
        %v942 = vmul.f32 %v878, %v800
        %v943 = vmul.f32 %v879, %v800
        %v944 = vmul.f32 %v880, %v800
        %v945 = vmul.f32 %v881, %v800
        %v946 = vmul.f32 %v882, %v800
        %v947 = vadd.f32 %v883, %v812
        %v948 = vadd.f32 %v884, %v812
        %v949 = vadd.f32 %v885, %v812
        %v950 = vadd.f32 %v886, %v812
        %v951 = vadd.f32 %v887, %v812
        %v952 = vadd.f32 %v888, %v812
        %v953 = vadd.f32 %v889, %v812
        %v954 = vadd.f32 %v890, %v812
        %v955 = vadd.f32 %v891, %v812
        %v956 = vadd.f32 %v892, %v812
        %v957 = vadd.f32 %v893, %v812
        %v958 = vadd.f32 %v894, %v812
        %v959 = vadd.f32 %v895, %v812
        %v960 = vadd.f32 %v896, %v812
        %v961 = vadd.f32 %v897, %v812
        %v962 = vadd.f32 %v898, %v812
        %v963 = vadd.f32 %v899, %v812
        %v964 = vadd.f32 %v900, %v812
        %v965 = vadd.f32 %v901, %v812
        %v966 = vadd.f32 %v902, %v812
        %v967 = vadd.f32 %v903, %v812
        %v968 = vadd.f32 %v904, %v812
        %v969 = vadd.f32 %v905, %v812
        %v970 = vadd.f32 %v906, %v812
        %v971 = vadd.f32 %v907, %v812
        %v972 = vadd.f32 %v908, %v812
        %v973 = vadd.f32 %v909, %v812
        %v974 = vadd.f32 %v910, %v812
        %v975 = vadd.f32 %v911, %v812
        %v976 = vadd.f32 %v912, %v812
        %v977 = vadd.f32 %v913, %v812
        %v978 = vadd.f32 %v914, %v812
        %v979 = vadd.f32 %v915, %v812
        %v980 = vadd.f32 %v916, %v812
        %v981 = vadd.f32 %v917, %v812
        %v982 = vadd.f32 %v918, %v812
        %v983 = vadd.f32 %v919, %v812
        %v984 = vadd.f32 %v920, %v812
        %v985 = vadd.f32 %v921, %v812
        %v986 = vadd.f32 %v922, %v812
        %v987 = vadd.f32 %v923, %v812
        %v988 = vadd.f32 %v924, %v812
        %v989 = vadd.f32 %v925, %v812
        %v990 = vadd.f32 %v926, %v812
        %v991 = vadd.f32 %v927, %v812
        %v992 = vadd.f32 %v928, %v812
        %v993 = vadd.f32 %v929, %v812
        %v994 = vadd.f32 %v930, %v812
        %v995 = vadd.f32 %v931, %v812
        %v996 = vadd.f32 %v932, %v812
        %v997 = vadd.f32 %v933, %v812
        %v998 = vadd.f32 %v934, %v812
        %v999 = vadd.f32 %v935, %v812
        %v1000 = vadd.f32 %v936, %v812
        %v1001 = vadd.f32 %v937, %v812
        %v1002 = vadd.f32 %v938, %v812
        %v1003 = vadd.f32 %v939, %v812
        %v1004 = vadd.f32 %v940, %v812
        %v1005 = vadd.f32 %v941, %v812
        %v1006 = vadd.f32 %v942, %v812
        %v1007 = vadd.f32 %v943, %v812
        %v1008 = vadd.f32 %v944, %v812
        %v1009 = vadd.f32 %v945, %v812
        %v1010 = vadd.f32 %v946, %v812
        %s1011 = sadd.s32 %s785, 32
        %p1012 = scmp.lt.s32.totalorder %s1011, 64
        %s1013 = scalar_select %p1012, 1, 0
        %s1014 = scvt.s32.f32 %s1013
        %v1015 = vld [vmem:[%s729] sm:$0x3]
        %v1016 = vld [vmem:[%s729 + $0x2] sm:$0x3]
        %v1017 = vmul.f32 %v1015, %v800
        %v1018 = vmul.f32 %v1016, %v800
        %v1019 = vadd.f32 %v1017, %v812
        %v1020 = vadd.f32 %v1018, %v812
        %v1021 = vstv %s1014
        %v1022 = vmul.f32 %v1019, %v1021
        %v1023 = vmul.f32 %v1020, %v1021
        %1057 = vrot.lane.b32.xlu0 0.0, 8
        %v1058 = vpop.permute.xlu0 %1057
        %1059 = vrot.lane.b32.xlu0 %v947, 8
        %v1060 = vpop.permute.xlu0 %1059
        %1061 = vrot.lane.b32.xlu0 %v948, 8
        %v1062 = vpop.permute.xlu0 %1061
        %1063 = vrot.lane.b32.xlu0 %v949, 8
        %v1064 = vpop.permute.xlu0 %1063
        %1065 = vrot.lane.b32.xlu0 %v950, 8
        %v1066 = vpop.permute.xlu0 %1065
        %1067 = vrot.lane.b32.xlu0 %v951, 8
        %v1068 = vpop.permute.xlu0 %1067
        %1069 = vrot.lane.b32.xlu0 %v952, 8
        %v1070 = vpop.permute.xlu0 %1069
        %1071 = vrot.lane.b32.xlu0 %v953, 8
        %v1072 = vpop.permute.xlu0 %1071
        %1073 = vrot.lane.b32.xlu0 %v954, 8
        %v1074 = vpop.permute.xlu0 %1073
        %1075 = vrot.lane.b32.xlu0 %v955, 8
        %v1076 = vpop.permute.xlu0 %1075
        %1077 = vrot.lane.b32.xlu0 %v956, 8
        %v1078 = vpop.permute.xlu0 %1077
        %1079 = vrot.lane.b32.xlu0 %v957, 8
        %v1080 = vpop.permute.xlu0 %1079
        %1081 = vrot.lane.b32.xlu0 %v958, 8
        %v1082 = vpop.permute.xlu0 %1081
        %1083 = vrot.lane.b32.xlu0 %v959, 8
        %v1084 = vpop.permute.xlu0 %1083
        %1085 = vrot.lane.b32.xlu0 %v960, 8
        %v1086 = vpop.permute.xlu0 %1085
        %1087 = vrot.lane.b32.xlu0 %v961, 8
        %v1088 = vpop.permute.xlu0 %1087
        %1089 = vrot.lane.b32.xlu0 %v962, 8
        %v1090 = vpop.permute.xlu0 %1089
        %1091 = vrot.lane.b32.xlu0 %v963, 8
        %v1092 = vpop.permute.xlu0 %1091
        %1093 = vrot.lane.b32.xlu0 %v964, 8
        %v1094 = vpop.permute.xlu0 %1093
        %1095 = vrot.lane.b32.xlu0 %v965, 8
        %v1096 = vpop.permute.xlu0 %1095
        %1097 = vrot.lane.b32.xlu0 %v966, 8
        %v1098 = vpop.permute.xlu0 %1097
        %1099 = vrot.lane.b32.xlu0 %v967, 8
        %v1100 = vpop.permute.xlu0 %1099
        %1101 = vrot.lane.b32.xlu0 %v968, 8
        %v1102 = vpop.permute.xlu0 %1101
        %1103 = vrot.lane.b32.xlu0 %v969, 8
        %v1104 = vpop.permute.xlu0 %1103
        %1105 = vrot.lane.b32.xlu0 %v970, 8
        %v1106 = vpop.permute.xlu0 %1105
        %1107 = vrot.lane.b32.xlu0 %v971, 8
        %v1108 = vpop.permute.xlu0 %1107
        %1109 = vrot.lane.b32.xlu0 %v972, 8
        %v1110 = vpop.permute.xlu0 %1109
        %1111 = vrot.lane.b32.xlu0 %v973, 8
        %v1112 = vpop.permute.xlu0 %1111
        %1113 = vrot.lane.b32.xlu0 %v974, 8
        %v1114 = vpop.permute.xlu0 %1113
        %1115 = vrot.lane.b32.xlu0 %v975, 8
        %v1116 = vpop.permute.xlu0 %1115
        %1117 = vrot.lane.b32.xlu0 %v976, 8
        %v1118 = vpop.permute.xlu0 %1117
        %1119 = vrot.lane.b32.xlu0 %v977, 8
        %v1120 = vpop.permute.xlu0 %1119
        %1121 = vrot.lane.b32.xlu0 %v978, 8
        %v1122 = vpop.permute.xlu0 %1121
        %1157 = vrot.lane.b32.xlu0 0.0, 16
        %v1158 = vpop.permute.xlu0 %1157
        %1159 = vrot.lane.b32.xlu0 %v948, 16
        %v1160 = vpop.permute.xlu0 %1159
        %1161 = vrot.lane.b32.xlu0 %v949, 16
        %v1162 = vpop.permute.xlu0 %1161
        %1163 = vrot.lane.b32.xlu0 %v950, 16
        %v1164 = vpop.permute.xlu0 %1163
        %1165 = vrot.lane.b32.xlu0 %v951, 16
        %v1166 = vpop.permute.xlu0 %1165
        %1167 = vrot.lane.b32.xlu0 %v952, 16
        %v1168 = vpop.permute.xlu0 %1167
        %1169 = vrot.lane.b32.xlu0 %v953, 16
        %v1170 = vpop.permute.xlu0 %1169
        %1171 = vrot.lane.b32.xlu0 %v954, 16
        %v1172 = vpop.permute.xlu0 %1171
        %1173 = vrot.lane.b32.xlu0 %v955, 16
        %v1174 = vpop.permute.xlu0 %1173
        %1175 = vrot.lane.b32.xlu0 %v956, 16
        %v1176 = vpop.permute.xlu0 %1175
        %1177 = vrot.lane.b32.xlu0 %v957, 16
        %v1178 = vpop.permute.xlu0 %1177
        %1179 = vrot.lane.b32.xlu0 %v958, 16
        %v1180 = vpop.permute.xlu0 %1179
        %1181 = vrot.lane.b32.xlu0 %v959, 16
        %v1182 = vpop.permute.xlu0 %1181
        %1183 = vrot.lane.b32.xlu0 %v960, 16
        %v1184 = vpop.permute.xlu0 %1183
        %1185 = vrot.lane.b32.xlu0 %v961, 16
        %v1186 = vpop.permute.xlu0 %1185
        %1187 = vrot.lane.b32.xlu0 %v962, 16
        %v1188 = vpop.permute.xlu0 %1187
        %1189 = vrot.lane.b32.xlu0 %v963, 16
        %v1190 = vpop.permute.xlu0 %1189
        %1191 = vrot.lane.b32.xlu0 %v964, 16
        %v1192 = vpop.permute.xlu0 %1191
        %1193 = vrot.lane.b32.xlu0 %v965, 16
        %v1194 = vpop.permute.xlu0 %1193
        %1195 = vrot.lane.b32.xlu0 %v966, 16
        %v1196 = vpop.permute.xlu0 %1195
        %1197 = vrot.lane.b32.xlu0 %v967, 16
        %v1198 = vpop.permute.xlu0 %1197
        %1199 = vrot.lane.b32.xlu0 %v968, 16
        %v1200 = vpop.permute.xlu0 %1199
        %1201 = vrot.lane.b32.xlu0 %v969, 16
        %v1202 = vpop.permute.xlu0 %1201
        %1203 = vrot.lane.b32.xlu0 %v970, 16
        %v1204 = vpop.permute.xlu0 %1203
        %1205 = vrot.lane.b32.xlu0 %v971, 16
        %v1206 = vpop.permute.xlu0 %1205
        %1207 = vrot.lane.b32.xlu0 %v972, 16
        %v1208 = vpop.permute.xlu0 %1207
        %1209 = vrot.lane.b32.xlu0 %v973, 16
        %v1210 = vpop.permute.xlu0 %1209
        %1211 = vrot.lane.b32.xlu0 %v974, 16
        %v1212 = vpop.permute.xlu0 %1211
        %1213 = vrot.lane.b32.xlu0 %v975, 16
        %v1214 = vpop.permute.xlu0 %1213
        %1215 = vrot.lane.b32.xlu0 %v976, 16
        %v1216 = vpop.permute.xlu0 %1215
        %1217 = vrot.lane.b32.xlu0 %v977, 16
        %v1218 = vpop.permute.xlu0 %1217
        %1219 = vrot.lane.b32.xlu0 %v978, 16
        %v1220 = vpop.permute.xlu0 %1219
        %1221 = vrot.lane.b32.xlu0 %v1022, 16
        %v1222 = vpop.permute.xlu0 %1221
        %1289 = vrot.lane.b32.xlu0 %v817, 24
        %v1290 = vpop.permute.xlu0 %1289
        %1291 = vrot.lane.b32.xlu0 %v947, 24
        %v1292 = vpop.permute.xlu0 %1291
        %1293 = vrot.lane.b32.xlu0 %v948, 24
        %v1294 = vpop.permute.xlu0 %1293
        %1295 = vrot.lane.b32.xlu0 %v949, 24
        %v1296 = vpop.permute.xlu0 %1295
        %1297 = vrot.lane.b32.xlu0 %v950, 24
        %v1298 = vpop.permute.xlu0 %1297
        %1299 = vrot.lane.b32.xlu0 %v951, 24
        %v1300 = vpop.permute.xlu0 %1299
        %1301 = vrot.lane.b32.xlu0 %v952, 24
        %v1302 = vpop.permute.xlu0 %1301
        %1303 = vrot.lane.b32.xlu0 %v953, 24
        %v1304 = vpop.permute.xlu0 %1303
        %1305 = vrot.lane.b32.xlu0 %v954, 24
        %v1306 = vpop.permute.xlu0 %1305
        %1307 = vrot.lane.b32.xlu0 %v955, 24
        %v1308 = vpop.permute.xlu0 %1307
        %1309 = vrot.lane.b32.xlu0 %v956, 24
        %v1310 = vpop.permute.xlu0 %1309
        %1311 = vrot.lane.b32.xlu0 %v957, 24
        %v1312 = vpop.permute.xlu0 %1311
        %1313 = vrot.lane.b32.xlu0 %v958, 24
        %v1314 = vpop.permute.xlu0 %1313
        %1315 = vrot.lane.b32.xlu0 %v959, 24
        %v1316 = vpop.permute.xlu0 %1315
        %1317 = vrot.lane.b32.xlu0 %v960, 24
        %v1318 = vpop.permute.xlu0 %1317
        %1319 = vrot.lane.b32.xlu0 %v961, 24
        %v1320 = vpop.permute.xlu0 %1319
        %1321 = vrot.lane.b32.xlu0 %v962, 24
        %v1322 = vpop.permute.xlu0 %1321
        %1323 = vrot.lane.b32.xlu0 %v963, 24
        %v1324 = vpop.permute.xlu0 %1323
        %1325 = vrot.lane.b32.xlu0 %v964, 24
        %v1326 = vpop.permute.xlu0 %1325
        %1327 = vrot.lane.b32.xlu0 %v965, 24
        %v1328 = vpop.permute.xlu0 %1327
        %1329 = vrot.lane.b32.xlu0 %v966, 24
        %v1330 = vpop.permute.xlu0 %1329
        %1331 = vrot.lane.b32.xlu0 %v967, 24
        %v1332 = vpop.permute.xlu0 %1331
        %1333 = vrot.lane.b32.xlu0 %v968, 24
        %v1334 = vpop.permute.xlu0 %1333
        %1335 = vrot.lane.b32.xlu0 %v969, 24
        %v1336 = vpop.permute.xlu0 %1335
        %1337 = vrot.lane.b32.xlu0 %v970, 24
        %v1338 = vpop.permute.xlu0 %1337
        %1339 = vrot.lane.b32.xlu0 %v971, 24
        %v1340 = vpop.permute.xlu0 %1339
        %1341 = vrot.lane.b32.xlu0 %v972, 24
        %v1342 = vpop.permute.xlu0 %1341
        %1343 = vrot.lane.b32.xlu0 %v973, 24
        %v1344 = vpop.permute.xlu0 %1343
        %1345 = vrot.lane.b32.xlu0 %v974, 24
        %v1346 = vpop.permute.xlu0 %1345
        %1347 = vrot.lane.b32.xlu0 %v975, 24
        %v1348 = vpop.permute.xlu0 %1347
        %1349 = vrot.lane.b32.xlu0 %v976, 24
        %v1350 = vpop.permute.xlu0 %1349
        %1351 = vrot.lane.b32.xlu0 %v977, 24
        %v1352 = vpop.permute.xlu0 %1351
        %1353 = vrot.lane.b32.xlu0 %v818, 24
        %v1354 = vpop.permute.xlu0 %1353
        %1355 = vrot.lane.b32.xlu0 %v979, 24
        %v1356 = vpop.permute.xlu0 %1355
        %1357 = vrot.lane.b32.xlu0 %v980, 24
        %v1358 = vpop.permute.xlu0 %1357
        %1359 = vrot.lane.b32.xlu0 %v981, 24
        %v1360 = vpop.permute.xlu0 %1359
        %1361 = vrot.lane.b32.xlu0 %v982, 24
        %v1362 = vpop.permute.xlu0 %1361
        %1363 = vrot.lane.b32.xlu0 %v983, 24
        %v1364 = vpop.permute.xlu0 %1363
        %1365 = vrot.lane.b32.xlu0 %v984, 24
        %v1366 = vpop.permute.xlu0 %1365
        %1367 = vrot.lane.b32.xlu0 %v985, 24
        %v1368 = vpop.permute.xlu0 %1367
        %1369 = vrot.lane.b32.xlu0 %v986, 24
        %v1370 = vpop.permute.xlu0 %1369
        %1371 = vrot.lane.b32.xlu0 %v987, 24
        %v1372 = vpop.permute.xlu0 %1371
        %1373 = vrot.lane.b32.xlu0 %v988, 24
        %v1374 = vpop.permute.xlu0 %1373
        %1375 = vrot.lane.b32.xlu0 %v989, 24
        %v1376 = vpop.permute.xlu0 %1375
        %1377 = vrot.lane.b32.xlu0 %v990, 24
        %v1378 = vpop.permute.xlu0 %1377
        %1379 = vrot.lane.b32.xlu0 %v991, 24
        %v1380 = vpop.permute.xlu0 %1379
        %1381 = vrot.lane.b32.xlu0 %v992, 24
        %v1382 = vpop.permute.xlu0 %1381
        %1383 = vrot.lane.b32.xlu0 %v993, 24
        %v1384 = vpop.permute.xlu0 %1383
        %1385 = vrot.lane.b32.xlu0 %v994, 24
        %v1386 = vpop.permute.xlu0 %1385
        %1387 = vrot.lane.b32.xlu0 %v995, 24
        %v1388 = vpop.permute.xlu0 %1387
        %1389 = vrot.lane.b32.xlu0 %v996, 24
        %v1390 = vpop.permute.xlu0 %1389
        %1391 = vrot.lane.b32.xlu0 %v997, 24
        %v1392 = vpop.permute.xlu0 %1391
        %1393 = vrot.lane.b32.xlu0 %v998, 24
        %v1394 = vpop.permute.xlu0 %1393
        %1395 = vrot.lane.b32.xlu0 %v999, 24
        %v1396 = vpop.permute.xlu0 %1395
        %1397 = vrot.lane.b32.xlu0 %v1000, 24
        %v1398 = vpop.permute.xlu0 %1397
        %1399 = vrot.lane.b32.xlu0 %v1001, 24
        %v1400 = vpop.permute.xlu0 %1399
        %1401 = vrot.lane.b32.xlu0 %v1002, 24
        %v1402 = vpop.permute.xlu0 %1401
        %1403 = vrot.lane.b32.xlu0 %v1003, 24
        %v1404 = vpop.permute.xlu0 %1403
        %1405 = vrot.lane.b32.xlu0 %v1004, 24
        %v1406 = vpop.permute.xlu0 %1405
        %1407 = vrot.lane.b32.xlu0 %v1005, 24
        %v1408 = vpop.permute.xlu0 %1407
        %1409 = vrot.lane.b32.xlu0 %v1006, 24
        %v1410 = vpop.permute.xlu0 %1409
        %1411 = vrot.lane.b32.xlu0 %v1007, 24
        %v1412 = vpop.permute.xlu0 %1411
        %1413 = vrot.lane.b32.xlu0 %v1008, 24
        %v1414 = vpop.permute.xlu0 %1413
        %1415 = vrot.lane.b32.xlu0 %v1009, 24
        %v1416 = vpop.permute.xlu0 %1415
        %1482 = vrot.lane.b32.xlu0 %v947, 32
        %v1483 = vpop.permute.xlu0 %1482
        %1484 = vrot.lane.b32.xlu0 %v948, 32
        %v1485 = vpop.permute.xlu0 %1484
        %1486 = vrot.lane.b32.xlu0 %v949, 32
        %v1487 = vpop.permute.xlu0 %1486
        %1488 = vrot.lane.b32.xlu0 %v950, 32
        %v1489 = vpop.permute.xlu0 %1488
        %1490 = vrot.lane.b32.xlu0 %v951, 32
        %v1491 = vpop.permute.xlu0 %1490
        %1492 = vrot.lane.b32.xlu0 %v952, 32
        %v1493 = vpop.permute.xlu0 %1492
        %1494 = vrot.lane.b32.xlu0 %v953, 32
        %v1495 = vpop.permute.xlu0 %1494
        %1496 = vrot.lane.b32.xlu0 %v954, 32
        %v1497 = vpop.permute.xlu0 %1496
        %1498 = vrot.lane.b32.xlu0 %v955, 32
        %v1499 = vpop.permute.xlu0 %1498
        %1500 = vrot.lane.b32.xlu0 %v956, 32
        %v1501 = vpop.permute.xlu0 %1500
        %1502 = vrot.lane.b32.xlu0 %v957, 32
        %v1503 = vpop.permute.xlu0 %1502
        %1504 = vrot.lane.b32.xlu0 %v958, 32
        %v1505 = vpop.permute.xlu0 %1504
        %1506 = vrot.lane.b32.xlu0 %v959, 32
        %v1507 = vpop.permute.xlu0 %1506
        %1508 = vrot.lane.b32.xlu0 %v960, 32
        %v1509 = vpop.permute.xlu0 %1508
        %1510 = vrot.lane.b32.xlu0 %v961, 32
        %v1511 = vpop.permute.xlu0 %1510
        %1512 = vrot.lane.b32.xlu0 %v962, 32
        %v1513 = vpop.permute.xlu0 %1512
        %1514 = vrot.lane.b32.xlu0 %v963, 32
        %v1515 = vpop.permute.xlu0 %1514
        %1516 = vrot.lane.b32.xlu0 %v964, 32
        %v1517 = vpop.permute.xlu0 %1516
        %1518 = vrot.lane.b32.xlu0 %v965, 32
        %v1519 = vpop.permute.xlu0 %1518
        %1520 = vrot.lane.b32.xlu0 %v966, 32
        %v1521 = vpop.permute.xlu0 %1520
        %1522 = vrot.lane.b32.xlu0 %v967, 32
        %v1523 = vpop.permute.xlu0 %1522
        %1524 = vrot.lane.b32.xlu0 %v968, 32
        %v1525 = vpop.permute.xlu0 %1524
        %1526 = vrot.lane.b32.xlu0 %v969, 32
        %v1527 = vpop.permute.xlu0 %1526
        %1528 = vrot.lane.b32.xlu0 %v970, 32
        %v1529 = vpop.permute.xlu0 %1528
        %1530 = vrot.lane.b32.xlu0 %v971, 32
        %v1531 = vpop.permute.xlu0 %1530
        %1532 = vrot.lane.b32.xlu0 %v972, 32
        %v1533 = vpop.permute.xlu0 %1532
        %1534 = vrot.lane.b32.xlu0 %v973, 32
        %v1535 = vpop.permute.xlu0 %1534
        %1536 = vrot.lane.b32.xlu0 %v974, 32
        %v1537 = vpop.permute.xlu0 %1536
        %1538 = vrot.lane.b32.xlu0 %v975, 32
        %v1539 = vpop.permute.xlu0 %1538
        %1540 = vrot.lane.b32.xlu0 %v976, 32
        %v1541 = vpop.permute.xlu0 %1540
        %1542 = vrot.lane.b32.xlu0 %v977, 32
        %v1543 = vpop.permute.xlu0 %1542
        %1544 = vrot.lane.b32.xlu0 %v978, 32
        %v1545 = vpop.permute.xlu0 %1544
        %1546 = vrot.lane.b32.xlu0 %v979, 32
        %v1547 = vpop.permute.xlu0 %1546
        %1548 = vrot.lane.b32.xlu0 %v980, 32
        %v1549 = vpop.permute.xlu0 %1548
        %1550 = vrot.lane.b32.xlu0 %v981, 32
        %v1551 = vpop.permute.xlu0 %1550
        %1552 = vrot.lane.b32.xlu0 %v982, 32
        %v1553 = vpop.permute.xlu0 %1552
        %1554 = vrot.lane.b32.xlu0 %v983, 32
        %v1555 = vpop.permute.xlu0 %1554
        %1556 = vrot.lane.b32.xlu0 %v984, 32
        %v1557 = vpop.permute.xlu0 %1556
        %1558 = vrot.lane.b32.xlu0 %v985, 32
        %v1559 = vpop.permute.xlu0 %1558
        %1560 = vrot.lane.b32.xlu0 %v986, 32
        %v1561 = vpop.permute.xlu0 %1560
        %1562 = vrot.lane.b32.xlu0 %v987, 32
        %v1563 = vpop.permute.xlu0 %1562
        %1564 = vrot.lane.b32.xlu0 %v988, 32
        %v1565 = vpop.permute.xlu0 %1564
        %1566 = vrot.lane.b32.xlu0 %v989, 32
        %v1567 = vpop.permute.xlu0 %1566
        %1568 = vrot.lane.b32.xlu0 %v990, 32
        %v1569 = vpop.permute.xlu0 %1568
        %1570 = vrot.lane.b32.xlu0 %v991, 32
        %v1571 = vpop.permute.xlu0 %1570
        %1572 = vrot.lane.b32.xlu0 %v992, 32
        %v1573 = vpop.permute.xlu0 %1572
        %1574 = vrot.lane.b32.xlu0 %v993, 32
        %v1575 = vpop.permute.xlu0 %1574
        %1576 = vrot.lane.b32.xlu0 %v994, 32
        %v1577 = vpop.permute.xlu0 %1576
        %1578 = vrot.lane.b32.xlu0 %v995, 32
        %v1579 = vpop.permute.xlu0 %1578
        %1580 = vrot.lane.b32.xlu0 %v996, 32
        %v1581 = vpop.permute.xlu0 %1580
        %1582 = vrot.lane.b32.xlu0 %v997, 32
        %v1583 = vpop.permute.xlu0 %1582
        %1584 = vrot.lane.b32.xlu0 %v998, 32
        %v1585 = vpop.permute.xlu0 %1584
        %1586 = vrot.lane.b32.xlu0 %v999, 32
        %v1587 = vpop.permute.xlu0 %1586
        %1588 = vrot.lane.b32.xlu0 %v1000, 32
        %v1589 = vpop.permute.xlu0 %1588
        %1590 = vrot.lane.b32.xlu0 %v1001, 32
        %v1591 = vpop.permute.xlu0 %1590
        %1592 = vrot.lane.b32.xlu0 %v1002, 32
        %v1593 = vpop.permute.xlu0 %1592
        %1594 = vrot.lane.b32.xlu0 %v1003, 32
        %v1595 = vpop.permute.xlu0 %1594
        %1596 = vrot.lane.b32.xlu0 %v1004, 32
        %v1597 = vpop.permute.xlu0 %1596
        %1598 = vrot.lane.b32.xlu0 %v1005, 32
        %v1599 = vpop.permute.xlu0 %1598
        %1600 = vrot.lane.b32.xlu0 %v1006, 32
        %v1601 = vpop.permute.xlu0 %1600
        %1602 = vrot.lane.b32.xlu0 %v1007, 32
        %v1603 = vpop.permute.xlu0 %1602
        %1604 = vrot.lane.b32.xlu0 %v1008, 32
        %v1605 = vpop.permute.xlu0 %1604
        %1606 = vrot.lane.b32.xlu0 %v1009, 32
        %v1607 = vpop.permute.xlu0 %1606
        %1608 = vrot.lane.b32.xlu0 %v1010, 32
        %v1609 = vpop.permute.xlu0 %1608
        %1675 = vrot.lane.b32.xlu0 %v948, 40
        %v1676 = vpop.permute.xlu0 %1675
        %1677 = vrot.lane.b32.xlu0 %v949, 40
        %v1678 = vpop.permute.xlu0 %1677
        %1679 = vrot.lane.b32.xlu0 %v950, 40
        %v1680 = vpop.permute.xlu0 %1679
        %1681 = vrot.lane.b32.xlu0 %v951, 40
        %v1682 = vpop.permute.xlu0 %1681
        %1683 = vrot.lane.b32.xlu0 %v952, 40
        %v1684 = vpop.permute.xlu0 %1683
        %1685 = vrot.lane.b32.xlu0 %v953, 40
        %v1686 = vpop.permute.xlu0 %1685
        %1687 = vrot.lane.b32.xlu0 %v954, 40
        %v1688 = vpop.permute.xlu0 %1687
        %1689 = vrot.lane.b32.xlu0 %v955, 40
        %v1690 = vpop.permute.xlu0 %1689
        %1691 = vrot.lane.b32.xlu0 %v956, 40
        %v1692 = vpop.permute.xlu0 %1691
        %1693 = vrot.lane.b32.xlu0 %v957, 40
        %v1694 = vpop.permute.xlu0 %1693
        %1695 = vrot.lane.b32.xlu0 %v958, 40
        %v1696 = vpop.permute.xlu0 %1695
        %1697 = vrot.lane.b32.xlu0 %v959, 40
        %v1698 = vpop.permute.xlu0 %1697
        %1699 = vrot.lane.b32.xlu0 %v960, 40
        %v1700 = vpop.permute.xlu0 %1699
        %1701 = vrot.lane.b32.xlu0 %v961, 40
        %v1702 = vpop.permute.xlu0 %1701
        %1703 = vrot.lane.b32.xlu0 %v962, 40
        %v1704 = vpop.permute.xlu0 %1703
        %1705 = vrot.lane.b32.xlu0 %v963, 40
        %v1706 = vpop.permute.xlu0 %1705
        %1707 = vrot.lane.b32.xlu0 %v964, 40
        %v1708 = vpop.permute.xlu0 %1707
        %1709 = vrot.lane.b32.xlu0 %v965, 40
        %v1710 = vpop.permute.xlu0 %1709
        %1711 = vrot.lane.b32.xlu0 %v966, 40
        %v1712 = vpop.permute.xlu0 %1711
        %1713 = vrot.lane.b32.xlu0 %v967, 40
        %v1714 = vpop.permute.xlu0 %1713
        %1715 = vrot.lane.b32.xlu0 %v968, 40
        %v1716 = vpop.permute.xlu0 %1715
        %1717 = vrot.lane.b32.xlu0 %v969, 40
        %v1718 = vpop.permute.xlu0 %1717
        %1719 = vrot.lane.b32.xlu0 %v970, 40
        %v1720 = vpop.permute.xlu0 %1719
        %1721 = vrot.lane.b32.xlu0 %v971, 40
        %v1722 = vpop.permute.xlu0 %1721
        %1723 = vrot.lane.b32.xlu0 %v972, 40
        %v1724 = vpop.permute.xlu0 %1723
        %1725 = vrot.lane.b32.xlu0 %v973, 40
        %v1726 = vpop.permute.xlu0 %1725
        %1727 = vrot.lane.b32.xlu0 %v974, 40
        %v1728 = vpop.permute.xlu0 %1727
        %1729 = vrot.lane.b32.xlu0 %v975, 40
        %v1730 = vpop.permute.xlu0 %1729
        %1731 = vrot.lane.b32.xlu0 %v976, 40
        %v1732 = vpop.permute.xlu0 %1731
        %1733 = vrot.lane.b32.xlu0 %v977, 40
        %v1734 = vpop.permute.xlu0 %1733
        %1735 = vrot.lane.b32.xlu0 %v978, 40
        %v1736 = vpop.permute.xlu0 %1735
        %1737 = vrot.lane.b32.xlu0 %v1022, 40
        %v1738 = vpop.permute.xlu0 %1737
        %1739 = vrot.lane.b32.xlu0 %v980, 40
        %v1740 = vpop.permute.xlu0 %1739
        %1741 = vrot.lane.b32.xlu0 %v981, 40
        %v1742 = vpop.permute.xlu0 %1741
        %1743 = vrot.lane.b32.xlu0 %v982, 40
        %v1744 = vpop.permute.xlu0 %1743
        %1745 = vrot.lane.b32.xlu0 %v983, 40
        %v1746 = vpop.permute.xlu0 %1745
        %1747 = vrot.lane.b32.xlu0 %v984, 40
        %v1748 = vpop.permute.xlu0 %1747
        %1749 = vrot.lane.b32.xlu0 %v985, 40
        %v1750 = vpop.permute.xlu0 %1749
        %1751 = vrot.lane.b32.xlu0 %v986, 40
        %v1752 = vpop.permute.xlu0 %1751
        %1753 = vrot.lane.b32.xlu0 %v987, 40
        %v1754 = vpop.permute.xlu0 %1753
        %1755 = vrot.lane.b32.xlu0 %v988, 40
        %v1756 = vpop.permute.xlu0 %1755
        %1757 = vrot.lane.b32.xlu0 %v989, 40
        %v1758 = vpop.permute.xlu0 %1757
        %1759 = vrot.lane.b32.xlu0 %v990, 40
        %v1760 = vpop.permute.xlu0 %1759
        %1761 = vrot.lane.b32.xlu0 %v991, 40
        %v1762 = vpop.permute.xlu0 %1761
        %1763 = vrot.lane.b32.xlu0 %v992, 40
        %v1764 = vpop.permute.xlu0 %1763
        %1765 = vrot.lane.b32.xlu0 %v993, 40
        %v1766 = vpop.permute.xlu0 %1765
        %1767 = vrot.lane.b32.xlu0 %v994, 40
        %v1768 = vpop.permute.xlu0 %1767
        %1769 = vrot.lane.b32.xlu0 %v995, 40
        %v1770 = vpop.permute.xlu0 %1769
        %1771 = vrot.lane.b32.xlu0 %v996, 40
        %v1772 = vpop.permute.xlu0 %1771
        %1773 = vrot.lane.b32.xlu0 %v997, 40
        %v1774 = vpop.permute.xlu0 %1773
        %1775 = vrot.lane.b32.xlu0 %v998, 40
        %v1776 = vpop.permute.xlu0 %1775
        %1777 = vrot.lane.b32.xlu0 %v999, 40
        %v1778 = vpop.permute.xlu0 %1777
        %1779 = vrot.lane.b32.xlu0 %v1000, 40
        %v1780 = vpop.permute.xlu0 %1779
        %1781 = vrot.lane.b32.xlu0 %v1001, 40
        %v1782 = vpop.permute.xlu0 %1781
        %1783 = vrot.lane.b32.xlu0 %v1002, 40
        %v1784 = vpop.permute.xlu0 %1783
        %1785 = vrot.lane.b32.xlu0 %v1003, 40
        %v1786 = vpop.permute.xlu0 %1785
        %1787 = vrot.lane.b32.xlu0 %v1004, 40
        %v1788 = vpop.permute.xlu0 %1787
        %1789 = vrot.lane.b32.xlu0 %v1005, 40
        %v1790 = vpop.permute.xlu0 %1789
        %1791 = vrot.lane.b32.xlu0 %v1006, 40
        %v1792 = vpop.permute.xlu0 %1791
        %1793 = vrot.lane.b32.xlu0 %v1007, 40
        %v1794 = vpop.permute.xlu0 %1793
        %1795 = vrot.lane.b32.xlu0 %v1008, 40
        %v1796 = vpop.permute.xlu0 %1795
        %1797 = vrot.lane.b32.xlu0 %v1009, 40
        %v1798 = vpop.permute.xlu0 %1797
        %1799 = vrot.lane.b32.xlu0 %v1010, 40
        %v1800 = vpop.permute.xlu0 %1799
        %1801 = vrot.lane.b32.xlu0 %v1023, 40
        %v1802 = vpop.permute.xlu0 %1801
        %1867 = vrot.lane.b32.xlu0 %v818, 48
        %v1868 = vpop.permute.xlu0 %1867
        %1869 = vrot.lane.b32.xlu0 %v979, 48
        %v1870 = vpop.permute.xlu0 %1869
        %1871 = vrot.lane.b32.xlu0 %v980, 48
        %v1872 = vpop.permute.xlu0 %1871
        %1873 = vrot.lane.b32.xlu0 %v981, 48
        %v1874 = vpop.permute.xlu0 %1873
        %1875 = vrot.lane.b32.xlu0 %v982, 48
        %v1876 = vpop.permute.xlu0 %1875
        %1877 = vrot.lane.b32.xlu0 %v983, 48
        %v1878 = vpop.permute.xlu0 %1877
        %1879 = vrot.lane.b32.xlu0 %v984, 48
        %v1880 = vpop.permute.xlu0 %1879
        %1881 = vrot.lane.b32.xlu0 %v985, 48
        %v1882 = vpop.permute.xlu0 %1881
        %1883 = vrot.lane.b32.xlu0 %v986, 48
        %v1884 = vpop.permute.xlu0 %1883
        %1885 = vrot.lane.b32.xlu0 %v987, 48
        %v1886 = vpop.permute.xlu0 %1885
        %1887 = vrot.lane.b32.xlu0 %v988, 48
        %v1888 = vpop.permute.xlu0 %1887
        %1889 = vrot.lane.b32.xlu0 %v989, 48
        %v1890 = vpop.permute.xlu0 %1889
        %1891 = vrot.lane.b32.xlu0 %v990, 48
        %v1892 = vpop.permute.xlu0 %1891
        %1893 = vrot.lane.b32.xlu0 %v991, 48
        %v1894 = vpop.permute.xlu0 %1893
        %1895 = vrot.lane.b32.xlu0 %v992, 48
        %v1896 = vpop.permute.xlu0 %1895
        %1897 = vrot.lane.b32.xlu0 %v993, 48
        %v1898 = vpop.permute.xlu0 %1897
        %1899 = vrot.lane.b32.xlu0 %v994, 48
        %v1900 = vpop.permute.xlu0 %1899
        %1901 = vrot.lane.b32.xlu0 %v995, 48
        %v1902 = vpop.permute.xlu0 %1901
        %1903 = vrot.lane.b32.xlu0 %v996, 48
        %v1904 = vpop.permute.xlu0 %1903
        %1905 = vrot.lane.b32.xlu0 %v997, 48
        %v1906 = vpop.permute.xlu0 %1905
        %1907 = vrot.lane.b32.xlu0 %v998, 48
        %v1908 = vpop.permute.xlu0 %1907
        %1909 = vrot.lane.b32.xlu0 %v999, 48
        %v1910 = vpop.permute.xlu0 %1909
        %1911 = vrot.lane.b32.xlu0 %v1000, 48
        %v1912 = vpop.permute.xlu0 %1911
        %1913 = vrot.lane.b32.xlu0 %v1001, 48
        %v1914 = vpop.permute.xlu0 %1913
        %1915 = vrot.lane.b32.xlu0 %v1002, 48
        %v1916 = vpop.permute.xlu0 %1915
        %1917 = vrot.lane.b32.xlu0 %v1003, 48
        %v1918 = vpop.permute.xlu0 %1917
        %1919 = vrot.lane.b32.xlu0 %v1004, 48
        %v1920 = vpop.permute.xlu0 %1919
        %1921 = vrot.lane.b32.xlu0 %v1005, 48
        %v1922 = vpop.permute.xlu0 %1921
        %1923 = vrot.lane.b32.xlu0 %v1006, 48
        %v1924 = vpop.permute.xlu0 %1923
        %1925 = vrot.lane.b32.xlu0 %v1007, 48
        %v1926 = vpop.permute.xlu0 %1925
        %1927 = vrot.lane.b32.xlu0 %v1008, 48
        %v1928 = vpop.permute.xlu0 %1927
        %1929 = vrot.lane.b32.xlu0 %v1009, 48
        %v1930 = vpop.permute.xlu0 %1929
        %1931 = vrot.lane.b32.xlu0 0.0, 48
        %v1932 = vpop.permute.xlu0 %1931
        %1966 = vrot.lane.b32.xlu0 %v979, 56
        %v1967 = vpop.permute.xlu0 %1966
        %1968 = vrot.lane.b32.xlu0 %v980, 56
        %v1969 = vpop.permute.xlu0 %1968
        %1970 = vrot.lane.b32.xlu0 %v981, 56
        %v1971 = vpop.permute.xlu0 %1970
        %1972 = vrot.lane.b32.xlu0 %v982, 56
        %v1973 = vpop.permute.xlu0 %1972
        %1974 = vrot.lane.b32.xlu0 %v983, 56
        %v1975 = vpop.permute.xlu0 %1974
        %1976 = vrot.lane.b32.xlu0 %v984, 56
        %v1977 = vpop.permute.xlu0 %1976
        %1978 = vrot.lane.b32.xlu0 %v985, 56
        %v1979 = vpop.permute.xlu0 %1978
        %1980 = vrot.lane.b32.xlu0 %v986, 56
        %v1981 = vpop.permute.xlu0 %1980
        %1982 = vrot.lane.b32.xlu0 %v987, 56
        %v1983 = vpop.permute.xlu0 %1982
        %1984 = vrot.lane.b32.xlu0 %v988, 56
        %v1985 = vpop.permute.xlu0 %1984
        %1986 = vrot.lane.b32.xlu0 %v989, 56
        %v1987 = vpop.permute.xlu0 %1986
        %1988 = vrot.lane.b32.xlu0 %v990, 56
        %v1989 = vpop.permute.xlu0 %1988
        %1990 = vrot.lane.b32.xlu0 %v991, 56
        %v1991 = vpop.permute.xlu0 %1990
        %1992 = vrot.lane.b32.xlu0 %v992, 56
        %v1993 = vpop.permute.xlu0 %1992
        %1994 = vrot.lane.b32.xlu0 %v993, 56
        %v1995 = vpop.permute.xlu0 %1994
        %1996 = vrot.lane.b32.xlu0 %v994, 56
        %v1997 = vpop.permute.xlu0 %1996
        %1998 = vrot.lane.b32.xlu0 %v995, 56
        %v1999 = vpop.permute.xlu0 %1998
        %2000 = vrot.lane.b32.xlu0 %v996, 56
        %v2001 = vpop.permute.xlu0 %2000
        %2002 = vrot.lane.b32.xlu0 %v997, 56
        %v2003 = vpop.permute.xlu0 %2002
        %2004 = vrot.lane.b32.xlu0 %v998, 56
        %v2005 = vpop.permute.xlu0 %2004
        %2006 = vrot.lane.b32.xlu0 %v999, 56
        %v2007 = vpop.permute.xlu0 %2006
        %2008 = vrot.lane.b32.xlu0 %v1000, 56
        %v2009 = vpop.permute.xlu0 %2008
        %2010 = vrot.lane.b32.xlu0 %v1001, 56
        %v2011 = vpop.permute.xlu0 %2010
        %2012 = vrot.lane.b32.xlu0 %v1002, 56
        %v2013 = vpop.permute.xlu0 %2012
        %2014 = vrot.lane.b32.xlu0 %v1003, 56
        %v2015 = vpop.permute.xlu0 %2014
        %2016 = vrot.lane.b32.xlu0 %v1004, 56
        %v2017 = vpop.permute.xlu0 %2016
        %2018 = vrot.lane.b32.xlu0 %v1005, 56
        %v2019 = vpop.permute.xlu0 %2018
        %2020 = vrot.lane.b32.xlu0 %v1006, 56
        %v2021 = vpop.permute.xlu0 %2020
        %2022 = vrot.lane.b32.xlu0 %v1007, 56
        %v2023 = vpop.permute.xlu0 %2022
        %2024 = vrot.lane.b32.xlu0 %v1008, 56
        %v2025 = vpop.permute.xlu0 %2024
        %2026 = vrot.lane.b32.xlu0 %v1009, 56
        %v2027 = vpop.permute.xlu0 %2026
        %2028 = vrot.lane.b32.xlu0 %v1010, 56
        %v2029 = vpop.permute.xlu0 %2028
        %2030 = vrot.lane.b32.xlu0 0.0, 56
        %v2031 = vpop.permute.xlu0 %2030
        %2065 = vrot.lane.b32.xlu0 %v980, 64
        %v2066 = vpop.permute.xlu0 %2065
        %2067 = vrot.lane.b32.xlu0 %v981, 64
        %v2068 = vpop.permute.xlu0 %2067
        %2069 = vrot.lane.b32.xlu0 %v982, 64
        %v2070 = vpop.permute.xlu0 %2069
        %2071 = vrot.lane.b32.xlu0 %v983, 64
        %v2072 = vpop.permute.xlu0 %2071
        %2073 = vrot.lane.b32.xlu0 %v984, 64
        %v2074 = vpop.permute.xlu0 %2073
        %2075 = vrot.lane.b32.xlu0 %v985, 64
        %v2076 = vpop.permute.xlu0 %2075
        %2077 = vrot.lane.b32.xlu0 %v986, 64
        %v2078 = vpop.permute.xlu0 %2077
        %2079 = vrot.lane.b32.xlu0 %v987, 64
        %v2080 = vpop.permute.xlu0 %2079
        %2081 = vrot.lane.b32.xlu0 %v988, 64
        %v2082 = vpop.permute.xlu0 %2081
        %2083 = vrot.lane.b32.xlu0 %v989, 64
        %v2084 = vpop.permute.xlu0 %2083
        %2085 = vrot.lane.b32.xlu0 %v990, 64
        %v2086 = vpop.permute.xlu0 %2085
        %2087 = vrot.lane.b32.xlu0 %v991, 64
        %v2088 = vpop.permute.xlu0 %2087
        %2089 = vrot.lane.b32.xlu0 %v992, 64
        %v2090 = vpop.permute.xlu0 %2089
        %2091 = vrot.lane.b32.xlu0 %v993, 64
        %v2092 = vpop.permute.xlu0 %2091
        %2093 = vrot.lane.b32.xlu0 %v994, 64
        %v2094 = vpop.permute.xlu0 %2093
        %2095 = vrot.lane.b32.xlu0 %v995, 64
        %v2096 = vpop.permute.xlu0 %2095
        %2097 = vrot.lane.b32.xlu0 %v996, 64
        %v2098 = vpop.permute.xlu0 %2097
        %2099 = vrot.lane.b32.xlu0 %v997, 64
        %v2100 = vpop.permute.xlu0 %2099
        %2101 = vrot.lane.b32.xlu0 %v998, 64
        %v2102 = vpop.permute.xlu0 %2101
        %2103 = vrot.lane.b32.xlu0 %v999, 64
        %v2104 = vpop.permute.xlu0 %2103
        %2105 = vrot.lane.b32.xlu0 %v1000, 64
        %v2106 = vpop.permute.xlu0 %2105
        %2107 = vrot.lane.b32.xlu0 %v1001, 64
        %v2108 = vpop.permute.xlu0 %2107
        %2109 = vrot.lane.b32.xlu0 %v1002, 64
        %v2110 = vpop.permute.xlu0 %2109
        %2111 = vrot.lane.b32.xlu0 %v1003, 64
        %v2112 = vpop.permute.xlu0 %2111
        %2113 = vrot.lane.b32.xlu0 %v1004, 64
        %v2114 = vpop.permute.xlu0 %2113
        %2115 = vrot.lane.b32.xlu0 %v1005, 64
        %v2116 = vpop.permute.xlu0 %2115
        %2117 = vrot.lane.b32.xlu0 %v1006, 64
        %v2118 = vpop.permute.xlu0 %2117
        %2119 = vrot.lane.b32.xlu0 %v1007, 64
        %v2120 = vpop.permute.xlu0 %2119
        %2121 = vrot.lane.b32.xlu0 %v1008, 64
        %v2122 = vpop.permute.xlu0 %2121
        %2123 = vrot.lane.b32.xlu0 %v1009, 64
        %v2124 = vpop.permute.xlu0 %2123
        %2125 = vrot.lane.b32.xlu0 %v1010, 64
        %v2126 = vpop.permute.xlu0 %2125
        %2127 = vrot.lane.b32.xlu0 %v1023, 64
        %v2128 = vpop.permute.xlu0 %2127
        %2129 = vrot.lane.b32.xlu0 0.0, 64
        %v2130 = vpop.permute.xlu0 %2129
        %vm2164 = vcmask 64512
        %v2165 = vsel %vm2164, 0.0, %v1058
        %v2166 = vsel %vm2164, %v817, %v1060
        %v2167 = vsel %vm2164, %v947, %v1062
        %v2168 = vsel %vm2164, %v948, %v1064
        %v2169 = vsel %vm2164, %v949, %v1066
        %v2170 = vsel %vm2164, %v950, %v1068
        %v2171 = vsel %vm2164, %v951, %v1070
        %v2172 = vsel %vm2164, %v952, %v1072
        %v2173 = vsel %vm2164, %v953, %v1074
        %v2174 = vsel %vm2164, %v954, %v1076
        %v2175 = vsel %vm2164, %v955, %v1078
        %v2176 = vsel %vm2164, %v956, %v1080
        %v2177 = vsel %vm2164, %v957, %v1082
        %v2178 = vsel %vm2164, %v958, %v1084
        %v2179 = vsel %vm2164, %v959, %v1086
        %v2180 = vsel %vm2164, %v960, %v1088
        %v2181 = vsel %vm2164, %v961, %v1090
        %v2182 = vsel %vm2164, %v962, %v1092
        %v2183 = vsel %vm2164, %v963, %v1094
        %v2184 = vsel %vm2164, %v964, %v1096
        %v2185 = vsel %vm2164, %v965, %v1098
        %v2186 = vsel %vm2164, %v966, %v1100
        %v2187 = vsel %vm2164, %v967, %v1102
        %v2188 = vsel %vm2164, %v968, %v1104
        %v2189 = vsel %vm2164, %v969, %v1106
        %v2190 = vsel %vm2164, %v970, %v1108
        %v2191 = vsel %vm2164, %v971, %v1110
        %v2192 = vsel %vm2164, %v972, %v1112
        %v2193 = vsel %vm2164, %v973, %v1114
        %v2194 = vsel %vm2164, %v974, %v1116
        %v2195 = vsel %vm2164, %v975, %v1118
        %v2196 = vsel %vm2164, %v976, %v1120
        %v2197 = vsel %vm2164, %v977, %v1122
        %vm2198 = vcmask 130048
        %v2199 = vsel %vm2198, %v2165, %v1158
        %v2200 = vsel %vm2198, %v2166, %v1160
        %v2201 = vsel %vm2198, %v2167, %v1162
        %v2202 = vsel %vm2198, %v2168, %v1164
        %v2203 = vsel %vm2198, %v2169, %v1166
        %v2204 = vsel %vm2198, %v2170, %v1168
        %v2205 = vsel %vm2198, %v2171, %v1170
        %v2206 = vsel %vm2198, %v2172, %v1172
        %v2207 = vsel %vm2198, %v2173, %v1174
        %v2208 = vsel %vm2198, %v2174, %v1176
        %v2209 = vsel %vm2198, %v2175, %v1178
        %v2210 = vsel %vm2198, %v2176, %v1180
        %v2211 = vsel %vm2198, %v2177, %v1182
        %v2212 = vsel %vm2198, %v2178, %v1184
        %v2213 = vsel %vm2198, %v2179, %v1186
        %v2214 = vsel %vm2198, %v2180, %v1188
        %v2215 = vsel %vm2198, %v2181, %v1190
        %v2216 = vsel %vm2198, %v2182, %v1192
        %v2217 = vsel %vm2198, %v2183, %v1194
        %v2218 = vsel %vm2198, %v2184, %v1196
        %v2219 = vsel %vm2198, %v2185, %v1198
        %v2220 = vsel %vm2198, %v2186, %v1200
        %v2221 = vsel %vm2198, %v2187, %v1202
        %v2222 = vsel %vm2198, %v2188, %v1204
        %v2223 = vsel %vm2198, %v2189, %v1206
        %v2224 = vsel %vm2198, %v2190, %v1208
        %v2225 = vsel %vm2198, %v2191, %v1210
        %v2226 = vsel %vm2198, %v2192, %v1212
        %v2227 = vsel %vm2198, %v2193, %v1214
        %v2228 = vsel %vm2198, %v2194, %v1216
        %v2229 = vsel %vm2198, %v2195, %v1218
        %v2230 = vsel %vm2198, %v2196, %v1220
        %v2231 = vsel %vm2198, %v2197, %v1222
        %vm2232 = vcmask 195584
        %v2233 = vsel %vm2232, %v2199, %v1290
        %v2234 = vsel %vm2232, %v2199, %v1292
        %v2235 = vsel %vm2232, %v2199, %v1294
        %v2236 = vsel %vm2232, %v2199, %v1296
        %v2237 = vsel %vm2232, %v2199, %v1298
        %v2238 = vsel %vm2232, %v2199, %v1300
        %v2239 = vsel %vm2232, %v2199, %v1302
        %v2240 = vsel %vm2232, %v2199, %v1304
        %v2241 = vsel %vm2232, %v2199, %v1306
        %v2242 = vsel %vm2232, %v2199, %v1308
        %v2243 = vsel %vm2232, %v2199, %v1310
        %v2244 = vsel %vm2232, %v2199, %v1312
        %v2245 = vsel %vm2232, %v2199, %v1314
        %v2246 = vsel %vm2232, %v2199, %v1316
        %v2247 = vsel %vm2232, %v2199, %v1318
        %v2248 = vsel %vm2232, %v2199, %v1320
        %v2249 = vsel %vm2232, %v2199, %v1322
        %v2250 = vsel %vm2232, %v2199, %v1324
        %v2251 = vsel %vm2232, %v2199, %v1326
        %v2252 = vsel %vm2232, %v2199, %v1328
        %v2253 = vsel %vm2232, %v2199, %v1330
        %v2254 = vsel %vm2232, %v2199, %v1332
        %v2255 = vsel %vm2232, %v2199, %v1334
        %v2256 = vsel %vm2232, %v2199, %v1336
        %v2257 = vsel %vm2232, %v2199, %v1338
        %v2258 = vsel %vm2232, %v2199, %v1340
        %v2259 = vsel %vm2232, %v2199, %v1342
        %v2260 = vsel %vm2232, %v2199, %v1344
        %v2261 = vsel %vm2232, %v2199, %v1346
        %v2262 = vsel %vm2232, %v2199, %v1348
        %v2263 = vsel %vm2232, %v2199, %v1350
        %v2264 = vsel %vm2232, %v2199, %v1352
        %v2265 = vsel %vm2232, %v2200, %v1354
        %v2266 = vsel %vm2232, %v2201, %v1356
        %v2267 = vsel %vm2232, %v2202, %v1358
        %v2268 = vsel %vm2232, %v2203, %v1360
        %v2269 = vsel %vm2232, %v2204, %v1362
        %v2270 = vsel %vm2232, %v2205, %v1364
        %v2271 = vsel %vm2232, %v2206, %v1366
        %v2272 = vsel %vm2232, %v2207, %v1368
        %v2273 = vsel %vm2232, %v2208, %v1370
        %v2274 = vsel %vm2232, %v2209, %v1372
        %v2275 = vsel %vm2232, %v2210, %v1374
        %v2276 = vsel %vm2232, %v2211, %v1376
        %v2277 = vsel %vm2232, %v2212, %v1378
        %v2278 = vsel %vm2232, %v2213, %v1380
        %v2279 = vsel %vm2232, %v2214, %v1382
        %v2280 = vsel %vm2232, %v2215, %v1384
        %v2281 = vsel %vm2232, %v2216, %v1386
        %v2282 = vsel %vm2232, %v2217, %v1388
        %v2283 = vsel %vm2232, %v2218, %v1390
        %v2284 = vsel %vm2232, %v2219, %v1392
        %v2285 = vsel %vm2232, %v2220, %v1394
        %v2286 = vsel %vm2232, %v2221, %v1396
        %v2287 = vsel %vm2232, %v2222, %v1398
        %v2288 = vsel %vm2232, %v2223, %v1400
        %v2289 = vsel %vm2232, %v2224, %v1402
        %v2290 = vsel %vm2232, %v2225, %v1404
        %v2291 = vsel %vm2232, %v2226, %v1406
        %v2292 = vsel %vm2232, %v2227, %v1408
        %v2293 = vsel %vm2232, %v2228, %v1410
        %v2294 = vsel %vm2232, %v2229, %v1412
        %v2295 = vsel %vm2232, %v2230, %v1414
        %v2296 = vsel %vm2232, %v2231, %v1416
        %vm2297 = vcmask 261120
        %v2298 = vsel %vm2297, %v2233, %v1483
        %v2299 = vsel %vm2297, %v2234, %v1485
        %v2300 = vsel %vm2297, %v2235, %v1487
        %v2301 = vsel %vm2297, %v2236, %v1489
        %v2302 = vsel %vm2297, %v2237, %v1491
        %v2303 = vsel %vm2297, %v2238, %v1493
        %v2304 = vsel %vm2297, %v2239, %v1495
        %v2305 = vsel %vm2297, %v2240, %v1497
        %v2306 = vsel %vm2297, %v2241, %v1499
        %v2307 = vsel %vm2297, %v2242, %v1501
        %v2308 = vsel %vm2297, %v2243, %v1503
        %v2309 = vsel %vm2297, %v2244, %v1505
        %v2310 = vsel %vm2297, %v2245, %v1507
        %v2311 = vsel %vm2297, %v2246, %v1509
        %v2312 = vsel %vm2297, %v2247, %v1511
        %v2313 = vsel %vm2297, %v2248, %v1513
        %v2314 = vsel %vm2297, %v2249, %v1515
        %v2315 = vsel %vm2297, %v2250, %v1517
        %v2316 = vsel %vm2297, %v2251, %v1519
        %v2317 = vsel %vm2297, %v2252, %v1521
        %v2318 = vsel %vm2297, %v2253, %v1523
        %v2319 = vsel %vm2297, %v2254, %v1525
        %v2320 = vsel %vm2297, %v2255, %v1527
        %v2321 = vsel %vm2297, %v2256, %v1529
        %v2322 = vsel %vm2297, %v2257, %v1531
        %v2323 = vsel %vm2297, %v2258, %v1533
        %v2324 = vsel %vm2297, %v2259, %v1535
        %v2325 = vsel %vm2297, %v2260, %v1537
        %v2326 = vsel %vm2297, %v2261, %v1539
        %v2327 = vsel %vm2297, %v2262, %v1541
        %v2328 = vsel %vm2297, %v2263, %v1543
        %v2329 = vsel %vm2297, %v2264, %v1545
        %v2330 = vsel %vm2297, %v2265, %v1547
        %v2331 = vsel %vm2297, %v2266, %v1549
        %v2332 = vsel %vm2297, %v2267, %v1551
        %v2333 = vsel %vm2297, %v2268, %v1553
        %v2334 = vsel %vm2297, %v2269, %v1555
        %v2335 = vsel %vm2297, %v2270, %v1557
        %v2336 = vsel %vm2297, %v2271, %v1559
        %v2337 = vsel %vm2297, %v2272, %v1561
        %v2338 = vsel %vm2297, %v2273, %v1563
        %v2339 = vsel %vm2297, %v2274, %v1565
        %v2340 = vsel %vm2297, %v2275, %v1567
        %v2341 = vsel %vm2297, %v2276, %v1569
        %v2342 = vsel %vm2297, %v2277, %v1571
        %v2343 = vsel %vm2297, %v2278, %v1573
        %v2344 = vsel %vm2297, %v2279, %v1575
        %v2345 = vsel %vm2297, %v2280, %v1577
        %v2346 = vsel %vm2297, %v2281, %v1579
        %v2347 = vsel %vm2297, %v2282, %v1581
        %v2348 = vsel %vm2297, %v2283, %v1583
        %v2349 = vsel %vm2297, %v2284, %v1585
        %v2350 = vsel %vm2297, %v2285, %v1587
        %v2351 = vsel %vm2297, %v2286, %v1589
        %v2352 = vsel %vm2297, %v2287, %v1591
        %v2353 = vsel %vm2297, %v2288, %v1593
        %v2354 = vsel %vm2297, %v2289, %v1595
        %v2355 = vsel %vm2297, %v2290, %v1597
        %v2356 = vsel %vm2297, %v2291, %v1599
        %v2357 = vsel %vm2297, %v2292, %v1601
        %v2358 = vsel %vm2297, %v2293, %v1603
        %v2359 = vsel %vm2297, %v2294, %v1605
        %v2360 = vsel %vm2297, %v2295, %v1607
        %v2361 = vsel %vm2297, %v2296, %v1609
        %vm2362 = vcmask 326656
        %v2363 = vsel %vm2362, %v2298, %v1676
        %v2364 = vsel %vm2362, %v2299, %v1678
        %v2365 = vsel %vm2362, %v2300, %v1680
        %v2366 = vsel %vm2362, %v2301, %v1682
        %v2367 = vsel %vm2362, %v2302, %v1684
        %v2368 = vsel %vm2362, %v2303, %v1686
        %v2369 = vsel %vm2362, %v2304, %v1688
        %v2370 = vsel %vm2362, %v2305, %v1690
        %v2371 = vsel %vm2362, %v2306, %v1692
        %v2372 = vsel %vm2362, %v2307, %v1694
        %v2373 = vsel %vm2362, %v2308, %v1696
        %v2374 = vsel %vm2362, %v2309, %v1698
        %v2375 = vsel %vm2362, %v2310, %v1700
        %v2376 = vsel %vm2362, %v2311, %v1702
        %v2377 = vsel %vm2362, %v2312, %v1704
        %v2378 = vsel %vm2362, %v2313, %v1706
        %v2379 = vsel %vm2362, %v2314, %v1708
        %v2380 = vsel %vm2362, %v2315, %v1710
        %v2381 = vsel %vm2362, %v2316, %v1712
        %v2382 = vsel %vm2362, %v2317, %v1714
        %v2383 = vsel %vm2362, %v2318, %v1716
        %v2384 = vsel %vm2362, %v2319, %v1718
        %v2385 = vsel %vm2362, %v2320, %v1720
        %v2386 = vsel %vm2362, %v2321, %v1722
        %v2387 = vsel %vm2362, %v2322, %v1724
        %v2388 = vsel %vm2362, %v2323, %v1726
        %v2389 = vsel %vm2362, %v2324, %v1728
        %v2390 = vsel %vm2362, %v2325, %v1730
        %v2391 = vsel %vm2362, %v2326, %v1732
        %v2392 = vsel %vm2362, %v2327, %v1734
        %v2393 = vsel %vm2362, %v2328, %v1736
        %v2394 = vsel %vm2362, %v2329, %v1738
        %v2395 = vsel %vm2362, %v2330, %v1740
        %v2396 = vsel %vm2362, %v2331, %v1742
        %v2397 = vsel %vm2362, %v2332, %v1744
        %v2398 = vsel %vm2362, %v2333, %v1746
        %v2399 = vsel %vm2362, %v2334, %v1748
        %v2400 = vsel %vm2362, %v2335, %v1750
        %v2401 = vsel %vm2362, %v2336, %v1752
        %v2402 = vsel %vm2362, %v2337, %v1754
        %v2403 = vsel %vm2362, %v2338, %v1756
        %v2404 = vsel %vm2362, %v2339, %v1758
        %v2405 = vsel %vm2362, %v2340, %v1760
        %v2406 = vsel %vm2362, %v2341, %v1762
        %v2407 = vsel %vm2362, %v2342, %v1764
        %v2408 = vsel %vm2362, %v2343, %v1766
        %v2409 = vsel %vm2362, %v2344, %v1768
        %v2410 = vsel %vm2362, %v2345, %v1770
        %v2411 = vsel %vm2362, %v2346, %v1772
        %v2412 = vsel %vm2362, %v2347, %v1774
        %v2413 = vsel %vm2362, %v2348, %v1776
        %v2414 = vsel %vm2362, %v2349, %v1778
        %v2415 = vsel %vm2362, %v2350, %v1780
        %v2416 = vsel %vm2362, %v2351, %v1782
        %v2417 = vsel %vm2362, %v2352, %v1784
        %v2418 = vsel %vm2362, %v2353, %v1786
        %v2419 = vsel %vm2362, %v2354, %v1788
        %v2420 = vsel %vm2362, %v2355, %v1790
        %v2421 = vsel %vm2362, %v2356, %v1792
        %v2422 = vsel %vm2362, %v2357, %v1794
        %v2423 = vsel %vm2362, %v2358, %v1796
        %v2424 = vsel %vm2362, %v2359, %v1798
        %v2425 = vsel %vm2362, %v2360, %v1800
        %v2426 = vsel %vm2362, %v2361, %v1802
        %vm2427 = vcmask 392192
        %v2428 = vsel %vm2427, %v2363, %v1868
        %v2429 = vsel %vm2427, %v2364, %v1870
        %v2430 = vsel %vm2427, %v2365, %v1872
        %v2431 = vsel %vm2427, %v2366, %v1874
        %v2432 = vsel %vm2427, %v2367, %v1876
        %v2433 = vsel %vm2427, %v2368, %v1878
        %v2434 = vsel %vm2427, %v2369, %v1880
        %v2435 = vsel %vm2427, %v2370, %v1882
        %v2436 = vsel %vm2427, %v2371, %v1884
        %v2437 = vsel %vm2427, %v2372, %v1886
        %v2438 = vsel %vm2427, %v2373, %v1888
        %v2439 = vsel %vm2427, %v2374, %v1890
        %v2440 = vsel %vm2427, %v2375, %v1892
        %v2441 = vsel %vm2427, %v2376, %v1894
        %v2442 = vsel %vm2427, %v2377, %v1896
        %v2443 = vsel %vm2427, %v2378, %v1898
        %v2444 = vsel %vm2427, %v2379, %v1900
        %v2445 = vsel %vm2427, %v2380, %v1902
        %v2446 = vsel %vm2427, %v2381, %v1904
        %v2447 = vsel %vm2427, %v2382, %v1906
        %v2448 = vsel %vm2427, %v2383, %v1908
        %v2449 = vsel %vm2427, %v2384, %v1910
        %v2450 = vsel %vm2427, %v2385, %v1912
        %v2451 = vsel %vm2427, %v2386, %v1914
        %v2452 = vsel %vm2427, %v2387, %v1916
        %v2453 = vsel %vm2427, %v2388, %v1918
        %v2454 = vsel %vm2427, %v2389, %v1920
        %v2455 = vsel %vm2427, %v2390, %v1922
        %v2456 = vsel %vm2427, %v2391, %v1924
        %v2457 = vsel %vm2427, %v2392, %v1926
        %v2458 = vsel %vm2427, %v2393, %v1928
        %v2459 = vsel %vm2427, %v2394, %v1930
        %v2460 = vsel %vm2427, %v2395, %v1932
        %v2461 = vsel %vm2427, %v2396, %v1932
        %v2462 = vsel %vm2427, %v2397, %v1932
        %v2463 = vsel %vm2427, %v2398, %v1932
        %v2464 = vsel %vm2427, %v2399, %v1932
        %v2465 = vsel %vm2427, %v2400, %v1932
        %v2466 = vsel %vm2427, %v2401, %v1932
        %v2467 = vsel %vm2427, %v2402, %v1932
        %v2468 = vsel %vm2427, %v2403, %v1932
        %v2469 = vsel %vm2427, %v2404, %v1932
        %v2470 = vsel %vm2427, %v2405, %v1932
        %v2471 = vsel %vm2427, %v2406, %v1932
        %v2472 = vsel %vm2427, %v2407, %v1932
        %v2473 = vsel %vm2427, %v2408, %v1932
        %v2474 = vsel %vm2427, %v2409, %v1932
        %v2475 = vsel %vm2427, %v2410, %v1932
        %v2476 = vsel %vm2427, %v2411, %v1932
        %v2477 = vsel %vm2427, %v2412, %v1932
        %v2478 = vsel %vm2427, %v2413, %v1932
        %v2479 = vsel %vm2427, %v2414, %v1932
        %v2480 = vsel %vm2427, %v2415, %v1932
        %v2481 = vsel %vm2427, %v2416, %v1932
        %v2482 = vsel %vm2427, %v2417, %v1932
        %v2483 = vsel %vm2427, %v2418, %v1932
        %v2484 = vsel %vm2427, %v2419, %v1932
        %v2485 = vsel %vm2427, %v2420, %v1932
        %v2486 = vsel %vm2427, %v2421, %v1932
        %v2487 = vsel %vm2427, %v2422, %v1932
        %v2488 = vsel %vm2427, %v2423, %v1932
        %v2489 = vsel %vm2427, %v2424, %v1932
        %v2490 = vsel %vm2427, %v2425, %v1932
        %v2491 = vsel %vm2427, %v2426, %v1932
        %vm2492 = vcmask 457728
        %v2493 = vsel %vm2492, %v2428, %v1967
        %v2494 = vsel %vm2492, %v2429, %v1969
        %v2495 = vsel %vm2492, %v2430, %v1971
        %v2496 = vsel %vm2492, %v2431, %v1973
        %v2497 = vsel %vm2492, %v2432, %v1975
        %v2498 = vsel %vm2492, %v2433, %v1977
        %v2499 = vsel %vm2492, %v2434, %v1979
        %v2500 = vsel %vm2492, %v2435, %v1981
        %v2501 = vsel %vm2492, %v2436, %v1983
        %v2502 = vsel %vm2492, %v2437, %v1985
        %v2503 = vsel %vm2492, %v2438, %v1987
        %v2504 = vsel %vm2492, %v2439, %v1989
        %v2505 = vsel %vm2492, %v2440, %v1991
        %v2506 = vsel %vm2492, %v2441, %v1993
        %v2507 = vsel %vm2492, %v2442, %v1995
        %v2508 = vsel %vm2492, %v2443, %v1997
        %v2509 = vsel %vm2492, %v2444, %v1999
        %v2510 = vsel %vm2492, %v2445, %v2001
        %v2511 = vsel %vm2492, %v2446, %v2003
        %v2512 = vsel %vm2492, %v2447, %v2005
        %v2513 = vsel %vm2492, %v2448, %v2007
        %v2514 = vsel %vm2492, %v2449, %v2009
        %v2515 = vsel %vm2492, %v2450, %v2011
        %v2516 = vsel %vm2492, %v2451, %v2013
        %v2517 = vsel %vm2492, %v2452, %v2015
        %v2518 = vsel %vm2492, %v2453, %v2017
        %v2519 = vsel %vm2492, %v2454, %v2019
        %v2520 = vsel %vm2492, %v2455, %v2021
        %v2521 = vsel %vm2492, %v2456, %v2023
        %v2522 = vsel %vm2492, %v2457, %v2025
        %v2523 = vsel %vm2492, %v2458, %v2027
        %v2524 = vsel %vm2492, %v2459, %v2029
        %v2525 = vsel %vm2492, %v2460, %v2031
        %v2526 = vsel %vm2492, %v2461, %v2031
        %v2527 = vsel %vm2492, %v2462, %v2031
        %v2528 = vsel %vm2492, %v2463, %v2031
        %v2529 = vsel %vm2492, %v2464, %v2031
        %v2530 = vsel %vm2492, %v2465, %v2031
        %v2531 = vsel %vm2492, %v2466, %v2031
        %v2532 = vsel %vm2492, %v2467, %v2031
        %v2533 = vsel %vm2492, %v2468, %v2031
        %v2534 = vsel %vm2492, %v2469, %v2031
        %v2535 = vsel %vm2492, %v2470, %v2031
        %v2536 = vsel %vm2492, %v2471, %v2031
        %v2537 = vsel %vm2492, %v2472, %v2031
        %v2538 = vsel %vm2492, %v2473, %v2031
        %v2539 = vsel %vm2492, %v2474, %v2031
        %v2540 = vsel %vm2492, %v2475, %v2031
        %v2541 = vsel %vm2492, %v2476, %v2031
        %v2542 = vsel %vm2492, %v2477, %v2031
        %v2543 = vsel %vm2492, %v2478, %v2031
        %v2544 = vsel %vm2492, %v2479, %v2031
        %v2545 = vsel %vm2492, %v2480, %v2031
        %v2546 = vsel %vm2492, %v2481, %v2031
        %v2547 = vsel %vm2492, %v2482, %v2031
        %v2548 = vsel %vm2492, %v2483, %v2031
        %v2549 = vsel %vm2492, %v2484, %v2031
        %v2550 = vsel %vm2492, %v2485, %v2031
        %v2551 = vsel %vm2492, %v2486, %v2031
        %v2552 = vsel %vm2492, %v2487, %v2031
        %v2553 = vsel %vm2492, %v2488, %v2031
        %v2554 = vsel %vm2492, %v2489, %v2031
        %v2555 = vsel %vm2492, %v2490, %v2031
        %v2556 = vsel %vm2492, %v2491, %v2031
        %vm2557 = vcmask 523264
        %v2558 = vsel %vm2557, %v2493, %v2066
        %v2559 = vsel %vm2557, %v2494, %v2068
        %v2560 = vsel %vm2557, %v2495, %v2070
        %v2561 = vsel %vm2557, %v2496, %v2072
        %v2562 = vsel %vm2557, %v2497, %v2074
        %v2563 = vsel %vm2557, %v2498, %v2076
        %v2564 = vsel %vm2557, %v2499, %v2078
        %v2565 = vsel %vm2557, %v2500, %v2080
        %v2566 = vsel %vm2557, %v2501, %v2082
        %v2567 = vsel %vm2557, %v2502, %v2084
        %v2568 = vsel %vm2557, %v2503, %v2086
        %v2569 = vsel %vm2557, %v2504, %v2088
        %v2570 = vsel %vm2557, %v2505, %v2090
        %v2571 = vsel %vm2557, %v2506, %v2092
        %v2572 = vsel %vm2557, %v2507, %v2094
        %v2573 = vsel %vm2557, %v2508, %v2096
        %v2574 = vsel %vm2557, %v2509, %v2098
        %v2575 = vsel %vm2557, %v2510, %v2100
        %v2576 = vsel %vm2557, %v2511, %v2102
        %v2577 = vsel %vm2557, %v2512, %v2104
        %v2578 = vsel %vm2557, %v2513, %v2106
        %v2579 = vsel %vm2557, %v2514, %v2108
        %v2580 = vsel %vm2557, %v2515, %v2110
        %v2581 = vsel %vm2557, %v2516, %v2112
        %v2582 = vsel %vm2557, %v2517, %v2114
        %v2583 = vsel %vm2557, %v2518, %v2116
        %v2584 = vsel %vm2557, %v2519, %v2118
        %v2585 = vsel %vm2557, %v2520, %v2120
        %v2586 = vsel %vm2557, %v2521, %v2122
        %v2587 = vsel %vm2557, %v2522, %v2124
        %v2588 = vsel %vm2557, %v2523, %v2126
        %v2589 = vsel %vm2557, %v2524, %v2128
        %v2590 = vsel %vm2557, %v2525, %v2130
        %v2591 = vsel %vm2557, %v2526, %v2130
        %v2592 = vsel %vm2557, %v2527, %v2130
        %v2593 = vsel %vm2557, %v2528, %v2130
        %v2594 = vsel %vm2557, %v2529, %v2130
        %v2595 = vsel %vm2557, %v2530, %v2130
        %v2596 = vsel %vm2557, %v2531, %v2130
        %v2597 = vsel %vm2557, %v2532, %v2130
        %v2598 = vsel %vm2557, %v2533, %v2130
        %v2599 = vsel %vm2557, %v2534, %v2130
        %v2600 = vsel %vm2557, %v2535, %v2130
        %v2601 = vsel %vm2557, %v2536, %v2130
        %v2602 = vsel %vm2557, %v2537, %v2130
        %v2603 = vsel %vm2557, %v2538, %v2130
        %v2604 = vsel %vm2557, %v2539, %v2130
        %v2605 = vsel %vm2557, %v2540, %v2130
        %v2606 = vsel %vm2557, %v2541, %v2130
        %v2607 = vsel %vm2557, %v2542, %v2130
        %v2608 = vsel %vm2557, %v2543, %v2130
        %v2609 = vsel %vm2557, %v2544, %v2130
        %v2610 = vsel %vm2557, %v2545, %v2130
        %v2611 = vsel %vm2557, %v2546, %v2130
        %v2612 = vsel %vm2557, %v2547, %v2130
        %v2613 = vsel %vm2557, %v2548, %v2130
        %v2614 = vsel %vm2557, %v2549, %v2130
        %v2615 = vsel %vm2557, %v2550, %v2130
        %v2616 = vsel %vm2557, %v2551, %v2130
        %v2617 = vsel %vm2557, %v2552, %v2130
        %v2618 = vsel %vm2557, %v2553, %v2130
        %v2619 = vsel %vm2557, %v2554, %v2130
        %v2620 = vsel %vm2557, %v2555, %v2130
        %v2621 = vsel %vm2557, %v2556, %v2130
        %v2622 = vld [vmem:[%s5] sm:$0xff]
        %v2623 = vld [vmem:[%s5 + $0x8] sm:$0xff]
        %v2624 = vld [vmem:[%s5 + $0x10] sm:$0xff]
        %v2625 = vld [vmem:[%s5 + $0x18] sm:$0xff]
        %v2626 = vld [vmem:[%s5 + $0x20] sm:$0xff]
        %v2627 = vld [vmem:[%s5 + $0x28] sm:$0xff]
        %v2628 = vld [vmem:[%s5 + $0x30] sm:$0xff]
        %v2629 = vld [vmem:[%s5 + $0x38] sm:$0xff]
        %v2630 = vld [vmem:[%s5 + $0x40] sm:$0xff]
        %v2631 = vld [vmem:[%s6] sm:$0x1]
        %v2633 = vlaneseq
        %v2634 = vshrl.u32 %v2633, 7
        %v2635 = vsub.s32 0, %v2634
        %v2636 = vrot.slane %v2631, %v2635
        %v2701 = vcombine.low %v2558, %v2559
        %v2702 = vcombine.low %v2560, %v2561
        %v2704 = vunpack.c.l.s4 1983009808
        %v2705 = vunpack.c.0.s8 %v2704
        %v2706 = vlaneseq
        %v2707 = vshrl.u32 %v2706, 7
        %v2708 = vsub.s32 %v2705, %v2707
        %v2709 = vrot.slane %v2701, %v2708
        %v2711 = vunpack.c.l.s4 1983009808
        %v2712 = vunpack.c.0.s8 %v2711
        %v2713 = vlaneseq
        %v2714 = vshrl.u32 %v2713, 7
        %v2715 = vsub.s32 %v2712, %v2714
        %v2716 = vrot.slane %v2702, %v2715
        %v2717 = vcombine.low %v2709, %v2716
        %v2718 = vcombine.low %v2562, %v2563
        %v2719 = vcombine.low %v2564, %v2565
        %v2721 = vunpack.c.l.s4 1983009808
        %v2722 = vunpack.c.0.s8 %v2721
        %v2723 = vlaneseq
        %v2724 = vshrl.u32 %v2723, 7
        %v2725 = vsub.s32 %v2722, %v2724
        %v2726 = vrot.slane %v2718, %v2725
        %v2728 = vunpack.c.l.s4 1983009808
        %v2729 = vunpack.c.0.s8 %v2728
        %v2730 = vlaneseq
        %v2731 = vshrl.u32 %v2730, 7
        %v2732 = vsub.s32 %v2729, %v2731
        %v2733 = vrot.slane %v2719, %v2732
        %v2734 = vcombine.low %v2726, %v2733
        %v2735 = vcombine.low %v2566, %v2567
        %v2736 = vcombine.low %v2568, %v2569
        %v2738 = vunpack.c.l.s4 1983009808
        %v2739 = vunpack.c.0.s8 %v2738
        %v2740 = vlaneseq
        %v2741 = vshrl.u32 %v2740, 7
        %v2742 = vsub.s32 %v2739, %v2741
        %v2743 = vrot.slane %v2735, %v2742
        %v2745 = vunpack.c.l.s4 1983009808
        %v2746 = vunpack.c.0.s8 %v2745
        %v2747 = vlaneseq
        %v2748 = vshrl.u32 %v2747, 7
        %v2749 = vsub.s32 %v2746, %v2748
        %v2750 = vrot.slane %v2736, %v2749
        %v2751 = vcombine.low %v2743, %v2750
        %v2752 = vcombine.low %v2570, %v2571
        %v2753 = vcombine.low %v2572, %v2573
        %v2755 = vunpack.c.l.s4 1983009808
        %v2756 = vunpack.c.0.s8 %v2755
        %v2757 = vlaneseq
        %v2758 = vshrl.u32 %v2757, 7
        %v2759 = vsub.s32 %v2756, %v2758
        %v2760 = vrot.slane %v2752, %v2759
        %v2762 = vunpack.c.l.s4 1983009808
        %v2763 = vunpack.c.0.s8 %v2762
        %v2764 = vlaneseq
        %v2765 = vshrl.u32 %v2764, 7
        %v2766 = vsub.s32 %v2763, %v2765
        %v2767 = vrot.slane %v2753, %v2766
        %v2768 = vcombine.low %v2760, %v2767
        %v2769 = vcombine.low %v2574, %v2575
        %v2770 = vcombine.low %v2576, %v2577
        %v2772 = vunpack.c.l.s4 1983009808
        %v2773 = vunpack.c.0.s8 %v2772
        %v2774 = vlaneseq
        %v2775 = vshrl.u32 %v2774, 7
        %v2776 = vsub.s32 %v2773, %v2775
        %v2777 = vrot.slane %v2769, %v2776
        %v2779 = vunpack.c.l.s4 1983009808
        %v2780 = vunpack.c.0.s8 %v2779
        %v2781 = vlaneseq
        %v2782 = vshrl.u32 %v2781, 7
        %v2783 = vsub.s32 %v2780, %v2782
        %v2784 = vrot.slane %v2770, %v2783
        %v2785 = vcombine.low %v2777, %v2784
        %v2786 = vcombine.low %v2578, %v2579
        %v2787 = vcombine.low %v2580, %v2581
        %v2789 = vunpack.c.l.s4 1983009808
        %v2790 = vunpack.c.0.s8 %v2789
        %v2791 = vlaneseq
        %v2792 = vshrl.u32 %v2791, 7
        %v2793 = vsub.s32 %v2790, %v2792
        %v2794 = vrot.slane %v2786, %v2793
        %v2796 = vunpack.c.l.s4 1983009808
        %v2797 = vunpack.c.0.s8 %v2796
        %v2798 = vlaneseq
        %v2799 = vshrl.u32 %v2798, 7
        %v2800 = vsub.s32 %v2797, %v2799
        %v2801 = vrot.slane %v2787, %v2800
        %v2802 = vcombine.low %v2794, %v2801
        %v2803 = vcombine.low %v2582, %v2583
        %v2804 = vcombine.low %v2584, %v2585
        %v2806 = vunpack.c.l.s4 1983009808
        %v2807 = vunpack.c.0.s8 %v2806
        %v2808 = vlaneseq
        %v2809 = vshrl.u32 %v2808, 7
        %v2810 = vsub.s32 %v2807, %v2809
        %v2811 = vrot.slane %v2803, %v2810
        %v2813 = vunpack.c.l.s4 1983009808
        %v2814 = vunpack.c.0.s8 %v2813
        %v2815 = vlaneseq
        %v2816 = vshrl.u32 %v2815, 7
        %v2817 = vsub.s32 %v2814, %v2816
        %v2818 = vrot.slane %v2804, %v2817
        %v2819 = vcombine.low %v2811, %v2818
        %v2820 = vcombine.low %v2586, %v2587
        %v2821 = vcombine.low %v2588, %v2589
        %v2823 = vunpack.c.l.s4 1983009808
        %v2824 = vunpack.c.0.s8 %v2823
        %v2825 = vlaneseq
        %v2826 = vshrl.u32 %v2825, 7
        %v2827 = vsub.s32 %v2824, %v2826
        %v2828 = vrot.slane %v2820, %v2827
        %v2830 = vunpack.c.l.s4 1983009808
        %v2831 = vunpack.c.0.s8 %v2830
        %v2832 = vlaneseq
        %v2833 = vshrl.u32 %v2832, 7
        %v2834 = vsub.s32 %v2831, %v2833
        %v2835 = vrot.slane %v2821, %v2834
        %v2836 = vcombine.low %v2828, %v2835
        %v2837 = vcombine.low %v2590, %v2591
        %v2838 = vcombine.low %v2592, %v2593
        %v2840 = vunpack.c.l.s4 1983009808
        %v2841 = vunpack.c.0.s8 %v2840
        %v2842 = vlaneseq
        %v2843 = vshrl.u32 %v2842, 7
        %v2844 = vsub.s32 %v2841, %v2843
        %v2845 = vrot.slane %v2837, %v2844
        %v2847 = vunpack.c.l.s4 1983009808
        %v2848 = vunpack.c.0.s8 %v2847
        %v2849 = vlaneseq
        %v2850 = vshrl.u32 %v2849, 7
        %v2851 = vsub.s32 %v2848, %v2850
        %v2852 = vrot.slane %v2838, %v2851
        %v2853 = vcombine.low %v2845, %v2852
        %v2854 = vcombine.low %v2594, %v2595
        %v2855 = vcombine.low %v2596, %v2597
        %v2857 = vunpack.c.l.s4 1983009808
        %v2858 = vunpack.c.0.s8 %v2857
        %v2859 = vlaneseq
        %v2860 = vshrl.u32 %v2859, 7
        %v2861 = vsub.s32 %v2858, %v2860
        %v2862 = vrot.slane %v2854, %v2861
        %v2864 = vunpack.c.l.s4 1983009808
        %v2865 = vunpack.c.0.s8 %v2864
        %v2866 = vlaneseq
        %v2867 = vshrl.u32 %v2866, 7
        %v2868 = vsub.s32 %v2865, %v2867
        %v2869 = vrot.slane %v2855, %v2868
        %v2870 = vcombine.low %v2862, %v2869
        %v2871 = vcombine.low %v2598, %v2599
        %v2872 = vcombine.low %v2600, %v2601
        %v2874 = vunpack.c.l.s4 1983009808
        %v2875 = vunpack.c.0.s8 %v2874
        %v2876 = vlaneseq
        %v2877 = vshrl.u32 %v2876, 7
        %v2878 = vsub.s32 %v2875, %v2877
        %v2879 = vrot.slane %v2871, %v2878
        %v2881 = vunpack.c.l.s4 1983009808
        %v2882 = vunpack.c.0.s8 %v2881
        %v2883 = vlaneseq
        %v2884 = vshrl.u32 %v2883, 7
        %v2885 = vsub.s32 %v2882, %v2884
        %v2886 = vrot.slane %v2872, %v2885
        %v2887 = vcombine.low %v2879, %v2886
        %v2888 = vcombine.low %v2602, %v2603
        %v2889 = vcombine.low %v2604, %v2605
        %v2891 = vunpack.c.l.s4 1983009808
        %v2892 = vunpack.c.0.s8 %v2891
        %v2893 = vlaneseq
        %v2894 = vshrl.u32 %v2893, 7
        %v2895 = vsub.s32 %v2892, %v2894
        %v2896 = vrot.slane %v2888, %v2895
        %v2898 = vunpack.c.l.s4 1983009808
        %v2899 = vunpack.c.0.s8 %v2898
        %v2900 = vlaneseq
        %v2901 = vshrl.u32 %v2900, 7
        %v2902 = vsub.s32 %v2899, %v2901
        %v2903 = vrot.slane %v2889, %v2902
        %v2904 = vcombine.low %v2896, %v2903
        %v2905 = vcombine.low %v2606, %v2607
        %v2906 = vcombine.low %v2608, %v2609
        %v2908 = vunpack.c.l.s4 1983009808
        %v2909 = vunpack.c.0.s8 %v2908
        %v2910 = vlaneseq
        %v2911 = vshrl.u32 %v2910, 7
        %v2912 = vsub.s32 %v2909, %v2911
        %v2913 = vrot.slane %v2905, %v2912
        %v2915 = vunpack.c.l.s4 1983009808
        %v2916 = vunpack.c.0.s8 %v2915
        %v2917 = vlaneseq
        %v2918 = vshrl.u32 %v2917, 7
        %v2919 = vsub.s32 %v2916, %v2918
        %v2920 = vrot.slane %v2906, %v2919
        %v2921 = vcombine.low %v2913, %v2920
        %v2922 = vcombine.low %v2610, %v2611
        %v2923 = vcombine.low %v2612, %v2613
        %v2925 = vunpack.c.l.s4 1983009808
        %v2926 = vunpack.c.0.s8 %v2925
        %v2927 = vlaneseq
        %v2928 = vshrl.u32 %v2927, 7
        %v2929 = vsub.s32 %v2926, %v2928
        %v2930 = vrot.slane %v2922, %v2929
        %v2932 = vunpack.c.l.s4 1983009808
        %v2933 = vunpack.c.0.s8 %v2932
        %v2934 = vlaneseq
        %v2935 = vshrl.u32 %v2934, 7
        %v2936 = vsub.s32 %v2933, %v2935
        %v2937 = vrot.slane %v2923, %v2936
        %v2938 = vcombine.low %v2930, %v2937
        %v2939 = vcombine.low %v2614, %v2615
        %v2940 = vcombine.low %v2616, %v2617
        %v2942 = vunpack.c.l.s4 1983009808
        %v2943 = vunpack.c.0.s8 %v2942
        %v2944 = vlaneseq
        %v2945 = vshrl.u32 %v2944, 7
        %v2946 = vsub.s32 %v2943, %v2945
        %v2947 = vrot.slane %v2939, %v2946
        %v2949 = vunpack.c.l.s4 1983009808
        %v2950 = vunpack.c.0.s8 %v2949
        %v2951 = vlaneseq
        %v2952 = vshrl.u32 %v2951, 7
        %v2953 = vsub.s32 %v2950, %v2952
        %v2954 = vrot.slane %v2940, %v2953
        %v2955 = vcombine.low %v2947, %v2954
        %v2956 = vcombine.low %v2618, %v2619
        %v2957 = vcombine.low %v2620, %v2621
        %v2959 = vunpack.c.l.s4 1983009808
        %v2960 = vunpack.c.0.s8 %v2959
        %v2961 = vlaneseq
        %v2962 = vshrl.u32 %v2961, 7
        %v2963 = vsub.s32 %v2960, %v2962
        %v2964 = vrot.slane %v2956, %v2963
        %v2966 = vunpack.c.l.s4 1983009808
        %v2967 = vunpack.c.0.s8 %v2966
        %v2968 = vlaneseq
        %v2969 = vshrl.u32 %v2968, 7
        %v2970 = vsub.s32 %v2967, %v2969
        %v2971 = vrot.slane %v2957, %v2970
        %v2972 = vcombine.low %v2964, %v2971
        %v2973 = vcombine.low %v2636, %v2636
        %v2975 = vunpack.c.l.s4 1983009808
        %v2976 = vunpack.c.0.s8 %v2975
        %v2977 = vlaneseq
        %v2978 = vshrl.u32 %v2977, 7
        %v2979 = vsub.s32 %v2976, %v2978
        %v2980 = vrot.slane %v2973, %v2979
        %v2981 = vcombine.low %v2980, %v2980
        %vm2983 = vcmask 588800
        %v2984 = vsel %vm2983, %v2717, 0
        %v2986 = vsel %vm2983, %v2734, 0
        %v2988 = vsel %vm2983, %v2751, 0
        %v2990 = vsel %vm2983, %v2768, 0
        %v2992 = vsel %vm2983, %v2785, 0
        %v2994 = vsel %vm2983, %v2802, 0
        %v2996 = vsel %vm2983, %v2819, 0
        %v2998 = vsel %vm2983, %v2836, 0
        %v3000 = vsel %vm2983, %v2853, 0
        %v3002 = vsel %vm2983, %v2870, 0
        %v3004 = vsel %vm2983, %v2887, 0
        %v3006 = vsel %vm2983, %v2904, 0
        %v3008 = vsel %vm2983, %v2921, 0
        %v3010 = vsel %vm2983, %v2938, 0
        %v3012 = vsel %vm2983, %v2955, 0
        %v3014 = vsel %vm2983, %v2972, 0
        %3016 = vmatprep.subr.mxu0 0.0
        %3017 = vmatpush1.msra.mxu0 0.0
        %3018 = vmatprep.subr.mxu0 0.0
        %3019 = vmatpush1.msra.mxu0 0.0
        %3020 = vmatprep.subr.mxu0 0.0
        %3021 = vmatpush1.msra.mxu0 0.0
        %3022 = vmatprep.subr.mxu0 0.0
        %3023 = vmatpush1.msra.mxu0 0.0
        %3024 = vmatprep.subr.mxu0 0.0
        %3025 = vmatpush1.msra.mxu0 0.0
        %3026 = vmatprep.subr.mxu0 0.0
        %3027 = vmatpush1.msra.mxu0 0.0
        %3028 = vmatprep.subr.mxu0 0.0
        %3029 = vmatpush1.msra.mxu0 0.0
        %3030 = vmatprep.subr.mxu0 0.0
        %3031 = vmatpush1.msra.mxu0 %v2630
        %3032 = vmatprep.subr.mxu0 0.0
        %3033 = vmatpush1.msra.mxu0 %v2629
        %3034 = vmatprep.subr.mxu0 0.0
        %3035 = vmatpush1.msra.mxu0 %v2628
        %3036 = vmatprep.subr.mxu0 0.0
        %3037 = vmatpush1.msra.mxu0 %v2627
        %3038 = vmatprep.subr.mxu0 0.0
        %3039 = vmatpush1.msra.mxu0 %v2626
        %3040 = vmatprep.subr.mxu0 0.0
        %3041 = vmatpush1.msra.mxu0 %v2625
        %3042 = vmatprep.subr.mxu0 0.0
        %3043 = vmatpush1.msra.mxu0 %v2624
        %3044 = vmatprep.subr.mxu0 0.0
        %3045 = vmatpush1.msra.mxu0 %v2623
        %3046 = vmatprep.subr.mxu0 0.0
        %3047 = vmatpush1.msra.mxu0 %v2622
        %3048 = vmatprep.subr.mxu0 0.0
        %3049 = vmatpush2.msra.mxu0 0.0
        %3050 = vmatprep.subr.mxu0 0.0
        %3051 = vmatpush2.msra.mxu0 0.0
        %3052 = vmatprep.subr.mxu0 0.0
        %3053 = vmatpush2.msra.mxu0 0.0
        %3054 = vmatprep.subr.mxu0 0.0
        %3055 = vmatpush2.msra.mxu0 0.0
        %3056 = vmatprep.subr.mxu0 0.0
        %3057 = vmatpush2.msra.mxu0 0.0
        %3058 = vmatprep.subr.mxu0 0.0
        %3059 = vmatpush2.msra.mxu0 0.0
        %3060 = vmatprep.subr.mxu0 0.0
        %3061 = vmatpush2.msra.mxu0 0.0
        %3062 = vmatprep.subr.mxu0 0.0
        %3063 = vmatpush2.msra.mxu0 0.0
        %3064 = vmatprep.subr.mxu0 0.0
        %3065 = vmatpush2.msra.mxu0 0.0
        %3066 = vmatprep.subr.mxu0 0.0
        %3067 = vmatpush2.msra.mxu0 0.0
        %3068 = vmatprep.subr.mxu0 0.0
        %3069 = vmatpush2.msra.mxu0 0.0
        %3070 = vmatprep.subr.mxu0 0.0
        %3071 = vmatpush2.msra.mxu0 0.0
        %3072 = vmatprep.subr.mxu0 0.0
        %3073 = vmatpush2.msra.mxu0 0.0
        %3074 = vmatprep.subr.mxu0 0.0
        %3075 = vmatpush2.msra.mxu0 0.0
        %3076 = vmatprep.subr.mxu0 0.0
        %3077 = vmatpush2.msra.mxu0 0.0
        %3078 = vmatprep.subr.mxu0 0.0
        %3079 = vmatpush2.msra.mxu0 0.0
        %3080 = vmatprep.mubr.f32.mxu0 0.0
        %3081 = vmatmul.mubr.f32.gmra.mxu0 %v2984
        %v3082 = vpop.f32.mrf.mxu0
        %v3083 = vadd.f32 %v2981, %v3082
        %v3084 = vpop.f32.mrf.mxu0
        %3085 = vmatprep.mubr.f32.mxu0 0.0
        %3086 = vmatmul.mubr.f32.gmra.mxu0 %v2986
        %v3087 = vpop.f32.mrf.mxu0
        %v3088 = vadd.f32 %v2981, %v3087
        %v3089 = vpop.f32.mrf.mxu0
        %3090 = vmatprep.mubr.f32.mxu0 0.0
        %3091 = vmatmul.mubr.f32.gmra.mxu0 %v2988
        %v3092 = vpop.f32.mrf.mxu0
        %v3093 = vadd.f32 %v2981, %v3092
        %v3094 = vpop.f32.mrf.mxu0
        %3095 = vmatprep.mubr.f32.mxu0 0.0
        %3096 = vmatmul.mubr.f32.gmra.mxu0 %v2990
        %v3097 = vpop.f32.mrf.mxu0
        %v3098 = vadd.f32 %v2981, %v3097
        %v3099 = vpop.f32.mrf.mxu0
        %3100 = vmatprep.mubr.f32.mxu0 0.0
        %3101 = vmatmul.mubr.f32.gmra.mxu0 %v2992
        %v3102 = vpop.f32.mrf.mxu0
        %v3103 = vadd.f32 %v2981, %v3102
        %v3104 = vpop.f32.mrf.mxu0
        %3105 = vmatprep.mubr.f32.mxu0 0.0
        %3106 = vmatmul.mubr.f32.gmra.mxu0 %v2994
        %v3107 = vpop.f32.mrf.mxu0
        %v3108 = vadd.f32 %v2981, %v3107
        %v3109 = vpop.f32.mrf.mxu0
        %3110 = vmatprep.mubr.f32.mxu0 0.0
        %3111 = vmatmul.mubr.f32.gmra.mxu0 %v2996
        %v3112 = vpop.f32.mrf.mxu0
        %v3113 = vadd.f32 %v2981, %v3112
        %v3114 = vpop.f32.mrf.mxu0
        %3115 = vmatprep.mubr.f32.mxu0 0.0
        %3116 = vmatmul.mubr.f32.gmra.mxu0 %v2998
        %v3117 = vpop.f32.mrf.mxu0
        %v3118 = vadd.f32 %v2981, %v3117
        %v3119 = vpop.f32.mrf.mxu0
        %3120 = vmatprep.mubr.f32.mxu0 0.0
        %3121 = vmatmul.mubr.f32.gmra.mxu0 %v3000
        %v3122 = vpop.f32.mrf.mxu0
        %v3123 = vadd.f32 %v2981, %v3122
        %v3124 = vpop.f32.mrf.mxu0
        %3125 = vmatprep.mubr.f32.mxu0 0.0
        %3126 = vmatmul.mubr.f32.gmra.mxu0 %v3002
        %v3127 = vpop.f32.mrf.mxu0
        %v3128 = vadd.f32 %v2981, %v3127
        %v3129 = vpop.f32.mrf.mxu0
        %3130 = vmatprep.mubr.f32.mxu0 0.0
        %3131 = vmatmul.mubr.f32.gmra.mxu0 %v3004
        %v3132 = vpop.f32.mrf.mxu0
        %v3133 = vadd.f32 %v2981, %v3132
        %v3134 = vpop.f32.mrf.mxu0
        %3135 = vmatprep.mubr.f32.mxu0 0.0
        %3136 = vmatmul.mubr.f32.gmra.mxu0 %v3006
        %v3137 = vpop.f32.mrf.mxu0
        %v3138 = vadd.f32 %v2981, %v3137
        %v3139 = vpop.f32.mrf.mxu0
        %3140 = vmatprep.mubr.f32.mxu0 0.0
        %3141 = vmatmul.mubr.f32.gmra.mxu0 %v3008
        %v3142 = vpop.f32.mrf.mxu0
        %v3143 = vadd.f32 %v2981, %v3142
        %v3144 = vpop.f32.mrf.mxu0
        %3145 = vmatprep.mubr.f32.mxu0 0.0
        %3146 = vmatmul.mubr.f32.gmra.mxu0 %v3010
        %v3147 = vpop.f32.mrf.mxu0
        %v3148 = vadd.f32 %v2981, %v3147
        %v3149 = vpop.f32.mrf.mxu0
        %3150 = vmatprep.mubr.f32.mxu0 0.0
        %3151 = vmatmul.mubr.f32.gmra.mxu0 %v3012
        %v3152 = vpop.f32.mrf.mxu0
        %v3153 = vadd.f32 %v2981, %v3152
        %v3154 = vpop.f32.mrf.mxu0
        %3155 = vmatprep.mubr.f32.mxu0 0.0
        %3156 = vmatmul.mubr.f32.gmra.mxu0 %v3014
        %v3157 = vpop.f32.mrf.mxu0
        %v3158 = vadd.f32 %v2981, %v3157
        %v3159 = vpop.f32.mrf.mxu0
        %3160 = vdwg.mxu0
        %v3177 = vcombine.high %v3083, %v3083
        %v3179 = vunpack.c.l.s4 1983009808
        %v3180 = vunpack.c.0.s8 %v3179
        %v3181 = vlaneseq
        %v3182 = vshrl.u32 %v3181, 7
        %v3183 = vsub.s32 %v3180, %v3182
        %v3184 = vrot.slane %v3083, %v3183
        %v3186 = vunpack.c.l.s4 1983009808
        %v3187 = vunpack.c.0.s8 %v3186
        %v3188 = vlaneseq
        %v3189 = vshrl.u32 %v3188, 7
        %v3190 = vsub.s32 %v3187, %v3189
        %v3191 = vrot.slane %v3177, %v3190
        %v3192 = vcombine.high %v3184, %v3184
        %v3193 = vcombine.high %v3191, %v3191
        %v3194 = vcombine.high %v3088, %v3088
        %v3196 = vunpack.c.l.s4 1983009808
        %v3197 = vunpack.c.0.s8 %v3196
        %v3198 = vlaneseq
        %v3199 = vshrl.u32 %v3198, 7
        %v3200 = vsub.s32 %v3197, %v3199
        %v3201 = vrot.slane %v3088, %v3200
        %v3203 = vunpack.c.l.s4 1983009808
        %v3204 = vunpack.c.0.s8 %v3203
        %v3205 = vlaneseq
        %v3206 = vshrl.u32 %v3205, 7
        %v3207 = vsub.s32 %v3204, %v3206
        %v3208 = vrot.slane %v3194, %v3207
        %v3209 = vcombine.high %v3201, %v3201
        %v3210 = vcombine.high %v3208, %v3208
        %v3211 = vcombine.high %v3093, %v3093
        %v3213 = vunpack.c.l.s4 1983009808
        %v3214 = vunpack.c.0.s8 %v3213
        %v3215 = vlaneseq
        %v3216 = vshrl.u32 %v3215, 7
        %v3217 = vsub.s32 %v3214, %v3216
        %v3218 = vrot.slane %v3093, %v3217
        %v3220 = vunpack.c.l.s4 1983009808
        %v3221 = vunpack.c.0.s8 %v3220
        %v3222 = vlaneseq
        %v3223 = vshrl.u32 %v3222, 7
        %v3224 = vsub.s32 %v3221, %v3223
        %v3225 = vrot.slane %v3211, %v3224
        %v3226 = vcombine.high %v3218, %v3218
        %v3227 = vcombine.high %v3225, %v3225
        %v3228 = vcombine.high %v3098, %v3098
        %v3230 = vunpack.c.l.s4 1983009808
        %v3231 = vunpack.c.0.s8 %v3230
        %v3232 = vlaneseq
        %v3233 = vshrl.u32 %v3232, 7
        %v3234 = vsub.s32 %v3231, %v3233
        %v3235 = vrot.slane %v3098, %v3234
        %v3237 = vunpack.c.l.s4 1983009808
        %v3238 = vunpack.c.0.s8 %v3237
        %v3239 = vlaneseq
        %v3240 = vshrl.u32 %v3239, 7
        %v3241 = vsub.s32 %v3238, %v3240
        %v3242 = vrot.slane %v3228, %v3241
        %v3243 = vcombine.high %v3235, %v3235
        %v3244 = vcombine.high %v3242, %v3242
        %v3245 = vcombine.high %v3103, %v3103
        %v3247 = vunpack.c.l.s4 1983009808
        %v3248 = vunpack.c.0.s8 %v3247
        %v3249 = vlaneseq
        %v3250 = vshrl.u32 %v3249, 7
        %v3251 = vsub.s32 %v3248, %v3250
        %v3252 = vrot.slane %v3103, %v3251
        %v3254 = vunpack.c.l.s4 1983009808
        %v3255 = vunpack.c.0.s8 %v3254
        %v3256 = vlaneseq
        %v3257 = vshrl.u32 %v3256, 7
        %v3258 = vsub.s32 %v3255, %v3257
        %v3259 = vrot.slane %v3245, %v3258
        %v3260 = vcombine.high %v3252, %v3252
        %v3261 = vcombine.high %v3259, %v3259
        %v3262 = vcombine.high %v3108, %v3108
        %v3264 = vunpack.c.l.s4 1983009808
        %v3265 = vunpack.c.0.s8 %v3264
        %v3266 = vlaneseq
        %v3267 = vshrl.u32 %v3266, 7
        %v3268 = vsub.s32 %v3265, %v3267
        %v3269 = vrot.slane %v3108, %v3268
        %v3271 = vunpack.c.l.s4 1983009808
        %v3272 = vunpack.c.0.s8 %v3271
        %v3273 = vlaneseq
        %v3274 = vshrl.u32 %v3273, 7
        %v3275 = vsub.s32 %v3272, %v3274
        %v3276 = vrot.slane %v3262, %v3275
        %v3277 = vcombine.high %v3269, %v3269
        %v3278 = vcombine.high %v3276, %v3276
        %v3279 = vcombine.high %v3113, %v3113
        %v3281 = vunpack.c.l.s4 1983009808
        %v3282 = vunpack.c.0.s8 %v3281
        %v3283 = vlaneseq
        %v3284 = vshrl.u32 %v3283, 7
        %v3285 = vsub.s32 %v3282, %v3284
        %v3286 = vrot.slane %v3113, %v3285
        %v3288 = vunpack.c.l.s4 1983009808
        %v3289 = vunpack.c.0.s8 %v3288
        %v3290 = vlaneseq
        %v3291 = vshrl.u32 %v3290, 7
        %v3292 = vsub.s32 %v3289, %v3291
        %v3293 = vrot.slane %v3279, %v3292
        %v3294 = vcombine.high %v3286, %v3286
        %v3295 = vcombine.high %v3293, %v3293
        %v3296 = vcombine.high %v3118, %v3118
        %v3298 = vunpack.c.l.s4 1983009808
        %v3299 = vunpack.c.0.s8 %v3298
        %v3300 = vlaneseq
        %v3301 = vshrl.u32 %v3300, 7
        %v3302 = vsub.s32 %v3299, %v3301
        %v3303 = vrot.slane %v3118, %v3302
        %v3305 = vunpack.c.l.s4 1983009808
        %v3306 = vunpack.c.0.s8 %v3305
        %v3307 = vlaneseq
        %v3308 = vshrl.u32 %v3307, 7
        %v3309 = vsub.s32 %v3306, %v3308
        %v3310 = vrot.slane %v3296, %v3309
        %v3311 = vcombine.high %v3303, %v3303
        %v3312 = vcombine.high %v3310, %v3310
        %v3313 = vcombine.high %v3123, %v3123
        %v3315 = vunpack.c.l.s4 1983009808
        %v3316 = vunpack.c.0.s8 %v3315
        %v3317 = vlaneseq
        %v3318 = vshrl.u32 %v3317, 7
        %v3319 = vsub.s32 %v3316, %v3318
        %v3320 = vrot.slane %v3123, %v3319
        %v3322 = vunpack.c.l.s4 1983009808
        %v3323 = vunpack.c.0.s8 %v3322
        %v3324 = vlaneseq
        %v3325 = vshrl.u32 %v3324, 7
        %v3326 = vsub.s32 %v3323, %v3325
        %v3327 = vrot.slane %v3313, %v3326
        %v3328 = vcombine.high %v3320, %v3320
        %v3329 = vcombine.high %v3327, %v3327
        %v3330 = vcombine.high %v3128, %v3128
        %v3332 = vunpack.c.l.s4 1983009808
        %v3333 = vunpack.c.0.s8 %v3332
        %v3334 = vlaneseq
        %v3335 = vshrl.u32 %v3334, 7
        %v3336 = vsub.s32 %v3333, %v3335
        %v3337 = vrot.slane %v3128, %v3336
        %v3339 = vunpack.c.l.s4 1983009808
        %v3340 = vunpack.c.0.s8 %v3339
        %v3341 = vlaneseq
        %v3342 = vshrl.u32 %v3341, 7
        %v3343 = vsub.s32 %v3340, %v3342
        %v3344 = vrot.slane %v3330, %v3343
        %v3345 = vcombine.high %v3337, %v3337
        %v3346 = vcombine.high %v3344, %v3344
        %v3347 = vcombine.high %v3133, %v3133
        %v3349 = vunpack.c.l.s4 1983009808
        %v3350 = vunpack.c.0.s8 %v3349
        %v3351 = vlaneseq
        %v3352 = vshrl.u32 %v3351, 7
        %v3353 = vsub.s32 %v3350, %v3352
        %v3354 = vrot.slane %v3133, %v3353
        %v3356 = vunpack.c.l.s4 1983009808
        %v3357 = vunpack.c.0.s8 %v3356
        %v3358 = vlaneseq
        %v3359 = vshrl.u32 %v3358, 7
        %v3360 = vsub.s32 %v3357, %v3359
        %v3361 = vrot.slane %v3347, %v3360
        %v3362 = vcombine.high %v3354, %v3354
        %v3363 = vcombine.high %v3361, %v3361
        %v3364 = vcombine.high %v3138, %v3138
        %v3366 = vunpack.c.l.s4 1983009808
        %v3367 = vunpack.c.0.s8 %v3366
        %v3368 = vlaneseq
        %v3369 = vshrl.u32 %v3368, 7
        %v3370 = vsub.s32 %v3367, %v3369
        %v3371 = vrot.slane %v3138, %v3370
        %v3373 = vunpack.c.l.s4 1983009808
        %v3374 = vunpack.c.0.s8 %v3373
        %v3375 = vlaneseq
        %v3376 = vshrl.u32 %v3375, 7
        %v3377 = vsub.s32 %v3374, %v3376
        %v3378 = vrot.slane %v3364, %v3377
        %v3379 = vcombine.high %v3371, %v3371
        %v3380 = vcombine.high %v3378, %v3378
        %v3381 = vcombine.high %v3143, %v3143
        %v3383 = vunpack.c.l.s4 1983009808
        %v3384 = vunpack.c.0.s8 %v3383
        %v3385 = vlaneseq
        %v3386 = vshrl.u32 %v3385, 7
        %v3387 = vsub.s32 %v3384, %v3386
        %v3388 = vrot.slane %v3143, %v3387
        %v3390 = vunpack.c.l.s4 1983009808
        %v3391 = vunpack.c.0.s8 %v3390
        %v3392 = vlaneseq
        %v3393 = vshrl.u32 %v3392, 7
        %v3394 = vsub.s32 %v3391, %v3393
        %v3395 = vrot.slane %v3381, %v3394
        %v3396 = vcombine.high %v3388, %v3388
        %v3397 = vcombine.high %v3395, %v3395
        %v3398 = vcombine.high %v3148, %v3148
        %v3400 = vunpack.c.l.s4 1983009808
        %v3401 = vunpack.c.0.s8 %v3400
        %v3402 = vlaneseq
        %v3403 = vshrl.u32 %v3402, 7
        %v3404 = vsub.s32 %v3401, %v3403
        %v3405 = vrot.slane %v3148, %v3404
        %v3407 = vunpack.c.l.s4 1983009808
        %v3408 = vunpack.c.0.s8 %v3407
        %v3409 = vlaneseq
        %v3410 = vshrl.u32 %v3409, 7
        %v3411 = vsub.s32 %v3408, %v3410
        %v3412 = vrot.slane %v3398, %v3411
        %v3413 = vcombine.high %v3405, %v3405
        %v3414 = vcombine.high %v3412, %v3412
        %v3415 = vcombine.high %v3153, %v3153
        %v3417 = vunpack.c.l.s4 1983009808
        %v3418 = vunpack.c.0.s8 %v3417
        %v3419 = vlaneseq
        %v3420 = vshrl.u32 %v3419, 7
        %v3421 = vsub.s32 %v3418, %v3420
        %v3422 = vrot.slane %v3153, %v3421
        %v3424 = vunpack.c.l.s4 1983009808
        %v3425 = vunpack.c.0.s8 %v3424
        %v3426 = vlaneseq
        %v3427 = vshrl.u32 %v3426, 7
        %v3428 = vsub.s32 %v3425, %v3427
        %v3429 = vrot.slane %v3415, %v3428
        %v3430 = vcombine.high %v3422, %v3422
        %v3431 = vcombine.high %v3429, %v3429
        %v3432 = vcombine.high %v3158, %v3158
        %v3434 = vunpack.c.l.s4 1983009808
        %v3435 = vunpack.c.0.s8 %v3434
        %v3436 = vlaneseq
        %v3437 = vshrl.u32 %v3436, 7
        %v3438 = vsub.s32 %v3435, %v3437
        %v3439 = vrot.slane %v3158, %v3438
        %v3441 = vunpack.c.l.s4 1983009808
        %v3442 = vunpack.c.0.s8 %v3441
        %v3443 = vlaneseq
        %v3444 = vshrl.u32 %v3443, 7
        %v3445 = vsub.s32 %v3442, %v3444
        %v3446 = vrot.slane %v3432, %v3445
        %v3447 = vcombine.high %v3439, %v3439
        %v3448 = vcombine.high %v3446, %v3446
        %v3513 = vadd.f32 %v3184, %v3320
        %v3514 = vadd.f32 %v3192, %v3328
        %v3515 = vadd.f32 %v3191, %v3327
        %v3516 = vadd.f32 %v3193, %v3329
        %v3517 = vadd.f32 %v3201, %v3337
        %v3518 = vadd.f32 %v3209, %v3345
        %v3519 = vadd.f32 %v3208, %v3344
        %v3520 = vadd.f32 %v3210, %v3346
        %v3521 = vadd.f32 %v3218, %v3354
        %v3522 = vadd.f32 %v3226, %v3362
        %v3523 = vadd.f32 %v3225, %v3361
        %v3524 = vadd.f32 %v3227, %v3363
        %v3525 = vadd.f32 %v3235, %v3371
        %v3526 = vadd.f32 %v3243, %v3379
        %v3527 = vadd.f32 %v3242, %v3378
        %v3528 = vadd.f32 %v3244, %v3380
        %v3529 = vadd.f32 %v3252, %v3388
        %v3530 = vadd.f32 %v3260, %v3396
        %v3531 = vadd.f32 %v3259, %v3395
        %v3532 = vadd.f32 %v3261, %v3397
        %v3533 = vadd.f32 %v3269, %v3405
        %v3534 = vadd.f32 %v3277, %v3413
        %v3535 = vadd.f32 %v3276, %v3412
        %v3536 = vadd.f32 %v3278, %v3414
        %v3537 = vadd.f32 %v3286, %v3422
        %v3538 = vadd.f32 %v3294, %v3430
        %v3539 = vadd.f32 %v3293, %v3429
        %v3540 = vadd.f32 %v3295, %v3431
        %v3541 = vadd.f32 %v3303, %v3439
        %v3542 = vadd.f32 %v3311, %v3447
        %v3543 = vadd.f32 %v3310, %v3446
        %v3544 = vadd.f32 %v3312, %v3448
        %v3545 = vadd.f32 %v3513, %v3514
        %v3546 = vadd.f32 %v3515, %v3516
        %v3547 = vadd.f32 %v3517, %v3518
        %v3548 = vadd.f32 %v3519, %v3520
        %v3549 = vadd.f32 %v3521, %v3522
        %v3550 = vadd.f32 %v3523, %v3524
        %v3551 = vadd.f32 %v3525, %v3526
        %v3552 = vadd.f32 %v3527, %v3528
        %v3553 = vadd.f32 %v3529, %v3530
        %v3554 = vadd.f32 %v3531, %v3532
        %v3555 = vadd.f32 %v3533, %v3534
        %v3556 = vadd.f32 %v3535, %v3536
        %v3557 = vadd.f32 %v3537, %v3538
        %v3558 = vadd.f32 %v3539, %v3540
        %v3559 = vadd.f32 %v3541, %v3542
        %v3560 = vadd.f32 %v3543, %v3544
        %v3561 = vmul.f32 %v3545, 0.25
        %v3562 = vmul.f32 %v3546, 0.25
        %v3563 = vmul.f32 %v3547, 0.25
        %v3564 = vmul.f32 %v3548, 0.25
        %v3565 = vmul.f32 %v3549, 0.25
        %v3566 = vmul.f32 %v3550, 0.25
        %v3567 = vmul.f32 %v3551, 0.25
        %v3568 = vmul.f32 %v3552, 0.25
        %v3569 = vmul.f32 %v3553, 0.25
        %v3570 = vmul.f32 %v3554, 0.25
        %v3571 = vmul.f32 %v3555, 0.25
        %v3572 = vmul.f32 %v3556, 0.25
        %v3573 = vmul.f32 %v3557, 0.25
        %v3574 = vmul.f32 %v3558, 0.25
        %v3575 = vmul.f32 %v3559, 0.25
        %v3576 = vmul.f32 %v3560, 0.25
        %v3577 = vld [vmem:[%s7] sm:$0x1]
        %v3579 = vlaneseq
        %v3580 = vshrl.u32 %v3579, 7
        %v3581 = vsub.s32 0, %v3580
        %v3582 = vrot.slane %v3577, %v3581
        %v3584 = vmul.f32 %v3561, %v3582
        %v3585 = vmul.f32 %v3562, %v3582
        %v3586 = vmul.f32 %v3563, %v3582
        %v3587 = vmul.f32 %v3564, %v3582
        %v3588 = vmul.f32 %v3565, %v3582
        %v3589 = vmul.f32 %v3566, %v3582
        %v3590 = vmul.f32 %v3567, %v3582
        %v3591 = vmul.f32 %v3568, %v3582
        %v3592 = vmul.f32 %v3569, %v3582
        %v3593 = vmul.f32 %v3570, %v3582
        %v3594 = vmul.f32 %v3571, %v3582
        %v3595 = vmul.f32 %v3572, %v3582
        %v3596 = vmul.f32 %v3573, %v3582
        %v3597 = vmul.f32 %v3574, %v3582
        %v3598 = vmul.f32 %v3575, %v3582
        %v3599 = vmul.f32 %v3576, %v3582
        %v3600 = vld [vmem:[%s8] sm:$0x1]
        %v3602 = vlaneseq
        %v3603 = vshrl.u32 %v3602, 7
        %v3604 = vsub.s32 0, %v3603
        %v3605 = vrot.slane %v3600, %v3604
        %v3607 = vadd.f32 %v3584, %v3605
        %v3608 = vadd.f32 %v3585, %v3605
        %v3609 = vadd.f32 %v3586, %v3605
        %v3610 = vadd.f32 %v3587, %v3605
        %v3611 = vadd.f32 %v3588, %v3605
        %v3612 = vadd.f32 %v3589, %v3605
        %v3613 = vadd.f32 %v3590, %v3605
        %v3614 = vadd.f32 %v3591, %v3605
        %v3615 = vadd.f32 %v3592, %v3605
        %v3616 = vadd.f32 %v3593, %v3605
        %v3617 = vadd.f32 %v3594, %v3605
        %v3618 = vadd.f32 %v3595, %v3605
        %v3619 = vadd.f32 %v3596, %v3605
        %v3620 = vadd.f32 %v3597, %v3605
        %v3621 = vadd.f32 %v3598, %v3605
        %v3622 = vadd.f32 %v3599, %v3605
        %vm3623 = vcmp.gt.f32.partialorder %v3607, 0.0
        %vm3624 = vcmp.gt.f32.partialorder %v3608, 0.0
        %vm3625 = vcmp.gt.f32.partialorder %v3609, 0.0
        %vm3626 = vcmp.gt.f32.partialorder %v3610, 0.0
        %vm3627 = vcmp.gt.f32.partialorder %v3611, 0.0
        %vm3628 = vcmp.gt.f32.partialorder %v3612, 0.0
        %vm3629 = vcmp.gt.f32.partialorder %v3613, 0.0
        %vm3630 = vcmp.gt.f32.partialorder %v3614, 0.0
        %vm3631 = vcmp.gt.f32.partialorder %v3615, 0.0
        %vm3632 = vcmp.gt.f32.partialorder %v3616, 0.0
        %vm3633 = vcmp.gt.f32.partialorder %v3617, 0.0
        %vm3634 = vcmp.gt.f32.partialorder %v3618, 0.0
        %vm3635 = vcmp.gt.f32.partialorder %v3619, 0.0
        %vm3636 = vcmp.gt.f32.partialorder %v3620, 0.0
        %vm3637 = vcmp.gt.f32.partialorder %v3621, 0.0
        %vm3638 = vcmp.gt.f32.partialorder %v3622, 0.0
        %v3639 = vmin.f32 %v3607, 0.0
        %v3640 = vmin.f32 %v3608, 0.0
        %v3641 = vmin.f32 %v3609, 0.0
        %v3642 = vmin.f32 %v3610, 0.0
        %v3643 = vmin.f32 %v3611, 0.0
        %v3644 = vmin.f32 %v3612, 0.0
        %v3645 = vmin.f32 %v3613, 0.0
        %v3646 = vmin.f32 %v3614, 0.0
        %v3647 = vmin.f32 %v3615, 0.0
        %v3648 = vmin.f32 %v3616, 0.0
        %v3649 = vmin.f32 %v3617, 0.0
        %v3650 = vmin.f32 %v3618, 0.0
        %v3651 = vmin.f32 %v3619, 0.0
        %v3652 = vmin.f32 %v3620, 0.0
        %v3653 = vmin.f32 %v3621, 0.0
        %v3654 = vmin.f32 %v3622, 0.0
        %v3655 = vmul.f32 %v3639, 1.442695
        %v3656 = vpow.pop %v3655
        %v3657 = vmul.f32 %v3640, 1.442695
        %v3658 = vpow.pop %v3657
        %v3659 = vmul.f32 %v3641, 1.442695
        %v3660 = vpow.pop %v3659
        %v3661 = vmul.f32 %v3642, 1.442695
        %v3662 = vpow.pop %v3661
        %v3663 = vmul.f32 %v3643, 1.442695
        %v3664 = vpow.pop %v3663
        %v3665 = vmul.f32 %v3644, 1.442695
        %v3666 = vpow.pop %v3665
        %v3667 = vmul.f32 %v3645, 1.442695
        %v3668 = vpow.pop %v3667
        %v3669 = vmul.f32 %v3646, 1.442695
        %v3670 = vpow.pop %v3669
        %v3671 = vmul.f32 %v3647, 1.442695
        %v3672 = vpow.pop %v3671
        %v3673 = vmul.f32 %v3648, 1.442695
        %v3674 = vpow.pop %v3673
        %v3675 = vmul.f32 %v3649, 1.442695
        %v3676 = vpow.pop %v3675
        %v3677 = vmul.f32 %v3650, 1.442695
        %v3678 = vpow.pop %v3677
        %v3679 = vmul.f32 %v3651, 1.442695
        %v3680 = vpow.pop %v3679
        %v3681 = vmul.f32 %v3652, 1.442695
        %v3682 = vpow.pop %v3681
        %v3683 = vmul.f32 %v3653, 1.442695
        %v3684 = vpow.pop %v3683
        %v3685 = vmul.f32 %v3654, 1.442695
        %v3686 = vpow.pop %v3685
        %v3687 = vsub.f32 %v3656, 1.0
        %v3688 = vsub.f32 %v3658, 1.0
        %v3689 = vsub.f32 %v3660, 1.0
        %v3690 = vsub.f32 %v3662, 1.0
        %v3691 = vsub.f32 %v3664, 1.0
        %v3692 = vsub.f32 %v3666, 1.0
        %v3693 = vsub.f32 %v3668, 1.0
        %v3694 = vsub.f32 %v3670, 1.0
        %v3695 = vsub.f32 %v3672, 1.0
        %v3696 = vsub.f32 %v3674, 1.0
        %v3697 = vsub.f32 %v3676, 1.0
        %v3698 = vsub.f32 %v3678, 1.0
        %v3699 = vsub.f32 %v3680, 1.0
        %v3700 = vsub.f32 %v3682, 1.0
        %v3701 = vsub.f32 %v3684, 1.0
        %v3702 = vsub.f32 %v3686, 1.0
        %v3703 = vsel %vm3623, %v3607, %v3687
        %v3704 = vsel %vm3624, %v3608, %v3688
        %v3705 = vsel %vm3625, %v3609, %v3689
        %v3706 = vsel %vm3626, %v3610, %v3690
        %v3707 = vsel %vm3627, %v3611, %v3691
        %v3708 = vsel %vm3628, %v3612, %v3692
        %v3709 = vsel %vm3629, %v3613, %v3693
        %v3710 = vsel %vm3630, %v3614, %v3694
        %v3711 = vsel %vm3631, %v3615, %v3695
        %v3712 = vsel %vm3632, %v3616, %v3696
        %v3713 = vsel %vm3633, %v3617, %v3697
        %v3714 = vsel %vm3634, %v3618, %v3698
        %v3715 = vsel %vm3635, %v3619, %v3699
        %v3716 = vsel %vm3636, %v3620, %v3700
        %v3717 = vsel %vm3637, %v3621, %v3701
        %v3718 = vsel %vm3638, %v3622, %v3702
        %vm3719 = vcmask 123904
        %3720 = vst.msk [vmem:[%s783] sm:$0x3] %vm3719, %v3703
        %3721 = vst.msk [vmem:[%s783 + $0x2] sm:$0x3] %vm3719, %v3704
        %3722 = vst.msk [vmem:[%s783 + $0x4] sm:$0x3] %vm3719, %v3705
        %3723 = vst.msk [vmem:[%s783 + $0x6] sm:$0x3] %vm3719, %v3706
        %3724 = vst.msk [vmem:[%s783 + $0x8] sm:$0x3] %vm3719, %v3707
        %3725 = vst.msk [vmem:[%s783 + $0xa] sm:$0x3] %vm3719, %v3708
        %3726 = vst.msk [vmem:[%s783 + $0xc] sm:$0x3] %vm3719, %v3709
        %3727 = vst.msk [vmem:[%s783 + $0xe] sm:$0x3] %vm3719, %v3710
        %3728 = vst.msk [vmem:[%s783 + $0x10] sm:$0x3] %vm3719, %v3711
        %3729 = vst.msk [vmem:[%s783 + $0x12] sm:$0x3] %vm3719, %v3712
        %3730 = vst.msk [vmem:[%s783 + $0x14] sm:$0x3] %vm3719, %v3713
        %3731 = vst.msk [vmem:[%s783 + $0x16] sm:$0x3] %vm3719, %v3714
        %3732 = vst.msk [vmem:[%s783 + $0x18] sm:$0x3] %vm3719, %v3715
        %3733 = vst.msk [vmem:[%s783 + $0x1a] sm:$0x3] %vm3719, %v3716
        %3734 = vst.msk [vmem:[%s783 + $0x1c] sm:$0x3] %vm3719, %v3717
        %3735 = vst.msk [vmem:[%s783 + $0x1e] sm:$0x3] %vm3719, %v3718
        %s3736 = smul.u32 16, %s24
        %p3737 = scmp.lt.s32.totalorder %s3736, 31
        %s3738 = scalar_select %p3737, %s3736, 31
        %s3739 = smul.addr %s3738, 2
        %s3740 = scalar_lea.vmem %s9, %s3739
        // Predicated region
        $region166: #{_lambda_.3} parent=152 // pred_check
          %p3741 = pneg %p262
        $region167: #{_lambda_.3} parent=152 // pred_check_branch
          %3743 = sbr.rel (%p3741) target = $region169
        $region168: #{_lambda_.3} parent=152 // pred_region
          %s3744 = smul.u32 16, %s24
        $region169: #{_lambda_.3} parent=152 // pred_fallthru
          _
      $region153: #{_lambda_.3} parent=5 // pred_fallthru
        _
      %p3745 = scmp.le.s32.totalorder 2, %s19
      // Predicated region
      $region170: #{_lambda_.3} parent=5 // pred_check
        %p3746 = pneg %p3745
      $region171: #{_lambda_.3} parent=5 // pred_check_branch
        %3748 = sbr.rel (%p3746) target = $region173
      $region172: #{_lambda_.3} parent=5 // pred_region
        %s3749 = ssub.s32 %s19, 2
        // Predicated region
        $region174: #{_lambda_.3} parent=172 // pred_check
          %p3750 = pneg %p268
        $region175: #{_lambda_.3} parent=172 // pred_check_branch
          %3752 = sbr.rel (%p3750) target = $region177
        $region176: #{_lambda_.3} parent=172 // pred_region
          %s3753 = smul.u32 16, %s25
          %p3754 = scmp.lt.s32.totalorder %s3753, 31
          %s3755 = scalar_select %p3754, %s3753, 31
          %s3756 = smul.addr %s3755, 2
          %s3757 = scalar_lea.vmem %s9, %s3756
        $region177: #{_lambda_.3} parent=172 // pred_fallthru
          _
      $region173: #{_lambda_.3} parent=5 // pred_fallthru
        _
    $region6: #{_lambda_.3} parent=1 // loop_footer
      %s23 = sadd.s32 1, %s19
    $region7: #{_lambda_.3} parent=1 // loop_footer_branch
      %18 = sbr.rel target = $region3
    $region8: #{_lambda_.3} parent=1 // loop_exit
      _

// kernel: _lambda_.2
$region0: #{_lambda_.2}
  #allocation0 [shape = 'u32[]', space=smem, size = 0x4, offset = 0x4, fixed_abs, tag = 'smem constant byte address 0x4 - core index']
  #allocation1 [shape = 'u32[144,128]{1,0:T(1,128)}', space=vmem, size = 0x12000, scoped, tag = 'internal scratch']
  #allocation2 [shape = 'f32[1,1]{1,0:T(1,128)S(1)}', space=vmem, size = 0x200, scoped, tag = 'scoped memory for _lambda_.2']
  #allocation3 [shape = 'f32[1,1]{1,0:T(1,128)S(1)}', space=vmem, size = 0x200, scoped, tag = 'scoped memory for _lambda_.2']
  %s0 = inlined_call_operand.vmem [shape: f32[8,64,2,1], index: 0, kind: input, shape index: {}, may-alias: {0,1,2}]
  %s1 = inlined_call_operand.vmem [shape: f32[8,64,2,1], index: 1, kind: input, shape index: {}, may-alias: {0,1,2}]
  %s2 = inlined_call_operand.vmem [shape: f32[8,64,2,1], index: 2, kind: input, shape index: {}, may-alias: {0,1,2}]
  %s3 = inlined_call_operand.<no memory space> [shape: f32[1,1], index: 3, kind: input, shape index: {}]
  %s4 = inlined_call_operand.<no memory space> [shape: f32[1,1], index: 4, kind: input, shape index: {}]
  %s5 = inlined_call_operand.vmem [shape: f32[9,1,8], index: 5, kind: input, shape index: {}]
  %s6 = inlined_call_operand.vmem [shape: f32[1,8], index: 6, kind: input, shape index: {}]
  %s7 = inlined_call_operand.vmem [shape: f32[1,8], index: 7, kind: input, shape index: {}]
  %s8 = inlined_call_operand.vmem [shape: f32[1,8], index: 8, kind: input, shape index: {}]
  %s9 = inlined_call_operand.vmem [shape: f32[2,64,2,8], index: 9, kind: output, shape index: {}]
  %s10 = sld [smem:[#allocation0]]
  $region229: #{_lambda_.2} parent=0
    _
  %s12 = ssub.s32 1, %s10
  %s13 = scalar_select 0, %s12, %s10
  %v14 = vstv %s3
  %15 = vst [vmem:[#allocation2] sm:$0x1] %v14
  %v16 = vstv %s4
  %17 = vst [vmem:[#allocation3] sm:$0x1] %v16
  $region1: #{_lambda_.2} parent=0
    #allocation4 [shape = 'u8[262144]{0}', space=vmem, size = 0x40000, scoped, tag = 'input window, operand 0']
    #allocation5 [shape = 'u8[16384]{0}', space=vmem, size = 0x4000, scoped, tag = 'input window, operand 1']
    #allocation6 [shape = 'u8[16384]{0}', space=vmem, size = 0x4000, scoped, tag = 'input window, operand 2']
    #allocation7 [shape = 'u8[65536]{0}', space=vmem, size = 0x10000, scoped, tag = 'output window, operand 0']
    loop: start=0, step=1, limit=6
    $region2: #{_lambda_.2} parent=1 // loop_pre_header
      _
    $region3: #{_lambda_.2} parent=1 // loop_header
      %s19 = sphi 0, %s23
      %p20 = scmp.ge.s32.totalorder %s19, 6
      %s29 = sphi 0, %s31
      %s32 = sphi 0, %s29
      %s33 = sphi 0, %s32
      %s49 = sphi 0, %s33
      %s63 = sphi 0, %s65
      %s66 = sphi 0, %s63
      %s67 = sphi 0, %s66
      %s83 = sphi 0, %s67
      %s97 = sphi 0, %s99
      %s100 = sphi 0, %s97
      %s101 = sphi 0, %s100
      %s117 = sphi 0, %s101
      %s121 = sphi 0, %s121
      %s123 = sphi 0, %s121
      %s124 = sphi 0, %s123
      %s138 = sphi 0, %s124
      %s142 = sphi 0, %s142
      %s144 = sphi 0, %s142
      %s145 = sphi 0, %s144
      %s159 = sphi 0, %s145
      %s163 = sphi 0, %s163
      %s165 = sphi 0, %s163
      %s166 = sphi 0, %s165
      %s180 = sphi 0, %s166
      %s184 = sphi 0, %s184
      %s186 = sphi 0, %s184
      %s187 = sphi 0, %s186
      %s201 = sphi 0, %s187
      %s205 = sphi 0, %s205
      %s207 = sphi 0, %s205
      %s208 = sphi 0, %s207
      %s222 = sphi 0, %s208
      %s226 = sphi 0, %s226
      %s228 = sphi 0, %s226
      %s229 = sphi 0, %s228
      %s243 = sphi 0, %s229
      %s249 = sphi 0, %s251
      %s252 = sphi 0, %s249
      %s253 = sphi 0, %s252
      %s269 = sphi 0, %s253
    $region4: #{_lambda_.2} parent=1 // loop_header_branch
      %22 = sbr.rel (%p20) target = $region8
    $region5: #{_lambda_.2} parent=1 // loop_body
      %s24 = ssub.s32 %s19, 1
      %s25 = ssub.s32 %s19, 2
      %s26 = sadd.s32 %s19, 1
      %s27 = ssub.s32 %s19, %s26
      %p28 = scmp.eq.s32.totalorder %s27, 0
      %s30 = sadd.s32 %s29, 1
      %s31 = scalar_select %p28, %s29, %s30
      %p34 = pneg %p28
      %p35 = scmp.eq.s32.totalorder %s19, 3
      %p36 = por %p34, %p35
      %p37 = scmp.ne.s32.totalorder %s29, %s32
      %p38 = scmp.eq.s32.totalorder %s19, 0
      %p39 = por %p37, %p38
      %p40 = scmp.ne.s32.totalorder %s29, %s32
      %p41 = scmp.eq.s32.totalorder %s24, 3
      %p42 = por %p40, %p41
      %p43 = scmp.ne.s32.totalorder %s32, %s33
      %p44 = scmp.eq.s32.totalorder %s24, 0
      %p45 = por %p43, %p44
      %p46 = scmp.ne.s32.totalorder %s32, %s33
      %p47 = scmp.eq.s32.totalorder %s25, 3
      %p48 = por %p46, %p47
      %p50 = scmp.ne.s32.totalorder %s33, %s49
      %p51 = scmp.eq.s32.totalorder %s25, 0
      %p52 = por %p50, %p51
      %s53 = smul.u32 %s19, 16
      %s54 = ssub.s32 %s53, 1
      %p55 = scmp.gt.s32.totalorder %s54, 0
      %s56 = scalar_select %p55, %s54, 0
      %s57 = smul.u32 %s26, 16
      %s58 = ssub.s32 %s57, 1
      %p59 = scmp.gt.s32.totalorder %s58, 0
      %s60 = scalar_select %p59, %s58, 0
      %s61 = ssub.s32 %s56, %s60
      %p62 = scmp.eq.s32.totalorder %s61, 0
      %s64 = sadd.s32 %s63, 1
      %s65 = scalar_select %p62, %s63, %s64
      %p68 = pneg %p62
      %p69 = scmp.eq.s32.totalorder %s19, 3
      %p70 = por %p68, %p69
      %p71 = scmp.ne.s32.totalorder %s63, %s66
      %p72 = scmp.eq.s32.totalorder %s19, 0
      %p73 = por %p71, %p72
      %p74 = scmp.ne.s32.totalorder %s63, %s66
      %p75 = scmp.eq.s32.totalorder %s24, 3
      %p76 = por %p74, %p75
      %p77 = scmp.ne.s32.totalorder %s66, %s67
      %p78 = scmp.eq.s32.totalorder %s24, 0
      %p79 = por %p77, %p78
      %p80 = scmp.ne.s32.totalorder %s66, %s67
      %p81 = scmp.eq.s32.totalorder %s25, 3
      %p82 = por %p80, %p81
      %p84 = scmp.ne.s32.totalorder %s67, %s83
      %p85 = scmp.eq.s32.totalorder %s25, 0
      %p86 = por %p84, %p85
      %s87 = smul.u32 %s19, 16
      %s88 = sadd.s32 %s87, 16
      %p89 = scmp.lt.s32.totalorder %s88, 63
      %s90 = scalar_select %p89, %s88, 63
      %s91 = smul.u32 %s26, 16
      %s92 = sadd.s32 %s91, 16
      %p93 = scmp.lt.s32.totalorder %s92, 63
      %s94 = scalar_select %p93, %s92, 63
      %s95 = ssub.s32 %s90, %s94
      %p96 = scmp.eq.s32.totalorder %s95, 0
      %s98 = sadd.s32 %s97, 1
      %s99 = scalar_select %p96, %s97, %s98
      %p102 = pneg %p96
      %p103 = scmp.eq.s32.totalorder %s19, 3
      %p104 = por %p102, %p103
      %p105 = scmp.ne.s32.totalorder %s97, %s100
      %p106 = scmp.eq.s32.totalorder %s19, 0
      %p107 = por %p105, %p106
      %p108 = scmp.ne.s32.totalorder %s97, %s100
      %p109 = scmp.eq.s32.totalorder %s24, 3
      %p110 = por %p108, %p109
      %p111 = scmp.ne.s32.totalorder %s100, %s101
      %p112 = scmp.eq.s32.totalorder %s24, 0
      %p113 = por %p111, %p112
      %p114 = scmp.ne.s32.totalorder %s100, %s101
      %p115 = scmp.eq.s32.totalorder %s25, 3
      %p116 = por %p114, %p115
      %p118 = scmp.ne.s32.totalorder %s101, %s117
      %p119 = scmp.eq.s32.totalorder %s25, 0
      %p120 = por %p118, %p119
      %s122 = sadd.s32 %s121, 1
      %p125 = scmp.eq.s32.totalorder %s19, 3
      %p126 = scmp.ne.s32.totalorder %s121, %s123
      %p127 = scmp.eq.s32.totalorder %s19, 0
      %p128 = por %p126, %p127
      %p129 = scmp.ne.s32.totalorder %s121, %s123
      %p130 = scmp.eq.s32.totalorder %s24, 3
      %p131 = por %p129, %p130
      %p132 = scmp.ne.s32.totalorder %s123, %s124
      %p133 = scmp.eq.s32.totalorder %s24, 0
      %p134 = por %p132, %p133
      %p135 = scmp.ne.s32.totalorder %s123, %s124
      %p136 = scmp.eq.s32.totalorder %s25, 3
      %p137 = por %p135, %p136
      %p139 = scmp.ne.s32.totalorder %s124, %s138
      %p140 = scmp.eq.s32.totalorder %s25, 0
      %p141 = por %p139, %p140
      %s143 = sadd.s32 %s142, 1
      %p146 = scmp.eq.s32.totalorder %s19, 3
      %p147 = scmp.ne.s32.totalorder %s142, %s144
      %p148 = scmp.eq.s32.totalorder %s19, 0
      %p149 = por %p147, %p148
      %p150 = scmp.ne.s32.totalorder %s142, %s144
      %p151 = scmp.eq.s32.totalorder %s24, 3
      %p152 = por %p150, %p151
      %p153 = scmp.ne.s32.totalorder %s144, %s145
      %p154 = scmp.eq.s32.totalorder %s24, 0
      %p155 = por %p153, %p154
      %p156 = scmp.ne.s32.totalorder %s144, %s145
      %p157 = scmp.eq.s32.totalorder %s25, 3
      %p158 = por %p156, %p157
      %p160 = scmp.ne.s32.totalorder %s145, %s159
      %p161 = scmp.eq.s32.totalorder %s25, 0
      %p162 = por %p160, %p161
      %s164 = sadd.s32 %s163, 1
      %p167 = scmp.eq.s32.totalorder %s19, 3
      %p168 = scmp.ne.s32.totalorder %s163, %s165
      %p169 = scmp.eq.s32.totalorder %s19, 0
      %p170 = por %p168, %p169
      %p171 = scmp.ne.s32.totalorder %s163, %s165
      %p172 = scmp.eq.s32.totalorder %s24, 3
      %p173 = por %p171, %p172
      %p174 = scmp.ne.s32.totalorder %s165, %s166
      %p175 = scmp.eq.s32.totalorder %s24, 0
      %p176 = por %p174, %p175
      %p177 = scmp.ne.s32.totalorder %s165, %s166
      %p178 = scmp.eq.s32.totalorder %s25, 3
      %p179 = por %p177, %p178
      %p181 = scmp.ne.s32.totalorder %s166, %s180
      %p182 = scmp.eq.s32.totalorder %s25, 0
      %p183 = por %p181, %p182
      %s185 = sadd.s32 %s184, 1
      %p188 = scmp.eq.s32.totalorder %s19, 3
      %p189 = scmp.ne.s32.totalorder %s184, %s186
      %p190 = scmp.eq.s32.totalorder %s19, 0
      %p191 = por %p189, %p190
      %p192 = scmp.ne.s32.totalorder %s184, %s186
      %p193 = scmp.eq.s32.totalorder %s24, 3
      %p194 = por %p192, %p193
      %p195 = scmp.ne.s32.totalorder %s186, %s187
      %p196 = scmp.eq.s32.totalorder %s24, 0
      %p197 = por %p195, %p196
      %p198 = scmp.ne.s32.totalorder %s186, %s187
      %p199 = scmp.eq.s32.totalorder %s25, 3
      %p200 = por %p198, %p199
      %p202 = scmp.ne.s32.totalorder %s187, %s201
      %p203 = scmp.eq.s32.totalorder %s25, 0
      %p204 = por %p202, %p203
      %s206 = sadd.s32 %s205, 1
      %p209 = scmp.eq.s32.totalorder %s19, 3
      %p210 = scmp.ne.s32.totalorder %s205, %s207
      %p211 = scmp.eq.s32.totalorder %s19, 0
      %p212 = por %p210, %p211
      %p213 = scmp.ne.s32.totalorder %s205, %s207
      %p214 = scmp.eq.s32.totalorder %s24, 3
      %p215 = por %p213, %p214
      %p216 = scmp.ne.s32.totalorder %s207, %s208
      %p217 = scmp.eq.s32.totalorder %s24, 0
      %p218 = por %p216, %p217
      %p219 = scmp.ne.s32.totalorder %s207, %s208
      %p220 = scmp.eq.s32.totalorder %s25, 3
      %p221 = por %p219, %p220
      %p223 = scmp.ne.s32.totalorder %s208, %s222
      %p224 = scmp.eq.s32.totalorder %s25, 0
      %p225 = por %p223, %p224
      %s227 = sadd.s32 %s226, 1
      %p230 = scmp.eq.s32.totalorder %s19, 3
      %p231 = scmp.ne.s32.totalorder %s226, %s228
      %p232 = scmp.eq.s32.totalorder %s19, 0
      %p233 = por %p231, %p232
      %p234 = scmp.ne.s32.totalorder %s226, %s228
      %p235 = scmp.eq.s32.totalorder %s24, 3
      %p236 = por %p234, %p235
      %p237 = scmp.ne.s32.totalorder %s228, %s229
      %p238 = scmp.eq.s32.totalorder %s24, 0
      %p239 = por %p237, %p238
      %p240 = scmp.ne.s32.totalorder %s228, %s229
      %p241 = scmp.eq.s32.totalorder %s25, 3
      %p242 = por %p240, %p241
      %p244 = scmp.ne.s32.totalorder %s229, %s243
      %p245 = scmp.eq.s32.totalorder %s25, 0
      %p246 = por %p244, %p245
      %s247 = ssub.s32 %s19, %s26
      %p248 = scmp.eq.s32.totalorder %s247, 0
      %s250 = sadd.s32 %s249, 1
      %s251 = scalar_select %p248, %s249, %s250
      %p254 = pneg %p248
      %p255 = scmp.eq.s32.totalorder %s19, 3
      %p256 = por %p254, %p255
      %p257 = scmp.ne.s32.totalorder %s249, %s252
      %p258 = scmp.eq.s32.totalorder %s19, 0
      %p259 = por %p257, %p258
      %p260 = scmp.ne.s32.totalorder %s249, %s252
      %p261 = scmp.eq.s32.totalorder %s24, 3
      %p262 = por %p260, %p261
      %p263 = scmp.ne.s32.totalorder %s252, %s253
      %p264 = scmp.eq.s32.totalorder %s24, 0
      %p265 = por %p263, %p264
      %p266 = scmp.ne.s32.totalorder %s252, %s253
      %p267 = scmp.eq.s32.totalorder %s25, 3
      %p268 = por %p266, %p267
      %p270 = scmp.ne.s32.totalorder %s253, %s269
      %p271 = scmp.eq.s32.totalorder %s25, 0
      %p272 = por %p270, %p271
      %p273 = scmp.le.s32.totalorder 1, %s19
      %p274 = scmp.lt.s32.totalorder %s19, 5
      %p275 = pnand %p273, %p274
      %p276 = pneg %p275
      // Predicated region
      $region9: #{_lambda_.2} parent=5 // pred_check
        _
      $region10: #{_lambda_.2} parent=5 // pred_check_branch
        %278 = sbr.rel (%p275) target = $region12
      $region11: #{_lambda_.2} parent=5 // pred_region
        %s279 = ssub.s32 %s19, 1
        // Predicated region
        $region13: #{_lambda_.2} parent=11 // pred_check
          %p280 = pneg %p134
        $region14: #{_lambda_.2} parent=11 // pred_check_branch
          %282 = sbr.rel (%p280) target = $region16
        $region15: #{_lambda_.2} parent=11 // pred_region
          _
        $region16: #{_lambda_.2} parent=11 // pred_fallthru
          _
        // Predicated region
        $region17: #{_lambda_.2} parent=11 // pred_check
          %p283 = pneg %p155
        $region18: #{_lambda_.2} parent=11 // pred_check_branch
          %285 = sbr.rel (%p283) target = $region20
        $region19: #{_lambda_.2} parent=11 // pred_region
          _
        $region20: #{_lambda_.2} parent=11 // pred_fallthru
          _
        // Predicated region
        $region21: #{_lambda_.2} parent=11 // pred_check
          %p286 = pneg %p176
        $region22: #{_lambda_.2} parent=11 // pred_check_branch
          %288 = sbr.rel (%p286) target = $region24
        $region23: #{_lambda_.2} parent=11 // pred_region
          _
        $region24: #{_lambda_.2} parent=11 // pred_fallthru
          _
        // Predicated region
        $region25: #{_lambda_.2} parent=11 // pred_check
          %p289 = pneg %p197
        $region26: #{_lambda_.2} parent=11 // pred_check_branch
          %291 = sbr.rel (%p289) target = $region28
        $region27: #{_lambda_.2} parent=11 // pred_region
          _
        $region28: #{_lambda_.2} parent=11 // pred_fallthru
          _
        // Predicated region
        $region29: #{_lambda_.2} parent=11 // pred_check
          %p292 = pneg %p218
        $region30: #{_lambda_.2} parent=11 // pred_check_branch
          %294 = sbr.rel (%p292) target = $region32
        $region31: #{_lambda_.2} parent=11 // pred_region
          _
        $region32: #{_lambda_.2} parent=11 // pred_fallthru
          _
        // Predicated region
        $region33: #{_lambda_.2} parent=11 // pred_check
          %p295 = pneg %p239
        $region34: #{_lambda_.2} parent=11 // pred_check_branch
          %297 = sbr.rel (%p295) target = $region36
        $region35: #{_lambda_.2} parent=11 // pred_region
          _
        $region36: #{_lambda_.2} parent=11 // pred_fallthru
          _
      $region12: #{_lambda_.2} parent=5 // pred_fallthru
        _
      %p298 = scmp.lt.s32.totalorder %s19, 4
      // Predicated region
      $region37: #{_lambda_.2} parent=5 // pred_check
        %p299 = pneg %p298
      $region38: #{_lambda_.2} parent=5 // pred_check_branch
        %301 = sbr.rel (%p299) target = $region40
      $region39: #{_lambda_.2} parent=5 // pred_region
        // Predicated region
        $region41: #{_lambda_.2} parent=39 // pred_check
          %p302 = pneg %p39
        $region42: #{_lambda_.2} parent=39 // pred_check_branch
          %304 = sbr.rel (%p302) target = $region44
        $region43: #{_lambda_.2} parent=39 // pred_region
          %s305 = sand.u32 %s29, 1
          %s306 = sand.u32 %s29, 1
          %s307 = smul.addr %s306, 256
          %s308 = scalar_lea.vmem [#allocation4], %s307
          %s309 = smul.u32 16, %s19
          %s310 = smul.addr %s309, 2
          %s311 = scalar_lea.vmem %s0, %s310
          // Predicated region
          $region45: #{_lambda_.2} parent=43 // pred_check
            _
          $region46: #{_lambda_.2} parent=43 // pred_check_branch
            %313 = sbr.rel (0) target = $region48
          $region47: #{_lambda_.2} parent=43 // pred_region
            // Predicated region
            $region49: #{_lambda_.2} parent=47 // pred_check
              _
            $region50: #{_lambda_.2} parent=47 // pred_check_branch
              %315 = sbr.rel target = $region52
            $region51: #{_lambda_.2} parent=47 // pred_region
              // Predicated region
              $region64: #{_lambda_.2} parent=51 // pred_check
                _
              $region65: #{_lambda_.2} parent=51 // pred_check_branch
                %585 = sbr.rel (0) target = $region67
              $region66: #{_lambda_.2} parent=51 // pred_region
                loop: start=0, step=1, limit=1
                $region68: #{_lambda_.2} parent=66 // loop_pre_header
                  _
                $region69: #{_lambda_.2} parent=66 // loop_header
                  %s587 = sphi 0, %s591
                  %p588 = scmp.ge.s32.totalorder %s587, 1
                  %s592 = sphi %s311, %s311
                  %s593 = sphi %s308, %s308
                $region70: #{_lambda_.2} parent=66 // loop_header_branch
                  %590 = sbr.rel (%p588) target = $region74
                $region71: #{_lambda_.2} parent=66 // loop_body
                  _
                $region72: #{_lambda_.2} parent=66 // loop_footer
                  %s591 = sadd.s32 1, %s587
                $region73: #{_lambda_.2} parent=66 // loop_footer_branch
                  %586 = sbr.rel target = $region69
                $region74: #{_lambda_.2} parent=66 // loop_exit
                  _
                %s595 = ssub.s32 4, 1
                loop: start=0, step=1, limit=1
                $region75: #{_lambda_.2} parent=66 // loop_pre_header
                  _
                $region76: #{_lambda_.2} parent=66 // loop_header
                  %s597 = sphi 0, %s601
                  %p598 = scmp.ge.s32.totalorder %s597, 1
                  %s602 = sphi %s311, %s311
                  %s603 = sphi %s308, %s308
                $region77: #{_lambda_.2} parent=66 // loop_header_branch
                  %600 = sbr.rel (%p598) target = $region81
                $region78: #{_lambda_.2} parent=66 // loop_body
                  %v604 = vld [vmem:[%s602] sm:%s595]
                  %605 = vst [vmem:[%s603] sm:%s595] %v604
                  %v606 = vld [vmem:[%s602 + $0x2] sm:%s595]
                  %607 = vst [vmem:[%s603 + $0x2] sm:%s595] %v606
                  %v608 = vld [vmem:[%s602 + $0x4] sm:%s595]
                  %609 = vst [vmem:[%s603 + $0x4] sm:%s595] %v608
                  %v610 = vld [vmem:[%s602 + $0x6] sm:%s595]
                  %611 = vst [vmem:[%s603 + $0x6] sm:%s595] %v610
                  %v612 = vld [vmem:[%s602 + $0x8] sm:%s595]
                  %613 = vst [vmem:[%s603 + $0x8] sm:%s595] %v612
                  %v614 = vld [vmem:[%s602 + $0xa] sm:%s595]
                  %615 = vst [vmem:[%s603 + $0xa] sm:%s595] %v614
                  %v616 = vld [vmem:[%s602 + $0xc] sm:%s595]
                  %617 = vst [vmem:[%s603 + $0xc] sm:%s595] %v616
                  %v618 = vld [vmem:[%s602 + $0xe] sm:%s595]
                  %619 = vst [vmem:[%s603 + $0xe] sm:%s595] %v618
                  %v620 = vld [vmem:[%s602 + $0x10] sm:%s595]
                  %621 = vst [vmem:[%s603 + $0x10] sm:%s595] %v620
                  %v622 = vld [vmem:[%s602 + $0x12] sm:%s595]
                  %623 = vst [vmem:[%s603 + $0x12] sm:%s595] %v622
                  %v624 = vld [vmem:[%s602 + $0x14] sm:%s595]
                  %625 = vst [vmem:[%s603 + $0x14] sm:%s595] %v624
                  %v626 = vld [vmem:[%s602 + $0x16] sm:%s595]
                  %627 = vst [vmem:[%s603 + $0x16] sm:%s595] %v626
                  %v628 = vld [vmem:[%s602 + $0x18] sm:%s595]
                  %629 = vst [vmem:[%s603 + $0x18] sm:%s595] %v628
                  %v630 = vld [vmem:[%s602 + $0x1a] sm:%s595]
                  %631 = vst [vmem:[%s603 + $0x1a] sm:%s595] %v630
                  %v632 = vld [vmem:[%s602 + $0x1c] sm:%s595]
                  %633 = vst [vmem:[%s603 + $0x1c] sm:%s595] %v632
                  %v634 = vld [vmem:[%s602 + $0x1e] sm:%s595]
                  %635 = vst [vmem:[%s603 + $0x1e] sm:%s595] %v634
                  %v636 = vld [vmem:[%s602 + $0x80] sm:%s595]
                  %637 = vst [vmem:[%s603 + $0x20] sm:%s595] %v636
                  %v638 = vld [vmem:[%s602 + $0x82] sm:%s595]
                  %639 = vst [vmem:[%s603 + $0x22] sm:%s595] %v638
                  %v640 = vld [vmem:[%s602 + $0x84] sm:%s595]
                  %641 = vst [vmem:[%s603 + $0x24] sm:%s595] %v640
                  %v642 = vld [vmem:[%s602 + $0x86] sm:%s595]
                  %643 = vst [vmem:[%s603 + $0x26] sm:%s595] %v642
                  %v644 = vld [vmem:[%s602 + $0x88] sm:%s595]
                  %645 = vst [vmem:[%s603 + $0x28] sm:%s595] %v644
                  %v646 = vld [vmem:[%s602 + $0x8a] sm:%s595]
                  %647 = vst [vmem:[%s603 + $0x2a] sm:%s595] %v646
                  %v648 = vld [vmem:[%s602 + $0x8c] sm:%s595]
                  %649 = vst [vmem:[%s603 + $0x2c] sm:%s595] %v648
                  %v650 = vld [vmem:[%s602 + $0x8e] sm:%s595]
                  %651 = vst [vmem:[%s603 + $0x2e] sm:%s595] %v650
                  %v652 = vld [vmem:[%s602 + $0x90] sm:%s595]
                  %653 = vst [vmem:[%s603 + $0x30] sm:%s595] %v652
                  %v654 = vld [vmem:[%s602 + $0x92] sm:%s595]
                  %655 = vst [vmem:[%s603 + $0x32] sm:%s595] %v654
                  %v656 = vld [vmem:[%s602 + $0x94] sm:%s595]
                  %657 = vst [vmem:[%s603 + $0x34] sm:%s595] %v656
                  %v658 = vld [vmem:[%s602 + $0x96] sm:%s595]
                  %659 = vst [vmem:[%s603 + $0x36] sm:%s595] %v658
                  %v660 = vld [vmem:[%s602 + $0x98] sm:%s595]
                  %661 = vst [vmem:[%s603 + $0x38] sm:%s595] %v660
                  %v662 = vld [vmem:[%s602 + $0x9a] sm:%s595]
                  %663 = vst [vmem:[%s603 + $0x3a] sm:%s595] %v662
                  %v664 = vld [vmem:[%s602 + $0x9c] sm:%s595]
                  %665 = vst [vmem:[%s603 + $0x3c] sm:%s595] %v664
                  %v666 = vld [vmem:[%s602 + $0x9e] sm:%s595]
                  %667 = vst [vmem:[%s603 + $0x3e] sm:%s595] %v666
                  %v668 = vld [vmem:[%s602 + $0x100] sm:%s595]
                  %669 = vst [vmem:[%s603 + $0x40] sm:%s595] %v668
                  %v670 = vld [vmem:[%s602 + $0x102] sm:%s595]
                  %671 = vst [vmem:[%s603 + $0x42] sm:%s595] %v670
                  %v672 = vld [vmem:[%s602 + $0x104] sm:%s595]
                  %673 = vst [vmem:[%s603 + $0x44] sm:%s595] %v672
                  %v674 = vld [vmem:[%s602 + $0x106] sm:%s595]
                  %675 = vst [vmem:[%s603 + $0x46] sm:%s595] %v674
                  %v676 = vld [vmem:[%s602 + $0x108] sm:%s595]
                  %677 = vst [vmem:[%s603 + $0x48] sm:%s595] %v676
                  %v678 = vld [vmem:[%s602 + $0x10a] sm:%s595]
                  %679 = vst [vmem:[%s603 + $0x4a] sm:%s595] %v678
                  %v680 = vld [vmem:[%s602 + $0x10c] sm:%s595]
                  %681 = vst [vmem:[%s603 + $0x4c] sm:%s595] %v680
                  %v682 = vld [vmem:[%s602 + $0x10e] sm:%s595]
                  %683 = vst [vmem:[%s603 + $0x4e] sm:%s595] %v682
                  %v684 = vld [vmem:[%s602 + $0x110] sm:%s595]
                  %685 = vst [vmem:[%s603 + $0x50] sm:%s595] %v684
                  %v686 = vld [vmem:[%s602 + $0x112] sm:%s595]
                  %687 = vst [vmem:[%s603 + $0x52] sm:%s595] %v686
                  %v688 = vld [vmem:[%s602 + $0x114] sm:%s595]
                  %689 = vst [vmem:[%s603 + $0x54] sm:%s595] %v688
                  %v690 = vld [vmem:[%s602 + $0x116] sm:%s595]
                  %691 = vst [vmem:[%s603 + $0x56] sm:%s595] %v690
                  %v692 = vld [vmem:[%s602 + $0x118] sm:%s595]
                  %693 = vst [vmem:[%s603 + $0x58] sm:%s595] %v692
                  %v694 = vld [vmem:[%s602 + $0x11a] sm:%s595]
                  %695 = vst [vmem:[%s603 + $0x5a] sm:%s595] %v694
                  %v696 = vld [vmem:[%s602 + $0x11c] sm:%s595]
                  %697 = vst [vmem:[%s603 + $0x5c] sm:%s595] %v696
                  %v698 = vld [vmem:[%s602 + $0x11e] sm:%s595]
                  %699 = vst [vmem:[%s603 + $0x5e] sm:%s595] %v698
                  %v700 = vld [vmem:[%s602 + $0x180] sm:%s595]
                  %701 = vst [vmem:[%s603 + $0x60] sm:%s595] %v700
                  %v702 = vld [vmem:[%s602 + $0x182] sm:%s595]
                  %703 = vst [vmem:[%s603 + $0x62] sm:%s595] %v702
                  %v704 = vld [vmem:[%s602 + $0x184] sm:%s595]
                  %705 = vst [vmem:[%s603 + $0x64] sm:%s595] %v704
                  %v706 = vld [vmem:[%s602 + $0x186] sm:%s595]
                  %707 = vst [vmem:[%s603 + $0x66] sm:%s595] %v706
                  %v708 = vld [vmem:[%s602 + $0x188] sm:%s595]
                  %709 = vst [vmem:[%s603 + $0x68] sm:%s595] %v708
                  %v710 = vld [vmem:[%s602 + $0x18a] sm:%s595]
                  %711 = vst [vmem:[%s603 + $0x6a] sm:%s595] %v710
                  %v712 = vld [vmem:[%s602 + $0x18c] sm:%s595]
                  %713 = vst [vmem:[%s603 + $0x6c] sm:%s595] %v712
                  %v714 = vld [vmem:[%s602 + $0x18e] sm:%s595]
                  %715 = vst [vmem:[%s603 + $0x6e] sm:%s595] %v714
                  %v716 = vld [vmem:[%s602 + $0x190] sm:%s595]
                  %717 = vst [vmem:[%s603 + $0x70] sm:%s595] %v716
                  %v718 = vld [vmem:[%s602 + $0x192] sm:%s595]
                  %719 = vst [vmem:[%s603 + $0x72] sm:%s595] %v718
                  %v720 = vld [vmem:[%s602 + $0x194] sm:%s595]
                  %721 = vst [vmem:[%s603 + $0x74] sm:%s595] %v720
                  %v722 = vld [vmem:[%s602 + $0x196] sm:%s595]
                  %723 = vst [vmem:[%s603 + $0x76] sm:%s595] %v722
                  %v724 = vld [vmem:[%s602 + $0x198] sm:%s595]
                  %725 = vst [vmem:[%s603 + $0x78] sm:%s595] %v724
                  %v726 = vld [vmem:[%s602 + $0x19a] sm:%s595]
                  %727 = vst [vmem:[%s603 + $0x7a] sm:%s595] %v726
                  %v728 = vld [vmem:[%s602 + $0x19c] sm:%s595]
                  %729 = vst [vmem:[%s603 + $0x7c] sm:%s595] %v728
                  %v730 = vld [vmem:[%s602 + $0x19e] sm:%s595]
                  %731 = vst [vmem:[%s603 + $0x7e] sm:%s595] %v730
                  %v732 = vld [vmem:[%s602 + $0x200] sm:%s595]
                  %733 = vst [vmem:[%s603 + $0x80] sm:%s595] %v732
                  %v734 = vld [vmem:[%s602 + $0x202] sm:%s595]
                  %735 = vst [vmem:[%s603 + $0x82] sm:%s595] %v734
                  %v736 = vld [vmem:[%s602 + $0x204] sm:%s595]
                  %737 = vst [vmem:[%s603 + $0x84] sm:%s595] %v736
                  %v738 = vld [vmem:[%s602 + $0x206] sm:%s595]
                  %739 = vst [vmem:[%s603 + $0x86] sm:%s595] %v738
                  %v740 = vld [vmem:[%s602 + $0x208] sm:%s595]
                  %741 = vst [vmem:[%s603 + $0x88] sm:%s595] %v740
                  %v742 = vld [vmem:[%s602 + $0x20a] sm:%s595]
                  %743 = vst [vmem:[%s603 + $0x8a] sm:%s595] %v742
                  %v744 = vld [vmem:[%s602 + $0x20c] sm:%s595]
                  %745 = vst [vmem:[%s603 + $0x8c] sm:%s595] %v744
                  %v746 = vld [vmem:[%s602 + $0x20e] sm:%s595]
                  %747 = vst [vmem:[%s603 + $0x8e] sm:%s595] %v746
                  %v748 = vld [vmem:[%s602 + $0x210] sm:%s595]
                  %749 = vst [vmem:[%s603 + $0x90] sm:%s595] %v748
                  %v750 = vld [vmem:[%s602 + $0x212] sm:%s595]
                  %751 = vst [vmem:[%s603 + $0x92] sm:%s595] %v750
                  %v752 = vld [vmem:[%s602 + $0x214] sm:%s595]
                  %753 = vst [vmem:[%s603 + $0x94] sm:%s595] %v752
                  %v754 = vld [vmem:[%s602 + $0x216] sm:%s595]
                  %755 = vst [vmem:[%s603 + $0x96] sm:%s595] %v754
                  %v756 = vld [vmem:[%s602 + $0x218] sm:%s595]
                  %757 = vst [vmem:[%s603 + $0x98] sm:%s595] %v756
                  %v758 = vld [vmem:[%s602 + $0x21a] sm:%s595]
                  %759 = vst [vmem:[%s603 + $0x9a] sm:%s595] %v758
                  %v760 = vld [vmem:[%s602 + $0x21c] sm:%s595]
                  %761 = vst [vmem:[%s603 + $0x9c] sm:%s595] %v760
                  %v762 = vld [vmem:[%s602 + $0x21e] sm:%s595]
                  %763 = vst [vmem:[%s603 + $0x9e] sm:%s595] %v762
                  %v764 = vld [vmem:[%s602 + $0x280] sm:%s595]
                  %765 = vst [vmem:[%s603 + $0xa0] sm:%s595] %v764
                  %v766 = vld [vmem:[%s602 + $0x282] sm:%s595]
                  %767 = vst [vmem:[%s603 + $0xa2] sm:%s595] %v766
                  %v768 = vld [vmem:[%s602 + $0x284] sm:%s595]
                  %769 = vst [vmem:[%s603 + $0xa4] sm:%s595] %v768
                  %v770 = vld [vmem:[%s602 + $0x286] sm:%s595]
                  %771 = vst [vmem:[%s603 + $0xa6] sm:%s595] %v770
                  %v772 = vld [vmem:[%s602 + $0x288] sm:%s595]
                  %773 = vst [vmem:[%s603 + $0xa8] sm:%s595] %v772
                  %v774 = vld [vmem:[%s602 + $0x28a] sm:%s595]
                  %775 = vst [vmem:[%s603 + $0xaa] sm:%s595] %v774
                  %v776 = vld [vmem:[%s602 + $0x28c] sm:%s595]
                  %777 = vst [vmem:[%s603 + $0xac] sm:%s595] %v776
                  %v778 = vld [vmem:[%s602 + $0x28e] sm:%s595]
                  %779 = vst [vmem:[%s603 + $0xae] sm:%s595] %v778
                  %v780 = vld [vmem:[%s602 + $0x290] sm:%s595]
                  %781 = vst [vmem:[%s603 + $0xb0] sm:%s595] %v780
                  %v782 = vld [vmem:[%s602 + $0x292] sm:%s595]
                  %783 = vst [vmem:[%s603 + $0xb2] sm:%s595] %v782
                  %v784 = vld [vmem:[%s602 + $0x294] sm:%s595]
                  %785 = vst [vmem:[%s603 + $0xb4] sm:%s595] %v784
                  %v786 = vld [vmem:[%s602 + $0x296] sm:%s595]
                  %787 = vst [vmem:[%s603 + $0xb6] sm:%s595] %v786
                  %v788 = vld [vmem:[%s602 + $0x298] sm:%s595]
                  %789 = vst [vmem:[%s603 + $0xb8] sm:%s595] %v788
                  %v790 = vld [vmem:[%s602 + $0x29a] sm:%s595]
                  %791 = vst [vmem:[%s603 + $0xba] sm:%s595] %v790
                  %v792 = vld [vmem:[%s602 + $0x29c] sm:%s595]
                  %793 = vst [vmem:[%s603 + $0xbc] sm:%s595] %v792
                  %v794 = vld [vmem:[%s602 + $0x29e] sm:%s595]
                  %795 = vst [vmem:[%s603 + $0xbe] sm:%s595] %v794
                  %v796 = vld [vmem:[%s602 + $0x300] sm:%s595]
                  %797 = vst [vmem:[%s603 + $0xc0] sm:%s595] %v796
                  %v798 = vld [vmem:[%s602 + $0x302] sm:%s595]
                  %799 = vst [vmem:[%s603 + $0xc2] sm:%s595] %v798
                  %v800 = vld [vmem:[%s602 + $0x304] sm:%s595]
                  %801 = vst [vmem:[%s603 + $0xc4] sm:%s595] %v800
                  %v802 = vld [vmem:[%s602 + $0x306] sm:%s595]
                  %803 = vst [vmem:[%s603 + $0xc6] sm:%s595] %v802
                  %v804 = vld [vmem:[%s602 + $0x308] sm:%s595]
                  %805 = vst [vmem:[%s603 + $0xc8] sm:%s595] %v804
                  %v806 = vld [vmem:[%s602 + $0x30a] sm:%s595]
                  %807 = vst [vmem:[%s603 + $0xca] sm:%s595] %v806
                  %v808 = vld [vmem:[%s602 + $0x30c] sm:%s595]
                  %809 = vst [vmem:[%s603 + $0xcc] sm:%s595] %v808
                  %v810 = vld [vmem:[%s602 + $0x30e] sm:%s595]
                  %811 = vst [vmem:[%s603 + $0xce] sm:%s595] %v810
                  %v812 = vld [vmem:[%s602 + $0x310] sm:%s595]
                  %813 = vst [vmem:[%s603 + $0xd0] sm:%s595] %v812
                  %v814 = vld [vmem:[%s602 + $0x312] sm:%s595]
                  %815 = vst [vmem:[%s603 + $0xd2] sm:%s595] %v814
                  %v816 = vld [vmem:[%s602 + $0x314] sm:%s595]
                  %817 = vst [vmem:[%s603 + $0xd4] sm:%s595] %v816
                  %v818 = vld [vmem:[%s602 + $0x316] sm:%s595]
                  %819 = vst [vmem:[%s603 + $0xd6] sm:%s595] %v818
                  %v820 = vld [vmem:[%s602 + $0x318] sm:%s595]
                  %821 = vst [vmem:[%s603 + $0xd8] sm:%s595] %v820
                  %v822 = vld [vmem:[%s602 + $0x31a] sm:%s595]
                  %823 = vst [vmem:[%s603 + $0xda] sm:%s595] %v822
                  %v824 = vld [vmem:[%s602 + $0x31c] sm:%s595]
                  %825 = vst [vmem:[%s603 + $0xdc] sm:%s595] %v824
                  %v826 = vld [vmem:[%s602 + $0x31e] sm:%s595]
                  %827 = vst [vmem:[%s603 + $0xde] sm:%s595] %v826
                  %v828 = vld [vmem:[%s602 + $0x380] sm:%s595]
                  %829 = vst [vmem:[%s603 + $0xe0] sm:%s595] %v828
                  %v830 = vld [vmem:[%s602 + $0x382] sm:%s595]
                  %831 = vst [vmem:[%s603 + $0xe2] sm:%s595] %v830
                  %v832 = vld [vmem:[%s602 + $0x384] sm:%s595]
                  %833 = vst [vmem:[%s603 + $0xe4] sm:%s595] %v832
                  %v834 = vld [vmem:[%s602 + $0x386] sm:%s595]
                  %835 = vst [vmem:[%s603 + $0xe6] sm:%s595] %v834
                  %v836 = vld [vmem:[%s602 + $0x388] sm:%s595]
                  %837 = vst [vmem:[%s603 + $0xe8] sm:%s595] %v836
                  %v838 = vld [vmem:[%s602 + $0x38a] sm:%s595]
                  %839 = vst [vmem:[%s603 + $0xea] sm:%s595] %v838
                  %v840 = vld [vmem:[%s602 + $0x38c] sm:%s595]
                  %841 = vst [vmem:[%s603 + $0xec] sm:%s595] %v840
                  %v842 = vld [vmem:[%s602 + $0x38e] sm:%s595]
                  %843 = vst [vmem:[%s603 + $0xee] sm:%s595] %v842
                  %v844 = vld [vmem:[%s602 + $0x390] sm:%s595]
                  %845 = vst [vmem:[%s603 + $0xf0] sm:%s595] %v844
                  %v846 = vld [vmem:[%s602 + $0x392] sm:%s595]
                  %847 = vst [vmem:[%s603 + $0xf2] sm:%s595] %v846
                  %v848 = vld [vmem:[%s602 + $0x394] sm:%s595]
                  %849 = vst [vmem:[%s603 + $0xf4] sm:%s595] %v848
                  %v850 = vld [vmem:[%s602 + $0x396] sm:%s595]
                  %851 = vst [vmem:[%s603 + $0xf6] sm:%s595] %v850
                  %v852 = vld [vmem:[%s602 + $0x398] sm:%s595]
                  %853 = vst [vmem:[%s603 + $0xf8] sm:%s595] %v852
                  %v854 = vld [vmem:[%s602 + $0x39a] sm:%s595]
                  %855 = vst [vmem:[%s603 + $0xfa] sm:%s595] %v854
                  %v856 = vld [vmem:[%s602 + $0x39c] sm:%s595]
                  %857 = vst [vmem:[%s603 + $0xfc] sm:%s595] %v856
                  %v858 = vld [vmem:[%s602 + $0x39e] sm:%s595]
                  %859 = vst [vmem:[%s603 + $0xfe] sm:%s595] %v858
                $region79: #{_lambda_.2} parent=66 // loop_footer
                  %s601 = sadd.s32 1, %s597
                $region80: #{_lambda_.2} parent=66 // loop_footer_branch
                  %596 = sbr.rel target = $region76
                $region81: #{_lambda_.2} parent=66 // loop_exit
                  _
              $region67: #{_lambda_.2} parent=51 // pred_fallthru
                _
            $region52: #{_lambda_.2} parent=47 // pred_fallthru
              _
            // Predicated region
            $region53: #{_lambda_.2} parent=47 // pred_check
              _
            $region54: #{_lambda_.2} parent=47 // pred_check_branch
              %317 = sbr.rel (0) target = $region56
            $region55: #{_lambda_.2} parent=47 // pred_region
              %s319 = ssub.s32 4, 1
              loop: start=0, step=1, limit=1
              $region57: #{_lambda_.2} parent=55 // loop_pre_header
                _
              $region58: #{_lambda_.2} parent=55 // loop_header
                %s321 = sphi 0, %s325
                %p322 = scmp.ge.s32.totalorder %s321, 1
                %s326 = sphi %s311, %s311
                %s327 = sphi %s308, %s308
              $region59: #{_lambda_.2} parent=55 // loop_header_branch
                %324 = sbr.rel (%p322) target = $region63
              $region60: #{_lambda_.2} parent=55 // loop_body
                %v328 = vld [vmem:[%s326] sm:%s319]
                %329 = vst [vmem:[%s327] sm:%s319] %v328
                %v330 = vld [vmem:[%s326 + $0x2] sm:%s319]
                %331 = vst [vmem:[%s327 + $0x2] sm:%s319] %v330
                %v332 = vld [vmem:[%s326 + $0x4] sm:%s319]
                %333 = vst [vmem:[%s327 + $0x4] sm:%s319] %v332
                %v334 = vld [vmem:[%s326 + $0x6] sm:%s319]
                %335 = vst [vmem:[%s327 + $0x6] sm:%s319] %v334
                %v336 = vld [vmem:[%s326 + $0x8] sm:%s319]
                %337 = vst [vmem:[%s327 + $0x8] sm:%s319] %v336
                %v338 = vld [vmem:[%s326 + $0xa] sm:%s319]
                %339 = vst [vmem:[%s327 + $0xa] sm:%s319] %v338
                %v340 = vld [vmem:[%s326 + $0xc] sm:%s319]
                %341 = vst [vmem:[%s327 + $0xc] sm:%s319] %v340
                %v342 = vld [vmem:[%s326 + $0xe] sm:%s319]
                %343 = vst [vmem:[%s327 + $0xe] sm:%s319] %v342
                %v344 = vld [vmem:[%s326 + $0x10] sm:%s319]
                %345 = vst [vmem:[%s327 + $0x10] sm:%s319] %v344
                %v346 = vld [vmem:[%s326 + $0x12] sm:%s319]
                %347 = vst [vmem:[%s327 + $0x12] sm:%s319] %v346
                %v348 = vld [vmem:[%s326 + $0x14] sm:%s319]
                %349 = vst [vmem:[%s327 + $0x14] sm:%s319] %v348
                %v350 = vld [vmem:[%s326 + $0x16] sm:%s319]
                %351 = vst [vmem:[%s327 + $0x16] sm:%s319] %v350
                %v352 = vld [vmem:[%s326 + $0x18] sm:%s319]
                %353 = vst [vmem:[%s327 + $0x18] sm:%s319] %v352
                %v354 = vld [vmem:[%s326 + $0x1a] sm:%s319]
                %355 = vst [vmem:[%s327 + $0x1a] sm:%s319] %v354
                %v356 = vld [vmem:[%s326 + $0x1c] sm:%s319]
                %357 = vst [vmem:[%s327 + $0x1c] sm:%s319] %v356
                %v358 = vld [vmem:[%s326 + $0x1e] sm:%s319]
                %359 = vst [vmem:[%s327 + $0x1e] sm:%s319] %v358
                %v360 = vld [vmem:[%s326 + $0x80] sm:%s319]
                %361 = vst [vmem:[%s327 + $0x20] sm:%s319] %v360
                %v362 = vld [vmem:[%s326 + $0x82] sm:%s319]
                %363 = vst [vmem:[%s327 + $0x22] sm:%s319] %v362
                %v364 = vld [vmem:[%s326 + $0x84] sm:%s319]
                %365 = vst [vmem:[%s327 + $0x24] sm:%s319] %v364
                %v366 = vld [vmem:[%s326 + $0x86] sm:%s319]
                %367 = vst [vmem:[%s327 + $0x26] sm:%s319] %v366
                %v368 = vld [vmem:[%s326 + $0x88] sm:%s319]
                %369 = vst [vmem:[%s327 + $0x28] sm:%s319] %v368
                %v370 = vld [vmem:[%s326 + $0x8a] sm:%s319]
                %371 = vst [vmem:[%s327 + $0x2a] sm:%s319] %v370
                %v372 = vld [vmem:[%s326 + $0x8c] sm:%s319]
                %373 = vst [vmem:[%s327 + $0x2c] sm:%s319] %v372
                %v374 = vld [vmem:[%s326 + $0x8e] sm:%s319]
                %375 = vst [vmem:[%s327 + $0x2e] sm:%s319] %v374
                %v376 = vld [vmem:[%s326 + $0x90] sm:%s319]
                %377 = vst [vmem:[%s327 + $0x30] sm:%s319] %v376
                %v378 = vld [vmem:[%s326 + $0x92] sm:%s319]
                %379 = vst [vmem:[%s327 + $0x32] sm:%s319] %v378
                %v380 = vld [vmem:[%s326 + $0x94] sm:%s319]
                %381 = vst [vmem:[%s327 + $0x34] sm:%s319] %v380
                %v382 = vld [vmem:[%s326 + $0x96] sm:%s319]
                %383 = vst [vmem:[%s327 + $0x36] sm:%s319] %v382
                %v384 = vld [vmem:[%s326 + $0x98] sm:%s319]
                %385 = vst [vmem:[%s327 + $0x38] sm:%s319] %v384
                %v386 = vld [vmem:[%s326 + $0x9a] sm:%s319]
                %387 = vst [vmem:[%s327 + $0x3a] sm:%s319] %v386
                %v388 = vld [vmem:[%s326 + $0x9c] sm:%s319]
                %389 = vst [vmem:[%s327 + $0x3c] sm:%s319] %v388
                %v390 = vld [vmem:[%s326 + $0x9e] sm:%s319]
                %391 = vst [vmem:[%s327 + $0x3e] sm:%s319] %v390
                %v392 = vld [vmem:[%s326 + $0x100] sm:%s319]
                %393 = vst [vmem:[%s327 + $0x40] sm:%s319] %v392
                %v394 = vld [vmem:[%s326 + $0x102] sm:%s319]
                %395 = vst [vmem:[%s327 + $0x42] sm:%s319] %v394
                %v396 = vld [vmem:[%s326 + $0x104] sm:%s319]
                %397 = vst [vmem:[%s327 + $0x44] sm:%s319] %v396
                %v398 = vld [vmem:[%s326 + $0x106] sm:%s319]
                %399 = vst [vmem:[%s327 + $0x46] sm:%s319] %v398
                %v400 = vld [vmem:[%s326 + $0x108] sm:%s319]
                %401 = vst [vmem:[%s327 + $0x48] sm:%s319] %v400
                %v402 = vld [vmem:[%s326 + $0x10a] sm:%s319]
                %403 = vst [vmem:[%s327 + $0x4a] sm:%s319] %v402
                %v404 = vld [vmem:[%s326 + $0x10c] sm:%s319]
                %405 = vst [vmem:[%s327 + $0x4c] sm:%s319] %v404
                %v406 = vld [vmem:[%s326 + $0x10e] sm:%s319]
                %407 = vst [vmem:[%s327 + $0x4e] sm:%s319] %v406
                %v408 = vld [vmem:[%s326 + $0x110] sm:%s319]
                %409 = vst [vmem:[%s327 + $0x50] sm:%s319] %v408
                %v410 = vld [vmem:[%s326 + $0x112] sm:%s319]
                %411 = vst [vmem:[%s327 + $0x52] sm:%s319] %v410
                %v412 = vld [vmem:[%s326 + $0x114] sm:%s319]
                %413 = vst [vmem:[%s327 + $0x54] sm:%s319] %v412
                %v414 = vld [vmem:[%s326 + $0x116] sm:%s319]
                %415 = vst [vmem:[%s327 + $0x56] sm:%s319] %v414
                %v416 = vld [vmem:[%s326 + $0x118] sm:%s319]
                %417 = vst [vmem:[%s327 + $0x58] sm:%s319] %v416
                %v418 = vld [vmem:[%s326 + $0x11a] sm:%s319]
                %419 = vst [vmem:[%s327 + $0x5a] sm:%s319] %v418
                %v420 = vld [vmem:[%s326 + $0x11c] sm:%s319]
                %421 = vst [vmem:[%s327 + $0x5c] sm:%s319] %v420
                %v422 = vld [vmem:[%s326 + $0x11e] sm:%s319]
                %423 = vst [vmem:[%s327 + $0x5e] sm:%s319] %v422
                %v424 = vld [vmem:[%s326 + $0x180] sm:%s319]
                %425 = vst [vmem:[%s327 + $0x60] sm:%s319] %v424
                %v426 = vld [vmem:[%s326 + $0x182] sm:%s319]
                %427 = vst [vmem:[%s327 + $0x62] sm:%s319] %v426
                %v428 = vld [vmem:[%s326 + $0x184] sm:%s319]
                %429 = vst [vmem:[%s327 + $0x64] sm:%s319] %v428
                %v430 = vld [vmem:[%s326 + $0x186] sm:%s319]
                %431 = vst [vmem:[%s327 + $0x66] sm:%s319] %v430
                %v432 = vld [vmem:[%s326 + $0x188] sm:%s319]
                %433 = vst [vmem:[%s327 + $0x68] sm:%s319] %v432
                %v434 = vld [vmem:[%s326 + $0x18a] sm:%s319]
                %435 = vst [vmem:[%s327 + $0x6a] sm:%s319] %v434
                %v436 = vld [vmem:[%s326 + $0x18c] sm:%s319]
                %437 = vst [vmem:[%s327 + $0x6c] sm:%s319] %v436
                %v438 = vld [vmem:[%s326 + $0x18e] sm:%s319]
                %439 = vst [vmem:[%s327 + $0x6e] sm:%s319] %v438
                %v440 = vld [vmem:[%s326 + $0x190] sm:%s319]
                %441 = vst [vmem:[%s327 + $0x70] sm:%s319] %v440
                %v442 = vld [vmem:[%s326 + $0x192] sm:%s319]
                %443 = vst [vmem:[%s327 + $0x72] sm:%s319] %v442
                %v444 = vld [vmem:[%s326 + $0x194] sm:%s319]
                %445 = vst [vmem:[%s327 + $0x74] sm:%s319] %v444
                %v446 = vld [vmem:[%s326 + $0x196] sm:%s319]
                %447 = vst [vmem:[%s327 + $0x76] sm:%s319] %v446
                %v448 = vld [vmem:[%s326 + $0x198] sm:%s319]
                %449 = vst [vmem:[%s327 + $0x78] sm:%s319] %v448
                %v450 = vld [vmem:[%s326 + $0x19a] sm:%s319]
                %451 = vst [vmem:[%s327 + $0x7a] sm:%s319] %v450
                %v452 = vld [vmem:[%s326 + $0x19c] sm:%s319]
                %453 = vst [vmem:[%s327 + $0x7c] sm:%s319] %v452
                %v454 = vld [vmem:[%s326 + $0x19e] sm:%s319]
                %455 = vst [vmem:[%s327 + $0x7e] sm:%s319] %v454
                %v456 = vld [vmem:[%s326 + $0x200] sm:%s319]
                %457 = vst [vmem:[%s327 + $0x80] sm:%s319] %v456
                %v458 = vld [vmem:[%s326 + $0x202] sm:%s319]
                %459 = vst [vmem:[%s327 + $0x82] sm:%s319] %v458
                %v460 = vld [vmem:[%s326 + $0x204] sm:%s319]
                %461 = vst [vmem:[%s327 + $0x84] sm:%s319] %v460
                %v462 = vld [vmem:[%s326 + $0x206] sm:%s319]
                %463 = vst [vmem:[%s327 + $0x86] sm:%s319] %v462
                %v464 = vld [vmem:[%s326 + $0x208] sm:%s319]
                %465 = vst [vmem:[%s327 + $0x88] sm:%s319] %v464
                %v466 = vld [vmem:[%s326 + $0x20a] sm:%s319]
                %467 = vst [vmem:[%s327 + $0x8a] sm:%s319] %v466
                %v468 = vld [vmem:[%s326 + $0x20c] sm:%s319]
                %469 = vst [vmem:[%s327 + $0x8c] sm:%s319] %v468
                %v470 = vld [vmem:[%s326 + $0x20e] sm:%s319]
                %471 = vst [vmem:[%s327 + $0x8e] sm:%s319] %v470
                %v472 = vld [vmem:[%s326 + $0x210] sm:%s319]
                %473 = vst [vmem:[%s327 + $0x90] sm:%s319] %v472
                %v474 = vld [vmem:[%s326 + $0x212] sm:%s319]
                %475 = vst [vmem:[%s327 + $0x92] sm:%s319] %v474
                %v476 = vld [vmem:[%s326 + $0x214] sm:%s319]
                %477 = vst [vmem:[%s327 + $0x94] sm:%s319] %v476
                %v478 = vld [vmem:[%s326 + $0x216] sm:%s319]
                %479 = vst [vmem:[%s327 + $0x96] sm:%s319] %v478
                %v480 = vld [vmem:[%s326 + $0x218] sm:%s319]
                %481 = vst [vmem:[%s327 + $0x98] sm:%s319] %v480
                %v482 = vld [vmem:[%s326 + $0x21a] sm:%s319]
                %483 = vst [vmem:[%s327 + $0x9a] sm:%s319] %v482
                %v484 = vld [vmem:[%s326 + $0x21c] sm:%s319]
                %485 = vst [vmem:[%s327 + $0x9c] sm:%s319] %v484
                %v486 = vld [vmem:[%s326 + $0x21e] sm:%s319]
                %487 = vst [vmem:[%s327 + $0x9e] sm:%s319] %v486
                %v488 = vld [vmem:[%s326 + $0x280] sm:%s319]
                %489 = vst [vmem:[%s327 + $0xa0] sm:%s319] %v488
                %v490 = vld [vmem:[%s326 + $0x282] sm:%s319]
                %491 = vst [vmem:[%s327 + $0xa2] sm:%s319] %v490
                %v492 = vld [vmem:[%s326 + $0x284] sm:%s319]
                %493 = vst [vmem:[%s327 + $0xa4] sm:%s319] %v492
                %v494 = vld [vmem:[%s326 + $0x286] sm:%s319]
                %495 = vst [vmem:[%s327 + $0xa6] sm:%s319] %v494
                %v496 = vld [vmem:[%s326 + $0x288] sm:%s319]
                %497 = vst [vmem:[%s327 + $0xa8] sm:%s319] %v496
                %v498 = vld [vmem:[%s326 + $0x28a] sm:%s319]
                %499 = vst [vmem:[%s327 + $0xaa] sm:%s319] %v498
                %v500 = vld [vmem:[%s326 + $0x28c] sm:%s319]
                %501 = vst [vmem:[%s327 + $0xac] sm:%s319] %v500
                %v502 = vld [vmem:[%s326 + $0x28e] sm:%s319]
                %503 = vst [vmem:[%s327 + $0xae] sm:%s319] %v502
                %v504 = vld [vmem:[%s326 + $0x290] sm:%s319]
                %505 = vst [vmem:[%s327 + $0xb0] sm:%s319] %v504
                %v506 = vld [vmem:[%s326 + $0x292] sm:%s319]
                %507 = vst [vmem:[%s327 + $0xb2] sm:%s319] %v506
                %v508 = vld [vmem:[%s326 + $0x294] sm:%s319]
                %509 = vst [vmem:[%s327 + $0xb4] sm:%s319] %v508
                %v510 = vld [vmem:[%s326 + $0x296] sm:%s319]
                %511 = vst [vmem:[%s327 + $0xb6] sm:%s319] %v510
                %v512 = vld [vmem:[%s326 + $0x298] sm:%s319]
                %513 = vst [vmem:[%s327 + $0xb8] sm:%s319] %v512
                %v514 = vld [vmem:[%s326 + $0x29a] sm:%s319]
                %515 = vst [vmem:[%s327 + $0xba] sm:%s319] %v514
                %v516 = vld [vmem:[%s326 + $0x29c] sm:%s319]
                %517 = vst [vmem:[%s327 + $0xbc] sm:%s319] %v516
                %v518 = vld [vmem:[%s326 + $0x29e] sm:%s319]
                %519 = vst [vmem:[%s327 + $0xbe] sm:%s319] %v518
                %v520 = vld [vmem:[%s326 + $0x300] sm:%s319]
                %521 = vst [vmem:[%s327 + $0xc0] sm:%s319] %v520
                %v522 = vld [vmem:[%s326 + $0x302] sm:%s319]
                %523 = vst [vmem:[%s327 + $0xc2] sm:%s319] %v522
                %v524 = vld [vmem:[%s326 + $0x304] sm:%s319]
                %525 = vst [vmem:[%s327 + $0xc4] sm:%s319] %v524
                %v526 = vld [vmem:[%s326 + $0x306] sm:%s319]
                %527 = vst [vmem:[%s327 + $0xc6] sm:%s319] %v526
                %v528 = vld [vmem:[%s326 + $0x308] sm:%s319]
                %529 = vst [vmem:[%s327 + $0xc8] sm:%s319] %v528
                %v530 = vld [vmem:[%s326 + $0x30a] sm:%s319]
                %531 = vst [vmem:[%s327 + $0xca] sm:%s319] %v530
                %v532 = vld [vmem:[%s326 + $0x30c] sm:%s319]
                %533 = vst [vmem:[%s327 + $0xcc] sm:%s319] %v532
                %v534 = vld [vmem:[%s326 + $0x30e] sm:%s319]
                %535 = vst [vmem:[%s327 + $0xce] sm:%s319] %v534
                %v536 = vld [vmem:[%s326 + $0x310] sm:%s319]
                %537 = vst [vmem:[%s327 + $0xd0] sm:%s319] %v536
                %v538 = vld [vmem:[%s326 + $0x312] sm:%s319]
                %539 = vst [vmem:[%s327 + $0xd2] sm:%s319] %v538
                %v540 = vld [vmem:[%s326 + $0x314] sm:%s319]
                %541 = vst [vmem:[%s327 + $0xd4] sm:%s319] %v540
                %v542 = vld [vmem:[%s326 + $0x316] sm:%s319]
                %543 = vst [vmem:[%s327 + $0xd6] sm:%s319] %v542
                %v544 = vld [vmem:[%s326 + $0x318] sm:%s319]
                %545 = vst [vmem:[%s327 + $0xd8] sm:%s319] %v544
                %v546 = vld [vmem:[%s326 + $0x31a] sm:%s319]
                %547 = vst [vmem:[%s327 + $0xda] sm:%s319] %v546
                %v548 = vld [vmem:[%s326 + $0x31c] sm:%s319]
                %549 = vst [vmem:[%s327 + $0xdc] sm:%s319] %v548
                %v550 = vld [vmem:[%s326 + $0x31e] sm:%s319]
                %551 = vst [vmem:[%s327 + $0xde] sm:%s319] %v550
                %v552 = vld [vmem:[%s326 + $0x380] sm:%s319]
                %553 = vst [vmem:[%s327 + $0xe0] sm:%s319] %v552
                %v554 = vld [vmem:[%s326 + $0x382] sm:%s319]
                %555 = vst [vmem:[%s327 + $0xe2] sm:%s319] %v554
                %v556 = vld [vmem:[%s326 + $0x384] sm:%s319]
                %557 = vst [vmem:[%s327 + $0xe4] sm:%s319] %v556
                %v558 = vld [vmem:[%s326 + $0x386] sm:%s319]
                %559 = vst [vmem:[%s327 + $0xe6] sm:%s319] %v558
                %v560 = vld [vmem:[%s326 + $0x388] sm:%s319]
                %561 = vst [vmem:[%s327 + $0xe8] sm:%s319] %v560
                %v562 = vld [vmem:[%s326 + $0x38a] sm:%s319]
                %563 = vst [vmem:[%s327 + $0xea] sm:%s319] %v562
                %v564 = vld [vmem:[%s326 + $0x38c] sm:%s319]
                %565 = vst [vmem:[%s327 + $0xec] sm:%s319] %v564
                %v566 = vld [vmem:[%s326 + $0x38e] sm:%s319]
                %567 = vst [vmem:[%s327 + $0xee] sm:%s319] %v566
                %v568 = vld [vmem:[%s326 + $0x390] sm:%s319]
                %569 = vst [vmem:[%s327 + $0xf0] sm:%s319] %v568
                %v570 = vld [vmem:[%s326 + $0x392] sm:%s319]
                %571 = vst [vmem:[%s327 + $0xf2] sm:%s319] %v570
                %v572 = vld [vmem:[%s326 + $0x394] sm:%s319]
                %573 = vst [vmem:[%s327 + $0xf4] sm:%s319] %v572
                %v574 = vld [vmem:[%s326 + $0x396] sm:%s319]
                %575 = vst [vmem:[%s327 + $0xf6] sm:%s319] %v574
                %v576 = vld [vmem:[%s326 + $0x398] sm:%s319]
                %577 = vst [vmem:[%s327 + $0xf8] sm:%s319] %v576
                %v578 = vld [vmem:[%s326 + $0x39a] sm:%s319]
                %579 = vst [vmem:[%s327 + $0xfa] sm:%s319] %v578
                %v580 = vld [vmem:[%s326 + $0x39c] sm:%s319]
                %581 = vst [vmem:[%s327 + $0xfc] sm:%s319] %v580
                %v582 = vld [vmem:[%s326 + $0x39e] sm:%s319]
                %583 = vst [vmem:[%s327 + $0xfe] sm:%s319] %v582
              $region61: #{_lambda_.2} parent=55 // loop_footer
                %s325 = sadd.s32 1, %s321
              $region62: #{_lambda_.2} parent=55 // loop_footer_branch
                %320 = sbr.rel target = $region58
              $region63: #{_lambda_.2} parent=55 // loop_exit
                _
            $region56: #{_lambda_.2} parent=47 // pred_fallthru
              _
          $region48: #{_lambda_.2} parent=43 // pred_fallthru
            _
          %860 = vnop
        $region44: #{_lambda_.2} parent=39 // pred_fallthru
          _
        // Predicated region
        $region82: #{_lambda_.2} parent=39 // pred_check
          %p861 = pneg %p73
        $region83: #{_lambda_.2} parent=39 // pred_check_branch
          %863 = sbr.rel (%p861) target = $region85
        $region84: #{_lambda_.2} parent=39 // pred_region
          %s864 = sand.u32 %s63, 1
          %s865 = sand.u32 %s63, 1
          %s866 = smul.addr %s865, 16
          %s867 = scalar_lea.vmem [#allocation5], %s866
          %s868 = smul.u32 %s19, 16
          %s869 = ssub.s32 %s868, 1
          %p870 = scmp.gt.s32.totalorder %s869, 0
          %s871 = scalar_select %p870, %s869, 0
          %s872 = smul.addr %s871, 2
          %s873 = scalar_lea.vmem %s1, %s872
          // Predicated region
          $region86: #{_lambda_.2} parent=84 // pred_check
            _
          $region87: #{_lambda_.2} parent=84 // pred_check_branch
            %875 = sbr.rel (0) target = $region89
          $region88: #{_lambda_.2} parent=84 // pred_region
            // Predicated region
            $region90: #{_lambda_.2} parent=88 // pred_check
              _
            $region91: #{_lambda_.2} parent=88 // pred_check_branch
              %877 = sbr.rel target = $region93
            $region92: #{_lambda_.2} parent=88 // pred_region
              // Predicated region
              $region105: #{_lambda_.2} parent=92 // pred_check
                _
              $region106: #{_lambda_.2} parent=92 // pred_check_branch
                %907 = sbr.rel (0) target = $region108
              $region107: #{_lambda_.2} parent=92 // pred_region
                loop: start=0, step=1, limit=1
                $region109: #{_lambda_.2} parent=107 // loop_pre_header
                  _
                $region110: #{_lambda_.2} parent=107 // loop_header
                  %s909 = sphi 0, %s913
                  %p910 = scmp.ge.s32.totalorder %s909, 1
                  %s914 = sphi %s873, %s873
                  %s915 = sphi %s867, %s867
                $region111: #{_lambda_.2} parent=107 // loop_header_branch
                  %912 = sbr.rel (%p910) target = $region115
                $region112: #{_lambda_.2} parent=107 // loop_body
                  _
                $region113: #{_lambda_.2} parent=107 // loop_footer
                  %s913 = sadd.s32 1, %s909
                $region114: #{_lambda_.2} parent=107 // loop_footer_branch
                  %908 = sbr.rel target = $region110
                $region115: #{_lambda_.2} parent=107 // loop_exit
                  _
                %s917 = ssub.s32 4, 1
                loop: start=0, step=1, limit=1
                $region116: #{_lambda_.2} parent=107 // loop_pre_header
                  _
                $region117: #{_lambda_.2} parent=107 // loop_header
                  %s919 = sphi 0, %s923
                  %p920 = scmp.ge.s32.totalorder %s919, 1
                  %s924 = sphi %s873, %s873
                  %s925 = sphi %s867, %s867
                $region118: #{_lambda_.2} parent=107 // loop_header_branch
                  %922 = sbr.rel (%p920) target = $region122
                $region119: #{_lambda_.2} parent=107 // loop_body
                  %v926 = vld [vmem:[%s924] sm:%s917]
                  %927 = vst [vmem:[%s925] sm:%s917] %v926
                  %v928 = vld [vmem:[%s924 + $0x80] sm:%s917]
                  %929 = vst [vmem:[%s925 + $0x2] sm:%s917] %v928
                  %v930 = vld [vmem:[%s924 + $0x100] sm:%s917]
                  %931 = vst [vmem:[%s925 + $0x4] sm:%s917] %v930
                  %v932 = vld [vmem:[%s924 + $0x180] sm:%s917]
                  %933 = vst [vmem:[%s925 + $0x6] sm:%s917] %v932
                  %v934 = vld [vmem:[%s924 + $0x200] sm:%s917]
                  %935 = vst [vmem:[%s925 + $0x8] sm:%s917] %v934
                  %v936 = vld [vmem:[%s924 + $0x280] sm:%s917]
                  %937 = vst [vmem:[%s925 + $0xa] sm:%s917] %v936
                  %v938 = vld [vmem:[%s924 + $0x300] sm:%s917]
                  %939 = vst [vmem:[%s925 + $0xc] sm:%s917] %v938
                  %v940 = vld [vmem:[%s924 + $0x380] sm:%s917]
                  %941 = vst [vmem:[%s925 + $0xe] sm:%s917] %v940
                $region120: #{_lambda_.2} parent=107 // loop_footer
                  %s923 = sadd.s32 1, %s919
                $region121: #{_lambda_.2} parent=107 // loop_footer_branch
                  %918 = sbr.rel target = $region117
                $region122: #{_lambda_.2} parent=107 // loop_exit
                  _
              $region108: #{_lambda_.2} parent=92 // pred_fallthru
                _
            $region93: #{_lambda_.2} parent=88 // pred_fallthru
              _
            // Predicated region
            $region94: #{_lambda_.2} parent=88 // pred_check
              _
            $region95: #{_lambda_.2} parent=88 // pred_check_branch
              %879 = sbr.rel (0) target = $region97
            $region96: #{_lambda_.2} parent=88 // pred_region
              %s881 = ssub.s32 4, 1
              loop: start=0, step=1, limit=1
              $region98: #{_lambda_.2} parent=96 // loop_pre_header
                _
              $region99: #{_lambda_.2} parent=96 // loop_header
                %s883 = sphi 0, %s887
                %p884 = scmp.ge.s32.totalorder %s883, 1
                %s888 = sphi %s873, %s873
                %s889 = sphi %s867, %s867
              $region100: #{_lambda_.2} parent=96 // loop_header_branch
                %886 = sbr.rel (%p884) target = $region104
              $region101: #{_lambda_.2} parent=96 // loop_body
                %v890 = vld [vmem:[%s888] sm:%s881]
                %891 = vst [vmem:[%s889] sm:%s881] %v890
                %v892 = vld [vmem:[%s888 + $0x80] sm:%s881]
                %893 = vst [vmem:[%s889 + $0x2] sm:%s881] %v892
                %v894 = vld [vmem:[%s888 + $0x100] sm:%s881]
                %895 = vst [vmem:[%s889 + $0x4] sm:%s881] %v894
                %v896 = vld [vmem:[%s888 + $0x180] sm:%s881]
                %897 = vst [vmem:[%s889 + $0x6] sm:%s881] %v896
                %v898 = vld [vmem:[%s888 + $0x200] sm:%s881]
                %899 = vst [vmem:[%s889 + $0x8] sm:%s881] %v898
                %v900 = vld [vmem:[%s888 + $0x280] sm:%s881]
                %901 = vst [vmem:[%s889 + $0xa] sm:%s881] %v900
                %v902 = vld [vmem:[%s888 + $0x300] sm:%s881]
                %903 = vst [vmem:[%s889 + $0xc] sm:%s881] %v902
                %v904 = vld [vmem:[%s888 + $0x380] sm:%s881]
                %905 = vst [vmem:[%s889 + $0xe] sm:%s881] %v904
              $region102: #{_lambda_.2} parent=96 // loop_footer
                %s887 = sadd.s32 1, %s883
              $region103: #{_lambda_.2} parent=96 // loop_footer_branch
                %882 = sbr.rel target = $region99
              $region104: #{_lambda_.2} parent=96 // loop_exit
                _
            $region97: #{_lambda_.2} parent=88 // pred_fallthru
              _
          $region89: #{_lambda_.2} parent=84 // pred_fallthru
            _
          %942 = vnop
        $region85: #{_lambda_.2} parent=39 // pred_fallthru
          _
        // Predicated region
        $region123: #{_lambda_.2} parent=39 // pred_check
          %p943 = pneg %p107
        $region124: #{_lambda_.2} parent=39 // pred_check_branch
          %945 = sbr.rel (%p943) target = $region126
        $region125: #{_lambda_.2} parent=39 // pred_region
          %s946 = sand.u32 %s97, 1
          %s947 = sand.u32 %s97, 1
          %s948 = smul.addr %s947, 16
          %s949 = scalar_lea.vmem [#allocation6], %s948
          %s950 = smul.u32 %s19, 16
          %s951 = sadd.s32 %s950, 16
          %p952 = scmp.lt.s32.totalorder %s951, 63
          %s953 = scalar_select %p952, %s951, 63
          %s954 = smul.addr %s953, 2
          %s955 = scalar_lea.vmem %s2, %s954
          // Predicated region
          $region127: #{_lambda_.2} parent=125 // pred_check
            _
          $region128: #{_lambda_.2} parent=125 // pred_check_branch
            %957 = sbr.rel (0) target = $region130
          $region129: #{_lambda_.2} parent=125 // pred_region
            // Predicated region
            $region131: #{_lambda_.2} parent=129 // pred_check
              _
            $region132: #{_lambda_.2} parent=129 // pred_check_branch
              %959 = sbr.rel target = $region134
            $region133: #{_lambda_.2} parent=129 // pred_region
              // Predicated region
              $region146: #{_lambda_.2} parent=133 // pred_check
                _
              $region147: #{_lambda_.2} parent=133 // pred_check_branch
                %989 = sbr.rel (0) target = $region149
              $region148: #{_lambda_.2} parent=133 // pred_region
                loop: start=0, step=1, limit=1
                $region150: #{_lambda_.2} parent=148 // loop_pre_header
                  _
                $region151: #{_lambda_.2} parent=148 // loop_header
                  %s991 = sphi 0, %s995
                  %p992 = scmp.ge.s32.totalorder %s991, 1
                  %s996 = sphi %s955, %s955
                  %s997 = sphi %s949, %s949
                $region152: #{_lambda_.2} parent=148 // loop_header_branch
                  %994 = sbr.rel (%p992) target = $region156
                $region153: #{_lambda_.2} parent=148 // loop_body
                  _
                $region154: #{_lambda_.2} parent=148 // loop_footer
                  %s995 = sadd.s32 1, %s991
                $region155: #{_lambda_.2} parent=148 // loop_footer_branch
                  %990 = sbr.rel target = $region151
                $region156: #{_lambda_.2} parent=148 // loop_exit
                  _
                %s999 = ssub.s32 4, 1
                loop: start=0, step=1, limit=1
                $region157: #{_lambda_.2} parent=148 // loop_pre_header
                  _
                $region158: #{_lambda_.2} parent=148 // loop_header
                  %s1001 = sphi 0, %s1005
                  %p1002 = scmp.ge.s32.totalorder %s1001, 1
                  %s1006 = sphi %s955, %s955
                  %s1007 = sphi %s949, %s949
                $region159: #{_lambda_.2} parent=148 // loop_header_branch
                  %1004 = sbr.rel (%p1002) target = $region163
                $region160: #{_lambda_.2} parent=148 // loop_body
                  %v1008 = vld [vmem:[%s1006] sm:%s999]
                  %1009 = vst [vmem:[%s1007] sm:%s999] %v1008
                  %v1010 = vld [vmem:[%s1006 + $0x80] sm:%s999]
                  %1011 = vst [vmem:[%s1007 + $0x2] sm:%s999] %v1010
                  %v1012 = vld [vmem:[%s1006 + $0x100] sm:%s999]
                  %1013 = vst [vmem:[%s1007 + $0x4] sm:%s999] %v1012
                  %v1014 = vld [vmem:[%s1006 + $0x180] sm:%s999]
                  %1015 = vst [vmem:[%s1007 + $0x6] sm:%s999] %v1014
                  %v1016 = vld [vmem:[%s1006 + $0x200] sm:%s999]
                  %1017 = vst [vmem:[%s1007 + $0x8] sm:%s999] %v1016
                  %v1018 = vld [vmem:[%s1006 + $0x280] sm:%s999]
                  %1019 = vst [vmem:[%s1007 + $0xa] sm:%s999] %v1018
                  %v1020 = vld [vmem:[%s1006 + $0x300] sm:%s999]
                  %1021 = vst [vmem:[%s1007 + $0xc] sm:%s999] %v1020
                  %v1022 = vld [vmem:[%s1006 + $0x380] sm:%s999]
                  %1023 = vst [vmem:[%s1007 + $0xe] sm:%s999] %v1022
                $region161: #{_lambda_.2} parent=148 // loop_footer
                  %s1005 = sadd.s32 1, %s1001
                $region162: #{_lambda_.2} parent=148 // loop_footer_branch
                  %1000 = sbr.rel target = $region158
                $region163: #{_lambda_.2} parent=148 // loop_exit
                  _
              $region149: #{_lambda_.2} parent=133 // pred_fallthru
                _
            $region134: #{_lambda_.2} parent=129 // pred_fallthru
              _
            // Predicated region
            $region135: #{_lambda_.2} parent=129 // pred_check
              _
            $region136: #{_lambda_.2} parent=129 // pred_check_branch
              %961 = sbr.rel (0) target = $region138
            $region137: #{_lambda_.2} parent=129 // pred_region
              %s963 = ssub.s32 4, 1
              loop: start=0, step=1, limit=1
              $region139: #{_lambda_.2} parent=137 // loop_pre_header
                _
              $region140: #{_lambda_.2} parent=137 // loop_header
                %s965 = sphi 0, %s969
                %p966 = scmp.ge.s32.totalorder %s965, 1
                %s970 = sphi %s955, %s955
                %s971 = sphi %s949, %s949
              $region141: #{_lambda_.2} parent=137 // loop_header_branch
                %968 = sbr.rel (%p966) target = $region145
              $region142: #{_lambda_.2} parent=137 // loop_body
                %v972 = vld [vmem:[%s970] sm:%s963]
                %973 = vst [vmem:[%s971] sm:%s963] %v972
                %v974 = vld [vmem:[%s970 + $0x80] sm:%s963]
                %975 = vst [vmem:[%s971 + $0x2] sm:%s963] %v974
                %v976 = vld [vmem:[%s970 + $0x100] sm:%s963]
                %977 = vst [vmem:[%s971 + $0x4] sm:%s963] %v976
                %v978 = vld [vmem:[%s970 + $0x180] sm:%s963]
                %979 = vst [vmem:[%s971 + $0x6] sm:%s963] %v978
                %v980 = vld [vmem:[%s970 + $0x200] sm:%s963]
                %981 = vst [vmem:[%s971 + $0x8] sm:%s963] %v980
                %v982 = vld [vmem:[%s970 + $0x280] sm:%s963]
                %983 = vst [vmem:[%s971 + $0xa] sm:%s963] %v982
                %v984 = vld [vmem:[%s970 + $0x300] sm:%s963]
                %985 = vst [vmem:[%s971 + $0xc] sm:%s963] %v984
                %v986 = vld [vmem:[%s970 + $0x380] sm:%s963]
                %987 = vst [vmem:[%s971 + $0xe] sm:%s963] %v986
              $region143: #{_lambda_.2} parent=137 // loop_footer
                %s969 = sadd.s32 1, %s965
              $region144: #{_lambda_.2} parent=137 // loop_footer_branch
                %964 = sbr.rel target = $region140
              $region145: #{_lambda_.2} parent=137 // loop_exit
                _
            $region138: #{_lambda_.2} parent=129 // pred_fallthru
              _
          $region130: #{_lambda_.2} parent=125 // pred_fallthru
            _
          %1024 = vnop
        $region126: #{_lambda_.2} parent=39 // pred_fallthru
          _
      $region40: #{_lambda_.2} parent=5 // pred_fallthru
        _
      %p1025 = scmp.le.s32.totalorder 1, %s19
      %p1026 = scmp.lt.s32.totalorder %s19, 5
      %p1027 = pnand %p1025, %p1026
      %p1028 = pneg %p1027
      // Predicated region
      $region164: #{_lambda_.2} parent=5 // pred_check
        _
      $region165: #{_lambda_.2} parent=5 // pred_check_branch
        %1030 = sbr.rel (%p1027) target = $region167
      $region166: #{_lambda_.2} parent=5 // pred_region
        %s1031 = ssub.s32 %s19, 1
        %s1032 = sand.u32 %s32, 1
        %s1033 = sand.u32 %s32, 1
        %s1034 = smul.addr %s1033, 256
        %s1035 = scalar_lea.vmem [#allocation4], %s1034
        // Predicated region
        $region168: #{_lambda_.2} parent=166 // pred_check
          %p1036 = pneg %p45
        $region169: #{_lambda_.2} parent=166 // pred_check_branch
          %1038 = sbr.rel (%p1036) target = $region171
        $region170: #{_lambda_.2} parent=166 // pred_region
          _
        $region171: #{_lambda_.2} parent=166 // pred_fallthru
          _
        %s1039 = sand.u32 %s66, 1
        %s1040 = sand.u32 %s66, 1
        %s1041 = smul.addr %s1040, 16
        %s1042 = scalar_lea.vmem [#allocation5], %s1041
        // Predicated region
        $region172: #{_lambda_.2} parent=166 // pred_check
          %p1043 = pneg %p79
        $region173: #{_lambda_.2} parent=166 // pred_check_branch
          %1045 = sbr.rel (%p1043) target = $region175
        $region174: #{_lambda_.2} parent=166 // pred_region
          _
        $region175: #{_lambda_.2} parent=166 // pred_fallthru
          _
        %s1046 = sand.u32 %s100, 1
        %s1047 = sand.u32 %s100, 1
        %s1048 = smul.addr %s1047, 16
        %s1049 = scalar_lea.vmem [#allocation6], %s1048
        // Predicated region
        $region176: #{_lambda_.2} parent=166 // pred_check
          %p1050 = pneg %p113
        $region177: #{_lambda_.2} parent=166 // pred_check_branch
          %1052 = sbr.rel (%p1050) target = $region179
        $region178: #{_lambda_.2} parent=166 // pred_region
          _
        $region179: #{_lambda_.2} parent=166 // pred_fallthru
          _
        %s1053 = sand.u32 %s32, 1
        %s1054 = sand.u32 %s32, 1
        %s1055 = smul.addr %s1054, 256
        %s1056 = scalar_lea.vmem [#allocation4], %s1055
        %p1057 = pneg %p45
        %p1058 = pneg %p42
        %s1059 = sand.u32 %s66, 1
        %s1060 = sand.u32 %s66, 1
        %s1061 = smul.addr %s1060, 16
        %s1062 = scalar_lea.vmem [#allocation5], %s1061
        %p1063 = pneg %p79
        %p1064 = pneg %p76
        %s1065 = sand.u32 %s100, 1
        %s1066 = sand.u32 %s100, 1
        %s1067 = smul.addr %s1066, 16
        %s1068 = scalar_lea.vmem [#allocation6], %s1067
        %p1069 = pneg %p113
        %p1070 = pneg %p110
        %p1071 = pneg %p134
        %p1072 = pneg %p131
        %p1073 = pneg %p155
        %p1074 = pneg %p152
        %p1075 = pneg %p176
        %p1076 = pneg %p173
        %p1077 = pneg %p197
        %p1078 = pneg %p194
        %p1079 = pneg %p218
        %p1080 = pneg %p215
        %p1081 = pneg %p239
        %p1082 = pneg %p236
        %p1083 = pneg %p265
        %p1084 = pneg %p262
        %s1085 = sand.u32 %s252, 1
        %s1086 = sand.u32 %s252, 1
        %s1087 = smul.addr %s1086, 64
        %s1088 = scalar_lea.vmem [#allocation7], %s1087
        %s1089 = smul.u32 16, %s24
        %s1090 = smul.u32 %s24, 16
        %s1091 = ssub.s32 %s1090, 1
        %p1092 = scmp.gt.s32.totalorder %s1091, 0
        %s1093 = scalar_select %p1092, %s1091, 0
        %s1094 = smul.u32 %s24, 16
        %s1095 = sadd.s32 %s1094, 16
        %p1096 = scmp.lt.s32.totalorder %s1095, 63
        %s1097 = scalar_select %p1096, %s1095, 63
        %s1098 = smul.u32 16, %s24
        %s1099 = smul.u32 %s24, 16
        %s1100 = ssub.s32 %s1099, 1
        %p1101 = scmp.ge.s32.totalorder %s1100, 0
        %s1102 = scalar_select %p1101, 1, 0
        %s1103 = scvt.s32.f32 %s1102
        %v1104 = vld [vmem:[%s1042] sm:$0x3]
        %v1105 = vld [vmem:[%s1042 + $0x2] sm:$0x3]
        %v1106 = vld [vmem:[%s1042 + $0x4] sm:$0x3]
        %v1107 = vld [vmem:[%s1042 + $0x6] sm:$0x3]
        %v1108 = vld [vmem:[%s1042 + $0x8] sm:$0x3]
        %v1109 = vld [vmem:[%s1042 + $0xa] sm:$0x3]
        %v1110 = vld [vmem:[%s1042 + $0xc] sm:$0x3]
        %v1111 = vld [vmem:[%s1042 + $0xe] sm:$0x3]
        %v1112 = vld [vmem:[#allocation2] sm:$0x1]
        %v1114 = vlaneseq
        %v1115 = vshrl.u32 %v1114, 7
        %v1116 = vsub.s32 0, %v1115
        %v1117 = vrot.slane %v1112, %v1116
        %v1119 = vmul.f32 %v1104, %v1117
        %v1120 = vmul.f32 %v1105, %v1117
        %v1121 = vmul.f32 %v1106, %v1117
        %v1122 = vmul.f32 %v1107, %v1117
        %v1123 = vmul.f32 %v1108, %v1117
        %v1124 = vmul.f32 %v1109, %v1117
        %v1125 = vmul.f32 %v1110, %v1117
        %v1126 = vmul.f32 %v1111, %v1117
        %v1127 = vld [vmem:[#allocation3] sm:$0x1]
        %v1129 = vlaneseq
        %v1130 = vshrl.u32 %v1129, 7
        %v1131 = vsub.s32 0, %v1130
        %v1132 = vrot.slane %v1127, %v1131
        %v1134 = vadd.f32 %v1119, %v1132
        %v1135 = vadd.f32 %v1120, %v1132
        %v1136 = vadd.f32 %v1121, %v1132
        %v1137 = vadd.f32 %v1122, %v1132
        %v1138 = vadd.f32 %v1123, %v1132
        %v1139 = vadd.f32 %v1124, %v1132
        %v1140 = vadd.f32 %v1125, %v1132
        %v1141 = vadd.f32 %v1126, %v1132
        %v1142 = vstv %s1103
        %v1143 = vmul.f32 %v1134, %v1142
        %v1144 = vmul.f32 %v1135, %v1142
        %v1145 = vmul.f32 %v1136, %v1142
        %v1146 = vmul.f32 %v1137, %v1142
        %v1147 = vmul.f32 %v1138, %v1142
        %v1148 = vmul.f32 %v1139, %v1142
        %v1149 = vmul.f32 %v1140, %v1142
        %v1150 = vmul.f32 %v1141, %v1142
        %v1151 = vld [vmem:[%s1035] sm:$0x3]
        %v1152 = vld [vmem:[%s1035 + $0x2] sm:$0x3]
        %v1153 = vld [vmem:[%s1035 + $0x4] sm:$0x3]
        %v1154 = vld [vmem:[%s1035 + $0x6] sm:$0x3]
        %v1155 = vld [vmem:[%s1035 + $0x8] sm:$0x3]
        %v1156 = vld [vmem:[%s1035 + $0xa] sm:$0x3]
        %v1157 = vld [vmem:[%s1035 + $0xc] sm:$0x3]
        %v1158 = vld [vmem:[%s1035 + $0xe] sm:$0x3]
        %v1159 = vld [vmem:[%s1035 + $0x10] sm:$0x3]
        %v1160 = vld [vmem:[%s1035 + $0x12] sm:$0x3]
        %v1161 = vld [vmem:[%s1035 + $0x14] sm:$0x3]
        %v1162 = vld [vmem:[%s1035 + $0x16] sm:$0x3]
        %v1163 = vld [vmem:[%s1035 + $0x18] sm:$0x3]
        %v1164 = vld [vmem:[%s1035 + $0x1a] sm:$0x3]
        %v1165 = vld [vmem:[%s1035 + $0x1c] sm:$0x3]
        %v1166 = vld [vmem:[%s1035 + $0x1e] sm:$0x3]
        %v1167 = vld [vmem:[%s1035 + $0x20] sm:$0x3]
        %v1168 = vld [vmem:[%s1035 + $0x22] sm:$0x3]
        %v1169 = vld [vmem:[%s1035 + $0x24] sm:$0x3]
        %v1170 = vld [vmem:[%s1035 + $0x26] sm:$0x3]
        %v1171 = vld [vmem:[%s1035 + $0x28] sm:$0x3]
        %v1172 = vld [vmem:[%s1035 + $0x2a] sm:$0x3]
        %v1173 = vld [vmem:[%s1035 + $0x2c] sm:$0x3]
        %v1174 = vld [vmem:[%s1035 + $0x2e] sm:$0x3]
        %v1175 = vld [vmem:[%s1035 + $0x30] sm:$0x3]
        %v1176 = vld [vmem:[%s1035 + $0x32] sm:$0x3]
        %v1177 = vld [vmem:[%s1035 + $0x34] sm:$0x3]
        %v1178 = vld [vmem:[%s1035 + $0x36] sm:$0x3]
        %v1179 = vld [vmem:[%s1035 + $0x38] sm:$0x3]
        %v1180 = vld [vmem:[%s1035 + $0x3a] sm:$0x3]
        %v1181 = vld [vmem:[%s1035 + $0x3c] sm:$0x3]
        %v1182 = vld [vmem:[%s1035 + $0x3e] sm:$0x3]
        %v1183 = vld [vmem:[%s1035 + $0x40] sm:$0x3]
        %v1184 = vld [vmem:[%s1035 + $0x42] sm:$0x3]
        %v1185 = vld [vmem:[%s1035 + $0x44] sm:$0x3]
        %v1186 = vld [vmem:[%s1035 + $0x46] sm:$0x3]
        %v1187 = vld [vmem:[%s1035 + $0x48] sm:$0x3]
        %v1188 = vld [vmem:[%s1035 + $0x4a] sm:$0x3]
        %v1189 = vld [vmem:[%s1035 + $0x4c] sm:$0x3]
        %v1190 = vld [vmem:[%s1035 + $0x4e] sm:$0x3]
        %v1191 = vld [vmem:[%s1035 + $0x50] sm:$0x3]
        %v1192 = vld [vmem:[%s1035 + $0x52] sm:$0x3]
        %v1193 = vld [vmem:[%s1035 + $0x54] sm:$0x3]
        %v1194 = vld [vmem:[%s1035 + $0x56] sm:$0x3]
        %v1195 = vld [vmem:[%s1035 + $0x58] sm:$0x3]
        %v1196 = vld [vmem:[%s1035 + $0x5a] sm:$0x3]
        %v1197 = vld [vmem:[%s1035 + $0x5c] sm:$0x3]
        %v1198 = vld [vmem:[%s1035 + $0x5e] sm:$0x3]
        %v1199 = vld [vmem:[%s1035 + $0x60] sm:$0x3]
        %v1200 = vld [vmem:[%s1035 + $0x62] sm:$0x3]
        %v1201 = vld [vmem:[%s1035 + $0x64] sm:$0x3]
        %v1202 = vld [vmem:[%s1035 + $0x66] sm:$0x3]
        %v1203 = vld [vmem:[%s1035 + $0x68] sm:$0x3]
        %v1204 = vld [vmem:[%s1035 + $0x6a] sm:$0x3]
        %v1205 = vld [vmem:[%s1035 + $0x6c] sm:$0x3]
        %v1206 = vld [vmem:[%s1035 + $0x6e] sm:$0x3]
        %v1207 = vld [vmem:[%s1035 + $0x70] sm:$0x3]
        %v1208 = vld [vmem:[%s1035 + $0x72] sm:$0x3]
        %v1209 = vld [vmem:[%s1035 + $0x74] sm:$0x3]
        %v1210 = vld [vmem:[%s1035 + $0x76] sm:$0x3]
        %v1211 = vld [vmem:[%s1035 + $0x78] sm:$0x3]
        %v1212 = vld [vmem:[%s1035 + $0x7a] sm:$0x3]
        %v1213 = vld [vmem:[%s1035 + $0x7c] sm:$0x3]
        %v1214 = vld [vmem:[%s1035 + $0x7e] sm:$0x3]
        %v1215 = vld [vmem:[%s1035 + $0x80] sm:$0x3]
        %v1216 = vld [vmem:[%s1035 + $0x82] sm:$0x3]
        %v1217 = vld [vmem:[%s1035 + $0x84] sm:$0x3]
        %v1218 = vld [vmem:[%s1035 + $0x86] sm:$0x3]
        %v1219 = vld [vmem:[%s1035 + $0x88] sm:$0x3]
        %v1220 = vld [vmem:[%s1035 + $0x8a] sm:$0x3]
        %v1221 = vld [vmem:[%s1035 + $0x8c] sm:$0x3]
        %v1222 = vld [vmem:[%s1035 + $0x8e] sm:$0x3]
        %v1223 = vld [vmem:[%s1035 + $0x90] sm:$0x3]
        %v1224 = vld [vmem:[%s1035 + $0x92] sm:$0x3]
        %v1225 = vld [vmem:[%s1035 + $0x94] sm:$0x3]
        %v1226 = vld [vmem:[%s1035 + $0x96] sm:$0x3]
        %v1227 = vld [vmem:[%s1035 + $0x98] sm:$0x3]
        %v1228 = vld [vmem:[%s1035 + $0x9a] sm:$0x3]
        %v1229 = vld [vmem:[%s1035 + $0x9c] sm:$0x3]
        %v1230 = vld [vmem:[%s1035 + $0x9e] sm:$0x3]
        %v1231 = vld [vmem:[%s1035 + $0xa0] sm:$0x3]
        %v1232 = vld [vmem:[%s1035 + $0xa2] sm:$0x3]
        %v1233 = vld [vmem:[%s1035 + $0xa4] sm:$0x3]
        %v1234 = vld [vmem:[%s1035 + $0xa6] sm:$0x3]
        %v1235 = vld [vmem:[%s1035 + $0xa8] sm:$0x3]
        %v1236 = vld [vmem:[%s1035 + $0xaa] sm:$0x3]
        %v1237 = vld [vmem:[%s1035 + $0xac] sm:$0x3]
        %v1238 = vld [vmem:[%s1035 + $0xae] sm:$0x3]
        %v1239 = vld [vmem:[%s1035 + $0xb0] sm:$0x3]
        %v1240 = vld [vmem:[%s1035 + $0xb2] sm:$0x3]
        %v1241 = vld [vmem:[%s1035 + $0xb4] sm:$0x3]
        %v1242 = vld [vmem:[%s1035 + $0xb6] sm:$0x3]
        %v1243 = vld [vmem:[%s1035 + $0xb8] sm:$0x3]
        %v1244 = vld [vmem:[%s1035 + $0xba] sm:$0x3]
        %v1245 = vld [vmem:[%s1035 + $0xbc] sm:$0x3]
        %v1246 = vld [vmem:[%s1035 + $0xbe] sm:$0x3]
        %v1247 = vld [vmem:[%s1035 + $0xc0] sm:$0x3]
        %v1248 = vld [vmem:[%s1035 + $0xc2] sm:$0x3]
        %v1249 = vld [vmem:[%s1035 + $0xc4] sm:$0x3]
        %v1250 = vld [vmem:[%s1035 + $0xc6] sm:$0x3]
        %v1251 = vld [vmem:[%s1035 + $0xc8] sm:$0x3]
        %v1252 = vld [vmem:[%s1035 + $0xca] sm:$0x3]
        %v1253 = vld [vmem:[%s1035 + $0xcc] sm:$0x3]
        %v1254 = vld [vmem:[%s1035 + $0xce] sm:$0x3]
        %v1255 = vld [vmem:[%s1035 + $0xd0] sm:$0x3]
        %v1256 = vld [vmem:[%s1035 + $0xd2] sm:$0x3]
        %v1257 = vld [vmem:[%s1035 + $0xd4] sm:$0x3]
        %v1258 = vld [vmem:[%s1035 + $0xd6] sm:$0x3]
        %v1259 = vld [vmem:[%s1035 + $0xd8] sm:$0x3]
        %v1260 = vld [vmem:[%s1035 + $0xda] sm:$0x3]
        %v1261 = vld [vmem:[%s1035 + $0xdc] sm:$0x3]
        %v1262 = vld [vmem:[%s1035 + $0xde] sm:$0x3]
        %v1263 = vld [vmem:[%s1035 + $0xe0] sm:$0x3]
        %v1264 = vld [vmem:[%s1035 + $0xe2] sm:$0x3]
        %v1265 = vld [vmem:[%s1035 + $0xe4] sm:$0x3]
        %v1266 = vld [vmem:[%s1035 + $0xe6] sm:$0x3]
        %v1267 = vld [vmem:[%s1035 + $0xe8] sm:$0x3]
        %v1268 = vld [vmem:[%s1035 + $0xea] sm:$0x3]
        %v1269 = vld [vmem:[%s1035 + $0xec] sm:$0x3]
        %v1270 = vld [vmem:[%s1035 + $0xee] sm:$0x3]
        %v1271 = vld [vmem:[%s1035 + $0xf0] sm:$0x3]
        %v1272 = vld [vmem:[%s1035 + $0xf2] sm:$0x3]
        %v1273 = vld [vmem:[%s1035 + $0xf4] sm:$0x3]
        %v1274 = vld [vmem:[%s1035 + $0xf6] sm:$0x3]
        %v1275 = vld [vmem:[%s1035 + $0xf8] sm:$0x3]
        %v1276 = vld [vmem:[%s1035 + $0xfa] sm:$0x3]
        %v1277 = vld [vmem:[%s1035 + $0xfc] sm:$0x3]
        %v1278 = vld [vmem:[%s1035 + $0xfe] sm:$0x3]
        %v1279 = vmul.f32 %v1151, %v1117
        %v1280 = vmul.f32 %v1152, %v1117
        %v1281 = vmul.f32 %v1153, %v1117
        %v1282 = vmul.f32 %v1154, %v1117
        %v1283 = vmul.f32 %v1155, %v1117
        %v1284 = vmul.f32 %v1156, %v1117
        %v1285 = vmul.f32 %v1157, %v1117
        %v1286 = vmul.f32 %v1158, %v1117
        %v1287 = vmul.f32 %v1159, %v1117
        %v1288 = vmul.f32 %v1160, %v1117
        %v1289 = vmul.f32 %v1161, %v1117
        %v1290 = vmul.f32 %v1162, %v1117
        %v1291 = vmul.f32 %v1163, %v1117
        %v1292 = vmul.f32 %v1164, %v1117
        %v1293 = vmul.f32 %v1165, %v1117
        %v1294 = vmul.f32 %v1166, %v1117
        %v1295 = vmul.f32 %v1167, %v1117
        %v1296 = vmul.f32 %v1168, %v1117
        %v1297 = vmul.f32 %v1169, %v1117
        %v1298 = vmul.f32 %v1170, %v1117
        %v1299 = vmul.f32 %v1171, %v1117
        %v1300 = vmul.f32 %v1172, %v1117
        %v1301 = vmul.f32 %v1173, %v1117
        %v1302 = vmul.f32 %v1174, %v1117
        %v1303 = vmul.f32 %v1175, %v1117
        %v1304 = vmul.f32 %v1176, %v1117
        %v1305 = vmul.f32 %v1177, %v1117
        %v1306 = vmul.f32 %v1178, %v1117
        %v1307 = vmul.f32 %v1179, %v1117
        %v1308 = vmul.f32 %v1180, %v1117
        %v1309 = vmul.f32 %v1181, %v1117
        %v1310 = vmul.f32 %v1182, %v1117
        %v1311 = vmul.f32 %v1183, %v1117
        %v1312 = vmul.f32 %v1184, %v1117
        %v1313 = vmul.f32 %v1185, %v1117
        %v1314 = vmul.f32 %v1186, %v1117
        %v1315 = vmul.f32 %v1187, %v1117
        %v1316 = vmul.f32 %v1188, %v1117
        %v1317 = vmul.f32 %v1189, %v1117
        %v1318 = vmul.f32 %v1190, %v1117
        %v1319 = vmul.f32 %v1191, %v1117
        %v1320 = vmul.f32 %v1192, %v1117
        %v1321 = vmul.f32 %v1193, %v1117
        %v1322 = vmul.f32 %v1194, %v1117
        %v1323 = vmul.f32 %v1195, %v1117
        %v1324 = vmul.f32 %v1196, %v1117
        %v1325 = vmul.f32 %v1197, %v1117
        %v1326 = vmul.f32 %v1198, %v1117
        %v1327 = vmul.f32 %v1199, %v1117
        %v1328 = vmul.f32 %v1200, %v1117
        %v1329 = vmul.f32 %v1201, %v1117
        %v1330 = vmul.f32 %v1202, %v1117
        %v1331 = vmul.f32 %v1203, %v1117
        %v1332 = vmul.f32 %v1204, %v1117
        %v1333 = vmul.f32 %v1205, %v1117
        %v1334 = vmul.f32 %v1206, %v1117
        %v1335 = vmul.f32 %v1207, %v1117
        %v1336 = vmul.f32 %v1208, %v1117
        %v1337 = vmul.f32 %v1209, %v1117
        %v1338 = vmul.f32 %v1210, %v1117
        %v1339 = vmul.f32 %v1211, %v1117
        %v1340 = vmul.f32 %v1212, %v1117
        %v1341 = vmul.f32 %v1213, %v1117
        %v1342 = vmul.f32 %v1214, %v1117
        %v1343 = vmul.f32 %v1215, %v1117
        %v1344 = vmul.f32 %v1216, %v1117
        %v1345 = vmul.f32 %v1217, %v1117
        %v1346 = vmul.f32 %v1218, %v1117
        %v1347 = vmul.f32 %v1219, %v1117
        %v1348 = vmul.f32 %v1220, %v1117
        %v1349 = vmul.f32 %v1221, %v1117
        %v1350 = vmul.f32 %v1222, %v1117
        %v1351 = vmul.f32 %v1223, %v1117
        %v1352 = vmul.f32 %v1224, %v1117
        %v1353 = vmul.f32 %v1225, %v1117
        %v1354 = vmul.f32 %v1226, %v1117
        %v1355 = vmul.f32 %v1227, %v1117
        %v1356 = vmul.f32 %v1228, %v1117
        %v1357 = vmul.f32 %v1229, %v1117
        %v1358 = vmul.f32 %v1230, %v1117
        %v1359 = vmul.f32 %v1231, %v1117
        %v1360 = vmul.f32 %v1232, %v1117
        %v1361 = vmul.f32 %v1233, %v1117
        %v1362 = vmul.f32 %v1234, %v1117
        %v1363 = vmul.f32 %v1235, %v1117
        %v1364 = vmul.f32 %v1236, %v1117
        %v1365 = vmul.f32 %v1237, %v1117
        %v1366 = vmul.f32 %v1238, %v1117
        %v1367 = vmul.f32 %v1239, %v1117
        %v1368 = vmul.f32 %v1240, %v1117
        %v1369 = vmul.f32 %v1241, %v1117
        %v1370 = vmul.f32 %v1242, %v1117
        %v1371 = vmul.f32 %v1243, %v1117
        %v1372 = vmul.f32 %v1244, %v1117
        %v1373 = vmul.f32 %v1245, %v1117
        %v1374 = vmul.f32 %v1246, %v1117
        %v1375 = vmul.f32 %v1247, %v1117
        %v1376 = vmul.f32 %v1248, %v1117
        %v1377 = vmul.f32 %v1249, %v1117
        %v1378 = vmul.f32 %v1250, %v1117
        %v1379 = vmul.f32 %v1251, %v1117
        %v1380 = vmul.f32 %v1252, %v1117
        %v1381 = vmul.f32 %v1253, %v1117
        %v1382 = vmul.f32 %v1254, %v1117
        %v1383 = vmul.f32 %v1255, %v1117
        %v1384 = vmul.f32 %v1256, %v1117
        %v1385 = vmul.f32 %v1257, %v1117
        %v1386 = vmul.f32 %v1258, %v1117
        %v1387 = vmul.f32 %v1259, %v1117
        %v1388 = vmul.f32 %v1260, %v1117
        %v1389 = vmul.f32 %v1261, %v1117
        %v1390 = vmul.f32 %v1262, %v1117
        %v1391 = vmul.f32 %v1263, %v1117
        %v1392 = vmul.f32 %v1264, %v1117
        %v1393 = vmul.f32 %v1265, %v1117
        %v1394 = vmul.f32 %v1266, %v1117
        %v1395 = vmul.f32 %v1267, %v1117
        %v1396 = vmul.f32 %v1268, %v1117
        %v1397 = vmul.f32 %v1269, %v1117
        %v1398 = vmul.f32 %v1270, %v1117
        %v1399 = vmul.f32 %v1271, %v1117
        %v1400 = vmul.f32 %v1272, %v1117
        %v1401 = vmul.f32 %v1273, %v1117
        %v1402 = vmul.f32 %v1274, %v1117
        %v1403 = vmul.f32 %v1275, %v1117
        %v1404 = vmul.f32 %v1276, %v1117
        %v1405 = vmul.f32 %v1277, %v1117
        %v1406 = vmul.f32 %v1278, %v1117
        %v1407 = vadd.f32 %v1279, %v1132
        %v1408 = vadd.f32 %v1280, %v1132
        %v1409 = vadd.f32 %v1281, %v1132
        %v1410 = vadd.f32 %v1282, %v1132
        %v1411 = vadd.f32 %v1283, %v1132
        %v1412 = vadd.f32 %v1284, %v1132
        %v1413 = vadd.f32 %v1285, %v1132
        %v1414 = vadd.f32 %v1286, %v1132
        %v1415 = vadd.f32 %v1287, %v1132
        %v1416 = vadd.f32 %v1288, %v1132
        %v1417 = vadd.f32 %v1289, %v1132
        %v1418 = vadd.f32 %v1290, %v1132
        %v1419 = vadd.f32 %v1291, %v1132
        %v1420 = vadd.f32 %v1292, %v1132
        %v1421 = vadd.f32 %v1293, %v1132
        %v1422 = vadd.f32 %v1294, %v1132
        %v1423 = vadd.f32 %v1295, %v1132
        %v1424 = vadd.f32 %v1296, %v1132
        %v1425 = vadd.f32 %v1297, %v1132
        %v1426 = vadd.f32 %v1298, %v1132
        %v1427 = vadd.f32 %v1299, %v1132
        %v1428 = vadd.f32 %v1300, %v1132
        %v1429 = vadd.f32 %v1301, %v1132
        %v1430 = vadd.f32 %v1302, %v1132
        %v1431 = vadd.f32 %v1303, %v1132
        %v1432 = vadd.f32 %v1304, %v1132
        %v1433 = vadd.f32 %v1305, %v1132
        %v1434 = vadd.f32 %v1306, %v1132
        %v1435 = vadd.f32 %v1307, %v1132
        %v1436 = vadd.f32 %v1308, %v1132
        %v1437 = vadd.f32 %v1309, %v1132
        %v1438 = vadd.f32 %v1310, %v1132
        %v1439 = vadd.f32 %v1311, %v1132
        %v1440 = vadd.f32 %v1312, %v1132
        %v1441 = vadd.f32 %v1313, %v1132
        %v1442 = vadd.f32 %v1314, %v1132
        %v1443 = vadd.f32 %v1315, %v1132
        %v1444 = vadd.f32 %v1316, %v1132
        %v1445 = vadd.f32 %v1317, %v1132
        %v1446 = vadd.f32 %v1318, %v1132
        %v1447 = vadd.f32 %v1319, %v1132
        %v1448 = vadd.f32 %v1320, %v1132
        %v1449 = vadd.f32 %v1321, %v1132
        %v1450 = vadd.f32 %v1322, %v1132
        %v1451 = vadd.f32 %v1323, %v1132
        %v1452 = vadd.f32 %v1324, %v1132
        %v1453 = vadd.f32 %v1325, %v1132
        %v1454 = vadd.f32 %v1326, %v1132
        %v1455 = vadd.f32 %v1327, %v1132
        %v1456 = vadd.f32 %v1328, %v1132
        %v1457 = vadd.f32 %v1329, %v1132
        %v1458 = vadd.f32 %v1330, %v1132
        %v1459 = vadd.f32 %v1331, %v1132
        %v1460 = vadd.f32 %v1332, %v1132
        %v1461 = vadd.f32 %v1333, %v1132
        %v1462 = vadd.f32 %v1334, %v1132
        %v1463 = vadd.f32 %v1335, %v1132
        %v1464 = vadd.f32 %v1336, %v1132
        %v1465 = vadd.f32 %v1337, %v1132
        %v1466 = vadd.f32 %v1338, %v1132
        %v1467 = vadd.f32 %v1339, %v1132
        %v1468 = vadd.f32 %v1340, %v1132
        %v1469 = vadd.f32 %v1341, %v1132
        %v1470 = vadd.f32 %v1342, %v1132
        %v1471 = vadd.f32 %v1343, %v1132
        %v1472 = vadd.f32 %v1344, %v1132
        %v1473 = vadd.f32 %v1345, %v1132
        %v1474 = vadd.f32 %v1346, %v1132
        %v1475 = vadd.f32 %v1347, %v1132
        %v1476 = vadd.f32 %v1348, %v1132
        %v1477 = vadd.f32 %v1349, %v1132
        %v1478 = vadd.f32 %v1350, %v1132
        %v1479 = vadd.f32 %v1351, %v1132
        %v1480 = vadd.f32 %v1352, %v1132
        %v1481 = vadd.f32 %v1353, %v1132
        %v1482 = vadd.f32 %v1354, %v1132
        %v1483 = vadd.f32 %v1355, %v1132
        %v1484 = vadd.f32 %v1356, %v1132
        %v1485 = vadd.f32 %v1357, %v1132
        %v1486 = vadd.f32 %v1358, %v1132
        %v1487 = vadd.f32 %v1359, %v1132
        %v1488 = vadd.f32 %v1360, %v1132
        %v1489 = vadd.f32 %v1361, %v1132
        %v1490 = vadd.f32 %v1362, %v1132
        %v1491 = vadd.f32 %v1363, %v1132
        %v1492 = vadd.f32 %v1364, %v1132
        %v1493 = vadd.f32 %v1365, %v1132
        %v1494 = vadd.f32 %v1366, %v1132
        %v1495 = vadd.f32 %v1367, %v1132
        %v1496 = vadd.f32 %v1368, %v1132
        %v1497 = vadd.f32 %v1369, %v1132
        %v1498 = vadd.f32 %v1370, %v1132
        %v1499 = vadd.f32 %v1371, %v1132
        %v1500 = vadd.f32 %v1372, %v1132
        %v1501 = vadd.f32 %v1373, %v1132
        %v1502 = vadd.f32 %v1374, %v1132
        %v1503 = vadd.f32 %v1375, %v1132
        %v1504 = vadd.f32 %v1376, %v1132
        %v1505 = vadd.f32 %v1377, %v1132
        %v1506 = vadd.f32 %v1378, %v1132
        %v1507 = vadd.f32 %v1379, %v1132
        %v1508 = vadd.f32 %v1380, %v1132
        %v1509 = vadd.f32 %v1381, %v1132
        %v1510 = vadd.f32 %v1382, %v1132
        %v1511 = vadd.f32 %v1383, %v1132
        %v1512 = vadd.f32 %v1384, %v1132
        %v1513 = vadd.f32 %v1385, %v1132
        %v1514 = vadd.f32 %v1386, %v1132
        %v1515 = vadd.f32 %v1387, %v1132
        %v1516 = vadd.f32 %v1388, %v1132
        %v1517 = vadd.f32 %v1389, %v1132
        %v1518 = vadd.f32 %v1390, %v1132
        %v1519 = vadd.f32 %v1391, %v1132
        %v1520 = vadd.f32 %v1392, %v1132
        %v1521 = vadd.f32 %v1393, %v1132
        %v1522 = vadd.f32 %v1394, %v1132
        %v1523 = vadd.f32 %v1395, %v1132
        %v1524 = vadd.f32 %v1396, %v1132
        %v1525 = vadd.f32 %v1397, %v1132
        %v1526 = vadd.f32 %v1398, %v1132
        %v1527 = vadd.f32 %v1399, %v1132
        %v1528 = vadd.f32 %v1400, %v1132
        %v1529 = vadd.f32 %v1401, %v1132
        %v1530 = vadd.f32 %v1402, %v1132
        %v1531 = vadd.f32 %v1403, %v1132
        %v1532 = vadd.f32 %v1404, %v1132
        %v1533 = vadd.f32 %v1405, %v1132
        %v1534 = vadd.f32 %v1406, %v1132
        %s1535 = sadd.s32 %s1099, 16
        %p1536 = scmp.lt.s32.totalorder %s1535, 64
        %s1537 = scalar_select %p1536, 1, 0
        %s1538 = scvt.s32.f32 %s1537
        %v1539 = vld [vmem:[%s1049] sm:$0x3]
        %v1540 = vld [vmem:[%s1049 + $0x2] sm:$0x3]
        %v1541 = vld [vmem:[%s1049 + $0x4] sm:$0x3]
        %v1542 = vld [vmem:[%s1049 + $0x6] sm:$0x3]
        %v1543 = vld [vmem:[%s1049 + $0x8] sm:$0x3]
        %v1544 = vld [vmem:[%s1049 + $0xa] sm:$0x3]
        %v1545 = vld [vmem:[%s1049 + $0xc] sm:$0x3]
        %v1546 = vld [vmem:[%s1049 + $0xe] sm:$0x3]
        %v1547 = vmul.f32 %v1539, %v1117
        %v1548 = vmul.f32 %v1540, %v1117
        %v1549 = vmul.f32 %v1541, %v1117
        %v1550 = vmul.f32 %v1542, %v1117
        %v1551 = vmul.f32 %v1543, %v1117
        %v1552 = vmul.f32 %v1544, %v1117
        %v1553 = vmul.f32 %v1545, %v1117
        %v1554 = vmul.f32 %v1546, %v1117
        %v1555 = vadd.f32 %v1547, %v1132
        %v1556 = vadd.f32 %v1548, %v1132
        %v1557 = vadd.f32 %v1549, %v1132
        %v1558 = vadd.f32 %v1550, %v1132
        %v1559 = vadd.f32 %v1551, %v1132
        %v1560 = vadd.f32 %v1552, %v1132
        %v1561 = vadd.f32 %v1553, %v1132
        %v1562 = vadd.f32 %v1554, %v1132
        %v1563 = vstv %s1538
        %v1564 = vmul.f32 %v1555, %v1563
        %v1565 = vmul.f32 %v1556, %v1563
        %v1566 = vmul.f32 %v1557, %v1563
        %v1567 = vmul.f32 %v1558, %v1563
        %v1568 = vmul.f32 %v1559, %v1563
        %v1569 = vmul.f32 %v1560, %v1563
        %v1570 = vmul.f32 %v1561, %v1563
        %v1571 = vmul.f32 %v1562, %v1563
        %v1572 = vld [vmem:[%s5] sm:$0x1]
        %1574 = vset.pattern.permute.xlu0 0
        %1575 = vperm.xlu0 %1574, 0.0
        %v1576 = vpop.permute.xlu0 %1575
        %1579 = vset.pattern.permute.xlu0 0
        %1580 = vperm.xlu0 %1579, %v1143
        %v1581 = vpop.permute.xlu0 %1580
        %1584 = vset.pattern.permute.xlu0 0
        %1585 = vperm.xlu0 %1584, %v1407
        %v1586 = vpop.permute.xlu0 %1585
        %1589 = vset.pattern.permute.xlu0 0
        %1590 = vperm.xlu0 %1589, %v1408
        %v1591 = vpop.permute.xlu0 %1590
        %1594 = vset.pattern.permute.xlu0 0
        %1595 = vperm.xlu0 %1594, %v1409
        %v1596 = vpop.permute.xlu0 %1595
        %1599 = vset.pattern.permute.xlu0 0
        %1600 = vperm.xlu0 %1599, %v1410
        %v1601 = vpop.permute.xlu0 %1600
        %1604 = vset.pattern.permute.xlu0 0
        %1605 = vperm.xlu0 %1604, %v1411
        %v1606 = vpop.permute.xlu0 %1605
        %1609 = vset.pattern.permute.xlu0 0
        %1610 = vperm.xlu0 %1609, %v1412
        %v1611 = vpop.permute.xlu0 %1610
        %1614 = vset.pattern.permute.xlu0 0
        %1615 = vperm.xlu0 %1614, %v1413
        %v1616 = vpop.permute.xlu0 %1615
        %1619 = vset.pattern.permute.xlu0 0
        %1620 = vperm.xlu0 %1619, %v1414
        %v1621 = vpop.permute.xlu0 %1620
        %1624 = vset.pattern.permute.xlu0 0
        %1625 = vperm.xlu0 %1624, %v1415
        %v1626 = vpop.permute.xlu0 %1625
        %1629 = vset.pattern.permute.xlu0 0
        %1630 = vperm.xlu0 %1629, %v1416
        %v1631 = vpop.permute.xlu0 %1630
        %1634 = vset.pattern.permute.xlu0 0
        %1635 = vperm.xlu0 %1634, %v1417
        %v1636 = vpop.permute.xlu0 %1635
        %1639 = vset.pattern.permute.xlu0 0
        %1640 = vperm.xlu0 %1639, %v1418
        %v1641 = vpop.permute.xlu0 %1640
        %1644 = vset.pattern.permute.xlu0 0
        %1645 = vperm.xlu0 %1644, %v1419
        %v1646 = vpop.permute.xlu0 %1645
        %1649 = vset.pattern.permute.xlu0 0
        %1650 = vperm.xlu0 %1649, %v1420
        %v1651 = vpop.permute.xlu0 %1650
        %1654 = vset.pattern.permute.xlu0 0
        %1655 = vperm.xlu0 %1654, %v1421
        %v1656 = vpop.permute.xlu0 %1655
        %1659 = vset.pattern.permute.xlu0 0
        %1660 = vperm.xlu0 %1659, %v1144
        %v1661 = vpop.permute.xlu0 %1660
        %1664 = vset.pattern.permute.xlu0 0
        %1665 = vperm.xlu0 %1664, %v1423
        %v1666 = vpop.permute.xlu0 %1665
        %1669 = vset.pattern.permute.xlu0 0
        %1670 = vperm.xlu0 %1669, %v1424
        %v1671 = vpop.permute.xlu0 %1670
        %1674 = vset.pattern.permute.xlu0 0
        %1675 = vperm.xlu0 %1674, %v1425
        %v1676 = vpop.permute.xlu0 %1675
        %1679 = vset.pattern.permute.xlu0 0
        %1680 = vperm.xlu0 %1679, %v1426
        %v1681 = vpop.permute.xlu0 %1680
        %1684 = vset.pattern.permute.xlu0 0
        %1685 = vperm.xlu0 %1684, %v1427
        %v1686 = vpop.permute.xlu0 %1685
        %1689 = vset.pattern.permute.xlu0 0
        %1690 = vperm.xlu0 %1689, %v1428
        %v1691 = vpop.permute.xlu0 %1690
        %1694 = vset.pattern.permute.xlu0 0
        %1695 = vperm.xlu0 %1694, %v1429
        %v1696 = vpop.permute.xlu0 %1695
        %1699 = vset.pattern.permute.xlu0 0
        %1700 = vperm.xlu0 %1699, %v1430
        %v1701 = vpop.permute.xlu0 %1700
        %1704 = vset.pattern.permute.xlu0 0
        %1705 = vperm.xlu0 %1704, %v1431
        %v1706 = vpop.permute.xlu0 %1705
        %1709 = vset.pattern.permute.xlu0 0
        %1710 = vperm.xlu0 %1709, %v1432
        %v1711 = vpop.permute.xlu0 %1710
        %1714 = vset.pattern.permute.xlu0 0
        %1715 = vperm.xlu0 %1714, %v1433
        %v1716 = vpop.permute.xlu0 %1715
        %1719 = vset.pattern.permute.xlu0 0
        %1720 = vperm.xlu0 %1719, %v1434
        %v1721 = vpop.permute.xlu0 %1720
        %1724 = vset.pattern.permute.xlu0 0
        %1725 = vperm.xlu0 %1724, %v1435
        %v1726 = vpop.permute.xlu0 %1725
        %1729 = vset.pattern.permute.xlu0 0
        %1730 = vperm.xlu0 %1729, %v1436
        %v1731 = vpop.permute.xlu0 %1730
        %1734 = vset.pattern.permute.xlu0 0
        %1735 = vperm.xlu0 %1734, %v1437
        %v1736 = vpop.permute.xlu0 %1735
        %1739 = vset.pattern.permute.xlu0 0
        %1740 = vperm.xlu0 %1739, %v1145
        %v1741 = vpop.permute.xlu0 %1740
        %1744 = vset.pattern.permute.xlu0 0
        %1745 = vperm.xlu0 %1744, %v1439
        %v1746 = vpop.permute.xlu0 %1745
        %1749 = vset.pattern.permute.xlu0 0
        %1750 = vperm.xlu0 %1749, %v1440
        %v1751 = vpop.permute.xlu0 %1750
        %1754 = vset.pattern.permute.xlu0 0
        %1755 = vperm.xlu0 %1754, %v1441
        %v1756 = vpop.permute.xlu0 %1755
        %1759 = vset.pattern.permute.xlu0 0
        %1760 = vperm.xlu0 %1759, %v1442
        %v1761 = vpop.permute.xlu0 %1760
        %1764 = vset.pattern.permute.xlu0 0
        %1765 = vperm.xlu0 %1764, %v1443
        %v1766 = vpop.permute.xlu0 %1765
        %1769 = vset.pattern.permute.xlu0 0
        %1770 = vperm.xlu0 %1769, %v1444
        %v1771 = vpop.permute.xlu0 %1770
        %1774 = vset.pattern.permute.xlu0 0
        %1775 = vperm.xlu0 %1774, %v1445
        %v1776 = vpop.permute.xlu0 %1775
        %1779 = vset.pattern.permute.xlu0 0
        %1780 = vperm.xlu0 %1779, %v1446
        %v1781 = vpop.permute.xlu0 %1780
        %1784 = vset.pattern.permute.xlu0 0
        %1785 = vperm.xlu0 %1784, %v1447
        %v1786 = vpop.permute.xlu0 %1785
        %1789 = vset.pattern.permute.xlu0 0
        %1790 = vperm.xlu0 %1789, %v1448
        %v1791 = vpop.permute.xlu0 %1790
        %1794 = vset.pattern.permute.xlu0 0
        %1795 = vperm.xlu0 %1794, %v1449
        %v1796 = vpop.permute.xlu0 %1795
        %1799 = vset.pattern.permute.xlu0 0
        %1800 = vperm.xlu0 %1799, %v1450
        %v1801 = vpop.permute.xlu0 %1800
        %1804 = vset.pattern.permute.xlu0 0
        %1805 = vperm.xlu0 %1804, %v1451
        %v1806 = vpop.permute.xlu0 %1805
        %1809 = vset.pattern.permute.xlu0 0
        %1810 = vperm.xlu0 %1809, %v1452
        %v1811 = vpop.permute.xlu0 %1810
        %1814 = vset.pattern.permute.xlu0 0
        %1815 = vperm.xlu0 %1814, %v1453
        %v1816 = vpop.permute.xlu0 %1815
        %1819 = vset.pattern.permute.xlu0 0
        %1820 = vperm.xlu0 %1819, %v1146
        %v1821 = vpop.permute.xlu0 %1820
        %1824 = vset.pattern.permute.xlu0 0
        %1825 = vperm.xlu0 %1824, %v1455
        %v1826 = vpop.permute.xlu0 %1825
        %1829 = vset.pattern.permute.xlu0 0
        %1830 = vperm.xlu0 %1829, %v1456
        %v1831 = vpop.permute.xlu0 %1830
        %1834 = vset.pattern.permute.xlu0 0
        %1835 = vperm.xlu0 %1834, %v1457
        %v1836 = vpop.permute.xlu0 %1835
        %1839 = vset.pattern.permute.xlu0 0
        %1840 = vperm.xlu0 %1839, %v1458
        %v1841 = vpop.permute.xlu0 %1840
        %1844 = vset.pattern.permute.xlu0 0
        %1845 = vperm.xlu0 %1844, %v1459
        %v1846 = vpop.permute.xlu0 %1845
        %1849 = vset.pattern.permute.xlu0 0
        %1850 = vperm.xlu0 %1849, %v1460
        %v1851 = vpop.permute.xlu0 %1850
        %1854 = vset.pattern.permute.xlu0 0
        %1855 = vperm.xlu0 %1854, %v1461
        %v1856 = vpop.permute.xlu0 %1855
        %1859 = vset.pattern.permute.xlu0 0
        %1860 = vperm.xlu0 %1859, %v1462
        %v1861 = vpop.permute.xlu0 %1860
        %1864 = vset.pattern.permute.xlu0 0
        %1865 = vperm.xlu0 %1864, %v1463
        %v1866 = vpop.permute.xlu0 %1865
        %1869 = vset.pattern.permute.xlu0 0
        %1870 = vperm.xlu0 %1869, %v1464
        %v1871 = vpop.permute.xlu0 %1870
        %1874 = vset.pattern.permute.xlu0 0
        %1875 = vperm.xlu0 %1874, %v1465
        %v1876 = vpop.permute.xlu0 %1875
        %1879 = vset.pattern.permute.xlu0 0
        %1880 = vperm.xlu0 %1879, %v1466
        %v1881 = vpop.permute.xlu0 %1880
        %1884 = vset.pattern.permute.xlu0 0
        %1885 = vperm.xlu0 %1884, %v1467
        %v1886 = vpop.permute.xlu0 %1885
        %1889 = vset.pattern.permute.xlu0 0
        %1890 = vperm.xlu0 %1889, %v1468
        %v1891 = vpop.permute.xlu0 %1890
        %1894 = vset.pattern.permute.xlu0 0
        %1895 = vperm.xlu0 %1894, %v1469
        %v1896 = vpop.permute.xlu0 %1895
        %1899 = vset.pattern.permute.xlu0 0
        %1900 = vperm.xlu0 %1899, %v1147
        %v1901 = vpop.permute.xlu0 %1900
        %1904 = vset.pattern.permute.xlu0 0
        %1905 = vperm.xlu0 %1904, %v1471
        %v1906 = vpop.permute.xlu0 %1905
        %1909 = vset.pattern.permute.xlu0 0
        %1910 = vperm.xlu0 %1909, %v1472
        %v1911 = vpop.permute.xlu0 %1910
        %1914 = vset.pattern.permute.xlu0 0
        %1915 = vperm.xlu0 %1914, %v1473
        %v1916 = vpop.permute.xlu0 %1915
        %1919 = vset.pattern.permute.xlu0 0
        %1920 = vperm.xlu0 %1919, %v1474
        %v1921 = vpop.permute.xlu0 %1920
        %1924 = vset.pattern.permute.xlu0 0
        %1925 = vperm.xlu0 %1924, %v1475
        %v1926 = vpop.permute.xlu0 %1925
        %1929 = vset.pattern.permute.xlu0 0
        %1930 = vperm.xlu0 %1929, %v1476
        %v1931 = vpop.permute.xlu0 %1930
        %1934 = vset.pattern.permute.xlu0 0
        %1935 = vperm.xlu0 %1934, %v1477
        %v1936 = vpop.permute.xlu0 %1935
        %1939 = vset.pattern.permute.xlu0 0
        %1940 = vperm.xlu0 %1939, %v1478
        %v1941 = vpop.permute.xlu0 %1940
        %1944 = vset.pattern.permute.xlu0 0
        %1945 = vperm.xlu0 %1944, %v1479
        %v1946 = vpop.permute.xlu0 %1945
        %1949 = vset.pattern.permute.xlu0 0
        %1950 = vperm.xlu0 %1949, %v1480
        %v1951 = vpop.permute.xlu0 %1950
        %1954 = vset.pattern.permute.xlu0 0
        %1955 = vperm.xlu0 %1954, %v1481
        %v1956 = vpop.permute.xlu0 %1955
        %1959 = vset.pattern.permute.xlu0 0
        %1960 = vperm.xlu0 %1959, %v1482
        %v1961 = vpop.permute.xlu0 %1960
        %1964 = vset.pattern.permute.xlu0 0
        %1965 = vperm.xlu0 %1964, %v1483
        %v1966 = vpop.permute.xlu0 %1965
        %1969 = vset.pattern.permute.xlu0 0
        %1970 = vperm.xlu0 %1969, %v1484
        %v1971 = vpop.permute.xlu0 %1970
        %1974 = vset.pattern.permute.xlu0 0
        %1975 = vperm.xlu0 %1974, %v1485
        %v1976 = vpop.permute.xlu0 %1975
        %1979 = vset.pattern.permute.xlu0 0
        %1980 = vperm.xlu0 %1979, %v1148
        %v1981 = vpop.permute.xlu0 %1980
        %1984 = vset.pattern.permute.xlu0 0
        %1985 = vperm.xlu0 %1984, %v1487
        %v1986 = vpop.permute.xlu0 %1985
        %1989 = vset.pattern.permute.xlu0 0
        %1990 = vperm.xlu0 %1989, %v1488
        %v1991 = vpop.permute.xlu0 %1990
        %1994 = vset.pattern.permute.xlu0 0
        %1995 = vperm.xlu0 %1994, %v1489
        %v1996 = vpop.permute.xlu0 %1995
        %1999 = vset.pattern.permute.xlu0 0
        %2000 = vperm.xlu0 %1999, %v1490
        %v2001 = vpop.permute.xlu0 %2000
        %2004 = vset.pattern.permute.xlu0 0
        %2005 = vperm.xlu0 %2004, %v1491
        %v2006 = vpop.permute.xlu0 %2005
        %2009 = vset.pattern.permute.xlu0 0
        %2010 = vperm.xlu0 %2009, %v1492
        %v2011 = vpop.permute.xlu0 %2010
        %2014 = vset.pattern.permute.xlu0 0
        %2015 = vperm.xlu0 %2014, %v1493
        %v2016 = vpop.permute.xlu0 %2015
        %2019 = vset.pattern.permute.xlu0 0
        %2020 = vperm.xlu0 %2019, %v1494
        %v2021 = vpop.permute.xlu0 %2020
        %2024 = vset.pattern.permute.xlu0 0
        %2025 = vperm.xlu0 %2024, %v1495
        %v2026 = vpop.permute.xlu0 %2025
        %2029 = vset.pattern.permute.xlu0 0
        %2030 = vperm.xlu0 %2029, %v1496
        %v2031 = vpop.permute.xlu0 %2030
        %2034 = vset.pattern.permute.xlu0 0
        %2035 = vperm.xlu0 %2034, %v1497
        %v2036 = vpop.permute.xlu0 %2035
        %2039 = vset.pattern.permute.xlu0 0
        %2040 = vperm.xlu0 %2039, %v1498
        %v2041 = vpop.permute.xlu0 %2040
        %2044 = vset.pattern.permute.xlu0 0
        %2045 = vperm.xlu0 %2044, %v1499
        %v2046 = vpop.permute.xlu0 %2045
        %2049 = vset.pattern.permute.xlu0 0
        %2050 = vperm.xlu0 %2049, %v1500
        %v2051 = vpop.permute.xlu0 %2050
        %2054 = vset.pattern.permute.xlu0 0
        %2055 = vperm.xlu0 %2054, %v1501
        %v2056 = vpop.permute.xlu0 %2055
        %2059 = vset.pattern.permute.xlu0 0
        %2060 = vperm.xlu0 %2059, %v1149
        %v2061 = vpop.permute.xlu0 %2060
        %2064 = vset.pattern.permute.xlu0 0
        %2065 = vperm.xlu0 %2064, %v1503
        %v2066 = vpop.permute.xlu0 %2065
        %2069 = vset.pattern.permute.xlu0 0
        %2070 = vperm.xlu0 %2069, %v1504
        %v2071 = vpop.permute.xlu0 %2070
        %2074 = vset.pattern.permute.xlu0 0
        %2075 = vperm.xlu0 %2074, %v1505
        %v2076 = vpop.permute.xlu0 %2075
        %2079 = vset.pattern.permute.xlu0 0
        %2080 = vperm.xlu0 %2079, %v1506
        %v2081 = vpop.permute.xlu0 %2080
        %2084 = vset.pattern.permute.xlu0 0
        %2085 = vperm.xlu0 %2084, %v1507
        %v2086 = vpop.permute.xlu0 %2085
        %2089 = vset.pattern.permute.xlu0 0
        %2090 = vperm.xlu0 %2089, %v1508
        %v2091 = vpop.permute.xlu0 %2090
        %2094 = vset.pattern.permute.xlu0 0
        %2095 = vperm.xlu0 %2094, %v1509
        %v2096 = vpop.permute.xlu0 %2095
        %2099 = vset.pattern.permute.xlu0 0
        %2100 = vperm.xlu0 %2099, %v1510
        %v2101 = vpop.permute.xlu0 %2100
        %2104 = vset.pattern.permute.xlu0 0
        %2105 = vperm.xlu0 %2104, %v1511
        %v2106 = vpop.permute.xlu0 %2105
        %2109 = vset.pattern.permute.xlu0 0
        %2110 = vperm.xlu0 %2109, %v1512
        %v2111 = vpop.permute.xlu0 %2110
        %2114 = vset.pattern.permute.xlu0 0
        %2115 = vperm.xlu0 %2114, %v1513
        %v2116 = vpop.permute.xlu0 %2115
        %2119 = vset.pattern.permute.xlu0 0
        %2120 = vperm.xlu0 %2119, %v1514
        %v2121 = vpop.permute.xlu0 %2120
        %2124 = vset.pattern.permute.xlu0 0
        %2125 = vperm.xlu0 %2124, %v1515
        %v2126 = vpop.permute.xlu0 %2125
        %2129 = vset.pattern.permute.xlu0 0
        %2130 = vperm.xlu0 %2129, %v1516
        %v2131 = vpop.permute.xlu0 %2130
        %2134 = vset.pattern.permute.xlu0 0
        %2135 = vperm.xlu0 %2134, %v1517
        %v2136 = vpop.permute.xlu0 %2135
        %v2139 = vlaneseq
        %v2140 = vshrl.u32 %v2139, 7
        %v2141 = vsub.s32 0, %v2140
        %v2142 = vrot.slane %v1572, %v2141
        %v2144 = vmul.f32 %v1576, %v2142
        %v2145 = vmul.f32 %v1581, %v2142
        %v2146 = vmul.f32 %v1586, %v2142
        %v2147 = vmul.f32 %v1591, %v2142
        %v2148 = vmul.f32 %v1596, %v2142
        %v2149 = vmul.f32 %v1601, %v2142
        %v2150 = vmul.f32 %v1606, %v2142
        %v2151 = vmul.f32 %v1611, %v2142
        %v2152 = vmul.f32 %v1616, %v2142
        %v2153 = vmul.f32 %v1621, %v2142
        %v2154 = vmul.f32 %v1626, %v2142
        %v2155 = vmul.f32 %v1631, %v2142
        %v2156 = vmul.f32 %v1636, %v2142
        %v2157 = vmul.f32 %v1641, %v2142
        %v2158 = vmul.f32 %v1646, %v2142
        %v2159 = vmul.f32 %v1651, %v2142
        %v2160 = vmul.f32 %v1656, %v2142
        %v2161 = vmul.f32 %v1661, %v2142
        %v2162 = vmul.f32 %v1666, %v2142
        %v2163 = vmul.f32 %v1671, %v2142
        %v2164 = vmul.f32 %v1676, %v2142
        %v2165 = vmul.f32 %v1681, %v2142
        %v2166 = vmul.f32 %v1686, %v2142
        %v2167 = vmul.f32 %v1691, %v2142
        %v2168 = vmul.f32 %v1696, %v2142
        %v2169 = vmul.f32 %v1701, %v2142
        %v2170 = vmul.f32 %v1706, %v2142
        %v2171 = vmul.f32 %v1711, %v2142
        %v2172 = vmul.f32 %v1716, %v2142
        %v2173 = vmul.f32 %v1721, %v2142
        %v2174 = vmul.f32 %v1726, %v2142
        %v2175 = vmul.f32 %v1731, %v2142
        %v2176 = vmul.f32 %v1736, %v2142
        %v2177 = vmul.f32 %v1741, %v2142
        %v2178 = vmul.f32 %v1746, %v2142
        %v2179 = vmul.f32 %v1751, %v2142
        %v2180 = vmul.f32 %v1756, %v2142
        %v2181 = vmul.f32 %v1761, %v2142
        %v2182 = vmul.f32 %v1766, %v2142
        %v2183 = vmul.f32 %v1771, %v2142
        %v2184 = vmul.f32 %v1776, %v2142
        %v2185 = vmul.f32 %v1781, %v2142
        %v2186 = vmul.f32 %v1786, %v2142
        %v2187 = vmul.f32 %v1791, %v2142
        %v2188 = vmul.f32 %v1796, %v2142
        %v2189 = vmul.f32 %v1801, %v2142
        %v2190 = vmul.f32 %v1806, %v2142
        %v2191 = vmul.f32 %v1811, %v2142
        %v2192 = vmul.f32 %v1816, %v2142
        %v2193 = vmul.f32 %v1821, %v2142
        %v2194 = vmul.f32 %v1826, %v2142
        %v2195 = vmul.f32 %v1831, %v2142
        %v2196 = vmul.f32 %v1836, %v2142
        %v2197 = vmul.f32 %v1841, %v2142
        %v2198 = vmul.f32 %v1846, %v2142
        %v2199 = vmul.f32 %v1851, %v2142
        %v2200 = vmul.f32 %v1856, %v2142
        %v2201 = vmul.f32 %v1861, %v2142
        %v2202 = vmul.f32 %v1866, %v2142
        %v2203 = vmul.f32 %v1871, %v2142
        %v2204 = vmul.f32 %v1876, %v2142
        %v2205 = vmul.f32 %v1881, %v2142
        %v2206 = vmul.f32 %v1886, %v2142
        %v2207 = vmul.f32 %v1891, %v2142
        %v2208 = vmul.f32 %v1896, %v2142
        %v2209 = vmul.f32 %v1901, %v2142
        %v2210 = vmul.f32 %v1906, %v2142
        %v2211 = vmul.f32 %v1911, %v2142
        %v2212 = vmul.f32 %v1916, %v2142
        %v2213 = vmul.f32 %v1921, %v2142
        %v2214 = vmul.f32 %v1926, %v2142
        %v2215 = vmul.f32 %v1931, %v2142
        %v2216 = vmul.f32 %v1936, %v2142
        %v2217 = vmul.f32 %v1941, %v2142
        %v2218 = vmul.f32 %v1946, %v2142
        %v2219 = vmul.f32 %v1951, %v2142
        %v2220 = vmul.f32 %v1956, %v2142
        %v2221 = vmul.f32 %v1961, %v2142
        %v2222 = vmul.f32 %v1966, %v2142
        %v2223 = vmul.f32 %v1971, %v2142
        %v2224 = vmul.f32 %v1976, %v2142
        %v2225 = vmul.f32 %v1981, %v2142
        %v2226 = vmul.f32 %v1986, %v2142
        %v2227 = vmul.f32 %v1991, %v2142
        %v2228 = vmul.f32 %v1996, %v2142
        %v2229 = vmul.f32 %v2001, %v2142
        %v2230 = vmul.f32 %v2006, %v2142
        %v2231 = vmul.f32 %v2011, %v2142
        %v2232 = vmul.f32 %v2016, %v2142
        %v2233 = vmul.f32 %v2021, %v2142
        %v2234 = vmul.f32 %v2026, %v2142
        %v2235 = vmul.f32 %v2031, %v2142
        %v2236 = vmul.f32 %v2036, %v2142
        %v2237 = vmul.f32 %v2041, %v2142
        %v2238 = vmul.f32 %v2046, %v2142
        %v2239 = vmul.f32 %v2051, %v2142
        %v2240 = vmul.f32 %v2056, %v2142
        %v2241 = vmul.f32 %v2061, %v2142
        %v2242 = vmul.f32 %v2066, %v2142
        %v2243 = vmul.f32 %v2071, %v2142
        %v2244 = vmul.f32 %v2076, %v2142
        %v2245 = vmul.f32 %v2081, %v2142
        %v2246 = vmul.f32 %v2086, %v2142
        %v2247 = vmul.f32 %v2091, %v2142
        %v2248 = vmul.f32 %v2096, %v2142
        %v2249 = vmul.f32 %v2101, %v2142
        %v2250 = vmul.f32 %v2106, %v2142
        %v2251 = vmul.f32 %v2111, %v2142
        %v2252 = vmul.f32 %v2116, %v2142
        %v2253 = vmul.f32 %v2121, %v2142
        %v2254 = vmul.f32 %v2126, %v2142
        %v2255 = vmul.f32 %v2131, %v2142
        %v2256 = vmul.f32 %v2136, %v2142
        %v2257 = vadd.f32 %v2144, 0.0
        %v2258 = vadd.f32 %v2145, 0.0
        %v2259 = vadd.f32 %v2146, 0.0
        %v2260 = vadd.f32 %v2147, 0.0
        %v2261 = vadd.f32 %v2148, 0.0
        %v2262 = vadd.f32 %v2149, 0.0
        %v2263 = vadd.f32 %v2150, 0.0
        %v2264 = vadd.f32 %v2151, 0.0
        %v2265 = vadd.f32 %v2152, 0.0
        %v2266 = vadd.f32 %v2153, 0.0
        %v2267 = vadd.f32 %v2154, 0.0
        %v2268 = vadd.f32 %v2155, 0.0
        %v2269 = vadd.f32 %v2156, 0.0
        %v2270 = vadd.f32 %v2157, 0.0
        %v2271 = vadd.f32 %v2158, 0.0
        %v2272 = vadd.f32 %v2159, 0.0
        %v2273 = vadd.f32 %v2160, 0.0
        %v2274 = vadd.f32 %v2161, 0.0
        %v2275 = vadd.f32 %v2162, 0.0
        %v2276 = vadd.f32 %v2163, 0.0
        %v2277 = vadd.f32 %v2164, 0.0
        %v2278 = vadd.f32 %v2165, 0.0
        %v2279 = vadd.f32 %v2166, 0.0
        %v2280 = vadd.f32 %v2167, 0.0
        %v2281 = vadd.f32 %v2168, 0.0
        %v2282 = vadd.f32 %v2169, 0.0
        %v2283 = vadd.f32 %v2170, 0.0
        %v2284 = vadd.f32 %v2171, 0.0
        %v2285 = vadd.f32 %v2172, 0.0
        %v2286 = vadd.f32 %v2173, 0.0
        %v2287 = vadd.f32 %v2174, 0.0
        %v2288 = vadd.f32 %v2175, 0.0
        %v2289 = vadd.f32 %v2176, 0.0
        %v2290 = vadd.f32 %v2177, 0.0
        %v2291 = vadd.f32 %v2178, 0.0
        %v2292 = vadd.f32 %v2179, 0.0
        %v2293 = vadd.f32 %v2180, 0.0
        %v2294 = vadd.f32 %v2181, 0.0
        %v2295 = vadd.f32 %v2182, 0.0
        %v2296 = vadd.f32 %v2183, 0.0
        %v2297 = vadd.f32 %v2184, 0.0
        %v2298 = vadd.f32 %v2185, 0.0
        %v2299 = vadd.f32 %v2186, 0.0
        %v2300 = vadd.f32 %v2187, 0.0
        %v2301 = vadd.f32 %v2188, 0.0
        %v2302 = vadd.f32 %v2189, 0.0
        %v2303 = vadd.f32 %v2190, 0.0
        %v2304 = vadd.f32 %v2191, 0.0
        %v2305 = vadd.f32 %v2192, 0.0
        %v2306 = vadd.f32 %v2193, 0.0
        %v2307 = vadd.f32 %v2194, 0.0
        %v2308 = vadd.f32 %v2195, 0.0
        %v2309 = vadd.f32 %v2196, 0.0
        %v2310 = vadd.f32 %v2197, 0.0
        %v2311 = vadd.f32 %v2198, 0.0
        %v2312 = vadd.f32 %v2199, 0.0
        %v2313 = vadd.f32 %v2200, 0.0
        %v2314 = vadd.f32 %v2201, 0.0
        %v2315 = vadd.f32 %v2202, 0.0
        %v2316 = vadd.f32 %v2203, 0.0
        %v2317 = vadd.f32 %v2204, 0.0
        %v2318 = vadd.f32 %v2205, 0.0
        %v2319 = vadd.f32 %v2206, 0.0
        %v2320 = vadd.f32 %v2207, 0.0
        %v2321 = vadd.f32 %v2208, 0.0
        %v2322 = vadd.f32 %v2209, 0.0
        %v2323 = vadd.f32 %v2210, 0.0
        %v2324 = vadd.f32 %v2211, 0.0
        %v2325 = vadd.f32 %v2212, 0.0
        %v2326 = vadd.f32 %v2213, 0.0
        %v2327 = vadd.f32 %v2214, 0.0
        %v2328 = vadd.f32 %v2215, 0.0
        %v2329 = vadd.f32 %v2216, 0.0
        %v2330 = vadd.f32 %v2217, 0.0
        %v2331 = vadd.f32 %v2218, 0.0
        %v2332 = vadd.f32 %v2219, 0.0
        %v2333 = vadd.f32 %v2220, 0.0
        %v2334 = vadd.f32 %v2221, 0.0
        %v2335 = vadd.f32 %v2222, 0.0
        %v2336 = vadd.f32 %v2223, 0.0
        %v2337 = vadd.f32 %v2224, 0.0
        %v2338 = vadd.f32 %v2225, 0.0
        %v2339 = vadd.f32 %v2226, 0.0
        %v2340 = vadd.f32 %v2227, 0.0
        %v2341 = vadd.f32 %v2228, 0.0
        %v2342 = vadd.f32 %v2229, 0.0
        %v2343 = vadd.f32 %v2230, 0.0
        %v2344 = vadd.f32 %v2231, 0.0
        %v2345 = vadd.f32 %v2232, 0.0
        %v2346 = vadd.f32 %v2233, 0.0
        %v2347 = vadd.f32 %v2234, 0.0
        %v2348 = vadd.f32 %v2235, 0.0
        %v2349 = vadd.f32 %v2236, 0.0
        %v2350 = vadd.f32 %v2237, 0.0
        %v2351 = vadd.f32 %v2238, 0.0
        %v2352 = vadd.f32 %v2239, 0.0
        %v2353 = vadd.f32 %v2240, 0.0
        %v2354 = vadd.f32 %v2241, 0.0
        %v2355 = vadd.f32 %v2242, 0.0
        %v2356 = vadd.f32 %v2243, 0.0
        %v2357 = vadd.f32 %v2244, 0.0
        %v2358 = vadd.f32 %v2245, 0.0
        %v2359 = vadd.f32 %v2246, 0.0
        %v2360 = vadd.f32 %v2247, 0.0
        %v2361 = vadd.f32 %v2248, 0.0
        %v2362 = vadd.f32 %v2249, 0.0
        %v2363 = vadd.f32 %v2250, 0.0
        %v2364 = vadd.f32 %v2251, 0.0
        %v2365 = vadd.f32 %v2252, 0.0
        %v2366 = vadd.f32 %v2253, 0.0
        %v2367 = vadd.f32 %v2254, 0.0
        %v2368 = vadd.f32 %v2255, 0.0
        %v2369 = vadd.f32 %v2256, 0.0
        %s2370 = scalar_lea.vmem %s5, 1
        %v2371 = vld [vmem:[%s2370] sm:$0x1]
        %2373 = vset.pattern.permute.xlu0 0
        %2374 = vperm.xlu0 %2373, %v1422
        %v2375 = vpop.permute.xlu0 %2374
        %2378 = vset.pattern.permute.xlu0 0
        %2379 = vperm.xlu0 %2378, %v1438
        %v2380 = vpop.permute.xlu0 %2379
        %2383 = vset.pattern.permute.xlu0 0
        %2384 = vperm.xlu0 %2383, %v1454
        %v2385 = vpop.permute.xlu0 %2384
        %2388 = vset.pattern.permute.xlu0 0
        %2389 = vperm.xlu0 %2388, %v1470
        %v2390 = vpop.permute.xlu0 %2389
        %2393 = vset.pattern.permute.xlu0 0
        %2394 = vperm.xlu0 %2393, %v1486
        %v2395 = vpop.permute.xlu0 %2394
        %2398 = vset.pattern.permute.xlu0 0
        %2399 = vperm.xlu0 %2398, %v1502
        %v2400 = vpop.permute.xlu0 %2399
        %2403 = vset.pattern.permute.xlu0 0
        %2404 = vperm.xlu0 %2403, %v1518
        %v2405 = vpop.permute.xlu0 %2404
        %v2408 = vlaneseq
        %v2409 = vshrl.u32 %v2408, 7
        %v2410 = vsub.s32 0, %v2409
        %v2411 = vrot.slane %v2371, %v2410
        %v2413 = vmul.f32 %v1576, %v2411
        %v2414 = vmul.f32 %v1586, %v2411
        %v2415 = vmul.f32 %v1591, %v2411
        %v2416 = vmul.f32 %v1596, %v2411
        %v2417 = vmul.f32 %v1601, %v2411
        %v2418 = vmul.f32 %v1606, %v2411
        %v2419 = vmul.f32 %v1611, %v2411
        %v2420 = vmul.f32 %v1616, %v2411
        %v2421 = vmul.f32 %v1621, %v2411
        %v2422 = vmul.f32 %v1626, %v2411
        %v2423 = vmul.f32 %v1631, %v2411
        %v2424 = vmul.f32 %v1636, %v2411
        %v2425 = vmul.f32 %v1641, %v2411
        %v2426 = vmul.f32 %v1646, %v2411
        %v2427 = vmul.f32 %v1651, %v2411
        %v2428 = vmul.f32 %v1656, %v2411
        %v2429 = vmul.f32 %v2375, %v2411
        %v2430 = vmul.f32 %v1666, %v2411
        %v2431 = vmul.f32 %v1671, %v2411
        %v2432 = vmul.f32 %v1676, %v2411
        %v2433 = vmul.f32 %v1681, %v2411
        %v2434 = vmul.f32 %v1686, %v2411
        %v2435 = vmul.f32 %v1691, %v2411
        %v2436 = vmul.f32 %v1696, %v2411
        %v2437 = vmul.f32 %v1701, %v2411
        %v2438 = vmul.f32 %v1706, %v2411
        %v2439 = vmul.f32 %v1711, %v2411
        %v2440 = vmul.f32 %v1716, %v2411
        %v2441 = vmul.f32 %v1721, %v2411
        %v2442 = vmul.f32 %v1726, %v2411
        %v2443 = vmul.f32 %v1731, %v2411
        %v2444 = vmul.f32 %v1736, %v2411
        %v2445 = vmul.f32 %v2380, %v2411
        %v2446 = vmul.f32 %v1746, %v2411
        %v2447 = vmul.f32 %v1751, %v2411
        %v2448 = vmul.f32 %v1756, %v2411
        %v2449 = vmul.f32 %v1761, %v2411
        %v2450 = vmul.f32 %v1766, %v2411
        %v2451 = vmul.f32 %v1771, %v2411
        %v2452 = vmul.f32 %v1776, %v2411
        %v2453 = vmul.f32 %v1781, %v2411
        %v2454 = vmul.f32 %v1786, %v2411
        %v2455 = vmul.f32 %v1791, %v2411
        %v2456 = vmul.f32 %v1796, %v2411
        %v2457 = vmul.f32 %v1801, %v2411
        %v2458 = vmul.f32 %v1806, %v2411
        %v2459 = vmul.f32 %v1811, %v2411
        %v2460 = vmul.f32 %v1816, %v2411
        %v2461 = vmul.f32 %v2385, %v2411
        %v2462 = vmul.f32 %v1826, %v2411
        %v2463 = vmul.f32 %v1831, %v2411
        %v2464 = vmul.f32 %v1836, %v2411
        %v2465 = vmul.f32 %v1841, %v2411
        %v2466 = vmul.f32 %v1846, %v2411
        %v2467 = vmul.f32 %v1851, %v2411
        %v2468 = vmul.f32 %v1856, %v2411
        %v2469 = vmul.f32 %v1861, %v2411
        %v2470 = vmul.f32 %v1866, %v2411
        %v2471 = vmul.f32 %v1871, %v2411
        %v2472 = vmul.f32 %v1876, %v2411
        %v2473 = vmul.f32 %v1881, %v2411
        %v2474 = vmul.f32 %v1886, %v2411
        %v2475 = vmul.f32 %v1891, %v2411
        %v2476 = vmul.f32 %v1896, %v2411
        %v2477 = vmul.f32 %v2390, %v2411
        %v2478 = vmul.f32 %v1906, %v2411
        %v2479 = vmul.f32 %v1911, %v2411
        %v2480 = vmul.f32 %v1916, %v2411
        %v2481 = vmul.f32 %v1921, %v2411
        %v2482 = vmul.f32 %v1926, %v2411
        %v2483 = vmul.f32 %v1931, %v2411
        %v2484 = vmul.f32 %v1936, %v2411
        %v2485 = vmul.f32 %v1941, %v2411
        %v2486 = vmul.f32 %v1946, %v2411
        %v2487 = vmul.f32 %v1951, %v2411
        %v2488 = vmul.f32 %v1956, %v2411
        %v2489 = vmul.f32 %v1961, %v2411
        %v2490 = vmul.f32 %v1966, %v2411
        %v2491 = vmul.f32 %v1971, %v2411
        %v2492 = vmul.f32 %v1976, %v2411
        %v2493 = vmul.f32 %v2395, %v2411
        %v2494 = vmul.f32 %v1986, %v2411
        %v2495 = vmul.f32 %v1991, %v2411
        %v2496 = vmul.f32 %v1996, %v2411
        %v2497 = vmul.f32 %v2001, %v2411
        %v2498 = vmul.f32 %v2006, %v2411
        %v2499 = vmul.f32 %v2011, %v2411
        %v2500 = vmul.f32 %v2016, %v2411
        %v2501 = vmul.f32 %v2021, %v2411
        %v2502 = vmul.f32 %v2026, %v2411
        %v2503 = vmul.f32 %v2031, %v2411
        %v2504 = vmul.f32 %v2036, %v2411
        %v2505 = vmul.f32 %v2041, %v2411
        %v2506 = vmul.f32 %v2046, %v2411
        %v2507 = vmul.f32 %v2051, %v2411
        %v2508 = vmul.f32 %v2056, %v2411
        %v2509 = vmul.f32 %v2400, %v2411
        %v2510 = vmul.f32 %v2066, %v2411
        %v2511 = vmul.f32 %v2071, %v2411
        %v2512 = vmul.f32 %v2076, %v2411
        %v2513 = vmul.f32 %v2081, %v2411
        %v2514 = vmul.f32 %v2086, %v2411
        %v2515 = vmul.f32 %v2091, %v2411
        %v2516 = vmul.f32 %v2096, %v2411
        %v2517 = vmul.f32 %v2101, %v2411
        %v2518 = vmul.f32 %v2106, %v2411
        %v2519 = vmul.f32 %v2111, %v2411
        %v2520 = vmul.f32 %v2116, %v2411
        %v2521 = vmul.f32 %v2121, %v2411
        %v2522 = vmul.f32 %v2126, %v2411
        %v2523 = vmul.f32 %v2131, %v2411
        %v2524 = vmul.f32 %v2136, %v2411
        %v2525 = vmul.f32 %v2405, %v2411
        %v2526 = vadd.f32 %v2257, %v2413
        %v2527 = vadd.f32 %v2258, %v2414
        %v2528 = vadd.f32 %v2259, %v2415
        %v2529 = vadd.f32 %v2260, %v2416
        %v2530 = vadd.f32 %v2261, %v2417
        %v2531 = vadd.f32 %v2262, %v2418
        %v2532 = vadd.f32 %v2263, %v2419
        %v2533 = vadd.f32 %v2264, %v2420
        %v2534 = vadd.f32 %v2265, %v2421
        %v2535 = vadd.f32 %v2266, %v2422
        %v2536 = vadd.f32 %v2267, %v2423
        %v2537 = vadd.f32 %v2268, %v2424
        %v2538 = vadd.f32 %v2269, %v2425
        %v2539 = vadd.f32 %v2270, %v2426
        %v2540 = vadd.f32 %v2271, %v2427
        %v2541 = vadd.f32 %v2272, %v2428
        %v2542 = vadd.f32 %v2273, %v2429
        %v2543 = vadd.f32 %v2274, %v2430
        %v2544 = vadd.f32 %v2275, %v2431
        %v2545 = vadd.f32 %v2276, %v2432
        %v2546 = vadd.f32 %v2277, %v2433
        %v2547 = vadd.f32 %v2278, %v2434
        %v2548 = vadd.f32 %v2279, %v2435
        %v2549 = vadd.f32 %v2280, %v2436
        %v2550 = vadd.f32 %v2281, %v2437
        %v2551 = vadd.f32 %v2282, %v2438
        %v2552 = vadd.f32 %v2283, %v2439
        %v2553 = vadd.f32 %v2284, %v2440
        %v2554 = vadd.f32 %v2285, %v2441
        %v2555 = vadd.f32 %v2286, %v2442
        %v2556 = vadd.f32 %v2287, %v2443
        %v2557 = vadd.f32 %v2288, %v2444
        %v2558 = vadd.f32 %v2289, %v2445
        %v2559 = vadd.f32 %v2290, %v2446
        %v2560 = vadd.f32 %v2291, %v2447
        %v2561 = vadd.f32 %v2292, %v2448
        %v2562 = vadd.f32 %v2293, %v2449
        %v2563 = vadd.f32 %v2294, %v2450
        %v2564 = vadd.f32 %v2295, %v2451
        %v2565 = vadd.f32 %v2296, %v2452
        %v2566 = vadd.f32 %v2297, %v2453
        %v2567 = vadd.f32 %v2298, %v2454
        %v2568 = vadd.f32 %v2299, %v2455
        %v2569 = vadd.f32 %v2300, %v2456
        %v2570 = vadd.f32 %v2301, %v2457
        %v2571 = vadd.f32 %v2302, %v2458
        %v2572 = vadd.f32 %v2303, %v2459
        %v2573 = vadd.f32 %v2304, %v2460
        %v2574 = vadd.f32 %v2305, %v2461
        %v2575 = vadd.f32 %v2306, %v2462
        %v2576 = vadd.f32 %v2307, %v2463
        %v2577 = vadd.f32 %v2308, %v2464
        %v2578 = vadd.f32 %v2309, %v2465
        %v2579 = vadd.f32 %v2310, %v2466
        %v2580 = vadd.f32 %v2311, %v2467
        %v2581 = vadd.f32 %v2312, %v2468
        %v2582 = vadd.f32 %v2313, %v2469
        %v2583 = vadd.f32 %v2314, %v2470
        %v2584 = vadd.f32 %v2315, %v2471
        %v2585 = vadd.f32 %v2316, %v2472
        %v2586 = vadd.f32 %v2317, %v2473
        %v2587 = vadd.f32 %v2318, %v2474
        %v2588 = vadd.f32 %v2319, %v2475
        %v2589 = vadd.f32 %v2320, %v2476
        %v2590 = vadd.f32 %v2321, %v2477
        %v2591 = vadd.f32 %v2322, %v2478
        %v2592 = vadd.f32 %v2323, %v2479
        %v2593 = vadd.f32 %v2324, %v2480
        %v2594 = vadd.f32 %v2325, %v2481
        %v2595 = vadd.f32 %v2326, %v2482
        %v2596 = vadd.f32 %v2327, %v2483
        %v2597 = vadd.f32 %v2328, %v2484
        %v2598 = vadd.f32 %v2329, %v2485
        %v2599 = vadd.f32 %v2330, %v2486
        %v2600 = vadd.f32 %v2331, %v2487
        %v2601 = vadd.f32 %v2332, %v2488
        %v2602 = vadd.f32 %v2333, %v2489
        %v2603 = vadd.f32 %v2334, %v2490
        %v2604 = vadd.f32 %v2335, %v2491
        %v2605 = vadd.f32 %v2336, %v2492
        %v2606 = vadd.f32 %v2337, %v2493
        %v2607 = vadd.f32 %v2338, %v2494
        %v2608 = vadd.f32 %v2339, %v2495
        %v2609 = vadd.f32 %v2340, %v2496
        %v2610 = vadd.f32 %v2341, %v2497
        %v2611 = vadd.f32 %v2342, %v2498
        %v2612 = vadd.f32 %v2343, %v2499
        %v2613 = vadd.f32 %v2344, %v2500
        %v2614 = vadd.f32 %v2345, %v2501
        %v2615 = vadd.f32 %v2346, %v2502
        %v2616 = vadd.f32 %v2347, %v2503
        %v2617 = vadd.f32 %v2348, %v2504
        %v2618 = vadd.f32 %v2349, %v2505
        %v2619 = vadd.f32 %v2350, %v2506
        %v2620 = vadd.f32 %v2351, %v2507
        %v2621 = vadd.f32 %v2352, %v2508
        %v2622 = vadd.f32 %v2353, %v2509
        %v2623 = vadd.f32 %v2354, %v2510
        %v2624 = vadd.f32 %v2355, %v2511
        %v2625 = vadd.f32 %v2356, %v2512
        %v2626 = vadd.f32 %v2357, %v2513
        %v2627 = vadd.f32 %v2358, %v2514
        %v2628 = vadd.f32 %v2359, %v2515
        %v2629 = vadd.f32 %v2360, %v2516
        %v2630 = vadd.f32 %v2361, %v2517
        %v2631 = vadd.f32 %v2362, %v2518
        %v2632 = vadd.f32 %v2363, %v2519
        %v2633 = vadd.f32 %v2364, %v2520
        %v2634 = vadd.f32 %v2365, %v2521
        %v2635 = vadd.f32 %v2366, %v2522
        %v2636 = vadd.f32 %v2367, %v2523
        %v2637 = vadd.f32 %v2368, %v2524
        %v2638 = vadd.f32 %v2369, %v2525
        %s2639 = scalar_lea.vmem %s5, 2
        %v2640 = vld [vmem:[%s2639] sm:$0x1]
        %2642 = vset.pattern.permute.xlu0 0
        %2643 = vperm.xlu0 %2642, %v1564
        %v2644 = vpop.permute.xlu0 %2643
        %2647 = vset.pattern.permute.xlu0 0
        %2648 = vperm.xlu0 %2647, %v1565
        %v2649 = vpop.permute.xlu0 %2648
        %2652 = vset.pattern.permute.xlu0 0
        %2653 = vperm.xlu0 %2652, %v1566
        %v2654 = vpop.permute.xlu0 %2653
        %2657 = vset.pattern.permute.xlu0 0
        %2658 = vperm.xlu0 %2657, %v1567
        %v2659 = vpop.permute.xlu0 %2658
        %2662 = vset.pattern.permute.xlu0 0
        %2663 = vperm.xlu0 %2662, %v1568
        %v2664 = vpop.permute.xlu0 %2663
        %2667 = vset.pattern.permute.xlu0 0
        %2668 = vperm.xlu0 %2667, %v1569
        %v2669 = vpop.permute.xlu0 %2668
        %2672 = vset.pattern.permute.xlu0 0
        %2673 = vperm.xlu0 %2672, %v1570
        %v2674 = vpop.permute.xlu0 %2673
        %v2677 = vlaneseq
        %v2678 = vshrl.u32 %v2677, 7
        %v2679 = vsub.s32 0, %v2678
        %v2680 = vrot.slane %v2640, %v2679
        %v2682 = vmul.f32 %v1576, %v2680
        %v2683 = vmul.f32 %v1591, %v2680
        %v2684 = vmul.f32 %v1596, %v2680
        %v2685 = vmul.f32 %v1601, %v2680
        %v2686 = vmul.f32 %v1606, %v2680
        %v2687 = vmul.f32 %v1611, %v2680
        %v2688 = vmul.f32 %v1616, %v2680
        %v2689 = vmul.f32 %v1621, %v2680
        %v2690 = vmul.f32 %v1626, %v2680
        %v2691 = vmul.f32 %v1631, %v2680
        %v2692 = vmul.f32 %v1636, %v2680
        %v2693 = vmul.f32 %v1641, %v2680
        %v2694 = vmul.f32 %v1646, %v2680
        %v2695 = vmul.f32 %v1651, %v2680
        %v2696 = vmul.f32 %v1656, %v2680
        %v2697 = vmul.f32 %v2375, %v2680
        %v2698 = vmul.f32 %v2644, %v2680
        %v2699 = vmul.f32 %v1671, %v2680
        %v2700 = vmul.f32 %v1676, %v2680
        %v2701 = vmul.f32 %v1681, %v2680
        %v2702 = vmul.f32 %v1686, %v2680
        %v2703 = vmul.f32 %v1691, %v2680
        %v2704 = vmul.f32 %v1696, %v2680
        %v2705 = vmul.f32 %v1701, %v2680
        %v2706 = vmul.f32 %v1706, %v2680
        %v2707 = vmul.f32 %v1711, %v2680
        %v2708 = vmul.f32 %v1716, %v2680
        %v2709 = vmul.f32 %v1721, %v2680
        %v2710 = vmul.f32 %v1726, %v2680
        %v2711 = vmul.f32 %v1731, %v2680
        %v2712 = vmul.f32 %v1736, %v2680
        %v2713 = vmul.f32 %v2380, %v2680
        %v2714 = vmul.f32 %v2649, %v2680
        %v2715 = vmul.f32 %v1751, %v2680
        %v2716 = vmul.f32 %v1756, %v2680
        %v2717 = vmul.f32 %v1761, %v2680
        %v2718 = vmul.f32 %v1766, %v2680
        %v2719 = vmul.f32 %v1771, %v2680
        %v2720 = vmul.f32 %v1776, %v2680
        %v2721 = vmul.f32 %v1781, %v2680
        %v2722 = vmul.f32 %v1786, %v2680
        %v2723 = vmul.f32 %v1791, %v2680
        %v2724 = vmul.f32 %v1796, %v2680
        %v2725 = vmul.f32 %v1801, %v2680
        %v2726 = vmul.f32 %v1806, %v2680
        %v2727 = vmul.f32 %v1811, %v2680
        %v2728 = vmul.f32 %v1816, %v2680
        %v2729 = vmul.f32 %v2385, %v2680
        %v2730 = vmul.f32 %v2654, %v2680
        %v2731 = vmul.f32 %v1831, %v2680
        %v2732 = vmul.f32 %v1836, %v2680
        %v2733 = vmul.f32 %v1841, %v2680
        %v2734 = vmul.f32 %v1846, %v2680
        %v2735 = vmul.f32 %v1851, %v2680
        %v2736 = vmul.f32 %v1856, %v2680
        %v2737 = vmul.f32 %v1861, %v2680
        %v2738 = vmul.f32 %v1866, %v2680
        %v2739 = vmul.f32 %v1871, %v2680
        %v2740 = vmul.f32 %v1876, %v2680
        %v2741 = vmul.f32 %v1881, %v2680
        %v2742 = vmul.f32 %v1886, %v2680
        %v2743 = vmul.f32 %v1891, %v2680
        %v2744 = vmul.f32 %v1896, %v2680
        %v2745 = vmul.f32 %v2390, %v2680
        %v2746 = vmul.f32 %v2659, %v2680
        %v2747 = vmul.f32 %v1911, %v2680
        %v2748 = vmul.f32 %v1916, %v2680
        %v2749 = vmul.f32 %v1921, %v2680
        %v2750 = vmul.f32 %v1926, %v2680
        %v2751 = vmul.f32 %v1931, %v2680
        %v2752 = vmul.f32 %v1936, %v2680
        %v2753 = vmul.f32 %v1941, %v2680
        %v2754 = vmul.f32 %v1946, %v2680
        %v2755 = vmul.f32 %v1951, %v2680
        %v2756 = vmul.f32 %v1956, %v2680
        %v2757 = vmul.f32 %v1961, %v2680
        %v2758 = vmul.f32 %v1966, %v2680
        %v2759 = vmul.f32 %v1971, %v2680
        %v2760 = vmul.f32 %v1976, %v2680
        %v2761 = vmul.f32 %v2395, %v2680
        %v2762 = vmul.f32 %v2664, %v2680
        %v2763 = vmul.f32 %v1991, %v2680
        %v2764 = vmul.f32 %v1996, %v2680
        %v2765 = vmul.f32 %v2001, %v2680
        %v2766 = vmul.f32 %v2006, %v2680
        %v2767 = vmul.f32 %v2011, %v2680
        %v2768 = vmul.f32 %v2016, %v2680
        %v2769 = vmul.f32 %v2021, %v2680
        %v2770 = vmul.f32 %v2026, %v2680
        %v2771 = vmul.f32 %v2031, %v2680
        %v2772 = vmul.f32 %v2036, %v2680
        %v2773 = vmul.f32 %v2041, %v2680
        %v2774 = vmul.f32 %v2046, %v2680
        %v2775 = vmul.f32 %v2051, %v2680
        %v2776 = vmul.f32 %v2056, %v2680
        %v2777 = vmul.f32 %v2400, %v2680
        %v2778 = vmul.f32 %v2669, %v2680
        %v2779 = vmul.f32 %v2071, %v2680
        %v2780 = vmul.f32 %v2076, %v2680
        %v2781 = vmul.f32 %v2081, %v2680
        %v2782 = vmul.f32 %v2086, %v2680
        %v2783 = vmul.f32 %v2091, %v2680
        %v2784 = vmul.f32 %v2096, %v2680
        %v2785 = vmul.f32 %v2101, %v2680
        %v2786 = vmul.f32 %v2106, %v2680
        %v2787 = vmul.f32 %v2111, %v2680
        %v2788 = vmul.f32 %v2116, %v2680
        %v2789 = vmul.f32 %v2121, %v2680
        %v2790 = vmul.f32 %v2126, %v2680
        %v2791 = vmul.f32 %v2131, %v2680
        %v2792 = vmul.f32 %v2136, %v2680
        %v2793 = vmul.f32 %v2405, %v2680
        %v2794 = vmul.f32 %v2674, %v2680
        %v2795 = vadd.f32 %v2526, %v2682
        %v2796 = vadd.f32 %v2527, %v2683
        %v2797 = vadd.f32 %v2528, %v2684
        %v2798 = vadd.f32 %v2529, %v2685
        %v2799 = vadd.f32 %v2530, %v2686
        %v2800 = vadd.f32 %v2531, %v2687
        %v2801 = vadd.f32 %v2532, %v2688
        %v2802 = vadd.f32 %v2533, %v2689
        %v2803 = vadd.f32 %v2534, %v2690
        %v2804 = vadd.f32 %v2535, %v2691
        %v2805 = vadd.f32 %v2536, %v2692
        %v2806 = vadd.f32 %v2537, %v2693
        %v2807 = vadd.f32 %v2538, %v2694
        %v2808 = vadd.f32 %v2539, %v2695
        %v2809 = vadd.f32 %v2540, %v2696
        %v2810 = vadd.f32 %v2541, %v2697
        %v2811 = vadd.f32 %v2542, %v2698
        %v2812 = vadd.f32 %v2543, %v2699
        %v2813 = vadd.f32 %v2544, %v2700
        %v2814 = vadd.f32 %v2545, %v2701
        %v2815 = vadd.f32 %v2546, %v2702
        %v2816 = vadd.f32 %v2547, %v2703
        %v2817 = vadd.f32 %v2548, %v2704
        %v2818 = vadd.f32 %v2549, %v2705
        %v2819 = vadd.f32 %v2550, %v2706
        %v2820 = vadd.f32 %v2551, %v2707
        %v2821 = vadd.f32 %v2552, %v2708
        %v2822 = vadd.f32 %v2553, %v2709
        %v2823 = vadd.f32 %v2554, %v2710
        %v2824 = vadd.f32 %v2555, %v2711
        %v2825 = vadd.f32 %v2556, %v2712
        %v2826 = vadd.f32 %v2557, %v2713
        %v2827 = vadd.f32 %v2558, %v2714
        %v2828 = vadd.f32 %v2559, %v2715
        %v2829 = vadd.f32 %v2560, %v2716
        %v2830 = vadd.f32 %v2561, %v2717
        %v2831 = vadd.f32 %v2562, %v2718
        %v2832 = vadd.f32 %v2563, %v2719
        %v2833 = vadd.f32 %v2564, %v2720
        %v2834 = vadd.f32 %v2565, %v2721
        %v2835 = vadd.f32 %v2566, %v2722
        %v2836 = vadd.f32 %v2567, %v2723
        %v2837 = vadd.f32 %v2568, %v2724
        %v2838 = vadd.f32 %v2569, %v2725
        %v2839 = vadd.f32 %v2570, %v2726
        %v2840 = vadd.f32 %v2571, %v2727
        %v2841 = vadd.f32 %v2572, %v2728
        %v2842 = vadd.f32 %v2573, %v2729
        %v2843 = vadd.f32 %v2574, %v2730
        %v2844 = vadd.f32 %v2575, %v2731
        %v2845 = vadd.f32 %v2576, %v2732
        %v2846 = vadd.f32 %v2577, %v2733
        %v2847 = vadd.f32 %v2578, %v2734
        %v2848 = vadd.f32 %v2579, %v2735
        %v2849 = vadd.f32 %v2580, %v2736
        %v2850 = vadd.f32 %v2581, %v2737
        %v2851 = vadd.f32 %v2582, %v2738
        %v2852 = vadd.f32 %v2583, %v2739
        %v2853 = vadd.f32 %v2584, %v2740
        %v2854 = vadd.f32 %v2585, %v2741
        %v2855 = vadd.f32 %v2586, %v2742
        %v2856 = vadd.f32 %v2587, %v2743
        %v2857 = vadd.f32 %v2588, %v2744
        %v2858 = vadd.f32 %v2589, %v2745
        %v2859 = vadd.f32 %v2590, %v2746
        %v2860 = vadd.f32 %v2591, %v2747
        %v2861 = vadd.f32 %v2592, %v2748
        %v2862 = vadd.f32 %v2593, %v2749
        %v2863 = vadd.f32 %v2594, %v2750
        %v2864 = vadd.f32 %v2595, %v2751
        %v2865 = vadd.f32 %v2596, %v2752
        %v2866 = vadd.f32 %v2597, %v2753
        %v2867 = vadd.f32 %v2598, %v2754
        %v2868 = vadd.f32 %v2599, %v2755
        %v2869 = vadd.f32 %v2600, %v2756
        %v2870 = vadd.f32 %v2601, %v2757
        %v2871 = vadd.f32 %v2602, %v2758
        %v2872 = vadd.f32 %v2603, %v2759
        %v2873 = vadd.f32 %v2604, %v2760
        %v2874 = vadd.f32 %v2605, %v2761
        %v2875 = vadd.f32 %v2606, %v2762
        %v2876 = vadd.f32 %v2607, %v2763
        %v2877 = vadd.f32 %v2608, %v2764
        %v2878 = vadd.f32 %v2609, %v2765
        %v2879 = vadd.f32 %v2610, %v2766
        %v2880 = vadd.f32 %v2611, %v2767
        %v2881 = vadd.f32 %v2612, %v2768
        %v2882 = vadd.f32 %v2613, %v2769
        %v2883 = vadd.f32 %v2614, %v2770
        %v2884 = vadd.f32 %v2615, %v2771
        %v2885 = vadd.f32 %v2616, %v2772
        %v2886 = vadd.f32 %v2617, %v2773
        %v2887 = vadd.f32 %v2618, %v2774
        %v2888 = vadd.f32 %v2619, %v2775
        %v2889 = vadd.f32 %v2620, %v2776
        %v2890 = vadd.f32 %v2621, %v2777
        %v2891 = vadd.f32 %v2622, %v2778
        %v2892 = vadd.f32 %v2623, %v2779
        %v2893 = vadd.f32 %v2624, %v2780
        %v2894 = vadd.f32 %v2625, %v2781
        %v2895 = vadd.f32 %v2626, %v2782
        %v2896 = vadd.f32 %v2627, %v2783
        %v2897 = vadd.f32 %v2628, %v2784
        %v2898 = vadd.f32 %v2629, %v2785
        %v2899 = vadd.f32 %v2630, %v2786
        %v2900 = vadd.f32 %v2631, %v2787
        %v2901 = vadd.f32 %v2632, %v2788
        %v2902 = vadd.f32 %v2633, %v2789
        %v2903 = vadd.f32 %v2634, %v2790
        %v2904 = vadd.f32 %v2635, %v2791
        %v2905 = vadd.f32 %v2636, %v2792
        %v2906 = vadd.f32 %v2637, %v2793
        %v2907 = vadd.f32 %v2638, %v2794
        %s2908 = scalar_lea.vmem %s5, 3
        %v2909 = vld [vmem:[%s2908] sm:$0x1]
        %2911 = vset.pattern.permute.xlu0 0
        %2912 = vperm.xlu0 %2911, %v1150
        %v2913 = vpop.permute.xlu0 %2912
        %2916 = vset.pattern.permute.xlu0 0
        %2917 = vperm.xlu0 %2916, %v1519
        %v2918 = vpop.permute.xlu0 %2917
        %2921 = vset.pattern.permute.xlu0 0
        %2922 = vperm.xlu0 %2921, %v1520
        %v2923 = vpop.permute.xlu0 %2922
        %2926 = vset.pattern.permute.xlu0 0
        %2927 = vperm.xlu0 %2926, %v1521
        %v2928 = vpop.permute.xlu0 %2927
        %2931 = vset.pattern.permute.xlu0 0
        %2932 = vperm.xlu0 %2931, %v1522
        %v2933 = vpop.permute.xlu0 %2932
        %2936 = vset.pattern.permute.xlu0 0
        %2937 = vperm.xlu0 %2936, %v1523
        %v2938 = vpop.permute.xlu0 %2937
        %2941 = vset.pattern.permute.xlu0 0
        %2942 = vperm.xlu0 %2941, %v1524
        %v2943 = vpop.permute.xlu0 %2942
        %2946 = vset.pattern.permute.xlu0 0
        %2947 = vperm.xlu0 %2946, %v1525
        %v2948 = vpop.permute.xlu0 %2947
        %2951 = vset.pattern.permute.xlu0 0
        %2952 = vperm.xlu0 %2951, %v1526
        %v2953 = vpop.permute.xlu0 %2952
        %2956 = vset.pattern.permute.xlu0 0
        %2957 = vperm.xlu0 %2956, %v1527
        %v2958 = vpop.permute.xlu0 %2957
        %2961 = vset.pattern.permute.xlu0 0
        %2962 = vperm.xlu0 %2961, %v1528
        %v2963 = vpop.permute.xlu0 %2962
        %2966 = vset.pattern.permute.xlu0 0
        %2967 = vperm.xlu0 %2966, %v1529
        %v2968 = vpop.permute.xlu0 %2967
        %2971 = vset.pattern.permute.xlu0 0
        %2972 = vperm.xlu0 %2971, %v1530
        %v2973 = vpop.permute.xlu0 %2972
        %2976 = vset.pattern.permute.xlu0 0
        %2977 = vperm.xlu0 %2976, %v1531
        %v2978 = vpop.permute.xlu0 %2977
        %2981 = vset.pattern.permute.xlu0 0
        %2982 = vperm.xlu0 %2981, %v1532
        %v2983 = vpop.permute.xlu0 %2982
        %2986 = vset.pattern.permute.xlu0 0
        %2987 = vperm.xlu0 %2986, %v1533
        %v2988 = vpop.permute.xlu0 %2987
        %v2991 = vlaneseq
        %v2992 = vshrl.u32 %v2991, 7
        %v2993 = vsub.s32 0, %v2992
        %v2994 = vrot.slane %v2909, %v2993
        %v2996 = vmul.f32 %v1581, %v2994
        %v2997 = vmul.f32 %v1586, %v2994
        %v2998 = vmul.f32 %v1591, %v2994
        %v2999 = vmul.f32 %v1596, %v2994
        %v3000 = vmul.f32 %v1601, %v2994
        %v3001 = vmul.f32 %v1606, %v2994
        %v3002 = vmul.f32 %v1611, %v2994
        %v3003 = vmul.f32 %v1616, %v2994
        %v3004 = vmul.f32 %v1621, %v2994
        %v3005 = vmul.f32 %v1626, %v2994
        %v3006 = vmul.f32 %v1631, %v2994
        %v3007 = vmul.f32 %v1636, %v2994
        %v3008 = vmul.f32 %v1641, %v2994
        %v3009 = vmul.f32 %v1646, %v2994
        %v3010 = vmul.f32 %v1651, %v2994
        %v3011 = vmul.f32 %v1656, %v2994
        %v3012 = vmul.f32 %v1661, %v2994
        %v3013 = vmul.f32 %v1666, %v2994
        %v3014 = vmul.f32 %v1671, %v2994
        %v3015 = vmul.f32 %v1676, %v2994
        %v3016 = vmul.f32 %v1681, %v2994
        %v3017 = vmul.f32 %v1686, %v2994
        %v3018 = vmul.f32 %v1691, %v2994
        %v3019 = vmul.f32 %v1696, %v2994
        %v3020 = vmul.f32 %v1701, %v2994
        %v3021 = vmul.f32 %v1706, %v2994
        %v3022 = vmul.f32 %v1711, %v2994
        %v3023 = vmul.f32 %v1716, %v2994
        %v3024 = vmul.f32 %v1721, %v2994
        %v3025 = vmul.f32 %v1726, %v2994
        %v3026 = vmul.f32 %v1731, %v2994
        %v3027 = vmul.f32 %v1736, %v2994
        %v3028 = vmul.f32 %v1741, %v2994
        %v3029 = vmul.f32 %v1746, %v2994
        %v3030 = vmul.f32 %v1751, %v2994
        %v3031 = vmul.f32 %v1756, %v2994
        %v3032 = vmul.f32 %v1761, %v2994
        %v3033 = vmul.f32 %v1766, %v2994
        %v3034 = vmul.f32 %v1771, %v2994
        %v3035 = vmul.f32 %v1776, %v2994
        %v3036 = vmul.f32 %v1781, %v2994
        %v3037 = vmul.f32 %v1786, %v2994
        %v3038 = vmul.f32 %v1791, %v2994
        %v3039 = vmul.f32 %v1796, %v2994
        %v3040 = vmul.f32 %v1801, %v2994
        %v3041 = vmul.f32 %v1806, %v2994
        %v3042 = vmul.f32 %v1811, %v2994
        %v3043 = vmul.f32 %v1816, %v2994
        %v3044 = vmul.f32 %v1821, %v2994
        %v3045 = vmul.f32 %v1826, %v2994
        %v3046 = vmul.f32 %v1831, %v2994
        %v3047 = vmul.f32 %v1836, %v2994
        %v3048 = vmul.f32 %v1841, %v2994
        %v3049 = vmul.f32 %v1846, %v2994
        %v3050 = vmul.f32 %v1851, %v2994
        %v3051 = vmul.f32 %v1856, %v2994
        %v3052 = vmul.f32 %v1861, %v2994
        %v3053 = vmul.f32 %v1866, %v2994
        %v3054 = vmul.f32 %v1871, %v2994
        %v3055 = vmul.f32 %v1876, %v2994
        %v3056 = vmul.f32 %v1881, %v2994
        %v3057 = vmul.f32 %v1886, %v2994
        %v3058 = vmul.f32 %v1891, %v2994
        %v3059 = vmul.f32 %v1896, %v2994
        %v3060 = vmul.f32 %v1901, %v2994
        %v3061 = vmul.f32 %v1906, %v2994
        %v3062 = vmul.f32 %v1911, %v2994
        %v3063 = vmul.f32 %v1916, %v2994
        %v3064 = vmul.f32 %v1921, %v2994
        %v3065 = vmul.f32 %v1926, %v2994
        %v3066 = vmul.f32 %v1931, %v2994
        %v3067 = vmul.f32 %v1936, %v2994
        %v3068 = vmul.f32 %v1941, %v2994
        %v3069 = vmul.f32 %v1946, %v2994
        %v3070 = vmul.f32 %v1951, %v2994
        %v3071 = vmul.f32 %v1956, %v2994
        %v3072 = vmul.f32 %v1961, %v2994
        %v3073 = vmul.f32 %v1966, %v2994
        %v3074 = vmul.f32 %v1971, %v2994
        %v3075 = vmul.f32 %v1976, %v2994
        %v3076 = vmul.f32 %v1981, %v2994
        %v3077 = vmul.f32 %v1986, %v2994
        %v3078 = vmul.f32 %v1991, %v2994
        %v3079 = vmul.f32 %v1996, %v2994
        %v3080 = vmul.f32 %v2001, %v2994
        %v3081 = vmul.f32 %v2006, %v2994
        %v3082 = vmul.f32 %v2011, %v2994
        %v3083 = vmul.f32 %v2016, %v2994
        %v3084 = vmul.f32 %v2021, %v2994
        %v3085 = vmul.f32 %v2026, %v2994
        %v3086 = vmul.f32 %v2031, %v2994
        %v3087 = vmul.f32 %v2036, %v2994
        %v3088 = vmul.f32 %v2041, %v2994
        %v3089 = vmul.f32 %v2046, %v2994
        %v3090 = vmul.f32 %v2051, %v2994
        %v3091 = vmul.f32 %v2056, %v2994
        %v3092 = vmul.f32 %v2061, %v2994
        %v3093 = vmul.f32 %v2066, %v2994
        %v3094 = vmul.f32 %v2071, %v2994
        %v3095 = vmul.f32 %v2076, %v2994
        %v3096 = vmul.f32 %v2081, %v2994
        %v3097 = vmul.f32 %v2086, %v2994
        %v3098 = vmul.f32 %v2091, %v2994
        %v3099 = vmul.f32 %v2096, %v2994
        %v3100 = vmul.f32 %v2101, %v2994
        %v3101 = vmul.f32 %v2106, %v2994
        %v3102 = vmul.f32 %v2111, %v2994
        %v3103 = vmul.f32 %v2116, %v2994
        %v3104 = vmul.f32 %v2121, %v2994
        %v3105 = vmul.f32 %v2126, %v2994
        %v3106 = vmul.f32 %v2131, %v2994
        %v3107 = vmul.f32 %v2136, %v2994
        %v3108 = vmul.f32 %v2913, %v2994
        %v3109 = vmul.f32 %v2918, %v2994
        %v3110 = vmul.f32 %v2923, %v2994
        %v3111 = vmul.f32 %v2928, %v2994
        %v3112 = vmul.f32 %v2933, %v2994
        %v3113 = vmul.f32 %v2938, %v2994
        %v3114 = vmul.f32 %v2943, %v2994
        %v3115 = vmul.f32 %v2948, %v2994
        %v3116 = vmul.f32 %v2953, %v2994
        %v3117 = vmul.f32 %v2958, %v2994
        %v3118 = vmul.f32 %v2963, %v2994
        %v3119 = vmul.f32 %v2968, %v2994
        %v3120 = vmul.f32 %v2973, %v2994
        %v3121 = vmul.f32 %v2978, %v2994
        %v3122 = vmul.f32 %v2983, %v2994
        %v3123 = vmul.f32 %v2988, %v2994
        %v3124 = vadd.f32 %v2795, %v2996
        %v3125 = vadd.f32 %v2795, %v2997
        %v3126 = vadd.f32 %v2795, %v2998
        %v3127 = vadd.f32 %v2795, %v2999
        %v3128 = vadd.f32 %v2795, %v3000
        %v3129 = vadd.f32 %v2795, %v3001
        %v3130 = vadd.f32 %v2795, %v3002
        %v3131 = vadd.f32 %v2795, %v3003
        %v3132 = vadd.f32 %v2795, %v3004
        %v3133 = vadd.f32 %v2795, %v3005
        %v3134 = vadd.f32 %v2795, %v3006
        %v3135 = vadd.f32 %v2795, %v3007
        %v3136 = vadd.f32 %v2795, %v3008
        %v3137 = vadd.f32 %v2795, %v3009
        %v3138 = vadd.f32 %v2795, %v3010
        %v3139 = vadd.f32 %v2795, %v3011
        %v3140 = vadd.f32 %v2796, %v3012
        %v3141 = vadd.f32 %v2797, %v3013
        %v3142 = vadd.f32 %v2798, %v3014
        %v3143 = vadd.f32 %v2799, %v3015
        %v3144 = vadd.f32 %v2800, %v3016
        %v3145 = vadd.f32 %v2801, %v3017
        %v3146 = vadd.f32 %v2802, %v3018
        %v3147 = vadd.f32 %v2803, %v3019
        %v3148 = vadd.f32 %v2804, %v3020
        %v3149 = vadd.f32 %v2805, %v3021
        %v3150 = vadd.f32 %v2806, %v3022
        %v3151 = vadd.f32 %v2807, %v3023
        %v3152 = vadd.f32 %v2808, %v3024
        %v3153 = vadd.f32 %v2809, %v3025
        %v3154 = vadd.f32 %v2810, %v3026
        %v3155 = vadd.f32 %v2811, %v3027
        %v3156 = vadd.f32 %v2812, %v3028
        %v3157 = vadd.f32 %v2813, %v3029
        %v3158 = vadd.f32 %v2814, %v3030
        %v3159 = vadd.f32 %v2815, %v3031
        %v3160 = vadd.f32 %v2816, %v3032
        %v3161 = vadd.f32 %v2817, %v3033
        %v3162 = vadd.f32 %v2818, %v3034
        %v3163 = vadd.f32 %v2819, %v3035
        %v3164 = vadd.f32 %v2820, %v3036
        %v3165 = vadd.f32 %v2821, %v3037
        %v3166 = vadd.f32 %v2822, %v3038
        %v3167 = vadd.f32 %v2823, %v3039
        %v3168 = vadd.f32 %v2824, %v3040
        %v3169 = vadd.f32 %v2825, %v3041
        %v3170 = vadd.f32 %v2826, %v3042
        %v3171 = vadd.f32 %v2827, %v3043
        %v3172 = vadd.f32 %v2828, %v3044
        %v3173 = vadd.f32 %v2829, %v3045
        %v3174 = vadd.f32 %v2830, %v3046
        %v3175 = vadd.f32 %v2831, %v3047
        %v3176 = vadd.f32 %v2832, %v3048
        %v3177 = vadd.f32 %v2833, %v3049
        %v3178 = vadd.f32 %v2834, %v3050
        %v3179 = vadd.f32 %v2835, %v3051
        %v3180 = vadd.f32 %v2836, %v3052
        %v3181 = vadd.f32 %v2837, %v3053
        %v3182 = vadd.f32 %v2838, %v3054
        %v3183 = vadd.f32 %v2839, %v3055
        %v3184 = vadd.f32 %v2840, %v3056
        %v3185 = vadd.f32 %v2841, %v3057
        %v3186 = vadd.f32 %v2842, %v3058
        %v3187 = vadd.f32 %v2843, %v3059
        %v3188 = vadd.f32 %v2844, %v3060
        %v3189 = vadd.f32 %v2845, %v3061
        %v3190 = vadd.f32 %v2846, %v3062
        %v3191 = vadd.f32 %v2847, %v3063
        %v3192 = vadd.f32 %v2848, %v3064
        %v3193 = vadd.f32 %v2849, %v3065
        %v3194 = vadd.f32 %v2850, %v3066
        %v3195 = vadd.f32 %v2851, %v3067
        %v3196 = vadd.f32 %v2852, %v3068
        %v3197 = vadd.f32 %v2853, %v3069
        %v3198 = vadd.f32 %v2854, %v3070
        %v3199 = vadd.f32 %v2855, %v3071
        %v3200 = vadd.f32 %v2856, %v3072
        %v3201 = vadd.f32 %v2857, %v3073
        %v3202 = vadd.f32 %v2858, %v3074
        %v3203 = vadd.f32 %v2859, %v3075
        %v3204 = vadd.f32 %v2860, %v3076
        %v3205 = vadd.f32 %v2861, %v3077
        %v3206 = vadd.f32 %v2862, %v3078
        %v3207 = vadd.f32 %v2863, %v3079
        %v3208 = vadd.f32 %v2864, %v3080
        %v3209 = vadd.f32 %v2865, %v3081
        %v3210 = vadd.f32 %v2866, %v3082
        %v3211 = vadd.f32 %v2867, %v3083
        %v3212 = vadd.f32 %v2868, %v3084
        %v3213 = vadd.f32 %v2869, %v3085
        %v3214 = vadd.f32 %v2870, %v3086
        %v3215 = vadd.f32 %v2871, %v3087
        %v3216 = vadd.f32 %v2872, %v3088
        %v3217 = vadd.f32 %v2873, %v3089
        %v3218 = vadd.f32 %v2874, %v3090
        %v3219 = vadd.f32 %v2875, %v3091
        %v3220 = vadd.f32 %v2876, %v3092
        %v3221 = vadd.f32 %v2877, %v3093
        %v3222 = vadd.f32 %v2878, %v3094
        %v3223 = vadd.f32 %v2879, %v3095
        %v3224 = vadd.f32 %v2880, %v3096
        %v3225 = vadd.f32 %v2881, %v3097
        %v3226 = vadd.f32 %v2882, %v3098
        %v3227 = vadd.f32 %v2883, %v3099
        %v3228 = vadd.f32 %v2884, %v3100
        %v3229 = vadd.f32 %v2885, %v3101
        %v3230 = vadd.f32 %v2886, %v3102
        %v3231 = vadd.f32 %v2887, %v3103
        %v3232 = vadd.f32 %v2888, %v3104
        %v3233 = vadd.f32 %v2889, %v3105
        %v3234 = vadd.f32 %v2890, %v3106
        %v3235 = vadd.f32 %v2891, %v3107
        %v3236 = vadd.f32 %v2892, %v3108
        %v3237 = vadd.f32 %v2893, %v3109
        %v3238 = vadd.f32 %v2894, %v3110
        %v3239 = vadd.f32 %v2895, %v3111
        %v3240 = vadd.f32 %v2896, %v3112
        %v3241 = vadd.f32 %v2897, %v3113
        %v3242 = vadd.f32 %v2898, %v3114
        %v3243 = vadd.f32 %v2899, %v3115
        %v3244 = vadd.f32 %v2900, %v3116
        %v3245 = vadd.f32 %v2901, %v3117
        %v3246 = vadd.f32 %v2902, %v3118
        %v3247 = vadd.f32 %v2903, %v3119
        %v3248 = vadd.f32 %v2904, %v3120
        %v3249 = vadd.f32 %v2905, %v3121
        %v3250 = vadd.f32 %v2906, %v3122
        %v3251 = vadd.f32 %v2907, %v3123
        %s3252 = scalar_lea.vmem %s5, 4
        %v3253 = vld [vmem:[%s3252] sm:$0x1]
        %3255 = vset.pattern.permute.xlu0 0
        %3256 = vperm.xlu0 %3255, %v1534
        %v3257 = vpop.permute.xlu0 %3256
        %v3260 = vlaneseq
        %v3261 = vshrl.u32 %v3260, 7
        %v3262 = vsub.s32 0, %v3261
        %v3263 = vrot.slane %v3253, %v3262
        %v3265 = vmul.f32 %v1586, %v3263
        %v3266 = vmul.f32 %v1591, %v3263
        %v3267 = vmul.f32 %v1596, %v3263
        %v3268 = vmul.f32 %v1601, %v3263
        %v3269 = vmul.f32 %v1606, %v3263
        %v3270 = vmul.f32 %v1611, %v3263
        %v3271 = vmul.f32 %v1616, %v3263
        %v3272 = vmul.f32 %v1621, %v3263
        %v3273 = vmul.f32 %v1626, %v3263
        %v3274 = vmul.f32 %v1631, %v3263
        %v3275 = vmul.f32 %v1636, %v3263
        %v3276 = vmul.f32 %v1641, %v3263
        %v3277 = vmul.f32 %v1646, %v3263
        %v3278 = vmul.f32 %v1651, %v3263
        %v3279 = vmul.f32 %v1656, %v3263
        %v3280 = vmul.f32 %v2375, %v3263
        %v3281 = vmul.f32 %v1666, %v3263
        %v3282 = vmul.f32 %v1671, %v3263
        %v3283 = vmul.f32 %v1676, %v3263
        %v3284 = vmul.f32 %v1681, %v3263
        %v3285 = vmul.f32 %v1686, %v3263
        %v3286 = vmul.f32 %v1691, %v3263
        %v3287 = vmul.f32 %v1696, %v3263
        %v3288 = vmul.f32 %v1701, %v3263
        %v3289 = vmul.f32 %v1706, %v3263
        %v3290 = vmul.f32 %v1711, %v3263
        %v3291 = vmul.f32 %v1716, %v3263
        %v3292 = vmul.f32 %v1721, %v3263
        %v3293 = vmul.f32 %v1726, %v3263
        %v3294 = vmul.f32 %v1731, %v3263
        %v3295 = vmul.f32 %v1736, %v3263
        %v3296 = vmul.f32 %v2380, %v3263
        %v3297 = vmul.f32 %v1746, %v3263
        %v3298 = vmul.f32 %v1751, %v3263
        %v3299 = vmul.f32 %v1756, %v3263
        %v3300 = vmul.f32 %v1761, %v3263
        %v3301 = vmul.f32 %v1766, %v3263
        %v3302 = vmul.f32 %v1771, %v3263
        %v3303 = vmul.f32 %v1776, %v3263
        %v3304 = vmul.f32 %v1781, %v3263
        %v3305 = vmul.f32 %v1786, %v3263
        %v3306 = vmul.f32 %v1791, %v3263
        %v3307 = vmul.f32 %v1796, %v3263
        %v3308 = vmul.f32 %v1801, %v3263
        %v3309 = vmul.f32 %v1806, %v3263
        %v3310 = vmul.f32 %v1811, %v3263
        %v3311 = vmul.f32 %v1816, %v3263
        %v3312 = vmul.f32 %v2385, %v3263
        %v3313 = vmul.f32 %v1826, %v3263
        %v3314 = vmul.f32 %v1831, %v3263
        %v3315 = vmul.f32 %v1836, %v3263
        %v3316 = vmul.f32 %v1841, %v3263
        %v3317 = vmul.f32 %v1846, %v3263
        %v3318 = vmul.f32 %v1851, %v3263
        %v3319 = vmul.f32 %v1856, %v3263
        %v3320 = vmul.f32 %v1861, %v3263
        %v3321 = vmul.f32 %v1866, %v3263
        %v3322 = vmul.f32 %v1871, %v3263
        %v3323 = vmul.f32 %v1876, %v3263
        %v3324 = vmul.f32 %v1881, %v3263
        %v3325 = vmul.f32 %v1886, %v3263
        %v3326 = vmul.f32 %v1891, %v3263
        %v3327 = vmul.f32 %v1896, %v3263
        %v3328 = vmul.f32 %v2390, %v3263
        %v3329 = vmul.f32 %v1906, %v3263
        %v3330 = vmul.f32 %v1911, %v3263
        %v3331 = vmul.f32 %v1916, %v3263
        %v3332 = vmul.f32 %v1921, %v3263
        %v3333 = vmul.f32 %v1926, %v3263
        %v3334 = vmul.f32 %v1931, %v3263
        %v3335 = vmul.f32 %v1936, %v3263
        %v3336 = vmul.f32 %v1941, %v3263
        %v3337 = vmul.f32 %v1946, %v3263
        %v3338 = vmul.f32 %v1951, %v3263
        %v3339 = vmul.f32 %v1956, %v3263
        %v3340 = vmul.f32 %v1961, %v3263
        %v3341 = vmul.f32 %v1966, %v3263
        %v3342 = vmul.f32 %v1971, %v3263
        %v3343 = vmul.f32 %v1976, %v3263
        %v3344 = vmul.f32 %v2395, %v3263
        %v3345 = vmul.f32 %v1986, %v3263
        %v3346 = vmul.f32 %v1991, %v3263
        %v3347 = vmul.f32 %v1996, %v3263
        %v3348 = vmul.f32 %v2001, %v3263
        %v3349 = vmul.f32 %v2006, %v3263
        %v3350 = vmul.f32 %v2011, %v3263
        %v3351 = vmul.f32 %v2016, %v3263
        %v3352 = vmul.f32 %v2021, %v3263
        %v3353 = vmul.f32 %v2026, %v3263
        %v3354 = vmul.f32 %v2031, %v3263
        %v3355 = vmul.f32 %v2036, %v3263
        %v3356 = vmul.f32 %v2041, %v3263
        %v3357 = vmul.f32 %v2046, %v3263
        %v3358 = vmul.f32 %v2051, %v3263
        %v3359 = vmul.f32 %v2056, %v3263
        %v3360 = vmul.f32 %v2400, %v3263
        %v3361 = vmul.f32 %v2066, %v3263
        %v3362 = vmul.f32 %v2071, %v3263
        %v3363 = vmul.f32 %v2076, %v3263
        %v3364 = vmul.f32 %v2081, %v3263
        %v3365 = vmul.f32 %v2086, %v3263
        %v3366 = vmul.f32 %v2091, %v3263
        %v3367 = vmul.f32 %v2096, %v3263
        %v3368 = vmul.f32 %v2101, %v3263
        %v3369 = vmul.f32 %v2106, %v3263
        %v3370 = vmul.f32 %v2111, %v3263
        %v3371 = vmul.f32 %v2116, %v3263
        %v3372 = vmul.f32 %v2121, %v3263
        %v3373 = vmul.f32 %v2126, %v3263
        %v3374 = vmul.f32 %v2131, %v3263
        %v3375 = vmul.f32 %v2136, %v3263
        %v3376 = vmul.f32 %v2405, %v3263
        %v3377 = vmul.f32 %v2918, %v3263
        %v3378 = vmul.f32 %v2923, %v3263
        %v3379 = vmul.f32 %v2928, %v3263
        %v3380 = vmul.f32 %v2933, %v3263
        %v3381 = vmul.f32 %v2938, %v3263
        %v3382 = vmul.f32 %v2943, %v3263
        %v3383 = vmul.f32 %v2948, %v3263
        %v3384 = vmul.f32 %v2953, %v3263
        %v3385 = vmul.f32 %v2958, %v3263
        %v3386 = vmul.f32 %v2963, %v3263
        %v3387 = vmul.f32 %v2968, %v3263
        %v3388 = vmul.f32 %v2973, %v3263
        %v3389 = vmul.f32 %v2978, %v3263
        %v3390 = vmul.f32 %v2983, %v3263
        %v3391 = vmul.f32 %v2988, %v3263
        %v3392 = vmul.f32 %v3257, %v3263
        %v3393 = vadd.f32 %v3124, %v3265
        %v3394 = vadd.f32 %v3125, %v3266
        %v3395 = vadd.f32 %v3126, %v3267
        %v3396 = vadd.f32 %v3127, %v3268
        %v3397 = vadd.f32 %v3128, %v3269
        %v3398 = vadd.f32 %v3129, %v3270
        %v3399 = vadd.f32 %v3130, %v3271
        %v3400 = vadd.f32 %v3131, %v3272
        %v3401 = vadd.f32 %v3132, %v3273
        %v3402 = vadd.f32 %v3133, %v3274
        %v3403 = vadd.f32 %v3134, %v3275
        %v3404 = vadd.f32 %v3135, %v3276
        %v3405 = vadd.f32 %v3136, %v3277
        %v3406 = vadd.f32 %v3137, %v3278
        %v3407 = vadd.f32 %v3138, %v3279
        %v3408 = vadd.f32 %v3139, %v3280
        %v3409 = vadd.f32 %v3140, %v3281
        %v3410 = vadd.f32 %v3141, %v3282
        %v3411 = vadd.f32 %v3142, %v3283
        %v3412 = vadd.f32 %v3143, %v3284
        %v3413 = vadd.f32 %v3144, %v3285
        %v3414 = vadd.f32 %v3145, %v3286
        %v3415 = vadd.f32 %v3146, %v3287
        %v3416 = vadd.f32 %v3147, %v3288
        %v3417 = vadd.f32 %v3148, %v3289
        %v3418 = vadd.f32 %v3149, %v3290
        %v3419 = vadd.f32 %v3150, %v3291
        %v3420 = vadd.f32 %v3151, %v3292
        %v3421 = vadd.f32 %v3152, %v3293
        %v3422 = vadd.f32 %v3153, %v3294
        %v3423 = vadd.f32 %v3154, %v3295
        %v3424 = vadd.f32 %v3155, %v3296
        %v3425 = vadd.f32 %v3156, %v3297
        %v3426 = vadd.f32 %v3157, %v3298
        %v3427 = vadd.f32 %v3158, %v3299
        %v3428 = vadd.f32 %v3159, %v3300
        %v3429 = vadd.f32 %v3160, %v3301
        %v3430 = vadd.f32 %v3161, %v3302
        %v3431 = vadd.f32 %v3162, %v3303
        %v3432 = vadd.f32 %v3163, %v3304
        %v3433 = vadd.f32 %v3164, %v3305
        %v3434 = vadd.f32 %v3165, %v3306
        %v3435 = vadd.f32 %v3166, %v3307
        %v3436 = vadd.f32 %v3167, %v3308
        %v3437 = vadd.f32 %v3168, %v3309
        %v3438 = vadd.f32 %v3169, %v3310
        %v3439 = vadd.f32 %v3170, %v3311
        %v3440 = vadd.f32 %v3171, %v3312
        %v3441 = vadd.f32 %v3172, %v3313
        %v3442 = vadd.f32 %v3173, %v3314
        %v3443 = vadd.f32 %v3174, %v3315
        %v3444 = vadd.f32 %v3175, %v3316
        %v3445 = vadd.f32 %v3176, %v3317
        %v3446 = vadd.f32 %v3177, %v3318
        %v3447 = vadd.f32 %v3178, %v3319
        %v3448 = vadd.f32 %v3179, %v3320
        %v3449 = vadd.f32 %v3180, %v3321
        %v3450 = vadd.f32 %v3181, %v3322
        %v3451 = vadd.f32 %v3182, %v3323
        %v3452 = vadd.f32 %v3183, %v3324
        %v3453 = vadd.f32 %v3184, %v3325
        %v3454 = vadd.f32 %v3185, %v3326
        %v3455 = vadd.f32 %v3186, %v3327
        %v3456 = vadd.f32 %v3187, %v3328
        %v3457 = vadd.f32 %v3188, %v3329
        %v3458 = vadd.f32 %v3189, %v3330
        %v3459 = vadd.f32 %v3190, %v3331
        %v3460 = vadd.f32 %v3191, %v3332
        %v3461 = vadd.f32 %v3192, %v3333
        %v3462 = vadd.f32 %v3193, %v3334
        %v3463 = vadd.f32 %v3194, %v3335
        %v3464 = vadd.f32 %v3195, %v3336
        %v3465 = vadd.f32 %v3196, %v3337
        %v3466 = vadd.f32 %v3197, %v3338
        %v3467 = vadd.f32 %v3198, %v3339
        %v3468 = vadd.f32 %v3199, %v3340
        %v3469 = vadd.f32 %v3200, %v3341
        %v3470 = vadd.f32 %v3201, %v3342
        %v3471 = vadd.f32 %v3202, %v3343
        %v3472 = vadd.f32 %v3203, %v3344
        %v3473 = vadd.f32 %v3204, %v3345
        %v3474 = vadd.f32 %v3205, %v3346
        %v3475 = vadd.f32 %v3206, %v3347
        %v3476 = vadd.f32 %v3207, %v3348
        %v3477 = vadd.f32 %v3208, %v3349
        %v3478 = vadd.f32 %v3209, %v3350
        %v3479 = vadd.f32 %v3210, %v3351
        %v3480 = vadd.f32 %v3211, %v3352
        %v3481 = vadd.f32 %v3212, %v3353
        %v3482 = vadd.f32 %v3213, %v3354
        %v3483 = vadd.f32 %v3214, %v3355
        %v3484 = vadd.f32 %v3215, %v3356
        %v3485 = vadd.f32 %v3216, %v3357
        %v3486 = vadd.f32 %v3217, %v3358
        %v3487 = vadd.f32 %v3218, %v3359
        %v3488 = vadd.f32 %v3219, %v3360
        %v3489 = vadd.f32 %v3220, %v3361
        %v3490 = vadd.f32 %v3221, %v3362
        %v3491 = vadd.f32 %v3222, %v3363
        %v3492 = vadd.f32 %v3223, %v3364
        %v3493 = vadd.f32 %v3224, %v3365
        %v3494 = vadd.f32 %v3225, %v3366
        %v3495 = vadd.f32 %v3226, %v3367
        %v3496 = vadd.f32 %v3227, %v3368
        %v3497 = vadd.f32 %v3228, %v3369
        %v3498 = vadd.f32 %v3229, %v3370
        %v3499 = vadd.f32 %v3230, %v3371
        %v3500 = vadd.f32 %v3231, %v3372
        %v3501 = vadd.f32 %v3232, %v3373
        %v3502 = vadd.f32 %v3233, %v3374
        %v3503 = vadd.f32 %v3234, %v3375
        %v3504 = vadd.f32 %v3235, %v3376
        %v3505 = vadd.f32 %v3236, %v3377
        %v3506 = vadd.f32 %v3237, %v3378
        %v3507 = vadd.f32 %v3238, %v3379
        %v3508 = vadd.f32 %v3239, %v3380
        %v3509 = vadd.f32 %v3240, %v3381
        %v3510 = vadd.f32 %v3241, %v3382
        %v3511 = vadd.f32 %v3242, %v3383
        %v3512 = vadd.f32 %v3243, %v3384
        %v3513 = vadd.f32 %v3244, %v3385
        %v3514 = vadd.f32 %v3245, %v3386
        %v3515 = vadd.f32 %v3246, %v3387
        %v3516 = vadd.f32 %v3247, %v3388
        %v3517 = vadd.f32 %v3248, %v3389
        %v3518 = vadd.f32 %v3249, %v3390
        %v3519 = vadd.f32 %v3250, %v3391
        %v3520 = vadd.f32 %v3251, %v3392
        %s3521 = scalar_lea.vmem %s5, 5
        %v3522 = vld [vmem:[%s3521] sm:$0x1]
        %3524 = vset.pattern.permute.xlu0 0
        %3525 = vperm.xlu0 %3524, %v1571
        %v3526 = vpop.permute.xlu0 %3525
        %v3529 = vlaneseq
        %v3530 = vshrl.u32 %v3529, 7
        %v3531 = vsub.s32 0, %v3530
        %v3532 = vrot.slane %v3522, %v3531
        %v3534 = vmul.f32 %v1591, %v3532
        %v3535 = vmul.f32 %v1596, %v3532
        %v3536 = vmul.f32 %v1601, %v3532
        %v3537 = vmul.f32 %v1606, %v3532
        %v3538 = vmul.f32 %v1611, %v3532
        %v3539 = vmul.f32 %v1616, %v3532
        %v3540 = vmul.f32 %v1621, %v3532
        %v3541 = vmul.f32 %v1626, %v3532
        %v3542 = vmul.f32 %v1631, %v3532
        %v3543 = vmul.f32 %v1636, %v3532
        %v3544 = vmul.f32 %v1641, %v3532
        %v3545 = vmul.f32 %v1646, %v3532
        %v3546 = vmul.f32 %v1651, %v3532
        %v3547 = vmul.f32 %v1656, %v3532
        %v3548 = vmul.f32 %v2375, %v3532
        %v3549 = vmul.f32 %v2644, %v3532
        %v3550 = vmul.f32 %v1671, %v3532
        %v3551 = vmul.f32 %v1676, %v3532
        %v3552 = vmul.f32 %v1681, %v3532
        %v3553 = vmul.f32 %v1686, %v3532
        %v3554 = vmul.f32 %v1691, %v3532
        %v3555 = vmul.f32 %v1696, %v3532
        %v3556 = vmul.f32 %v1701, %v3532
        %v3557 = vmul.f32 %v1706, %v3532
        %v3558 = vmul.f32 %v1711, %v3532
        %v3559 = vmul.f32 %v1716, %v3532
        %v3560 = vmul.f32 %v1721, %v3532
        %v3561 = vmul.f32 %v1726, %v3532
        %v3562 = vmul.f32 %v1731, %v3532
        %v3563 = vmul.f32 %v1736, %v3532
        %v3564 = vmul.f32 %v2380, %v3532
        %v3565 = vmul.f32 %v2649, %v3532
        %v3566 = vmul.f32 %v1751, %v3532
        %v3567 = vmul.f32 %v1756, %v3532
        %v3568 = vmul.f32 %v1761, %v3532
        %v3569 = vmul.f32 %v1766, %v3532
        %v3570 = vmul.f32 %v1771, %v3532
        %v3571 = vmul.f32 %v1776, %v3532
        %v3572 = vmul.f32 %v1781, %v3532
        %v3573 = vmul.f32 %v1786, %v3532
        %v3574 = vmul.f32 %v1791, %v3532
        %v3575 = vmul.f32 %v1796, %v3532
        %v3576 = vmul.f32 %v1801, %v3532
        %v3577 = vmul.f32 %v1806, %v3532
        %v3578 = vmul.f32 %v1811, %v3532
        %v3579 = vmul.f32 %v1816, %v3532
        %v3580 = vmul.f32 %v2385, %v3532
        %v3581 = vmul.f32 %v2654, %v3532
        %v3582 = vmul.f32 %v1831, %v3532
        %v3583 = vmul.f32 %v1836, %v3532
        %v3584 = vmul.f32 %v1841, %v3532
        %v3585 = vmul.f32 %v1846, %v3532
        %v3586 = vmul.f32 %v1851, %v3532
        %v3587 = vmul.f32 %v1856, %v3532
        %v3588 = vmul.f32 %v1861, %v3532
        %v3589 = vmul.f32 %v1866, %v3532
        %v3590 = vmul.f32 %v1871, %v3532
        %v3591 = vmul.f32 %v1876, %v3532
        %v3592 = vmul.f32 %v1881, %v3532
        %v3593 = vmul.f32 %v1886, %v3532
        %v3594 = vmul.f32 %v1891, %v3532
        %v3595 = vmul.f32 %v1896, %v3532
        %v3596 = vmul.f32 %v2390, %v3532
        %v3597 = vmul.f32 %v2659, %v3532
        %v3598 = vmul.f32 %v1911, %v3532
        %v3599 = vmul.f32 %v1916, %v3532
        %v3600 = vmul.f32 %v1921, %v3532
        %v3601 = vmul.f32 %v1926, %v3532
        %v3602 = vmul.f32 %v1931, %v3532
        %v3603 = vmul.f32 %v1936, %v3532
        %v3604 = vmul.f32 %v1941, %v3532
        %v3605 = vmul.f32 %v1946, %v3532
        %v3606 = vmul.f32 %v1951, %v3532
        %v3607 = vmul.f32 %v1956, %v3532
        %v3608 = vmul.f32 %v1961, %v3532
        %v3609 = vmul.f32 %v1966, %v3532
        %v3610 = vmul.f32 %v1971, %v3532
        %v3611 = vmul.f32 %v1976, %v3532
        %v3612 = vmul.f32 %v2395, %v3532
        %v3613 = vmul.f32 %v2664, %v3532
        %v3614 = vmul.f32 %v1991, %v3532
        %v3615 = vmul.f32 %v1996, %v3532
        %v3616 = vmul.f32 %v2001, %v3532
        %v3617 = vmul.f32 %v2006, %v3532
        %v3618 = vmul.f32 %v2011, %v3532
        %v3619 = vmul.f32 %v2016, %v3532
        %v3620 = vmul.f32 %v2021, %v3532
        %v3621 = vmul.f32 %v2026, %v3532
        %v3622 = vmul.f32 %v2031, %v3532
        %v3623 = vmul.f32 %v2036, %v3532
        %v3624 = vmul.f32 %v2041, %v3532
        %v3625 = vmul.f32 %v2046, %v3532
        %v3626 = vmul.f32 %v2051, %v3532
        %v3627 = vmul.f32 %v2056, %v3532
        %v3628 = vmul.f32 %v2400, %v3532
        %v3629 = vmul.f32 %v2669, %v3532
        %v3630 = vmul.f32 %v2071, %v3532
        %v3631 = vmul.f32 %v2076, %v3532
        %v3632 = vmul.f32 %v2081, %v3532
        %v3633 = vmul.f32 %v2086, %v3532
        %v3634 = vmul.f32 %v2091, %v3532
        %v3635 = vmul.f32 %v2096, %v3532
        %v3636 = vmul.f32 %v2101, %v3532
        %v3637 = vmul.f32 %v2106, %v3532
        %v3638 = vmul.f32 %v2111, %v3532
        %v3639 = vmul.f32 %v2116, %v3532
        %v3640 = vmul.f32 %v2121, %v3532
        %v3641 = vmul.f32 %v2126, %v3532
        %v3642 = vmul.f32 %v2131, %v3532
        %v3643 = vmul.f32 %v2136, %v3532
        %v3644 = vmul.f32 %v2405, %v3532
        %v3645 = vmul.f32 %v2674, %v3532
        %v3646 = vmul.f32 %v2923, %v3532
        %v3647 = vmul.f32 %v2928, %v3532
        %v3648 = vmul.f32 %v2933, %v3532
        %v3649 = vmul.f32 %v2938, %v3532
        %v3650 = vmul.f32 %v2943, %v3532
        %v3651 = vmul.f32 %v2948, %v3532
        %v3652 = vmul.f32 %v2953, %v3532
        %v3653 = vmul.f32 %v2958, %v3532
        %v3654 = vmul.f32 %v2963, %v3532
        %v3655 = vmul.f32 %v2968, %v3532
        %v3656 = vmul.f32 %v2973, %v3532
        %v3657 = vmul.f32 %v2978, %v3532
        %v3658 = vmul.f32 %v2983, %v3532
        %v3659 = vmul.f32 %v2988, %v3532
        %v3660 = vmul.f32 %v3257, %v3532
        %v3661 = vmul.f32 %v3526, %v3532
        %v3662 = vadd.f32 %v3393, %v3534
        %v3663 = vadd.f32 %v3394, %v3535
        %v3664 = vadd.f32 %v3395, %v3536
        %v3665 = vadd.f32 %v3396, %v3537
        %v3666 = vadd.f32 %v3397, %v3538
        %v3667 = vadd.f32 %v3398, %v3539
        %v3668 = vadd.f32 %v3399, %v3540
        %v3669 = vadd.f32 %v3400, %v3541
        %v3670 = vadd.f32 %v3401, %v3542
        %v3671 = vadd.f32 %v3402, %v3543
        %v3672 = vadd.f32 %v3403, %v3544
        %v3673 = vadd.f32 %v3404, %v3545
        %v3674 = vadd.f32 %v3405, %v3546
        %v3675 = vadd.f32 %v3406, %v3547
        %v3676 = vadd.f32 %v3407, %v3548
        %v3677 = vadd.f32 %v3408, %v3549
        %v3678 = vadd.f32 %v3409, %v3550
        %v3679 = vadd.f32 %v3410, %v3551
        %v3680 = vadd.f32 %v3411, %v3552
        %v3681 = vadd.f32 %v3412, %v3553
        %v3682 = vadd.f32 %v3413, %v3554
        %v3683 = vadd.f32 %v3414, %v3555
        %v3684 = vadd.f32 %v3415, %v3556
        %v3685 = vadd.f32 %v3416, %v3557
        %v3686 = vadd.f32 %v3417, %v3558
        %v3687 = vadd.f32 %v3418, %v3559
        %v3688 = vadd.f32 %v3419, %v3560
        %v3689 = vadd.f32 %v3420, %v3561
        %v3690 = vadd.f32 %v3421, %v3562
        %v3691 = vadd.f32 %v3422, %v3563
        %v3692 = vadd.f32 %v3423, %v3564
        %v3693 = vadd.f32 %v3424, %v3565
        %v3694 = vadd.f32 %v3425, %v3566
        %v3695 = vadd.f32 %v3426, %v3567
        %v3696 = vadd.f32 %v3427, %v3568
        %v3697 = vadd.f32 %v3428, %v3569
        %v3698 = vadd.f32 %v3429, %v3570
        %v3699 = vadd.f32 %v3430, %v3571
        %v3700 = vadd.f32 %v3431, %v3572
        %v3701 = vadd.f32 %v3432, %v3573
        %v3702 = vadd.f32 %v3433, %v3574
        %v3703 = vadd.f32 %v3434, %v3575
        %v3704 = vadd.f32 %v3435, %v3576
        %v3705 = vadd.f32 %v3436, %v3577
        %v3706 = vadd.f32 %v3437, %v3578
        %v3707 = vadd.f32 %v3438, %v3579
        %v3708 = vadd.f32 %v3439, %v3580
        %v3709 = vadd.f32 %v3440, %v3581
        %v3710 = vadd.f32 %v3441, %v3582
        %v3711 = vadd.f32 %v3442, %v3583
        %v3712 = vadd.f32 %v3443, %v3584
        %v3713 = vadd.f32 %v3444, %v3585
        %v3714 = vadd.f32 %v3445, %v3586
        %v3715 = vadd.f32 %v3446, %v3587
        %v3716 = vadd.f32 %v3447, %v3588
        %v3717 = vadd.f32 %v3448, %v3589
        %v3718 = vadd.f32 %v3449, %v3590
        %v3719 = vadd.f32 %v3450, %v3591
        %v3720 = vadd.f32 %v3451, %v3592
        %v3721 = vadd.f32 %v3452, %v3593
        %v3722 = vadd.f32 %v3453, %v3594
        %v3723 = vadd.f32 %v3454, %v3595
        %v3724 = vadd.f32 %v3455, %v3596
        %v3725 = vadd.f32 %v3456, %v3597
        %v3726 = vadd.f32 %v3457, %v3598
        %v3727 = vadd.f32 %v3458, %v3599
        %v3728 = vadd.f32 %v3459, %v3600
        %v3729 = vadd.f32 %v3460, %v3601
        %v3730 = vadd.f32 %v3461, %v3602
        %v3731 = vadd.f32 %v3462, %v3603
        %v3732 = vadd.f32 %v3463, %v3604
        %v3733 = vadd.f32 %v3464, %v3605
        %v3734 = vadd.f32 %v3465, %v3606
        %v3735 = vadd.f32 %v3466, %v3607
        %v3736 = vadd.f32 %v3467, %v3608
        %v3737 = vadd.f32 %v3468, %v3609
        %v3738 = vadd.f32 %v3469, %v3610
        %v3739 = vadd.f32 %v3470, %v3611
        %v3740 = vadd.f32 %v3471, %v3612
        %v3741 = vadd.f32 %v3472, %v3613
        %v3742 = vadd.f32 %v3473, %v3614
        %v3743 = vadd.f32 %v3474, %v3615
        %v3744 = vadd.f32 %v3475, %v3616
        %v3745 = vadd.f32 %v3476, %v3617
        %v3746 = vadd.f32 %v3477, %v3618
        %v3747 = vadd.f32 %v3478, %v3619
        %v3748 = vadd.f32 %v3479, %v3620
        %v3749 = vadd.f32 %v3480, %v3621
        %v3750 = vadd.f32 %v3481, %v3622
        %v3751 = vadd.f32 %v3482, %v3623
        %v3752 = vadd.f32 %v3483, %v3624
        %v3753 = vadd.f32 %v3484, %v3625
        %v3754 = vadd.f32 %v3485, %v3626
        %v3755 = vadd.f32 %v3486, %v3627
        %v3756 = vadd.f32 %v3487, %v3628
        %v3757 = vadd.f32 %v3488, %v3629
        %v3758 = vadd.f32 %v3489, %v3630
        %v3759 = vadd.f32 %v3490, %v3631
        %v3760 = vadd.f32 %v3491, %v3632
        %v3761 = vadd.f32 %v3492, %v3633
        %v3762 = vadd.f32 %v3493, %v3634
        %v3763 = vadd.f32 %v3494, %v3635
        %v3764 = vadd.f32 %v3495, %v3636
        %v3765 = vadd.f32 %v3496, %v3637
        %v3766 = vadd.f32 %v3497, %v3638
        %v3767 = vadd.f32 %v3498, %v3639
        %v3768 = vadd.f32 %v3499, %v3640
        %v3769 = vadd.f32 %v3500, %v3641
        %v3770 = vadd.f32 %v3501, %v3642
        %v3771 = vadd.f32 %v3502, %v3643
        %v3772 = vadd.f32 %v3503, %v3644
        %v3773 = vadd.f32 %v3504, %v3645
        %v3774 = vadd.f32 %v3505, %v3646
        %v3775 = vadd.f32 %v3506, %v3647
        %v3776 = vadd.f32 %v3507, %v3648
        %v3777 = vadd.f32 %v3508, %v3649
        %v3778 = vadd.f32 %v3509, %v3650
        %v3779 = vadd.f32 %v3510, %v3651
        %v3780 = vadd.f32 %v3511, %v3652
        %v3781 = vadd.f32 %v3512, %v3653
        %v3782 = vadd.f32 %v3513, %v3654
        %v3783 = vadd.f32 %v3514, %v3655
        %v3784 = vadd.f32 %v3515, %v3656
        %v3785 = vadd.f32 %v3516, %v3657
        %v3786 = vadd.f32 %v3517, %v3658
        %v3787 = vadd.f32 %v3518, %v3659
        %v3788 = vadd.f32 %v3519, %v3660
        %v3789 = vadd.f32 %v3520, %v3661
        %s3790 = scalar_lea.vmem %s5, 6
        %v3791 = vld [vmem:[%s3790] sm:$0x1]
        %v3793 = vlaneseq
        %v3794 = vshrl.u32 %v3793, 7
        %v3795 = vsub.s32 0, %v3794
        %v3796 = vrot.slane %v3791, %v3795
        %v3798 = vmul.f32 %v1661, %v3796
        %v3799 = vmul.f32 %v1666, %v3796
        %v3800 = vmul.f32 %v1671, %v3796
        %v3801 = vmul.f32 %v1676, %v3796
        %v3802 = vmul.f32 %v1681, %v3796
        %v3803 = vmul.f32 %v1686, %v3796
        %v3804 = vmul.f32 %v1691, %v3796
        %v3805 = vmul.f32 %v1696, %v3796
        %v3806 = vmul.f32 %v1701, %v3796
        %v3807 = vmul.f32 %v1706, %v3796
        %v3808 = vmul.f32 %v1711, %v3796
        %v3809 = vmul.f32 %v1716, %v3796
        %v3810 = vmul.f32 %v1721, %v3796
        %v3811 = vmul.f32 %v1726, %v3796
        %v3812 = vmul.f32 %v1731, %v3796
        %v3813 = vmul.f32 %v1736, %v3796
        %v3814 = vmul.f32 %v1741, %v3796
        %v3815 = vmul.f32 %v1746, %v3796
        %v3816 = vmul.f32 %v1751, %v3796
        %v3817 = vmul.f32 %v1756, %v3796
        %v3818 = vmul.f32 %v1761, %v3796
        %v3819 = vmul.f32 %v1766, %v3796
        %v3820 = vmul.f32 %v1771, %v3796
        %v3821 = vmul.f32 %v1776, %v3796
        %v3822 = vmul.f32 %v1781, %v3796
        %v3823 = vmul.f32 %v1786, %v3796
        %v3824 = vmul.f32 %v1791, %v3796
        %v3825 = vmul.f32 %v1796, %v3796
        %v3826 = vmul.f32 %v1801, %v3796
        %v3827 = vmul.f32 %v1806, %v3796
        %v3828 = vmul.f32 %v1811, %v3796
        %v3829 = vmul.f32 %v1816, %v3796
        %v3830 = vmul.f32 %v1821, %v3796
        %v3831 = vmul.f32 %v1826, %v3796
        %v3832 = vmul.f32 %v1831, %v3796
        %v3833 = vmul.f32 %v1836, %v3796
        %v3834 = vmul.f32 %v1841, %v3796
        %v3835 = vmul.f32 %v1846, %v3796
        %v3836 = vmul.f32 %v1851, %v3796
        %v3837 = vmul.f32 %v1856, %v3796
        %v3838 = vmul.f32 %v1861, %v3796
        %v3839 = vmul.f32 %v1866, %v3796
        %v3840 = vmul.f32 %v1871, %v3796
        %v3841 = vmul.f32 %v1876, %v3796
        %v3842 = vmul.f32 %v1881, %v3796
        %v3843 = vmul.f32 %v1886, %v3796
        %v3844 = vmul.f32 %v1891, %v3796
        %v3845 = vmul.f32 %v1896, %v3796
        %v3846 = vmul.f32 %v1901, %v3796
        %v3847 = vmul.f32 %v1906, %v3796
        %v3848 = vmul.f32 %v1911, %v3796
        %v3849 = vmul.f32 %v1916, %v3796
        %v3850 = vmul.f32 %v1921, %v3796
        %v3851 = vmul.f32 %v1926, %v3796
        %v3852 = vmul.f32 %v1931, %v3796
        %v3853 = vmul.f32 %v1936, %v3796
        %v3854 = vmul.f32 %v1941, %v3796
        %v3855 = vmul.f32 %v1946, %v3796
        %v3856 = vmul.f32 %v1951, %v3796
        %v3857 = vmul.f32 %v1956, %v3796
        %v3858 = vmul.f32 %v1961, %v3796
        %v3859 = vmul.f32 %v1966, %v3796
        %v3860 = vmul.f32 %v1971, %v3796
        %v3861 = vmul.f32 %v1976, %v3796
        %v3862 = vmul.f32 %v1981, %v3796
        %v3863 = vmul.f32 %v1986, %v3796
        %v3864 = vmul.f32 %v1991, %v3796
        %v3865 = vmul.f32 %v1996, %v3796
        %v3866 = vmul.f32 %v2001, %v3796
        %v3867 = vmul.f32 %v2006, %v3796
        %v3868 = vmul.f32 %v2011, %v3796
        %v3869 = vmul.f32 %v2016, %v3796
        %v3870 = vmul.f32 %v2021, %v3796
        %v3871 = vmul.f32 %v2026, %v3796
        %v3872 = vmul.f32 %v2031, %v3796
        %v3873 = vmul.f32 %v2036, %v3796
        %v3874 = vmul.f32 %v2041, %v3796
        %v3875 = vmul.f32 %v2046, %v3796
        %v3876 = vmul.f32 %v2051, %v3796
        %v3877 = vmul.f32 %v2056, %v3796
        %v3878 = vmul.f32 %v2061, %v3796
        %v3879 = vmul.f32 %v2066, %v3796
        %v3880 = vmul.f32 %v2071, %v3796
        %v3881 = vmul.f32 %v2076, %v3796
        %v3882 = vmul.f32 %v2081, %v3796
        %v3883 = vmul.f32 %v2086, %v3796
        %v3884 = vmul.f32 %v2091, %v3796
        %v3885 = vmul.f32 %v2096, %v3796
        %v3886 = vmul.f32 %v2101, %v3796
        %v3887 = vmul.f32 %v2106, %v3796
        %v3888 = vmul.f32 %v2111, %v3796
        %v3889 = vmul.f32 %v2116, %v3796
        %v3890 = vmul.f32 %v2121, %v3796
        %v3891 = vmul.f32 %v2126, %v3796
        %v3892 = vmul.f32 %v2131, %v3796
        %v3893 = vmul.f32 %v2136, %v3796
        %v3894 = vmul.f32 %v2913, %v3796
        %v3895 = vmul.f32 %v2918, %v3796
        %v3896 = vmul.f32 %v2923, %v3796
        %v3897 = vmul.f32 %v2928, %v3796
        %v3898 = vmul.f32 %v2933, %v3796
        %v3899 = vmul.f32 %v2938, %v3796
        %v3900 = vmul.f32 %v2943, %v3796
        %v3901 = vmul.f32 %v2948, %v3796
        %v3902 = vmul.f32 %v2953, %v3796
        %v3903 = vmul.f32 %v2958, %v3796
        %v3904 = vmul.f32 %v2963, %v3796
        %v3905 = vmul.f32 %v2968, %v3796
        %v3906 = vmul.f32 %v2973, %v3796
        %v3907 = vmul.f32 %v2978, %v3796
        %v3908 = vmul.f32 %v2983, %v3796
        %v3909 = vmul.f32 %v2988, %v3796
        %v3910 = vmul.f32 %v1576, %v3796
        %v3911 = vadd.f32 %v3662, %v3798
        %v3912 = vadd.f32 %v3663, %v3799
        %v3913 = vadd.f32 %v3664, %v3800
        %v3914 = vadd.f32 %v3665, %v3801
        %v3915 = vadd.f32 %v3666, %v3802
        %v3916 = vadd.f32 %v3667, %v3803
        %v3917 = vadd.f32 %v3668, %v3804
        %v3918 = vadd.f32 %v3669, %v3805
        %v3919 = vadd.f32 %v3670, %v3806
        %v3920 = vadd.f32 %v3671, %v3807
        %v3921 = vadd.f32 %v3672, %v3808
        %v3922 = vadd.f32 %v3673, %v3809
        %v3923 = vadd.f32 %v3674, %v3810
        %v3924 = vadd.f32 %v3675, %v3811
        %v3925 = vadd.f32 %v3676, %v3812
        %v3926 = vadd.f32 %v3677, %v3813
        %v3927 = vadd.f32 %v3678, %v3814
        %v3928 = vadd.f32 %v3679, %v3815
        %v3929 = vadd.f32 %v3680, %v3816
        %v3930 = vadd.f32 %v3681, %v3817
        %v3931 = vadd.f32 %v3682, %v3818
        %v3932 = vadd.f32 %v3683, %v3819
        %v3933 = vadd.f32 %v3684, %v3820
        %v3934 = vadd.f32 %v3685, %v3821
        %v3935 = vadd.f32 %v3686, %v3822
        %v3936 = vadd.f32 %v3687, %v3823
        %v3937 = vadd.f32 %v3688, %v3824
        %v3938 = vadd.f32 %v3689, %v3825
        %v3939 = vadd.f32 %v3690, %v3826
        %v3940 = vadd.f32 %v3691, %v3827
        %v3941 = vadd.f32 %v3692, %v3828
        %v3942 = vadd.f32 %v3693, %v3829
        %v3943 = vadd.f32 %v3694, %v3830
        %v3944 = vadd.f32 %v3695, %v3831
        %v3945 = vadd.f32 %v3696, %v3832
        %v3946 = vadd.f32 %v3697, %v3833
        %v3947 = vadd.f32 %v3698, %v3834
        %v3948 = vadd.f32 %v3699, %v3835
        %v3949 = vadd.f32 %v3700, %v3836
        %v3950 = vadd.f32 %v3701, %v3837
        %v3951 = vadd.f32 %v3702, %v3838
        %v3952 = vadd.f32 %v3703, %v3839
        %v3953 = vadd.f32 %v3704, %v3840
        %v3954 = vadd.f32 %v3705, %v3841
        %v3955 = vadd.f32 %v3706, %v3842
        %v3956 = vadd.f32 %v3707, %v3843
        %v3957 = vadd.f32 %v3708, %v3844
        %v3958 = vadd.f32 %v3709, %v3845
        %v3959 = vadd.f32 %v3710, %v3846
        %v3960 = vadd.f32 %v3711, %v3847
        %v3961 = vadd.f32 %v3712, %v3848
        %v3962 = vadd.f32 %v3713, %v3849
        %v3963 = vadd.f32 %v3714, %v3850
        %v3964 = vadd.f32 %v3715, %v3851
        %v3965 = vadd.f32 %v3716, %v3852
        %v3966 = vadd.f32 %v3717, %v3853
        %v3967 = vadd.f32 %v3718, %v3854
        %v3968 = vadd.f32 %v3719, %v3855
        %v3969 = vadd.f32 %v3720, %v3856
        %v3970 = vadd.f32 %v3721, %v3857
        %v3971 = vadd.f32 %v3722, %v3858
        %v3972 = vadd.f32 %v3723, %v3859
        %v3973 = vadd.f32 %v3724, %v3860
        %v3974 = vadd.f32 %v3725, %v3861
        %v3975 = vadd.f32 %v3726, %v3862
        %v3976 = vadd.f32 %v3727, %v3863
        %v3977 = vadd.f32 %v3728, %v3864
        %v3978 = vadd.f32 %v3729, %v3865
        %v3979 = vadd.f32 %v3730, %v3866
        %v3980 = vadd.f32 %v3731, %v3867
        %v3981 = vadd.f32 %v3732, %v3868
        %v3982 = vadd.f32 %v3733, %v3869
        %v3983 = vadd.f32 %v3734, %v3870
        %v3984 = vadd.f32 %v3735, %v3871
        %v3985 = vadd.f32 %v3736, %v3872
        %v3986 = vadd.f32 %v3737, %v3873
        %v3987 = vadd.f32 %v3738, %v3874
        %v3988 = vadd.f32 %v3739, %v3875
        %v3989 = vadd.f32 %v3740, %v3876
        %v3990 = vadd.f32 %v3741, %v3877
        %v3991 = vadd.f32 %v3742, %v3878
        %v3992 = vadd.f32 %v3743, %v3879
        %v3993 = vadd.f32 %v3744, %v3880
        %v3994 = vadd.f32 %v3745, %v3881
        %v3995 = vadd.f32 %v3746, %v3882
        %v3996 = vadd.f32 %v3747, %v3883
        %v3997 = vadd.f32 %v3748, %v3884
        %v3998 = vadd.f32 %v3749, %v3885
        %v3999 = vadd.f32 %v3750, %v3886
        %v4000 = vadd.f32 %v3751, %v3887
        %v4001 = vadd.f32 %v3752, %v3888
        %v4002 = vadd.f32 %v3753, %v3889
        %v4003 = vadd.f32 %v3754, %v3890
        %v4004 = vadd.f32 %v3755, %v3891
        %v4005 = vadd.f32 %v3756, %v3892
        %v4006 = vadd.f32 %v3757, %v3893
        %v4007 = vadd.f32 %v3758, %v3894
        %v4008 = vadd.f32 %v3759, %v3895
        %v4009 = vadd.f32 %v3760, %v3896
        %v4010 = vadd.f32 %v3761, %v3897
        %v4011 = vadd.f32 %v3762, %v3898
        %v4012 = vadd.f32 %v3763, %v3899
        %v4013 = vadd.f32 %v3764, %v3900
        %v4014 = vadd.f32 %v3765, %v3901
        %v4015 = vadd.f32 %v3766, %v3902
        %v4016 = vadd.f32 %v3767, %v3903
        %v4017 = vadd.f32 %v3768, %v3904
        %v4018 = vadd.f32 %v3769, %v3905
        %v4019 = vadd.f32 %v3770, %v3906
        %v4020 = vadd.f32 %v3771, %v3907
        %v4021 = vadd.f32 %v3772, %v3908
        %v4022 = vadd.f32 %v3773, %v3909
        %v4023 = vadd.f32 %v3774, %v3910
        %v4024 = vadd.f32 %v3775, %v3910
        %v4025 = vadd.f32 %v3776, %v3910
        %v4026 = vadd.f32 %v3777, %v3910
        %v4027 = vadd.f32 %v3778, %v3910
        %v4028 = vadd.f32 %v3779, %v3910
        %v4029 = vadd.f32 %v3780, %v3910
        %v4030 = vadd.f32 %v3781, %v3910
        %v4031 = vadd.f32 %v3782, %v3910
        %v4032 = vadd.f32 %v3783, %v3910
        %v4033 = vadd.f32 %v3784, %v3910
        %v4034 = vadd.f32 %v3785, %v3910
        %v4035 = vadd.f32 %v3786, %v3910
        %v4036 = vadd.f32 %v3787, %v3910
        %v4037 = vadd.f32 %v3788, %v3910
        %v4038 = vadd.f32 %v3789, %v3910
        %s4039 = scalar_lea.vmem %s5, 7
        %v4040 = vld [vmem:[%s4039] sm:$0x1]
        %v4042 = vlaneseq
        %v4043 = vshrl.u32 %v4042, 7
        %v4044 = vsub.s32 0, %v4043
        %v4045 = vrot.slane %v4040, %v4044
        %v4047 = vmul.f32 %v1666, %v4045
        %v4048 = vmul.f32 %v1671, %v4045
        %v4049 = vmul.f32 %v1676, %v4045
        %v4050 = vmul.f32 %v1681, %v4045
        %v4051 = vmul.f32 %v1686, %v4045
        %v4052 = vmul.f32 %v1691, %v4045
        %v4053 = vmul.f32 %v1696, %v4045
        %v4054 = vmul.f32 %v1701, %v4045
        %v4055 = vmul.f32 %v1706, %v4045
        %v4056 = vmul.f32 %v1711, %v4045
        %v4057 = vmul.f32 %v1716, %v4045
        %v4058 = vmul.f32 %v1721, %v4045
        %v4059 = vmul.f32 %v1726, %v4045
        %v4060 = vmul.f32 %v1731, %v4045
        %v4061 = vmul.f32 %v1736, %v4045
        %v4062 = vmul.f32 %v2380, %v4045
        %v4063 = vmul.f32 %v1746, %v4045
        %v4064 = vmul.f32 %v1751, %v4045
        %v4065 = vmul.f32 %v1756, %v4045
        %v4066 = vmul.f32 %v1761, %v4045
        %v4067 = vmul.f32 %v1766, %v4045
        %v4068 = vmul.f32 %v1771, %v4045
        %v4069 = vmul.f32 %v1776, %v4045
        %v4070 = vmul.f32 %v1781, %v4045
        %v4071 = vmul.f32 %v1786, %v4045
        %v4072 = vmul.f32 %v1791, %v4045
        %v4073 = vmul.f32 %v1796, %v4045
        %v4074 = vmul.f32 %v1801, %v4045
        %v4075 = vmul.f32 %v1806, %v4045
        %v4076 = vmul.f32 %v1811, %v4045
        %v4077 = vmul.f32 %v1816, %v4045
        %v4078 = vmul.f32 %v2385, %v4045
        %v4079 = vmul.f32 %v1826, %v4045
        %v4080 = vmul.f32 %v1831, %v4045
        %v4081 = vmul.f32 %v1836, %v4045
        %v4082 = vmul.f32 %v1841, %v4045
        %v4083 = vmul.f32 %v1846, %v4045
        %v4084 = vmul.f32 %v1851, %v4045
        %v4085 = vmul.f32 %v1856, %v4045
        %v4086 = vmul.f32 %v1861, %v4045
        %v4087 = vmul.f32 %v1866, %v4045
        %v4088 = vmul.f32 %v1871, %v4045
        %v4089 = vmul.f32 %v1876, %v4045
        %v4090 = vmul.f32 %v1881, %v4045
        %v4091 = vmul.f32 %v1886, %v4045
        %v4092 = vmul.f32 %v1891, %v4045
        %v4093 = vmul.f32 %v1896, %v4045
        %v4094 = vmul.f32 %v2390, %v4045
        %v4095 = vmul.f32 %v1906, %v4045
        %v4096 = vmul.f32 %v1911, %v4045
        %v4097 = vmul.f32 %v1916, %v4045
        %v4098 = vmul.f32 %v1921, %v4045
        %v4099 = vmul.f32 %v1926, %v4045
        %v4100 = vmul.f32 %v1931, %v4045
        %v4101 = vmul.f32 %v1936, %v4045
        %v4102 = vmul.f32 %v1941, %v4045
        %v4103 = vmul.f32 %v1946, %v4045
        %v4104 = vmul.f32 %v1951, %v4045
        %v4105 = vmul.f32 %v1956, %v4045
        %v4106 = vmul.f32 %v1961, %v4045
        %v4107 = vmul.f32 %v1966, %v4045
        %v4108 = vmul.f32 %v1971, %v4045
        %v4109 = vmul.f32 %v1976, %v4045
        %v4110 = vmul.f32 %v2395, %v4045
        %v4111 = vmul.f32 %v1986, %v4045
        %v4112 = vmul.f32 %v1991, %v4045
        %v4113 = vmul.f32 %v1996, %v4045
        %v4114 = vmul.f32 %v2001, %v4045
        %v4115 = vmul.f32 %v2006, %v4045
        %v4116 = vmul.f32 %v2011, %v4045
        %v4117 = vmul.f32 %v2016, %v4045
        %v4118 = vmul.f32 %v2021, %v4045
        %v4119 = vmul.f32 %v2026, %v4045
        %v4120 = vmul.f32 %v2031, %v4045
        %v4121 = vmul.f32 %v2036, %v4045
        %v4122 = vmul.f32 %v2041, %v4045
        %v4123 = vmul.f32 %v2046, %v4045
        %v4124 = vmul.f32 %v2051, %v4045
        %v4125 = vmul.f32 %v2056, %v4045
        %v4126 = vmul.f32 %v2400, %v4045
        %v4127 = vmul.f32 %v2066, %v4045
        %v4128 = vmul.f32 %v2071, %v4045
        %v4129 = vmul.f32 %v2076, %v4045
        %v4130 = vmul.f32 %v2081, %v4045
        %v4131 = vmul.f32 %v2086, %v4045
        %v4132 = vmul.f32 %v2091, %v4045
        %v4133 = vmul.f32 %v2096, %v4045
        %v4134 = vmul.f32 %v2101, %v4045
        %v4135 = vmul.f32 %v2106, %v4045
        %v4136 = vmul.f32 %v2111, %v4045
        %v4137 = vmul.f32 %v2116, %v4045
        %v4138 = vmul.f32 %v2121, %v4045
        %v4139 = vmul.f32 %v2126, %v4045
        %v4140 = vmul.f32 %v2131, %v4045
        %v4141 = vmul.f32 %v2136, %v4045
        %v4142 = vmul.f32 %v2405, %v4045
        %v4143 = vmul.f32 %v2918, %v4045
        %v4144 = vmul.f32 %v2923, %v4045
        %v4145 = vmul.f32 %v2928, %v4045
        %v4146 = vmul.f32 %v2933, %v4045
        %v4147 = vmul.f32 %v2938, %v4045
        %v4148 = vmul.f32 %v2943, %v4045
        %v4149 = vmul.f32 %v2948, %v4045
        %v4150 = vmul.f32 %v2953, %v4045
        %v4151 = vmul.f32 %v2958, %v4045
        %v4152 = vmul.f32 %v2963, %v4045
        %v4153 = vmul.f32 %v2968, %v4045
        %v4154 = vmul.f32 %v2973, %v4045
        %v4155 = vmul.f32 %v2978, %v4045
        %v4156 = vmul.f32 %v2983, %v4045
        %v4157 = vmul.f32 %v2988, %v4045
        %v4158 = vmul.f32 %v3257, %v4045
        %v4159 = vmul.f32 %v1576, %v4045
        %v4160 = vadd.f32 %v3911, %v4047
        %v4161 = vadd.f32 %v3912, %v4048
        %v4162 = vadd.f32 %v3913, %v4049
        %v4163 = vadd.f32 %v3914, %v4050
        %v4164 = vadd.f32 %v3915, %v4051
        %v4165 = vadd.f32 %v3916, %v4052
        %v4166 = vadd.f32 %v3917, %v4053
        %v4167 = vadd.f32 %v3918, %v4054
        %v4168 = vadd.f32 %v3919, %v4055
        %v4169 = vadd.f32 %v3920, %v4056
        %v4170 = vadd.f32 %v3921, %v4057
        %v4171 = vadd.f32 %v3922, %v4058
        %v4172 = vadd.f32 %v3923, %v4059
        %v4173 = vadd.f32 %v3924, %v4060
        %v4174 = vadd.f32 %v3925, %v4061
        %v4175 = vadd.f32 %v3926, %v4062
        %v4176 = vadd.f32 %v3927, %v4063
        %v4177 = vadd.f32 %v3928, %v4064
        %v4178 = vadd.f32 %v3929, %v4065
        %v4179 = vadd.f32 %v3930, %v4066
        %v4180 = vadd.f32 %v3931, %v4067
        %v4181 = vadd.f32 %v3932, %v4068
        %v4182 = vadd.f32 %v3933, %v4069
        %v4183 = vadd.f32 %v3934, %v4070
        %v4184 = vadd.f32 %v3935, %v4071
        %v4185 = vadd.f32 %v3936, %v4072
        %v4186 = vadd.f32 %v3937, %v4073
        %v4187 = vadd.f32 %v3938, %v4074
        %v4188 = vadd.f32 %v3939, %v4075
        %v4189 = vadd.f32 %v3940, %v4076
        %v4190 = vadd.f32 %v3941, %v4077
        %v4191 = vadd.f32 %v3942, %v4078
        %v4192 = vadd.f32 %v3943, %v4079
        %v4193 = vadd.f32 %v3944, %v4080
        %v4194 = vadd.f32 %v3945, %v4081
        %v4195 = vadd.f32 %v3946, %v4082
        %v4196 = vadd.f32 %v3947, %v4083
        %v4197 = vadd.f32 %v3948, %v4084
        %v4198 = vadd.f32 %v3949, %v4085
        %v4199 = vadd.f32 %v3950, %v4086
        %v4200 = vadd.f32 %v3951, %v4087
        %v4201 = vadd.f32 %v3952, %v4088
        %v4202 = vadd.f32 %v3953, %v4089
        %v4203 = vadd.f32 %v3954, %v4090
        %v4204 = vadd.f32 %v3955, %v4091
        %v4205 = vadd.f32 %v3956, %v4092
        %v4206 = vadd.f32 %v3957, %v4093
        %v4207 = vadd.f32 %v3958, %v4094
        %v4208 = vadd.f32 %v3959, %v4095
        %v4209 = vadd.f32 %v3960, %v4096
        %v4210 = vadd.f32 %v3961, %v4097
        %v4211 = vadd.f32 %v3962, %v4098
        %v4212 = vadd.f32 %v3963, %v4099
        %v4213 = vadd.f32 %v3964, %v4100
        %v4214 = vadd.f32 %v3965, %v4101
        %v4215 = vadd.f32 %v3966, %v4102
        %v4216 = vadd.f32 %v3967, %v4103
        %v4217 = vadd.f32 %v3968, %v4104
        %v4218 = vadd.f32 %v3969, %v4105
        %v4219 = vadd.f32 %v3970, %v4106
        %v4220 = vadd.f32 %v3971, %v4107
        %v4221 = vadd.f32 %v3972, %v4108
        %v4222 = vadd.f32 %v3973, %v4109
        %v4223 = vadd.f32 %v3974, %v4110
        %v4224 = vadd.f32 %v3975, %v4111
        %v4225 = vadd.f32 %v3976, %v4112
        %v4226 = vadd.f32 %v3977, %v4113
        %v4227 = vadd.f32 %v3978, %v4114
        %v4228 = vadd.f32 %v3979, %v4115
        %v4229 = vadd.f32 %v3980, %v4116
        %v4230 = vadd.f32 %v3981, %v4117
        %v4231 = vadd.f32 %v3982, %v4118
        %v4232 = vadd.f32 %v3983, %v4119
        %v4233 = vadd.f32 %v3984, %v4120
        %v4234 = vadd.f32 %v3985, %v4121
        %v4235 = vadd.f32 %v3986, %v4122
        %v4236 = vadd.f32 %v3987, %v4123
        %v4237 = vadd.f32 %v3988, %v4124
        %v4238 = vadd.f32 %v3989, %v4125
        %v4239 = vadd.f32 %v3990, %v4126
        %v4240 = vadd.f32 %v3991, %v4127
        %v4241 = vadd.f32 %v3992, %v4128
        %v4242 = vadd.f32 %v3993, %v4129
        %v4243 = vadd.f32 %v3994, %v4130
        %v4244 = vadd.f32 %v3995, %v4131
        %v4245 = vadd.f32 %v3996, %v4132
        %v4246 = vadd.f32 %v3997, %v4133
        %v4247 = vadd.f32 %v3998, %v4134
        %v4248 = vadd.f32 %v3999, %v4135
        %v4249 = vadd.f32 %v4000, %v4136
        %v4250 = vadd.f32 %v4001, %v4137
        %v4251 = vadd.f32 %v4002, %v4138
        %v4252 = vadd.f32 %v4003, %v4139
        %v4253 = vadd.f32 %v4004, %v4140
        %v4254 = vadd.f32 %v4005, %v4141
        %v4255 = vadd.f32 %v4006, %v4142
        %v4256 = vadd.f32 %v4007, %v4143
        %v4257 = vadd.f32 %v4008, %v4144
        %v4258 = vadd.f32 %v4009, %v4145
        %v4259 = vadd.f32 %v4010, %v4146
        %v4260 = vadd.f32 %v4011, %v4147
        %v4261 = vadd.f32 %v4012, %v4148
        %v4262 = vadd.f32 %v4013, %v4149
        %v4263 = vadd.f32 %v4014, %v4150
        %v4264 = vadd.f32 %v4015, %v4151
        %v4265 = vadd.f32 %v4016, %v4152
        %v4266 = vadd.f32 %v4017, %v4153
        %v4267 = vadd.f32 %v4018, %v4154
        %v4268 = vadd.f32 %v4019, %v4155
        %v4269 = vadd.f32 %v4020, %v4156
        %v4270 = vadd.f32 %v4021, %v4157
        %v4271 = vadd.f32 %v4022, %v4158
        %v4272 = vadd.f32 %v4023, %v4159
        %v4273 = vadd.f32 %v4024, %v4159
        %v4274 = vadd.f32 %v4025, %v4159
        %v4275 = vadd.f32 %v4026, %v4159
        %v4276 = vadd.f32 %v4027, %v4159
        %v4277 = vadd.f32 %v4028, %v4159
        %v4278 = vadd.f32 %v4029, %v4159
        %v4279 = vadd.f32 %v4030, %v4159
        %v4280 = vadd.f32 %v4031, %v4159
        %v4281 = vadd.f32 %v4032, %v4159
        %v4282 = vadd.f32 %v4033, %v4159
        %v4283 = vadd.f32 %v4034, %v4159
        %v4284 = vadd.f32 %v4035, %v4159
        %v4285 = vadd.f32 %v4036, %v4159
        %v4286 = vadd.f32 %v4037, %v4159
        %v4287 = vadd.f32 %v4038, %v4159
        %s4288 = scalar_lea.vmem %s5, 8
        %v4289 = vld [vmem:[%s4288] sm:$0x1]
        %v4291 = vlaneseq
        %v4292 = vshrl.u32 %v4291, 7
        %v4293 = vsub.s32 0, %v4292
        %v4294 = vrot.slane %v4289, %v4293
        %v4296 = vmul.f32 %v1671, %v4294
        %v4297 = vmul.f32 %v1676, %v4294
        %v4298 = vmul.f32 %v1681, %v4294
        %v4299 = vmul.f32 %v1686, %v4294
        %v4300 = vmul.f32 %v1691, %v4294
        %v4301 = vmul.f32 %v1696, %v4294
        %v4302 = vmul.f32 %v1701, %v4294
        %v4303 = vmul.f32 %v1706, %v4294
        %v4304 = vmul.f32 %v1711, %v4294
        %v4305 = vmul.f32 %v1716, %v4294
        %v4306 = vmul.f32 %v1721, %v4294
        %v4307 = vmul.f32 %v1726, %v4294
        %v4308 = vmul.f32 %v1731, %v4294
        %v4309 = vmul.f32 %v1736, %v4294
        %v4310 = vmul.f32 %v2380, %v4294
        %v4311 = vmul.f32 %v2649, %v4294
        %v4312 = vmul.f32 %v1751, %v4294
        %v4313 = vmul.f32 %v1756, %v4294
        %v4314 = vmul.f32 %v1761, %v4294
        %v4315 = vmul.f32 %v1766, %v4294
        %v4316 = vmul.f32 %v1771, %v4294
        %v4317 = vmul.f32 %v1776, %v4294
        %v4318 = vmul.f32 %v1781, %v4294
        %v4319 = vmul.f32 %v1786, %v4294
        %v4320 = vmul.f32 %v1791, %v4294
        %v4321 = vmul.f32 %v1796, %v4294
        %v4322 = vmul.f32 %v1801, %v4294
        %v4323 = vmul.f32 %v1806, %v4294
        %v4324 = vmul.f32 %v1811, %v4294
        %v4325 = vmul.f32 %v1816, %v4294
        %v4326 = vmul.f32 %v2385, %v4294
        %v4327 = vmul.f32 %v2654, %v4294
        %v4328 = vmul.f32 %v1831, %v4294
        %v4329 = vmul.f32 %v1836, %v4294
        %v4330 = vmul.f32 %v1841, %v4294
        %v4331 = vmul.f32 %v1846, %v4294
        %v4332 = vmul.f32 %v1851, %v4294
        %v4333 = vmul.f32 %v1856, %v4294
        %v4334 = vmul.f32 %v1861, %v4294
        %v4335 = vmul.f32 %v1866, %v4294
        %v4336 = vmul.f32 %v1871, %v4294
        %v4337 = vmul.f32 %v1876, %v4294
        %v4338 = vmul.f32 %v1881, %v4294
        %v4339 = vmul.f32 %v1886, %v4294
        %v4340 = vmul.f32 %v1891, %v4294
        %v4341 = vmul.f32 %v1896, %v4294
        %v4342 = vmul.f32 %v2390, %v4294
        %v4343 = vmul.f32 %v2659, %v4294
        %v4344 = vmul.f32 %v1911, %v4294
        %v4345 = vmul.f32 %v1916, %v4294
        %v4346 = vmul.f32 %v1921, %v4294
        %v4347 = vmul.f32 %v1926, %v4294
        %v4348 = vmul.f32 %v1931, %v4294
        %v4349 = vmul.f32 %v1936, %v4294
        %v4350 = vmul.f32 %v1941, %v4294
        %v4351 = vmul.f32 %v1946, %v4294
        %v4352 = vmul.f32 %v1951, %v4294
        %v4353 = vmul.f32 %v1956, %v4294
        %v4354 = vmul.f32 %v1961, %v4294
        %v4355 = vmul.f32 %v1966, %v4294
        %v4356 = vmul.f32 %v1971, %v4294
        %v4357 = vmul.f32 %v1976, %v4294
        %v4358 = vmul.f32 %v2395, %v4294
        %v4359 = vmul.f32 %v2664, %v4294
        %v4360 = vmul.f32 %v1991, %v4294
        %v4361 = vmul.f32 %v1996, %v4294
        %v4362 = vmul.f32 %v2001, %v4294
        %v4363 = vmul.f32 %v2006, %v4294
        %v4364 = vmul.f32 %v2011, %v4294
        %v4365 = vmul.f32 %v2016, %v4294
        %v4366 = vmul.f32 %v2021, %v4294
        %v4367 = vmul.f32 %v2026, %v4294
        %v4368 = vmul.f32 %v2031, %v4294
        %v4369 = vmul.f32 %v2036, %v4294
        %v4370 = vmul.f32 %v2041, %v4294
        %v4371 = vmul.f32 %v2046, %v4294
        %v4372 = vmul.f32 %v2051, %v4294
        %v4373 = vmul.f32 %v2056, %v4294
        %v4374 = vmul.f32 %v2400, %v4294
        %v4375 = vmul.f32 %v2669, %v4294
        %v4376 = vmul.f32 %v2071, %v4294
        %v4377 = vmul.f32 %v2076, %v4294
        %v4378 = vmul.f32 %v2081, %v4294
        %v4379 = vmul.f32 %v2086, %v4294
        %v4380 = vmul.f32 %v2091, %v4294
        %v4381 = vmul.f32 %v2096, %v4294
        %v4382 = vmul.f32 %v2101, %v4294
        %v4383 = vmul.f32 %v2106, %v4294
        %v4384 = vmul.f32 %v2111, %v4294
        %v4385 = vmul.f32 %v2116, %v4294
        %v4386 = vmul.f32 %v2121, %v4294
        %v4387 = vmul.f32 %v2126, %v4294
        %v4388 = vmul.f32 %v2131, %v4294
        %v4389 = vmul.f32 %v2136, %v4294
        %v4390 = vmul.f32 %v2405, %v4294
        %v4391 = vmul.f32 %v2674, %v4294
        %v4392 = vmul.f32 %v2923, %v4294
        %v4393 = vmul.f32 %v2928, %v4294
        %v4394 = vmul.f32 %v2933, %v4294
        %v4395 = vmul.f32 %v2938, %v4294
        %v4396 = vmul.f32 %v2943, %v4294
        %v4397 = vmul.f32 %v2948, %v4294
        %v4398 = vmul.f32 %v2953, %v4294
        %v4399 = vmul.f32 %v2958, %v4294
        %v4400 = vmul.f32 %v2963, %v4294
        %v4401 = vmul.f32 %v2968, %v4294
        %v4402 = vmul.f32 %v2973, %v4294
        %v4403 = vmul.f32 %v2978, %v4294
        %v4404 = vmul.f32 %v2983, %v4294
        %v4405 = vmul.f32 %v2988, %v4294
        %v4406 = vmul.f32 %v3257, %v4294
        %v4407 = vmul.f32 %v3526, %v4294
        %v4408 = vmul.f32 %v1576, %v4294
        %v4409 = vadd.f32 %v4160, %v4296
        %v4410 = vadd.f32 %v4161, %v4297
        %v4411 = vadd.f32 %v4162, %v4298
        %v4412 = vadd.f32 %v4163, %v4299
        %v4413 = vadd.f32 %v4164, %v4300
        %v4414 = vadd.f32 %v4165, %v4301
        %v4415 = vadd.f32 %v4166, %v4302
        %v4416 = vadd.f32 %v4167, %v4303
        %v4417 = vadd.f32 %v4168, %v4304
        %v4418 = vadd.f32 %v4169, %v4305
        %v4419 = vadd.f32 %v4170, %v4306
        %v4420 = vadd.f32 %v4171, %v4307
        %v4421 = vadd.f32 %v4172, %v4308
        %v4422 = vadd.f32 %v4173, %v4309
        %v4423 = vadd.f32 %v4174, %v4310
        %v4424 = vadd.f32 %v4175, %v4311
        %v4425 = vadd.f32 %v4176, %v4312
        %v4426 = vadd.f32 %v4177, %v4313
        %v4427 = vadd.f32 %v4178, %v4314
        %v4428 = vadd.f32 %v4179, %v4315
        %v4429 = vadd.f32 %v4180, %v4316
        %v4430 = vadd.f32 %v4181, %v4317
        %v4431 = vadd.f32 %v4182, %v4318
        %v4432 = vadd.f32 %v4183, %v4319
        %v4433 = vadd.f32 %v4184, %v4320
        %v4434 = vadd.f32 %v4185, %v4321
        %v4435 = vadd.f32 %v4186, %v4322
        %v4436 = vadd.f32 %v4187, %v4323
        %v4437 = vadd.f32 %v4188, %v4324
        %v4438 = vadd.f32 %v4189, %v4325
        %v4439 = vadd.f32 %v4190, %v4326
        %v4440 = vadd.f32 %v4191, %v4327
        %v4441 = vadd.f32 %v4192, %v4328
        %v4442 = vadd.f32 %v4193, %v4329
        %v4443 = vadd.f32 %v4194, %v4330
        %v4444 = vadd.f32 %v4195, %v4331
        %v4445 = vadd.f32 %v4196, %v4332
        %v4446 = vadd.f32 %v4197, %v4333
        %v4447 = vadd.f32 %v4198, %v4334
        %v4448 = vadd.f32 %v4199, %v4335
        %v4449 = vadd.f32 %v4200, %v4336
        %v4450 = vadd.f32 %v4201, %v4337
        %v4451 = vadd.f32 %v4202, %v4338
        %v4452 = vadd.f32 %v4203, %v4339
        %v4453 = vadd.f32 %v4204, %v4340
        %v4454 = vadd.f32 %v4205, %v4341
        %v4455 = vadd.f32 %v4206, %v4342
        %v4456 = vadd.f32 %v4207, %v4343
        %v4457 = vadd.f32 %v4208, %v4344
        %v4458 = vadd.f32 %v4209, %v4345
        %v4459 = vadd.f32 %v4210, %v4346
        %v4460 = vadd.f32 %v4211, %v4347
        %v4461 = vadd.f32 %v4212, %v4348
        %v4462 = vadd.f32 %v4213, %v4349
        %v4463 = vadd.f32 %v4214, %v4350
        %v4464 = vadd.f32 %v4215, %v4351
        %v4465 = vadd.f32 %v4216, %v4352
        %v4466 = vadd.f32 %v4217, %v4353
        %v4467 = vadd.f32 %v4218, %v4354
        %v4468 = vadd.f32 %v4219, %v4355
        %v4469 = vadd.f32 %v4220, %v4356
        %v4470 = vadd.f32 %v4221, %v4357
        %v4471 = vadd.f32 %v4222, %v4358
        %v4472 = vadd.f32 %v4223, %v4359
        %v4473 = vadd.f32 %v4224, %v4360
        %v4474 = vadd.f32 %v4225, %v4361
        %v4475 = vadd.f32 %v4226, %v4362
        %v4476 = vadd.f32 %v4227, %v4363
        %v4477 = vadd.f32 %v4228, %v4364
        %v4478 = vadd.f32 %v4229, %v4365
        %v4479 = vadd.f32 %v4230, %v4366
        %v4480 = vadd.f32 %v4231, %v4367
        %v4481 = vadd.f32 %v4232, %v4368
        %v4482 = vadd.f32 %v4233, %v4369
        %v4483 = vadd.f32 %v4234, %v4370
        %v4484 = vadd.f32 %v4235, %v4371
        %v4485 = vadd.f32 %v4236, %v4372
        %v4486 = vadd.f32 %v4237, %v4373
        %v4487 = vadd.f32 %v4238, %v4374
        %v4488 = vadd.f32 %v4239, %v4375
        %v4489 = vadd.f32 %v4240, %v4376
        %v4490 = vadd.f32 %v4241, %v4377
        %v4491 = vadd.f32 %v4242, %v4378
        %v4492 = vadd.f32 %v4243, %v4379
        %v4493 = vadd.f32 %v4244, %v4380
        %v4494 = vadd.f32 %v4245, %v4381
        %v4495 = vadd.f32 %v4246, %v4382
        %v4496 = vadd.f32 %v4247, %v4383
        %v4497 = vadd.f32 %v4248, %v4384
        %v4498 = vadd.f32 %v4249, %v4385
        %v4499 = vadd.f32 %v4250, %v4386
        %v4500 = vadd.f32 %v4251, %v4387
        %v4501 = vadd.f32 %v4252, %v4388
        %v4502 = vadd.f32 %v4253, %v4389
        %v4503 = vadd.f32 %v4254, %v4390
        %v4504 = vadd.f32 %v4255, %v4391
        %v4505 = vadd.f32 %v4256, %v4392
        %v4506 = vadd.f32 %v4257, %v4393
        %v4507 = vadd.f32 %v4258, %v4394
        %v4508 = vadd.f32 %v4259, %v4395
        %v4509 = vadd.f32 %v4260, %v4396
        %v4510 = vadd.f32 %v4261, %v4397
        %v4511 = vadd.f32 %v4262, %v4398
        %v4512 = vadd.f32 %v4263, %v4399
        %v4513 = vadd.f32 %v4264, %v4400
        %v4514 = vadd.f32 %v4265, %v4401
        %v4515 = vadd.f32 %v4266, %v4402
        %v4516 = vadd.f32 %v4267, %v4403
        %v4517 = vadd.f32 %v4268, %v4404
        %v4518 = vadd.f32 %v4269, %v4405
        %v4519 = vadd.f32 %v4270, %v4406
        %v4520 = vadd.f32 %v4271, %v4407
        %v4521 = vadd.f32 %v4272, %v4408
        %v4522 = vadd.f32 %v4273, %v4408
        %v4523 = vadd.f32 %v4274, %v4408
        %v4524 = vadd.f32 %v4275, %v4408
        %v4525 = vadd.f32 %v4276, %v4408
        %v4526 = vadd.f32 %v4277, %v4408
        %v4527 = vadd.f32 %v4278, %v4408
        %v4528 = vadd.f32 %v4279, %v4408
        %v4529 = vadd.f32 %v4280, %v4408
        %v4530 = vadd.f32 %v4281, %v4408
        %v4531 = vadd.f32 %v4282, %v4408
        %v4532 = vadd.f32 %v4283, %v4408
        %v4533 = vadd.f32 %v4284, %v4408
        %v4534 = vadd.f32 %v4285, %v4408
        %v4535 = vadd.f32 %v4286, %v4408
        %v4536 = vadd.f32 %v4287, %v4408
        %v4537 = vld [vmem:[%s6] sm:$0x1]
        %v4539 = vlaneseq
        %v4540 = vshrl.u32 %v4539, 7
        %v4541 = vsub.s32 0, %v4540
        %v4542 = vrot.slane %v4537, %v4541
        %v4544 = vadd.f32 %v4409, %v4542
        %v4545 = vadd.f32 %v4410, %v4542
        %v4546 = vadd.f32 %v4411, %v4542
        %v4547 = vadd.f32 %v4412, %v4542
        %v4548 = vadd.f32 %v4413, %v4542
        %v4549 = vadd.f32 %v4414, %v4542
        %v4550 = vadd.f32 %v4415, %v4542
        %v4551 = vadd.f32 %v4416, %v4542
        %v4552 = vadd.f32 %v4417, %v4542
        %v4553 = vadd.f32 %v4418, %v4542
        %v4554 = vadd.f32 %v4419, %v4542
        %v4555 = vadd.f32 %v4420, %v4542
        %v4556 = vadd.f32 %v4421, %v4542
        %v4557 = vadd.f32 %v4422, %v4542
        %v4558 = vadd.f32 %v4423, %v4542
        %v4559 = vadd.f32 %v4424, %v4542
        %v4560 = vadd.f32 %v4425, %v4542
        %v4561 = vadd.f32 %v4426, %v4542
        %v4562 = vadd.f32 %v4427, %v4542
        %v4563 = vadd.f32 %v4428, %v4542
        %v4564 = vadd.f32 %v4429, %v4542
        %v4565 = vadd.f32 %v4430, %v4542
        %v4566 = vadd.f32 %v4431, %v4542
        %v4567 = vadd.f32 %v4432, %v4542
        %v4568 = vadd.f32 %v4433, %v4542
        %v4569 = vadd.f32 %v4434, %v4542
        %v4570 = vadd.f32 %v4435, %v4542
        %v4571 = vadd.f32 %v4436, %v4542
        %v4572 = vadd.f32 %v4437, %v4542
        %v4573 = vadd.f32 %v4438, %v4542
        %v4574 = vadd.f32 %v4439, %v4542
        %v4575 = vadd.f32 %v4440, %v4542
        %v4576 = vadd.f32 %v4441, %v4542
        %v4577 = vadd.f32 %v4442, %v4542
        %v4578 = vadd.f32 %v4443, %v4542
        %v4579 = vadd.f32 %v4444, %v4542
        %v4580 = vadd.f32 %v4445, %v4542
        %v4581 = vadd.f32 %v4446, %v4542
        %v4582 = vadd.f32 %v4447, %v4542
        %v4583 = vadd.f32 %v4448, %v4542
        %v4584 = vadd.f32 %v4449, %v4542
        %v4585 = vadd.f32 %v4450, %v4542
        %v4586 = vadd.f32 %v4451, %v4542
        %v4587 = vadd.f32 %v4452, %v4542
        %v4588 = vadd.f32 %v4453, %v4542
        %v4589 = vadd.f32 %v4454, %v4542
        %v4590 = vadd.f32 %v4455, %v4542
        %v4591 = vadd.f32 %v4456, %v4542
        %v4592 = vadd.f32 %v4457, %v4542
        %v4593 = vadd.f32 %v4458, %v4542
        %v4594 = vadd.f32 %v4459, %v4542
        %v4595 = vadd.f32 %v4460, %v4542
        %v4596 = vadd.f32 %v4461, %v4542
        %v4597 = vadd.f32 %v4462, %v4542
        %v4598 = vadd.f32 %v4463, %v4542
        %v4599 = vadd.f32 %v4464, %v4542
        %v4600 = vadd.f32 %v4465, %v4542
        %v4601 = vadd.f32 %v4466, %v4542
        %v4602 = vadd.f32 %v4467, %v4542
        %v4603 = vadd.f32 %v4468, %v4542
        %v4604 = vadd.f32 %v4469, %v4542
        %v4605 = vadd.f32 %v4470, %v4542
        %v4606 = vadd.f32 %v4471, %v4542
        %v4607 = vadd.f32 %v4472, %v4542
        %v4608 = vadd.f32 %v4473, %v4542
        %v4609 = vadd.f32 %v4474, %v4542
        %v4610 = vadd.f32 %v4475, %v4542
        %v4611 = vadd.f32 %v4476, %v4542
        %v4612 = vadd.f32 %v4477, %v4542
        %v4613 = vadd.f32 %v4478, %v4542
        %v4614 = vadd.f32 %v4479, %v4542
        %v4615 = vadd.f32 %v4480, %v4542
        %v4616 = vadd.f32 %v4481, %v4542
        %v4617 = vadd.f32 %v4482, %v4542
        %v4618 = vadd.f32 %v4483, %v4542
        %v4619 = vadd.f32 %v4484, %v4542
        %v4620 = vadd.f32 %v4485, %v4542
        %v4621 = vadd.f32 %v4486, %v4542
        %v4622 = vadd.f32 %v4487, %v4542
        %v4623 = vadd.f32 %v4488, %v4542
        %v4624 = vadd.f32 %v4489, %v4542
        %v4625 = vadd.f32 %v4490, %v4542
        %v4626 = vadd.f32 %v4491, %v4542
        %v4627 = vadd.f32 %v4492, %v4542
        %v4628 = vadd.f32 %v4493, %v4542
        %v4629 = vadd.f32 %v4494, %v4542
        %v4630 = vadd.f32 %v4495, %v4542
        %v4631 = vadd.f32 %v4496, %v4542
        %v4632 = vadd.f32 %v4497, %v4542
        %v4633 = vadd.f32 %v4498, %v4542
        %v4634 = vadd.f32 %v4499, %v4542
        %v4635 = vadd.f32 %v4500, %v4542
        %v4636 = vadd.f32 %v4501, %v4542
        %v4637 = vadd.f32 %v4502, %v4542
        %v4638 = vadd.f32 %v4503, %v4542
        %v4639 = vadd.f32 %v4504, %v4542
        %v4640 = vadd.f32 %v4505, %v4542
        %v4641 = vadd.f32 %v4506, %v4542
        %v4642 = vadd.f32 %v4507, %v4542
        %v4643 = vadd.f32 %v4508, %v4542
        %v4644 = vadd.f32 %v4509, %v4542
        %v4645 = vadd.f32 %v4510, %v4542
        %v4646 = vadd.f32 %v4511, %v4542
        %v4647 = vadd.f32 %v4512, %v4542
        %v4648 = vadd.f32 %v4513, %v4542
        %v4649 = vadd.f32 %v4514, %v4542
        %v4650 = vadd.f32 %v4515, %v4542
        %v4651 = vadd.f32 %v4516, %v4542
        %v4652 = vadd.f32 %v4517, %v4542
        %v4653 = vadd.f32 %v4518, %v4542
        %v4654 = vadd.f32 %v4519, %v4542
        %v4655 = vadd.f32 %v4520, %v4542
        %v4656 = vadd.f32 %v4521, %v4542
        %v4657 = vadd.f32 %v4522, %v4542
        %v4658 = vadd.f32 %v4523, %v4542
        %v4659 = vadd.f32 %v4524, %v4542
        %v4660 = vadd.f32 %v4525, %v4542
        %v4661 = vadd.f32 %v4526, %v4542
        %v4662 = vadd.f32 %v4527, %v4542
        %v4663 = vadd.f32 %v4528, %v4542
        %v4664 = vadd.f32 %v4529, %v4542
        %v4665 = vadd.f32 %v4530, %v4542
        %v4666 = vadd.f32 %v4531, %v4542
        %v4667 = vadd.f32 %v4532, %v4542
        %v4668 = vadd.f32 %v4533, %v4542
        %v4669 = vadd.f32 %v4534, %v4542
        %v4670 = vadd.f32 %v4535, %v4542
        %v4671 = vadd.f32 %v4536, %v4542
        %v4672 = vmax.f32 %v4544, %v4560
        %v4673 = vmax.f32 %v4545, %v4561
        %v4674 = vmax.f32 %v4546, %v4562
        %v4675 = vmax.f32 %v4547, %v4563
        %v4676 = vmax.f32 %v4548, %v4564
        %v4677 = vmax.f32 %v4549, %v4565
        %v4678 = vmax.f32 %v4550, %v4566
        %v4679 = vmax.f32 %v4551, %v4567
        %v4680 = vmax.f32 %v4552, %v4568
        %v4681 = vmax.f32 %v4553, %v4569
        %v4682 = vmax.f32 %v4554, %v4570
        %v4683 = vmax.f32 %v4555, %v4571
        %v4684 = vmax.f32 %v4556, %v4572
        %v4685 = vmax.f32 %v4557, %v4573
        %v4686 = vmax.f32 %v4558, %v4574
        %v4687 = vmax.f32 %v4559, %v4575
        %v4688 = vmax.f32 %v4608, %v4624
        %v4689 = vmax.f32 %v4609, %v4625
        %v4690 = vmax.f32 %v4610, %v4626
        %v4691 = vmax.f32 %v4611, %v4627
        %v4692 = vmax.f32 %v4612, %v4628
        %v4693 = vmax.f32 %v4613, %v4629
        %v4694 = vmax.f32 %v4614, %v4630
        %v4695 = vmax.f32 %v4615, %v4631
        %v4696 = vmax.f32 %v4616, %v4632
        %v4697 = vmax.f32 %v4617, %v4633
        %v4698 = vmax.f32 %v4618, %v4634
        %v4699 = vmax.f32 %v4619, %v4635
        %v4700 = vmax.f32 %v4620, %v4636
        %v4701 = vmax.f32 %v4621, %v4637
        %v4702 = vmax.f32 %v4622, %v4638
        %v4703 = vmax.f32 %v4623, %v4639
        %v4704 = vmax.f32 %v4672, %v4576
        %v4705 = vmax.f32 %v4673, %v4577
        %v4706 = vmax.f32 %v4674, %v4578
        %v4707 = vmax.f32 %v4675, %v4579
        %v4708 = vmax.f32 %v4676, %v4580
        %v4709 = vmax.f32 %v4677, %v4581
        %v4710 = vmax.f32 %v4678, %v4582
        %v4711 = vmax.f32 %v4679, %v4583
        %v4712 = vmax.f32 %v4680, %v4584
        %v4713 = vmax.f32 %v4681, %v4585
        %v4714 = vmax.f32 %v4682, %v4586
        %v4715 = vmax.f32 %v4683, %v4587
        %v4716 = vmax.f32 %v4684, %v4588
        %v4717 = vmax.f32 %v4685, %v4589
        %v4718 = vmax.f32 %v4686, %v4590
        %v4719 = vmax.f32 %v4687, %v4591
        %v4720 = vmax.f32 %v4688, %v4640
        %v4721 = vmax.f32 %v4689, %v4641
        %v4722 = vmax.f32 %v4690, %v4642
        %v4723 = vmax.f32 %v4691, %v4643
        %v4724 = vmax.f32 %v4692, %v4644
        %v4725 = vmax.f32 %v4693, %v4645
        %v4726 = vmax.f32 %v4694, %v4646
        %v4727 = vmax.f32 %v4695, %v4647
        %v4728 = vmax.f32 %v4696, %v4648
        %v4729 = vmax.f32 %v4697, %v4649
        %v4730 = vmax.f32 %v4698, %v4650
        %v4731 = vmax.f32 %v4699, %v4651
        %v4732 = vmax.f32 %v4700, %v4652
        %v4733 = vmax.f32 %v4701, %v4653
        %v4734 = vmax.f32 %v4702, %v4654
        %v4735 = vmax.f32 %v4703, %v4655
        %v4736 = vmax.f32 %v4704, %v4592
        %v4737 = vmax.f32 %v4705, %v4593
        %v4738 = vmax.f32 %v4706, %v4594
        %v4739 = vmax.f32 %v4707, %v4595
        %v4740 = vmax.f32 %v4708, %v4596
        %v4741 = vmax.f32 %v4709, %v4597
        %v4742 = vmax.f32 %v4710, %v4598
        %v4743 = vmax.f32 %v4711, %v4599
        %v4744 = vmax.f32 %v4712, %v4600
        %v4745 = vmax.f32 %v4713, %v4601
        %v4746 = vmax.f32 %v4714, %v4602
        %v4747 = vmax.f32 %v4715, %v4603
        %v4748 = vmax.f32 %v4716, %v4604
        %v4749 = vmax.f32 %v4717, %v4605
        %v4750 = vmax.f32 %v4718, %v4606
        %v4751 = vmax.f32 %v4719, %v4607
        %v4752 = vmax.f32 %v4720, %v4656
        %v4753 = vmax.f32 %v4721, %v4657
        %v4754 = vmax.f32 %v4722, %v4658
        %v4755 = vmax.f32 %v4723, %v4659
        %v4756 = vmax.f32 %v4724, %v4660
        %v4757 = vmax.f32 %v4725, %v4661
        %v4758 = vmax.f32 %v4726, %v4662
        %v4759 = vmax.f32 %v4727, %v4663
        %v4760 = vmax.f32 %v4728, %v4664
        %v4761 = vmax.f32 %v4729, %v4665
        %v4762 = vmax.f32 %v4730, %v4666
        %v4763 = vmax.f32 %v4731, %v4667
        %v4764 = vmax.f32 %v4732, %v4668
        %v4765 = vmax.f32 %v4733, %v4669
        %v4766 = vmax.f32 %v4734, %v4670
        %v4767 = vmax.f32 %v4735, %v4671
        %v4768 = vld [vmem:[%s7] sm:$0x1]
        %v4770 = vlaneseq
        %v4771 = vshrl.u32 %v4770, 7
        %v4772 = vsub.s32 0, %v4771
        %v4773 = vrot.slane %v4768, %v4772
        %v4775 = vmul.f32 %v4736, %v4773
        %v4776 = vmul.f32 %v4737, %v4773
        %v4777 = vmul.f32 %v4738, %v4773
        %v4778 = vmul.f32 %v4739, %v4773
        %v4779 = vmul.f32 %v4740, %v4773
        %v4780 = vmul.f32 %v4741, %v4773
        %v4781 = vmul.f32 %v4742, %v4773
        %v4782 = vmul.f32 %v4743, %v4773
        %v4783 = vmul.f32 %v4744, %v4773
        %v4784 = vmul.f32 %v4745, %v4773
        %v4785 = vmul.f32 %v4746, %v4773
        %v4786 = vmul.f32 %v4747, %v4773
        %v4787 = vmul.f32 %v4748, %v4773
        %v4788 = vmul.f32 %v4749, %v4773
        %v4789 = vmul.f32 %v4750, %v4773
        %v4790 = vmul.f32 %v4751, %v4773
        %v4791 = vmul.f32 %v4752, %v4773
        %v4792 = vmul.f32 %v4753, %v4773
        %v4793 = vmul.f32 %v4754, %v4773
        %v4794 = vmul.f32 %v4755, %v4773
        %v4795 = vmul.f32 %v4756, %v4773
        %v4796 = vmul.f32 %v4757, %v4773
        %v4797 = vmul.f32 %v4758, %v4773
        %v4798 = vmul.f32 %v4759, %v4773
        %v4799 = vmul.f32 %v4760, %v4773
        %v4800 = vmul.f32 %v4761, %v4773
        %v4801 = vmul.f32 %v4762, %v4773
        %v4802 = vmul.f32 %v4763, %v4773
        %v4803 = vmul.f32 %v4764, %v4773
        %v4804 = vmul.f32 %v4765, %v4773
        %v4805 = vmul.f32 %v4766, %v4773
        %v4806 = vmul.f32 %v4767, %v4773
        %v4807 = vld [vmem:[%s8] sm:$0x1]
        %v4809 = vlaneseq
        %v4810 = vshrl.u32 %v4809, 7
        %v4811 = vsub.s32 0, %v4810
        %v4812 = vrot.slane %v4807, %v4811
        %v4814 = vadd.f32 %v4775, %v4812
        %v4815 = vadd.f32 %v4776, %v4812
        %v4816 = vadd.f32 %v4777, %v4812
        %v4817 = vadd.f32 %v4778, %v4812
        %v4818 = vadd.f32 %v4779, %v4812
        %v4819 = vadd.f32 %v4780, %v4812
        %v4820 = vadd.f32 %v4781, %v4812
        %v4821 = vadd.f32 %v4782, %v4812
        %v4822 = vadd.f32 %v4783, %v4812
        %v4823 = vadd.f32 %v4784, %v4812
        %v4824 = vadd.f32 %v4785, %v4812
        %v4825 = vadd.f32 %v4786, %v4812
        %v4826 = vadd.f32 %v4787, %v4812
        %v4827 = vadd.f32 %v4788, %v4812
        %v4828 = vadd.f32 %v4789, %v4812
        %v4829 = vadd.f32 %v4790, %v4812
        %v4830 = vadd.f32 %v4791, %v4812
        %v4831 = vadd.f32 %v4792, %v4812
        %v4832 = vadd.f32 %v4793, %v4812
        %v4833 = vadd.f32 %v4794, %v4812
        %v4834 = vadd.f32 %v4795, %v4812
        %v4835 = vadd.f32 %v4796, %v4812
        %v4836 = vadd.f32 %v4797, %v4812
        %v4837 = vadd.f32 %v4798, %v4812
        %v4838 = vadd.f32 %v4799, %v4812
        %v4839 = vadd.f32 %v4800, %v4812
        %v4840 = vadd.f32 %v4801, %v4812
        %v4841 = vadd.f32 %v4802, %v4812
        %v4842 = vadd.f32 %v4803, %v4812
        %v4843 = vadd.f32 %v4804, %v4812
        %v4844 = vadd.f32 %v4805, %v4812
        %v4845 = vadd.f32 %v4806, %v4812
        %vm4846 = vcmp.gt.f32.partialorder %v4814, 0.0
        %vm4847 = vcmp.gt.f32.partialorder %v4815, 0.0
        %vm4848 = vcmp.gt.f32.partialorder %v4816, 0.0
        %vm4849 = vcmp.gt.f32.partialorder %v4817, 0.0
        %vm4850 = vcmp.gt.f32.partialorder %v4818, 0.0
        %vm4851 = vcmp.gt.f32.partialorder %v4819, 0.0
        %vm4852 = vcmp.gt.f32.partialorder %v4820, 0.0
        %vm4853 = vcmp.gt.f32.partialorder %v4821, 0.0
        %vm4854 = vcmp.gt.f32.partialorder %v4822, 0.0
        %vm4855 = vcmp.gt.f32.partialorder %v4823, 0.0
        %vm4856 = vcmp.gt.f32.partialorder %v4824, 0.0
        %vm4857 = vcmp.gt.f32.partialorder %v4825, 0.0
        %vm4858 = vcmp.gt.f32.partialorder %v4826, 0.0
        %vm4859 = vcmp.gt.f32.partialorder %v4827, 0.0
        %vm4860 = vcmp.gt.f32.partialorder %v4828, 0.0
        %vm4861 = vcmp.gt.f32.partialorder %v4829, 0.0
        %vm4862 = vcmp.gt.f32.partialorder %v4830, 0.0
        %vm4863 = vcmp.gt.f32.partialorder %v4831, 0.0
        %vm4864 = vcmp.gt.f32.partialorder %v4832, 0.0
        %vm4865 = vcmp.gt.f32.partialorder %v4833, 0.0
        %vm4866 = vcmp.gt.f32.partialorder %v4834, 0.0
        %vm4867 = vcmp.gt.f32.partialorder %v4835, 0.0
        %vm4868 = vcmp.gt.f32.partialorder %v4836, 0.0
        %vm4869 = vcmp.gt.f32.partialorder %v4837, 0.0
        %vm4870 = vcmp.gt.f32.partialorder %v4838, 0.0
        %vm4871 = vcmp.gt.f32.partialorder %v4839, 0.0
        %vm4872 = vcmp.gt.f32.partialorder %v4840, 0.0
        %vm4873 = vcmp.gt.f32.partialorder %v4841, 0.0
        %vm4874 = vcmp.gt.f32.partialorder %v4842, 0.0
        %vm4875 = vcmp.gt.f32.partialorder %v4843, 0.0
        %vm4876 = vcmp.gt.f32.partialorder %v4844, 0.0
        %vm4877 = vcmp.gt.f32.partialorder %v4845, 0.0
        %v4878 = vmin.f32 %v4814, 0.0
        %v4879 = vmin.f32 %v4815, 0.0
        %v4880 = vmin.f32 %v4816, 0.0
        %v4881 = vmin.f32 %v4817, 0.0
        %v4882 = vmin.f32 %v4818, 0.0
        %v4883 = vmin.f32 %v4819, 0.0
        %v4884 = vmin.f32 %v4820, 0.0
        %v4885 = vmin.f32 %v4821, 0.0
        %v4886 = vmin.f32 %v4822, 0.0
        %v4887 = vmin.f32 %v4823, 0.0
        %v4888 = vmin.f32 %v4824, 0.0
        %v4889 = vmin.f32 %v4825, 0.0
        %v4890 = vmin.f32 %v4826, 0.0
        %v4891 = vmin.f32 %v4827, 0.0
        %v4892 = vmin.f32 %v4828, 0.0
        %v4893 = vmin.f32 %v4829, 0.0
        %v4894 = vmin.f32 %v4830, 0.0
        %v4895 = vmin.f32 %v4831, 0.0
        %v4896 = vmin.f32 %v4832, 0.0
        %v4897 = vmin.f32 %v4833, 0.0
        %v4898 = vmin.f32 %v4834, 0.0
        %v4899 = vmin.f32 %v4835, 0.0
        %v4900 = vmin.f32 %v4836, 0.0
        %v4901 = vmin.f32 %v4837, 0.0
        %v4902 = vmin.f32 %v4838, 0.0
        %v4903 = vmin.f32 %v4839, 0.0
        %v4904 = vmin.f32 %v4840, 0.0
        %v4905 = vmin.f32 %v4841, 0.0
        %v4906 = vmin.f32 %v4842, 0.0
        %v4907 = vmin.f32 %v4843, 0.0
        %v4908 = vmin.f32 %v4844, 0.0
        %v4909 = vmin.f32 %v4845, 0.0
        %v4910 = vmul.f32 %v4878, 1.442695
        %v4911 = vpow.pop %v4910
        %v4912 = vmul.f32 %v4879, 1.442695
        %v4913 = vpow.pop %v4912
        %v4914 = vmul.f32 %v4880, 1.442695
        %v4915 = vpow.pop %v4914
        %v4916 = vmul.f32 %v4881, 1.442695
        %v4917 = vpow.pop %v4916
        %v4918 = vmul.f32 %v4882, 1.442695
        %v4919 = vpow.pop %v4918
        %v4920 = vmul.f32 %v4883, 1.442695
        %v4921 = vpow.pop %v4920
        %v4922 = vmul.f32 %v4884, 1.442695
        %v4923 = vpow.pop %v4922
        %v4924 = vmul.f32 %v4885, 1.442695
        %v4925 = vpow.pop %v4924
        %v4926 = vmul.f32 %v4886, 1.442695
        %v4927 = vpow.pop %v4926
        %v4928 = vmul.f32 %v4887, 1.442695
        %v4929 = vpow.pop %v4928
        %v4930 = vmul.f32 %v4888, 1.442695
        %v4931 = vpow.pop %v4930
        %v4932 = vmul.f32 %v4889, 1.442695
        %v4933 = vpow.pop %v4932
        %v4934 = vmul.f32 %v4890, 1.442695
        %v4935 = vpow.pop %v4934
        %v4936 = vmul.f32 %v4891, 1.442695
        %v4937 = vpow.pop %v4936
        %v4938 = vmul.f32 %v4892, 1.442695
        %v4939 = vpow.pop %v4938
        %v4940 = vmul.f32 %v4893, 1.442695
        %v4941 = vpow.pop %v4940
        %v4942 = vmul.f32 %v4894, 1.442695
        %v4943 = vpow.pop %v4942
        %v4944 = vmul.f32 %v4895, 1.442695
        %v4945 = vpow.pop %v4944
        %v4946 = vmul.f32 %v4896, 1.442695
        %v4947 = vpow.pop %v4946
        %v4948 = vmul.f32 %v4897, 1.442695
        %v4949 = vpow.pop %v4948
        %v4950 = vmul.f32 %v4898, 1.442695
        %v4951 = vpow.pop %v4950
        %v4952 = vmul.f32 %v4899, 1.442695
        %v4953 = vpow.pop %v4952
        %v4954 = vmul.f32 %v4900, 1.442695
        %v4955 = vpow.pop %v4954
        %v4956 = vmul.f32 %v4901, 1.442695
        %v4957 = vpow.pop %v4956
        %v4958 = vmul.f32 %v4902, 1.442695
        %v4959 = vpow.pop %v4958
        %v4960 = vmul.f32 %v4903, 1.442695
        %v4961 = vpow.pop %v4960
        %v4962 = vmul.f32 %v4904, 1.442695
        %v4963 = vpow.pop %v4962
        %v4964 = vmul.f32 %v4905, 1.442695
        %v4965 = vpow.pop %v4964
        %v4966 = vmul.f32 %v4906, 1.442695
        %v4967 = vpow.pop %v4966
        %v4968 = vmul.f32 %v4907, 1.442695
        %v4969 = vpow.pop %v4968
        %v4970 = vmul.f32 %v4908, 1.442695
        %v4971 = vpow.pop %v4970
        %v4972 = vmul.f32 %v4909, 1.442695
        %v4973 = vpow.pop %v4972
        %v4974 = vsub.f32 %v4911, 1.0
        %v4975 = vsub.f32 %v4913, 1.0
        %v4976 = vsub.f32 %v4915, 1.0
        %v4977 = vsub.f32 %v4917, 1.0
        %v4978 = vsub.f32 %v4919, 1.0
        %v4979 = vsub.f32 %v4921, 1.0
        %v4980 = vsub.f32 %v4923, 1.0
        %v4981 = vsub.f32 %v4925, 1.0
        %v4982 = vsub.f32 %v4927, 1.0
        %v4983 = vsub.f32 %v4929, 1.0
        %v4984 = vsub.f32 %v4931, 1.0
        %v4985 = vsub.f32 %v4933, 1.0
        %v4986 = vsub.f32 %v4935, 1.0
        %v4987 = vsub.f32 %v4937, 1.0
        %v4988 = vsub.f32 %v4939, 1.0
        %v4989 = vsub.f32 %v4941, 1.0
        %v4990 = vsub.f32 %v4943, 1.0
        %v4991 = vsub.f32 %v4945, 1.0
        %v4992 = vsub.f32 %v4947, 1.0
        %v4993 = vsub.f32 %v4949, 1.0
        %v4994 = vsub.f32 %v4951, 1.0
        %v4995 = vsub.f32 %v4953, 1.0
        %v4996 = vsub.f32 %v4955, 1.0
        %v4997 = vsub.f32 %v4957, 1.0
        %v4998 = vsub.f32 %v4959, 1.0
        %v4999 = vsub.f32 %v4961, 1.0
        %v5000 = vsub.f32 %v4963, 1.0
        %v5001 = vsub.f32 %v4965, 1.0
        %v5002 = vsub.f32 %v4967, 1.0
        %v5003 = vsub.f32 %v4969, 1.0
        %v5004 = vsub.f32 %v4971, 1.0
        %v5005 = vsub.f32 %v4973, 1.0
        %v5006 = vsel %vm4846, %v4814, %v4974
        %v5007 = vsel %vm4847, %v4815, %v4975
        %v5008 = vsel %vm4848, %v4816, %v4976
        %v5009 = vsel %vm4849, %v4817, %v4977
        %v5010 = vsel %vm4850, %v4818, %v4978
        %v5011 = vsel %vm4851, %v4819, %v4979
        %v5012 = vsel %vm4852, %v4820, %v4980
        %v5013 = vsel %vm4853, %v4821, %v4981
        %v5014 = vsel %vm4854, %v4822, %v4982
        %v5015 = vsel %vm4855, %v4823, %v4983
        %v5016 = vsel %vm4856, %v4824, %v4984
        %v5017 = vsel %vm4857, %v4825, %v4985
        %v5018 = vsel %vm4858, %v4826, %v4986
        %v5019 = vsel %vm4859, %v4827, %v4987
        %v5020 = vsel %vm4860, %v4828, %v4988
        %v5021 = vsel %vm4861, %v4829, %v4989
        %v5022 = vsel %vm4862, %v4830, %v4990
        %v5023 = vsel %vm4863, %v4831, %v4991
        %v5024 = vsel %vm4864, %v4832, %v4992
        %v5025 = vsel %vm4865, %v4833, %v4993
        %v5026 = vsel %vm4866, %v4834, %v4994
        %v5027 = vsel %vm4867, %v4835, %v4995
        %v5028 = vsel %vm4868, %v4836, %v4996
        %v5029 = vsel %vm4869, %v4837, %v4997
        %v5030 = vsel %vm4870, %v4838, %v4998
        %v5031 = vsel %vm4871, %v4839, %v4999
        %v5032 = vsel %vm4872, %v4840, %v5000
        %v5033 = vsel %vm4873, %v4841, %v5001
        %v5034 = vsel %vm4874, %v4842, %v5002
        %v5035 = vsel %vm4875, %v4843, %v5003
        %v5036 = vsel %vm4876, %v4844, %v5004
        %v5037 = vsel %vm4877, %v4845, %v5005
        %vm5038 = vcmask 58368
        %5039 = vst.msk [vmem:[%s1088] sm:$0x3] %vm5038, %v5006
        %5040 = vst.msk [vmem:[%s1088 + $0x2] sm:$0x3] %vm5038, %v5007
        %5041 = vst.msk [vmem:[%s1088 + $0x4] sm:$0x3] %vm5038, %v5008
        %5042 = vst.msk [vmem:[%s1088 + $0x6] sm:$0x3] %vm5038, %v5009
        %5043 = vst.msk [vmem:[%s1088 + $0x8] sm:$0x3] %vm5038, %v5010
        %5044 = vst.msk [vmem:[%s1088 + $0xa] sm:$0x3] %vm5038, %v5011
        %5045 = vst.msk [vmem:[%s1088 + $0xc] sm:$0x3] %vm5038, %v5012
        %5046 = vst.msk [vmem:[%s1088 + $0xe] sm:$0x3] %vm5038, %v5013
        %5047 = vst.msk [vmem:[%s1088 + $0x10] sm:$0x3] %vm5038, %v5014
        %5048 = vst.msk [vmem:[%s1088 + $0x12] sm:$0x3] %vm5038, %v5015
        %5049 = vst.msk [vmem:[%s1088 + $0x14] sm:$0x3] %vm5038, %v5016
        %5050 = vst.msk [vmem:[%s1088 + $0x16] sm:$0x3] %vm5038, %v5017
        %5051 = vst.msk [vmem:[%s1088 + $0x18] sm:$0x3] %vm5038, %v5018
        %5052 = vst.msk [vmem:[%s1088 + $0x1a] sm:$0x3] %vm5038, %v5019
        %5053 = vst.msk [vmem:[%s1088 + $0x1c] sm:$0x3] %vm5038, %v5020
        %5054 = vst.msk [vmem:[%s1088 + $0x1e] sm:$0x3] %vm5038, %v5021
        %5055 = vst.msk [vmem:[%s1088 + $0x20] sm:$0x3] %vm5038, %v5022
        %5056 = vst.msk [vmem:[%s1088 + $0x22] sm:$0x3] %vm5038, %v5023
        %5057 = vst.msk [vmem:[%s1088 + $0x24] sm:$0x3] %vm5038, %v5024
        %5058 = vst.msk [vmem:[%s1088 + $0x26] sm:$0x3] %vm5038, %v5025
        %5059 = vst.msk [vmem:[%s1088 + $0x28] sm:$0x3] %vm5038, %v5026
        %5060 = vst.msk [vmem:[%s1088 + $0x2a] sm:$0x3] %vm5038, %v5027
        %5061 = vst.msk [vmem:[%s1088 + $0x2c] sm:$0x3] %vm5038, %v5028
        %5062 = vst.msk [vmem:[%s1088 + $0x2e] sm:$0x3] %vm5038, %v5029
        %5063 = vst.msk [vmem:[%s1088 + $0x30] sm:$0x3] %vm5038, %v5030
        %5064 = vst.msk [vmem:[%s1088 + $0x32] sm:$0x3] %vm5038, %v5031
        %5065 = vst.msk [vmem:[%s1088 + $0x34] sm:$0x3] %vm5038, %v5032
        %5066 = vst.msk [vmem:[%s1088 + $0x36] sm:$0x3] %vm5038, %v5033
        %5067 = vst.msk [vmem:[%s1088 + $0x38] sm:$0x3] %vm5038, %v5034
        %5068 = vst.msk [vmem:[%s1088 + $0x3a] sm:$0x3] %vm5038, %v5035
        %5069 = vst.msk [vmem:[%s1088 + $0x3c] sm:$0x3] %vm5038, %v5036
        %5070 = vst.msk [vmem:[%s1088 + $0x3e] sm:$0x3] %vm5038, %v5037
        %s5071 = sand.u32 %s252, 1
        %s5072 = sand.u32 %s252, 1
        %s5073 = smul.addr %s5072, 64
        %s5074 = scalar_lea.vmem [#allocation7], %s5073
        // Predicated region
        $region180: #{_lambda_.2} parent=166 // pred_check
          %p5075 = pneg %p262
        $region181: #{_lambda_.2} parent=166 // pred_check_branch
          %5077 = sbr.rel (%p5075) target = $region183
        $region182: #{_lambda_.2} parent=166 // pred_region
          %s5078 = smul.u32 16, %s24
          %s5079 = smul.addr %s5078, 2
          %s5080 = scalar_lea.vmem %s9, %s5079
          // Predicated region
          $region184: #{_lambda_.2} parent=182 // pred_check
            _
          $region185: #{_lambda_.2} parent=182 // pred_check_branch
            %5082 = sbr.rel (0) target = $region187
          $region186: #{_lambda_.2} parent=182 // pred_region
            // Predicated region
            $region188: #{_lambda_.2} parent=186 // pred_check
              _
            $region189: #{_lambda_.2} parent=186 // pred_check_branch
              %5084 = sbr.rel target = $region191
            $region190: #{_lambda_.2} parent=186 // pred_region
              // Predicated region
              $region203: #{_lambda_.2} parent=190 // pred_check
                _
              $region204: #{_lambda_.2} parent=190 // pred_check_branch
                %5162 = sbr.rel (0) target = $region206
              $region205: #{_lambda_.2} parent=190 // pred_region
                loop: start=0, step=1, limit=1
                $region207: #{_lambda_.2} parent=205 // loop_pre_header
                  _
                $region208: #{_lambda_.2} parent=205 // loop_header
                  %s5164 = sphi 0, %s5168
                  %p5165 = scmp.ge.s32.totalorder %s5164, 1
                  %s5169 = sphi %s5074, %s5074
                  %s5170 = sphi %s5080, %s5080
                $region209: #{_lambda_.2} parent=205 // loop_header_branch
                  %5167 = sbr.rel (%p5165) target = $region213
                $region210: #{_lambda_.2} parent=205 // loop_body
                  _
                $region211: #{_lambda_.2} parent=205 // loop_footer
                  %s5168 = sadd.s32 1, %s5164
                $region212: #{_lambda_.2} parent=205 // loop_footer_branch
                  %5163 = sbr.rel target = $region208
                $region213: #{_lambda_.2} parent=205 // loop_exit
                  _
                %s5172 = ssub.s32 4, 1
                loop: start=0, step=1, limit=1
                $region214: #{_lambda_.2} parent=205 // loop_pre_header
                  _
                $region215: #{_lambda_.2} parent=205 // loop_header
                  %s5174 = sphi 0, %s5178
                  %p5175 = scmp.ge.s32.totalorder %s5174, 1
                  %s5179 = sphi %s5074, %s5074
                  %s5180 = sphi %s5080, %s5080
                $region216: #{_lambda_.2} parent=205 // loop_header_branch
                  %5177 = sbr.rel (%p5175) target = $region220
                $region217: #{_lambda_.2} parent=205 // loop_body
                  %v5181 = vld [vmem:[%s5179] sm:%s5172]
                  %5182 = vst [vmem:[%s5180] sm:%s5172] %v5181
                  %v5183 = vld [vmem:[%s5179 + $0x2] sm:%s5172]
                  %5184 = vst [vmem:[%s5180 + $0x2] sm:%s5172] %v5183
                  %v5185 = vld [vmem:[%s5179 + $0x4] sm:%s5172]
                  %5186 = vst [vmem:[%s5180 + $0x4] sm:%s5172] %v5185
                  %v5187 = vld [vmem:[%s5179 + $0x6] sm:%s5172]
                  %5188 = vst [vmem:[%s5180 + $0x6] sm:%s5172] %v5187
                  %v5189 = vld [vmem:[%s5179 + $0x8] sm:%s5172]
                  %5190 = vst [vmem:[%s5180 + $0x8] sm:%s5172] %v5189
                  %v5191 = vld [vmem:[%s5179 + $0xa] sm:%s5172]
                  %5192 = vst [vmem:[%s5180 + $0xa] sm:%s5172] %v5191
                  %v5193 = vld [vmem:[%s5179 + $0xc] sm:%s5172]
                  %5194 = vst [vmem:[%s5180 + $0xc] sm:%s5172] %v5193
                  %v5195 = vld [vmem:[%s5179 + $0xe] sm:%s5172]
                  %5196 = vst [vmem:[%s5180 + $0xe] sm:%s5172] %v5195
                  %v5197 = vld [vmem:[%s5179 + $0x10] sm:%s5172]
                  %5198 = vst [vmem:[%s5180 + $0x10] sm:%s5172] %v5197
                  %v5199 = vld [vmem:[%s5179 + $0x12] sm:%s5172]
                  %5200 = vst [vmem:[%s5180 + $0x12] sm:%s5172] %v5199
                  %v5201 = vld [vmem:[%s5179 + $0x14] sm:%s5172]
                  %5202 = vst [vmem:[%s5180 + $0x14] sm:%s5172] %v5201
                  %v5203 = vld [vmem:[%s5179 + $0x16] sm:%s5172]
                  %5204 = vst [vmem:[%s5180 + $0x16] sm:%s5172] %v5203
                  %v5205 = vld [vmem:[%s5179 + $0x18] sm:%s5172]
                  %5206 = vst [vmem:[%s5180 + $0x18] sm:%s5172] %v5205
                  %v5207 = vld [vmem:[%s5179 + $0x1a] sm:%s5172]
                  %5208 = vst [vmem:[%s5180 + $0x1a] sm:%s5172] %v5207
                  %v5209 = vld [vmem:[%s5179 + $0x1c] sm:%s5172]
                  %5210 = vst [vmem:[%s5180 + $0x1c] sm:%s5172] %v5209
                  %v5211 = vld [vmem:[%s5179 + $0x1e] sm:%s5172]
                  %5212 = vst [vmem:[%s5180 + $0x1e] sm:%s5172] %v5211
                  %v5213 = vld [vmem:[%s5179 + $0x20] sm:%s5172]
                  %5214 = vst [vmem:[%s5180 + $0x80] sm:%s5172] %v5213
                  %v5215 = vld [vmem:[%s5179 + $0x22] sm:%s5172]
                  %5216 = vst [vmem:[%s5180 + $0x82] sm:%s5172] %v5215
                  %v5217 = vld [vmem:[%s5179 + $0x24] sm:%s5172]
                  %5218 = vst [vmem:[%s5180 + $0x84] sm:%s5172] %v5217
                  %v5219 = vld [vmem:[%s5179 + $0x26] sm:%s5172]
                  %5220 = vst [vmem:[%s5180 + $0x86] sm:%s5172] %v5219
                  %v5221 = vld [vmem:[%s5179 + $0x28] sm:%s5172]
                  %5222 = vst [vmem:[%s5180 + $0x88] sm:%s5172] %v5221
                  %v5223 = vld [vmem:[%s5179 + $0x2a] sm:%s5172]
                  %5224 = vst [vmem:[%s5180 + $0x8a] sm:%s5172] %v5223
                  %v5225 = vld [vmem:[%s5179 + $0x2c] sm:%s5172]
                  %5226 = vst [vmem:[%s5180 + $0x8c] sm:%s5172] %v5225
                  %v5227 = vld [vmem:[%s5179 + $0x2e] sm:%s5172]
                  %5228 = vst [vmem:[%s5180 + $0x8e] sm:%s5172] %v5227
                  %v5229 = vld [vmem:[%s5179 + $0x30] sm:%s5172]
                  %5230 = vst [vmem:[%s5180 + $0x90] sm:%s5172] %v5229
                  %v5231 = vld [vmem:[%s5179 + $0x32] sm:%s5172]
                  %5232 = vst [vmem:[%s5180 + $0x92] sm:%s5172] %v5231
                  %v5233 = vld [vmem:[%s5179 + $0x34] sm:%s5172]
                  %5234 = vst [vmem:[%s5180 + $0x94] sm:%s5172] %v5233
                  %v5235 = vld [vmem:[%s5179 + $0x36] sm:%s5172]
                  %5236 = vst [vmem:[%s5180 + $0x96] sm:%s5172] %v5235
                  %v5237 = vld [vmem:[%s5179 + $0x38] sm:%s5172]
                  %5238 = vst [vmem:[%s5180 + $0x98] sm:%s5172] %v5237
                  %v5239 = vld [vmem:[%s5179 + $0x3a] sm:%s5172]
                  %5240 = vst [vmem:[%s5180 + $0x9a] sm:%s5172] %v5239
                  %v5241 = vld [vmem:[%s5179 + $0x3c] sm:%s5172]
                  %5242 = vst [vmem:[%s5180 + $0x9c] sm:%s5172] %v5241
                  %v5243 = vld [vmem:[%s5179 + $0x3e] sm:%s5172]
                  %5244 = vst [vmem:[%s5180 + $0x9e] sm:%s5172] %v5243
                $region218: #{_lambda_.2} parent=205 // loop_footer
                  %s5178 = sadd.s32 1, %s5174
                $region219: #{_lambda_.2} parent=205 // loop_footer_branch
                  %5173 = sbr.rel target = $region215
                $region220: #{_lambda_.2} parent=205 // loop_exit
                  _
              $region206: #{_lambda_.2} parent=190 // pred_fallthru
                _
            $region191: #{_lambda_.2} parent=186 // pred_fallthru
              _
            // Predicated region
            $region192: #{_lambda_.2} parent=186 // pred_check
              _
            $region193: #{_lambda_.2} parent=186 // pred_check_branch
              %5086 = sbr.rel (0) target = $region195
            $region194: #{_lambda_.2} parent=186 // pred_region
              %s5088 = ssub.s32 4, 1
              loop: start=0, step=1, limit=1
              $region196: #{_lambda_.2} parent=194 // loop_pre_header
                _
              $region197: #{_lambda_.2} parent=194 // loop_header
                %s5090 = sphi 0, %s5094
                %p5091 = scmp.ge.s32.totalorder %s5090, 1
                %s5095 = sphi %s5074, %s5074
                %s5096 = sphi %s5080, %s5080
              $region198: #{_lambda_.2} parent=194 // loop_header_branch
                %5093 = sbr.rel (%p5091) target = $region202
              $region199: #{_lambda_.2} parent=194 // loop_body
                %v5097 = vld [vmem:[%s5095] sm:%s5088]
                %5098 = vst [vmem:[%s5096] sm:%s5088] %v5097
                %v5099 = vld [vmem:[%s5095 + $0x2] sm:%s5088]
                %5100 = vst [vmem:[%s5096 + $0x2] sm:%s5088] %v5099
                %v5101 = vld [vmem:[%s5095 + $0x4] sm:%s5088]
                %5102 = vst [vmem:[%s5096 + $0x4] sm:%s5088] %v5101
                %v5103 = vld [vmem:[%s5095 + $0x6] sm:%s5088]
                %5104 = vst [vmem:[%s5096 + $0x6] sm:%s5088] %v5103
                %v5105 = vld [vmem:[%s5095 + $0x8] sm:%s5088]
                %5106 = vst [vmem:[%s5096 + $0x8] sm:%s5088] %v5105
                %v5107 = vld [vmem:[%s5095 + $0xa] sm:%s5088]
                %5108 = vst [vmem:[%s5096 + $0xa] sm:%s5088] %v5107
                %v5109 = vld [vmem:[%s5095 + $0xc] sm:%s5088]
                %5110 = vst [vmem:[%s5096 + $0xc] sm:%s5088] %v5109
                %v5111 = vld [vmem:[%s5095 + $0xe] sm:%s5088]
                %5112 = vst [vmem:[%s5096 + $0xe] sm:%s5088] %v5111
                %v5113 = vld [vmem:[%s5095 + $0x10] sm:%s5088]
                %5114 = vst [vmem:[%s5096 + $0x10] sm:%s5088] %v5113
                %v5115 = vld [vmem:[%s5095 + $0x12] sm:%s5088]
                %5116 = vst [vmem:[%s5096 + $0x12] sm:%s5088] %v5115
                %v5117 = vld [vmem:[%s5095 + $0x14] sm:%s5088]
                %5118 = vst [vmem:[%s5096 + $0x14] sm:%s5088] %v5117
                %v5119 = vld [vmem:[%s5095 + $0x16] sm:%s5088]
                %5120 = vst [vmem:[%s5096 + $0x16] sm:%s5088] %v5119
                %v5121 = vld [vmem:[%s5095 + $0x18] sm:%s5088]
                %5122 = vst [vmem:[%s5096 + $0x18] sm:%s5088] %v5121
                %v5123 = vld [vmem:[%s5095 + $0x1a] sm:%s5088]
                %5124 = vst [vmem:[%s5096 + $0x1a] sm:%s5088] %v5123
                %v5125 = vld [vmem:[%s5095 + $0x1c] sm:%s5088]
                %5126 = vst [vmem:[%s5096 + $0x1c] sm:%s5088] %v5125
                %v5127 = vld [vmem:[%s5095 + $0x1e] sm:%s5088]
                %5128 = vst [vmem:[%s5096 + $0x1e] sm:%s5088] %v5127
                %v5129 = vld [vmem:[%s5095 + $0x20] sm:%s5088]
                %5130 = vst [vmem:[%s5096 + $0x80] sm:%s5088] %v5129
                %v5131 = vld [vmem:[%s5095 + $0x22] sm:%s5088]
                %5132 = vst [vmem:[%s5096 + $0x82] sm:%s5088] %v5131
                %v5133 = vld [vmem:[%s5095 + $0x24] sm:%s5088]
                %5134 = vst [vmem:[%s5096 + $0x84] sm:%s5088] %v5133
                %v5135 = vld [vmem:[%s5095 + $0x26] sm:%s5088]
                %5136 = vst [vmem:[%s5096 + $0x86] sm:%s5088] %v5135
                %v5137 = vld [vmem:[%s5095 + $0x28] sm:%s5088]
                %5138 = vst [vmem:[%s5096 + $0x88] sm:%s5088] %v5137
                %v5139 = vld [vmem:[%s5095 + $0x2a] sm:%s5088]
                %5140 = vst [vmem:[%s5096 + $0x8a] sm:%s5088] %v5139
                %v5141 = vld [vmem:[%s5095 + $0x2c] sm:%s5088]
                %5142 = vst [vmem:[%s5096 + $0x8c] sm:%s5088] %v5141
                %v5143 = vld [vmem:[%s5095 + $0x2e] sm:%s5088]
                %5144 = vst [vmem:[%s5096 + $0x8e] sm:%s5088] %v5143
                %v5145 = vld [vmem:[%s5095 + $0x30] sm:%s5088]
                %5146 = vst [vmem:[%s5096 + $0x90] sm:%s5088] %v5145
                %v5147 = vld [vmem:[%s5095 + $0x32] sm:%s5088]
                %5148 = vst [vmem:[%s5096 + $0x92] sm:%s5088] %v5147
                %v5149 = vld [vmem:[%s5095 + $0x34] sm:%s5088]
                %5150 = vst [vmem:[%s5096 + $0x94] sm:%s5088] %v5149
                %v5151 = vld [vmem:[%s5095 + $0x36] sm:%s5088]
                %5152 = vst [vmem:[%s5096 + $0x96] sm:%s5088] %v5151
                %v5153 = vld [vmem:[%s5095 + $0x38] sm:%s5088]
                %5154 = vst [vmem:[%s5096 + $0x98] sm:%s5088] %v5153
                %v5155 = vld [vmem:[%s5095 + $0x3a] sm:%s5088]
                %5156 = vst [vmem:[%s5096 + $0x9a] sm:%s5088] %v5155
                %v5157 = vld [vmem:[%s5095 + $0x3c] sm:%s5088]
                %5158 = vst [vmem:[%s5096 + $0x9c] sm:%s5088] %v5157
                %v5159 = vld [vmem:[%s5095 + $0x3e] sm:%s5088]
                %5160 = vst [vmem:[%s5096 + $0x9e] sm:%s5088] %v5159
              $region200: #{_lambda_.2} parent=194 // loop_footer
                %s5094 = sadd.s32 1, %s5090
              $region201: #{_lambda_.2} parent=194 // loop_footer_branch
                %5089 = sbr.rel target = $region197
              $region202: #{_lambda_.2} parent=194 // loop_exit
                _
            $region195: #{_lambda_.2} parent=186 // pred_fallthru
              _
          $region187: #{_lambda_.2} parent=182 // pred_fallthru
            _
          %5245 = vnop
        $region183: #{_lambda_.2} parent=166 // pred_fallthru
          _
      $region167: #{_lambda_.2} parent=5 // pred_fallthru
        _
      %p5246 = scmp.le.s32.totalorder 2, %s19
      // Predicated region
      $region221: #{_lambda_.2} parent=5 // pred_check
        %p5247 = pneg %p5246
      $region222: #{_lambda_.2} parent=5 // pred_check_branch
        %5249 = sbr.rel (%p5247) target = $region224
      $region223: #{_lambda_.2} parent=5 // pred_region
        %s5250 = ssub.s32 %s19, 2
        // Predicated region
        $region225: #{_lambda_.2} parent=223 // pred_check
          %p5251 = pneg %p268
        $region226: #{_lambda_.2} parent=223 // pred_check_branch
          %5253 = sbr.rel (%p5251) target = $region228
        $region227: #{_lambda_.2} parent=223 // pred_region
          %s5254 = sand.u32 %s253, 1
          %s5255 = sand.u32 %s253, 1
          %s5256 = smul.addr %s5255, 64
          %s5257 = scalar_lea.vmem [#allocation7], %s5256
        $region228: #{_lambda_.2} parent=223 // pred_fallthru
          _
      $region224: #{_lambda_.2} parent=5 // pred_fallthru
        _
    $region6: #{_lambda_.2} parent=1 // loop_footer
      %s23 = sadd.s32 1, %s19
    $region7: #{_lambda_.2} parent=1 // loop_footer_branch
      %18 = sbr.rel target = $region3
    $region8: #{_lambda_.2} parent=1 // loop_exit
      _

</llo_original>
